<compile_context>
chip_gen: v7x
topology: tpu7x:2x2x1
jax: 0.10.0
libtpu: 0.0.40
codegen_flags: <defaults>
</compile_context>

<pallas_src>
import functools
import math

import jax
import jax.numpy as jnp
import numpy as np
from jax import lax
from jax.experimental import pallas as pl
from jax.experimental.pallas import tpu as pltpu


# ---------------------------------------------------------------------------
# Fused encoder-layer kernel: MHA(q=x, k=v=kv) + add&norm + FFN + add&norm
# ---------------------------------------------------------------------------
def encoder_layer_kernel(
    x_ref, kv_ref, bias_ref,
    wq_ref, bq_ref, wk_ref, bk_ref, wv_ref, bv_ref, woh_ref, bo_ref,
    g1_ref, be1_ref, w1_ref, b1_ref, w2_ref, b2_ref, g2_ref, be2_ref,
    o_ref, *, n_head):
    f32 = jnp.float32
    bf16 = jnp.bfloat16

    xb = x_ref[0]                       # (tq, D)   bf16
    kvb = kv_ref[0]                     # (Tk, D)   bf16
    bias = bias_ref[0]                  # (1, Tk)   f32 additive mask bias (0 / -1e4)

    x = xb.astype(f32)
    d_model = x.shape[-1]
    hd = d_model // n_head
    scale = 1.0 / math.sqrt(hd)

    # Full-width projections: one big MXU matmul each (bf16 in, f32 accumulate).
    # 1/sqrt(hd) is folded into q once (hoisted out of the head loop).
    q = (jnp.dot(xb, wq_ref[...], preferred_element_type=f32) + bq_ref[...]) * scale
    k = jnp.dot(kvb, wk_ref[...], preferred_element_type=f32) + bk_ref[...]
    v = jnp.dot(kvb, wv_ref[...], preferred_element_type=f32) + bv_ref[...]

    qb = q.astype(bf16)
    kb = k.astype(bf16)
    vb = v.astype(bf16)

    # Per-head attention.  The head output is folded straight into the output
    # projection via the pre-split Wo (n_head, hd, D): no lane-axis concat, and
    # each out-proj matmul is lane-dense (N = D).
    dn_qkT = (((1,), (1,)), ((), ()))   # contract last dims: (tq,hd)·(Tk,hd) -> (tq,Tk)
    acc = None
    for h in range(n_head):
        lo = h * hd
        qh = qb[:, lo:lo + hd]
        kh = kb[:, lo:lo + hd]
        vh = vb[:, lo:lo + hd]
        s = lax.dot_general(qh, kh, dn_qkT, preferred_element_type=f32) + bias
        s = s - jnp.max(s, axis=-1, keepdims=True)
        p = jnp.exp(s)
        p = p * pl.reciprocal(jnp.sum(p, axis=-1, keepdims=True), approx=True)
        ctx = jnp.dot(p.astype(bf16), vh, preferred_element_type=f32)          # (tq, hd)
        contrib = jnp.dot(ctx.astype(bf16), woh_ref[h],
                          preferred_element_type=f32)                          # (tq, D)
        acc = contrib if acc is None else acc + contrib
    attn = acc + bo_ref[...]

    # residual + LayerNorm 1 (eps=1e-12, biased variance — matches custom LayerNorm)
    y = x + attn
    mu1 = jnp.mean(y, axis=-1, keepdims=True)
    var1 = jnp.mean((y - mu1) ** 2, axis=-1, keepdims=True)
    y = (y - mu1) * lax.rsqrt(var1 + 1e-12)
    y = g1_ref[...] * y + be1_ref[...]

    # Positionwise FFN: linear -> relu -> linear   (dropout = identity at inference)
    h1 = jnp.dot(y.astype(bf16), w1_ref[...], preferred_element_type=f32) + b1_ref[...]
    h1 = jnp.maximum(h1, 0.0)
    ff = jnp.dot(h1.astype(bf16), w2_ref[...], preferred_element_type=f32) + b2_ref[...]

    # residual + LayerNorm 2
    z = y + ff
    mu2 = jnp.mean(z, axis=-1, keepdims=True)
    var2 = jnp.mean((z - mu2) ** 2, axis=-1, keepdims=True)
    z = (z - mu2) * lax.rsqrt(var2 + 1e-12)
    z = g2_ref[...] * z + be2_ref[...]

    o_ref[0] = z.astype(o_ref.dtype)


def encoder_layer_pallas(x, kv, mask_bias, p, n_head):
    """x: (B, Tq, D) bf16, kv: (B, Tk, D) bf16, mask_bias: (B, 1, Tk) f32."""
    B, Tq, D = x.shape
    Tk = kv.shape[1]
    hd = D // n_head
    F = p["w1"].shape[-1]

    # Query tile: largest tile that divides Tq (multiple of 8, capped at 512).
    tq = Tq
    for cand in (512, 256, 128, 64, 32, 16, 8):
        if Tq % cand == 0:
            tq = cand
            break
    grid = (B, Tq // tq)

    # Pre-split Wo by head: (D, D) -> (n_head, hd, D) so the kernel indexes the
    # leading axis instead of slicing/concatenating along lanes.
    woh = p["wo"].reshape(n_head, hd, D)
    plist = [p["wq"], p["bq"], p["wk"], p["bk"], p["wv"], p["bv"], woh, p["bo"],
             p["g1"], p["be1"], p["w1"], p["b1"], p["w2"], p["b2"], p["g2"], p["be2"]]

    def param_spec(arr):
        nd = arr.ndim
        # TODO(synk): mark invariant weights pl.Buffered(1) (single-buffer) once
        # supported, to halve param VMEM on v7x (64 MiB physical).
        return pl.BlockSpec(arr.shape, lambda b, qi, _nd=nd: (0,) * _nd)

    in_specs = [
        pl.BlockSpec((1, tq, D), lambda b, qi: (b, qi, 0)),
        pl.BlockSpec((1, Tk, D), lambda b, qi: (b, 0, 0)),
        pl.BlockSpec((1, 1, Tk), lambda b, qi: (b, 0, 0)),
    ] + [param_spec(a) for a in plist]
    out_spec = pl.BlockSpec((1, tq, D), lambda b, qi: (b, qi, 0))

    # Advisory cost estimate for XLA scheduling around the custom call.
    flops = int(B * (Tq * (8 * D * D + 4 * D * Tk + 4 * D * F) + Tk * 4 * D * D))
    transcendentals = int(B * n_head * Tq * Tk)
    param_bytes = int(sum(int(a.size) * a.dtype.itemsize for a in plist))
    bytes_accessed = int(2 * (x.size + kv.size + B * Tq * D)
                         + 4 * mask_bias.size + param_bytes)
    cost = pl.CostEstimate(flops=flops, transcendentals=transcendentals,
                           bytes_accessed=bytes_accessed)

    # VMEM budget: double-buffered activation blocks + params + headroom,
    # clamped to stay well within every generation (v7x physical = 64 MiB).
    block_bytes = 2 * ((tq * D + Tk * D + tq * D) * 2 + Tk * 4)
    vmem_limit = int(min(max(2 * param_bytes + 2 * block_bytes + (8 << 20),
                             32 << 20), 96 << 20))

    # TODO(synk): for very long concatenated kv (agg stage at real seq lengths),
    # stream kv through Tk tiles with an online-softmax accumulator instead of
    # holding the full (Tk, D) block in VMEM.

    kernel = functools.partial(encoder_layer_kernel, n_head=n_head)
    return pl.pallas_call(
        kernel,
        out_shape=jax.ShapeDtypeStruct((B, Tq, D), jnp.bfloat16),
        grid_spec=pltpu.PrefetchScalarGridSpec(
            num_scalar_prefetch=0,
            grid=grid,
            in_specs=in_specs,
            out_specs=out_spec,
        ),
        compiler_params=pltpu.CompilerParams(
            dimension_semantics=("parallel", "parallel"),
            vmem_limit_bytes=vmem_limit),
        cost_estimate=cost,
    )(x, kv, mask_bias, *plist)


# ---------------------------------------------------------------------------
# Parameter construction (deterministic synthetic init)
# ---------------------------------------------------------------------------
def init_layer_params(key, d_model, ffn_hidden):
    ks = jax.random.split(key, 16)

    def lin(kw, kb, din, dout):
        w = (jax.random.normal(kw, (din, dout), jnp.float32) * 0.05).astype(jnp.bfloat16)
        b = jax.random.normal(kb, (1, dout), jnp.float32) * 0.02
        return w, b

    wq, bq = lin(ks[0], ks[1], d_model, d_model)
    wk, bk = lin(ks[2], ks[3], d_model, d_model)
    wv, bv = lin(ks[4], ks[5], d_model, d_model)
    wo, bo = lin(ks[6], ks[7], d_model, d_model)
    w1, b1 = lin(ks[8], ks[9], d_model, ffn_hidden)
    w2, b2 = lin(ks[10], ks[11], ffn_hidden, d_model)
    g1 = 1.0 + 0.1 * jax.random.normal(ks[12], (1, d_model), jnp.float32)
    be1 = 0.05 * jax.random.normal(ks[13], (1, d_model), jnp.float32)
    g2 = 1.0 + 0.1 * jax.random.normal(ks[14], (1, d_model), jnp.float32)
    be2 = 0.05 * jax.random.normal(ks[15], (1, d_model), jnp.float32)
    return dict(wq=wq, bq=bq, wk=wk, bk=bk, wv=wv, bv=bv, wo=wo, bo=bo,
                g1=g1, be1=be1, w1=w1, b1=b1, w2=w2, b2=b2, g2=g2, be2=be2)


def sinusoidal_pe(max_len, d_model):
    pos = np.arange(max_len, dtype=np.float32)[:, None]
    _2i = np.arange(0, d_model, 2, dtype=np.float32)
    pe = np.zeros((max_len, d_model), np.float32)
    pe[:, 0::2] = np.sin(pos / (10000.0 ** (_2i / d_model)))
    pe[:, 1::2] = np.cos(pos / (10000.0 ** (_2i / d_model)))
    return jnp.asarray(pe)


def init_encoder_params(key, enc_voc_sizes, max_len, d_model, ffn_hidden,
                        n_layers, n_layers_agg):
    params = {"emb": [], "first": [], "agg": [],
              "pe": sinusoidal_pe(max_len, d_model)}
    keys = jax.random.split(key, 2 * len(enc_voc_sizes))
    for i, voc in enumerate(enc_voc_sizes):
        k_emb, k_rest = jax.random.split(keys[i])
        params["emb"].append(
            jax.random.normal(k_emb, (int(voc) + 1, d_model), jnp.float32) * 0.1)
        lkeys = jax.random.split(k_rest, n_layers)
        params["first"].append(
            [init_layer_params(lk, d_model, ffn_hidden) for lk in lkeys])
    for i in range(len(enc_voc_sizes)):
        lkeys = jax.random.split(keys[len(enc_voc_sizes) + i], n_layers_agg)
        params["agg"].append(
            [init_layer_params(lk, d_model, ffn_hidden) for lk in lkeys])
    return params


# ---------------------------------------------------------------------------
# Full Encoder forward (Pallas kernels for every encoder layer)
# ---------------------------------------------------------------------------
def encoder_forward(params, Xs, src_mask, n_head):
    B, T = Xs[0].shape
    n_attr = len(Xs)
    pe = params["pe"][:T][None]                               # (1, T, D)

    # Additive attention-mask bias: 0 where valid, -10000 where padded
    # (equivalent to masked_fill(mask == 0, -10000) after softmax).
    bias = ((src_mask - 1.0) * 10000.0).reshape(B, 1, T).astype(jnp.float32)

    enc_outputs = []
    for i in range(n_attr):
        # TransformerEmbedding: token embedding + sinusoidal PE (dropout = identity)
        x = (jnp.take(params["emb"][i], Xs[i], axis=0) + pe).astype(jnp.bfloat16)
        for lp in params["first"][i]:                         # Encoder_single layers
            x = encoder_layer_pallas(x, x, bias, lp, n_head)
        enc_outputs.append(x)

    all_x = jnp.concatenate(enc_outputs, axis=1)              # (B, n_attr*T, D) bf16
    agg_bias = jnp.tile(bias, (1, 1, n_attr))                 # repeat((1,1,1,n_attr))

    agg_outputs = []
    for i in range(n_attr):
        x = enc_outputs[i]
        for lp in params["agg"][i]:                           # Encoder_single_agg layers
            x = encoder_layer_pallas(x, all_x, agg_bias, lp, n_head)
        agg_outputs.append(x)
    return jnp.concatenate(agg_outputs, axis=1).astype(jnp.float32)


# ---------------------------------------------------------------------------
# Pure-JAX reference (f32 math, same bf16-quantized weights) for sanity check
# ---------------------------------------------------------------------------
def _ref_layernorm(x, g, b):
    m = jnp.mean(x, axis=-1, keepdims=True)
    v = jnp.mean((x - m) ** 2, axis=-1, keepdims=True)
    return g * (x - m) / jnp.sqrt(v + 1e-12) + b


def ref_layer(x, kv, src_mask, p, n_head):
    f32 = jnp.float32
    wq, wk, wv, wo = (p["wq"].astype(f32), p["wk"].astype(f32),
                      p["wv"].astype(f32), p["wo"].astype(f32))
    w1, w2 = p["w1"].astype(f32), p["w2"].astype(f32)
    B, Tq, D = x.shape
    Tk = kv.shape[1]
    hd = D // n_head
    q = (x @ wq + p["bq"]).reshape(B, Tq, n_head, hd).transpose(0, 2, 1, 3)
    k = (kv @ wk + p["bk"]).reshape(B, Tk, n_head, hd).transpose(0, 2, 1, 3)
    v = (kv @ wv + p["bv"]).reshape(B, Tk, n_head, hd).transpose(0, 2, 1, 3)
    s = jnp.einsum("bhqd,bhkd->bhqk", q, k) / math.sqrt(hd)
    s = jnp.where(src_mask[:, None, None, :] == 0, -10000.0, s)
    a = jax.nn.softmax(s, axis=-1)
    o = jnp.einsum("bhqk,bhkd->bhqd", a, v).transpose(0, 2, 1, 3).reshape(B, Tq, D)
    o = o @ wo + p["bo"]
    y = _ref_layernorm(x + o, p["g1"], p["be1"])
    ff = jnp.maximum(y @ w1 + p["b1"], 0.0) @ w2 + p["b2"]
    return _ref_layernorm(y + ff, p["g2"], p["be2"])


def ref_forward(params, Xs, src_mask, n_head):
    B, T = Xs[0].shape
    n_attr = len(Xs)
    pe = params["pe"][:T][None]
    enc = []
    for i in range(n_attr):
        x = jnp.take(params["emb"][i], Xs[i], axis=0) + pe
        for lp in params["first"][i]:
            x = ref_layer(x, x, src_mask, lp, n_head)
        enc.append(x)
    all_x = jnp.concatenate(enc, axis=1)
    agg_mask = jnp.tile(src_mask, (1, n_attr))
    outs = []
    for i in range(n_attr):
        x = enc[i]
        for lp in params["agg"][i]:
            x = ref_layer(x, all_x, agg_mask, lp, n_head)
        outs.append(x)
    return jnp.concatenate(outs, axis=1)


# ---------------------------------------------------------------------------
if __name__ == "__main__":
    key = jax.random.PRNGKey(0)

    enc_voc_sizes = [5, 7, 9]          # three attributes
    B, T = 2, 8                        # T multiple of 8 (sublane-friendly)
    max_len = 16
    # lane-dense config per perf review: D multiple of 128, head_dim = 128
    d_model, ffn_hidden, n_head = 256, 256, 2
    n_layers, n_layers_agg = 2, 1

    k_param, k_data = jax.random.split(key)
    params = init_encoder_params(k_param, enc_voc_sizes, max_len, d_model,
                                 ffn_hidden, n_layers, n_layers_agg)

    dkeys = jax.random.split(k_data, len(enc_voc_sizes))
    Xs = [jax.random.randint(dkeys[i], (B, T), 0, enc_voc_sizes[i] + 1, jnp.int32)
          for i in range(len(enc_voc_sizes))]
    lengths = jnp.array([[T], [T - 3]], jnp.int32)
    src_mask = (jnp.arange(T)[None, :] < lengths).astype(jnp.float32)   # (B, T)

    fwd = jax.jit(functools.partial(encoder_forward, n_head=n_head))
    out = jax.block_until_ready(fwd(params, Xs, src_mask))

    assert out.shape == (B, len(enc_voc_sizes) * T, d_model)
    assert bool(jnp.all(jnp.isfinite(out)))

    ref = jax.block_until_ready(ref_forward(params, Xs, src_mask, n_head))
    np.testing.assert_allclose(np.asarray(out), np.asarray(ref),
                               rtol=5e-2, atol=5e-2)

    print("KERNEL_OK")
</pallas_src>

<mosaic_0001>
module attributes {stable_mosaic.version = 11 : i64} {
  func.func @encoder_layer_kernel(%arg0: i32, %arg1: i32, %arg2: memref<1x8x256xbf16, #tpu.memory_space<vmem>>, %arg3: memref<1x8x256xbf16, #tpu.memory_space<vmem>>, %arg4: memref<1x1x8xf32, #tpu.memory_space<vmem>>, %arg5: memref<256x256xbf16, #tpu.memory_space<vmem>>, %arg6: memref<1x256xf32, #tpu.memory_space<vmem>>, %arg7: memref<256x256xbf16, #tpu.memory_space<vmem>>, %arg8: memref<1x256xf32, #tpu.memory_space<vmem>>, %arg9: memref<256x256xbf16, #tpu.memory_space<vmem>>, %arg10: memref<1x256xf32, #tpu.memory_space<vmem>>, %arg11: memref<2x128x256xbf16, #tpu.memory_space<vmem>>, %arg12: memref<1x256xf32, #tpu.memory_space<vmem>>, %arg13: memref<1x256xf32, #tpu.memory_space<vmem>>, %arg14: memref<1x256xf32, #tpu.memory_space<vmem>>, %arg15: memref<256x256xbf16, #tpu.memory_space<vmem>>, %arg16: memref<1x256xf32, #tpu.memory_space<vmem>>, %arg17: memref<256x256xbf16, #tpu.memory_space<vmem>>, %arg18: memref<1x256xf32, #tpu.memory_space<vmem>>, %arg19: memref<1x256xf32, #tpu.memory_space<vmem>>, %arg20: memref<1x256xf32, #tpu.memory_space<vmem>>, %arg21: memref<1x8x256xbf16, #tpu.memory_space<vmem>>) attributes {dimension_semantics = [#tpu.dimension_semantics<parallel>, #tpu.dimension_semantics<parallel>], iteration_bounds = array<i64: 2, 1>, scalar_prefetch = 0 : i64, scratch_operands = 0 : i64, tpu.core_type = #tpu.core_type<tc>, window_params = [{transform_indices = @transform_0, window_bounds = array<i64: 1, 8, 256>}, {transform_indices = @transform_1, window_bounds = array<i64: 1, 8, 256>}, {transform_indices = @transform_2, window_bounds = array<i64: 1, 1, 8>}, {pipeline_mode = #tpu.pipeline_mode<synchronous>, transform_indices = @transform_3, window_bounds = array<i64: 256, 256>}, {pipeline_mode = #tpu.pipeline_mode<synchronous>, transform_indices = @transform_4, window_bounds = array<i64: 1, 256>}, {pipeline_mode = #tpu.pipeline_mode<synchronous>, transform_indices = @transform_5, window_bounds = array<i64: 256, 256>}, {pipeline_mode = #tpu.pipeline_mode<synchronous>, transform_indices = @transform_6, window_bounds = array<i64: 1, 256>}, {pipeline_mode = #tpu.pipeline_mode<synchronous>, transform_indices = @transform_7, window_bounds = array<i64: 256, 256>}, {pipeline_mode = #tpu.pipeline_mode<synchronous>, transform_indices = @transform_8, window_bounds = array<i64: 1, 256>}, {pipeline_mode = #tpu.pipeline_mode<synchronous>, transform_indices = @transform_9, window_bounds = array<i64: 2, 128, 256>}, {pipeline_mode = #tpu.pipeline_mode<synchronous>, transform_indices = @transform_10, window_bounds = array<i64: 1, 256>}, {pipeline_mode = #tpu.pipeline_mode<synchronous>, transform_indices = @transform_11, window_bounds = array<i64: 1, 256>}, {pipeline_mode = #tpu.pipeline_mode<synchronous>, transform_indices = @transform_12, window_bounds = array<i64: 1, 256>}, {pipeline_mode = #tpu.pipeline_mode<synchronous>, transform_indices = @transform_13, window_bounds = array<i64: 256, 256>}, {pipeline_mode = #tpu.pipeline_mode<synchronous>, transform_indices = @transform_14, window_bounds = array<i64: 1, 256>}, {pipeline_mode = #tpu.pipeline_mode<synchronous>, transform_indices = @transform_15, window_bounds = array<i64: 256, 256>}, {pipeline_mode = #tpu.pipeline_mode<synchronous>, transform_indices = @transform_16, window_bounds = array<i64: 1, 256>}, {pipeline_mode = #tpu.pipeline_mode<synchronous>, transform_indices = @transform_17, window_bounds = array<i64: 1, 256>}, {pipeline_mode = #tpu.pipeline_mode<synchronous>, transform_indices = @transform_18, window_bounds = array<i64: 1, 256>}, {transform_indices = @transform_19, window_bounds = array<i64: 1, 8, 256>}]} {
    %c0 = arith.constant 0 : index
    %c0_0 = arith.constant 0 : index
    %c0_1 = arith.constant 0 : index
    %0 = vector.load %arg2[%c0, %c0_0, %c0_1] : memref<1x8x256xbf16, #tpu.memory_space<vmem>>, vector<1x8x256xbf16>
    %1 = vector.shape_cast %0 : vector<1x8x256xbf16> to vector<8x256xbf16>
    %c0_2 = arith.constant 0 : index
    %c0_3 = arith.constant 0 : index
    %c0_4 = arith.constant 0 : index
    %2 = vector.load %arg3[%c0_2, %c0_3, %c0_4] : memref<1x8x256xbf16, #tpu.memory_space<vmem>>, vector<1x8x256xbf16>
    %3 = vector.shape_cast %2 : vector<1x8x256xbf16> to vector<8x256xbf16>
    %c0_5 = arith.constant 0 : index
    %c0_6 = arith.constant 0 : index
    %c0_7 = arith.constant 0 : index
    %4 = vector.load %arg4[%c0_5, %c0_6, %c0_7] : memref<1x1x8xf32, #tpu.memory_space<vmem>>, vector<1x1x8xf32>
    %5 = vector.shape_cast %4 : vector<1x1x8xf32> to vector<1x8xf32>
    %6 = arith.extf %1 : vector<8x256xbf16> to vector<8x256xf32>
    %c0_8 = arith.constant 0 : index
    %c0_9 = arith.constant 0 : index
    %7 = vector.load %arg5[%c0_8, %c0_9] : memref<256x256xbf16, #tpu.memory_space<vmem>>, vector<256x256xbf16>
    %cst = arith.constant dense<0.000000e+00> : vector<8x256xf32>
    %8 = tpu.matmul %1, %7, %cst {dimension_numbers = #tpu.dot_dimension_numbers<[1], [0], [0], [1], [0, 0, 1, 1], [], []>} : vector<8x256xbf16>, vector<256x256xbf16>, vector<8x256xf32> -> vector<8x256xf32>
    %c0_10 = arith.constant 0 : index
    %c0_11 = arith.constant 0 : index
    %9 = vector.load %arg6[%c0_10, %c0_11] : memref<1x256xf32, #tpu.memory_space<vmem>>, vector<1x256xf32>
    %10 = vector.broadcast %9 : vector<1x256xf32> to vector<8x256xf32>
    %11 = arith.addf %8, %10 : vector<8x256xf32>
    %cst_12 = arith.constant 0.0883883461 : f32
    %12 = vector.broadcast %cst_12 : f32 to vector<8x256xf32>
    %13 = arith.mulf %11, %12 : vector<8x256xf32>
    %c0_13 = arith.constant 0 : index
    %c0_14 = arith.constant 0 : index
    %14 = vector.load %arg7[%c0_13, %c0_14] : memref<256x256xbf16, #tpu.memory_space<vmem>>, vector<256x256xbf16>
    %cst_15 = arith.constant dense<0.000000e+00> : vector<8x256xf32>
    %15 = tpu.matmul %3, %14, %cst_15 {dimension_numbers = #tpu.dot_dimension_numbers<[1], [0], [0], [1], [0, 0, 1, 1], [], []>} : vector<8x256xbf16>, vector<256x256xbf16>, vector<8x256xf32> -> vector<8x256xf32>
    %c0_16 = arith.constant 0 : index
    %c0_17 = arith.constant 0 : index
    %16 = vector.load %arg8[%c0_16, %c0_17] : memref<1x256xf32, #tpu.memory_space<vmem>>, vector<1x256xf32>
    %17 = vector.broadcast %16 : vector<1x256xf32> to vector<8x256xf32>
    %18 = arith.addf %15, %17 : vector<8x256xf32>
    %c0_18 = arith.constant 0 : index
    %c0_19 = arith.constant 0 : index
    %19 = vector.load %arg9[%c0_18, %c0_19] : memref<256x256xbf16, #tpu.memory_space<vmem>>, vector<256x256xbf16>
    %cst_20 = arith.constant dense<0.000000e+00> : vector<8x256xf32>
    %20 = tpu.matmul %3, %19, %cst_20 {dimension_numbers = #tpu.dot_dimension_numbers<[1], [0], [0], [1], [0, 0, 1, 1], [], []>} : vector<8x256xbf16>, vector<256x256xbf16>, vector<8x256xf32> -> vector<8x256xf32>
    %c0_21 = arith.constant 0 : index
    %c0_22 = arith.constant 0 : index
    %21 = vector.load %arg10[%c0_21, %c0_22] : memref<1x256xf32, #tpu.memory_space<vmem>>, vector<1x256xf32>
    %22 = vector.broadcast %21 : vector<1x256xf32> to vector<8x256xf32>
    %23 = arith.addf %20, %22 : vector<8x256xf32>
    %24 = arith.truncf %13 : vector<8x256xf32> to vector<8x256xbf16>
    %25 = arith.truncf %18 : vector<8x256xf32> to vector<8x256xbf16>
    %26 = arith.truncf %23 : vector<8x256xf32> to vector<8x256xbf16>
    %27 = vector.extract_strided_slice %24 {offsets = [0, 0], sizes = [8, 128], strides = [1, 1]} : vector<8x256xbf16> to vector<8x128xbf16>
    %28 = vector.extract_strided_slice %25 {offsets = [0, 0], sizes = [8, 128], strides = [1, 1]} : vector<8x256xbf16> to vector<8x128xbf16>
    %29 = vector.extract_strided_slice %26 {offsets = [0, 0], sizes = [8, 128], strides = [1, 1]} : vector<8x256xbf16> to vector<8x128xbf16>
    %cst_23 = arith.constant dense<0.000000e+00> : vector<8x8xf32>
    %30 = tpu.matmul %27, %28, %cst_23 {dimension_numbers = #tpu.dot_dimension_numbers<[1], [1], [0], [0], [0, 0, 1, 0], [], []>} : vector<8x128xbf16>, vector<8x128xbf16>, vector<8x8xf32> -> vector<8x8xf32>
    %31 = vector.broadcast %5 : vector<1x8xf32> to vector<8x8xf32>
    %32 = arith.addf %30, %31 : vector<8x8xf32>
    %cst_24 = arith.constant dense<0xFF800000> : vector<8xf32>
    %33 = vector.multi_reduction <maximumf>, %32, %cst_24 [1] : vector<8x8xf32> to vector<8xf32>
    %34 = vector.shape_cast %33 : vector<8xf32> to vector<8x1xf32>
    %35 = vector.broadcast %34 : vector<8x1xf32> to vector<8x8xf32>
    %36 = arith.subf %32, %35 : vector<8x8xf32>
    %37 = math.exp %36 : vector<8x8xf32>
    %cst_25 = arith.constant dense<0.000000e+00> : vector<8xf32>
    %38 = vector.multi_reduction <add>, %37, %cst_25 [1] : vector<8x8xf32> to vector<8xf32>
    %39 = vector.shape_cast %38 : vector<8xf32> to vector<8x1xf32>
    %40 = tpu.reciprocal %39 {approx = true} : vector<8x1xf32> -> vector<8x1xf32>
    %41 = vector.broadcast %40 : vector<8x1xf32> to vector<8x8xf32>
    %42 = arith.mulf %37, %41 : vector<8x8xf32>
    %43 = arith.truncf %42 : vector<8x8xf32> to vector<8x8xbf16>
    %cst_26 = arith.constant dense<0.000000e+00> : vector<8x128xf32>
    %44 = tpu.matmul %43, %29, %cst_26 {dimension_numbers = #tpu.dot_dimension_numbers<[1], [0], [0], [1], [0, 0, 1, 1], [], []>} : vector<8x8xbf16>, vector<8x128xbf16>, vector<8x128xf32> -> vector<8x128xf32>
    %45 = arith.truncf %44 : vector<8x128xf32> to vector<8x128xbf16>
    %c0_27 = arith.constant 0 : index
    %c0_28 = arith.constant 0 : index
    %c0_29 = arith.constant 0 : index
    %46 = vector.load %arg11[%c0_27, %c0_28, %c0_29] : memref<2x128x256xbf16, #tpu.memory_space<vmem>>, vector<1x128x256xbf16>
    %47 = vector.shape_cast %46 : vector<1x128x256xbf16> to vector<128x256xbf16>
    %cst_30 = arith.constant dense<0.000000e+00> : vector<8x256xf32>
    %48 = tpu.matmul %45, %47, %cst_30 {dimension_numbers = #tpu.dot_dimension_numbers<[1], [0], [0], [1], [0, 0, 1, 1], [], []>} : vector<8x128xbf16>, vector<128x256xbf16>, vector<8x256xf32> -> vector<8x256xf32>
    %49 = vector.extract_strided_slice %24 {offsets = [0, 128], sizes = [8, 128], strides = [1, 1]} : vector<8x256xbf16> to vector<8x128xbf16>
    %50 = vector.extract_strided_slice %25 {offsets = [0, 128], sizes = [8, 128], strides = [1, 1]} : vector<8x256xbf16> to vector<8x128xbf16>
    %51 = vector.extract_strided_slice %26 {offsets = [0, 128], sizes = [8, 128], strides = [1, 1]} : vector<8x256xbf16> to vector<8x128xbf16>
    %cst_31 = arith.constant dense<0.000000e+00> : vector<8x8xf32>
    %52 = tpu.matmul %49, %50, %cst_31 {dimension_numbers = #tpu.dot_dimension_numbers<[1], [1], [0], [0], [0, 0, 1, 0], [], []>} : vector<8x128xbf16>, vector<8x128xbf16>, vector<8x8xf32> -> vector<8x8xf32>
    %53 = vector.broadcast %5 : vector<1x8xf32> to vector<8x8xf32>
    %54 = arith.addf %52, %53 : vector<8x8xf32>
    %cst_32 = arith.constant dense<0xFF800000> : vector<8xf32>
    %55 = vector.multi_reduction <maximumf>, %54, %cst_32 [1] : vector<8x8xf32> to vector<8xf32>
    %56 = vector.shape_cast %55 : vector<8xf32> to vector<8x1xf32>
    %57 = vector.broadcast %56 : vector<8x1xf32> to vector<8x8xf32>
    %58 = arith.subf %54, %57 : vector<8x8xf32>
    %59 = math.exp %58 : vector<8x8xf32>
    %cst_33 = arith.constant dense<0.000000e+00> : vector<8xf32>
    %60 = vector.multi_reduction <add>, %59, %cst_33 [1] : vector<8x8xf32> to vector<8xf32>
    %61 = vector.shape_cast %60 : vector<8xf32> to vector<8x1xf32>
    %62 = tpu.reciprocal %61 {approx = true} : vector<8x1xf32> -> vector<8x1xf32>
    %63 = vector.broadcast %62 : vector<8x1xf32> to vector<8x8xf32>
    %64 = arith.mulf %59, %63 : vector<8x8xf32>
    %65 = arith.truncf %64 : vector<8x8xf32> to vector<8x8xbf16>
    %cst_34 = arith.constant dense<0.000000e+00> : vector<8x128xf32>
    %66 = tpu.matmul %65, %51, %cst_34 {dimension_numbers = #tpu.dot_dimension_numbers<[1], [0], [0], [1], [0, 0, 1, 1], [], []>} : vector<8x8xbf16>, vector<8x128xbf16>, vector<8x128xf32> -> vector<8x128xf32>
    %67 = arith.truncf %66 : vector<8x128xf32> to vector<8x128xbf16>
    %c1 = arith.constant 1 : index
    %c0_35 = arith.constant 0 : index
    %c0_36 = arith.constant 0 : index
    %68 = vector.load %arg11[%c1, %c0_35, %c0_36] : memref<2x128x256xbf16, #tpu.memory_space<vmem>>, vector<1x128x256xbf16>
    %69 = vector.shape_cast %68 : vector<1x128x256xbf16> to vector<128x256xbf16>
    %cst_37 = arith.constant dense<0.000000e+00> : vector<8x256xf32>
    %70 = tpu.matmul %67, %69, %cst_37 {dimension_numbers = #tpu.dot_dimension_numbers<[1], [0], [0], [1], [0, 0, 1, 1], [], []>} : vector<8x128xbf16>, vector<128x256xbf16>, vector<8x256xf32> -> vector<8x256xf32>
    %71 = arith.addf %48, %70 : vector<8x256xf32>
    %c0_38 = arith.constant 0 : index
    %c0_39 = arith.constant 0 : index
    %72 = vector.load %arg12[%c0_38, %c0_39] : memref<1x256xf32, #tpu.memory_space<vmem>>, vector<1x256xf32>
    %73 = vector.broadcast %72 : vector<1x256xf32> to vector<8x256xf32>
    %74 = arith.addf %71, %73 : vector<8x256xf32>
    %75 = arith.addf %6, %74 : vector<8x256xf32>
    %cst_40 = arith.constant dense<0.000000e+00> : vector<8xf32>
    %76 = vector.multi_reduction <add>, %75, %cst_40 [1] : vector<8x256xf32> to vector<8xf32>
    %77 = vector.shape_cast %76 : vector<8xf32> to vector<8x1xf32>
    %cst_41 = arith.constant 2.560000e+02 : f32
    %78 = vector.broadcast %cst_41 : f32 to vector<8x1xf32>
    %79 = arith.divf %77, %78 : vector<8x1xf32>
    %80 = vector.broadcast %79 : vector<8x1xf32> to vector<8x256xf32>
    %81 = arith.subf %75, %80 : vector<8x256xf32>
    %82 = arith.mulf %81, %81 : vector<8x256xf32>
    %cst_42 = arith.constant dense<0.000000e+00> : vector<8xf32>
    %83 = vector.multi_reduction <add>, %82, %cst_42 [1] : vector<8x256xf32> to vector<8xf32>
    %84 = vector.shape_cast %83 : vector<8xf32> to vector<8x1xf32>
    %cst_43 = arith.constant 2.560000e+02 : f32
    %85 = vector.broadcast %cst_43 : f32 to vector<8x1xf32>
    %86 = arith.divf %84, %85 : vector<8x1xf32>
    %87 = vector.broadcast %79 : vector<8x1xf32> to vector<8x256xf32>
    %88 = arith.subf %75, %87 : vector<8x256xf32>
    %cst_44 = arith.constant 9.99999996E-13 : f32
    %89 = vector.broadcast %cst_44 : f32 to vector<8x1xf32>
    %90 = arith.addf %86, %89 : vector<8x1xf32>
    %91 = math.rsqrt %90 : vector<8x1xf32>
    %92 = vector.broadcast %91 : vector<8x1xf32> to vector<8x256xf32>
    %93 = arith.mulf %88, %92 : vector<8x256xf32>
    %c0_45 = arith.constant 0 : index
    %c0_46 = arith.constant 0 : index
    %94 = vector.load %arg13[%c0_45, %c0_46] : memref<1x256xf32, #tpu.memory_space<vmem>>, vector<1x256xf32>
    %95 = vector.broadcast %94 : vector<1x256xf32> to vector<8x256xf32>
    %96 = arith.mulf %95, %93 : vector<8x256xf32>
    %c0_47 = arith.constant 0 : index
    %c0_48 = arith.constant 0 : index
    %97 = vector.load %arg14[%c0_47, %c0_48] : memref<1x256xf32, #tpu.memory_space<vmem>>, vector<1x256xf32>
    %98 = vector.broadcast %97 : vector<1x256xf32> to vector<8x256xf32>
    %99 = arith.addf %96, %98 : vector<8x256xf32>
    %100 = arith.truncf %99 : vector<8x256xf32> to vector<8x256xbf16>
    %c0_49 = arith.constant 0 : index
    %c0_50 = arith.constant 0 : index
    %101 = vector.load %arg15[%c0_49, %c0_50] : memref<256x256xbf16, #tpu.memory_space<vmem>>, vector<256x256xbf16>
    %cst_51 = arith.constant dense<0.000000e+00> : vector<8x256xf32>
    %102 = tpu.matmul %100, %101, %cst_51 {dimension_numbers = #tpu.dot_dimension_numbers<[1], [0], [0], [1], [0, 0, 1, 1], [], []>} : vector<8x256xbf16>, vector<256x256xbf16>, vector<8x256xf32> -> vector<8x256xf32>
    %c0_52 = arith.constant 0 : index
    %c0_53 = arith.constant 0 : index
    %103 = vector.load %arg16[%c0_52, %c0_53] : memref<1x256xf32, #tpu.memory_space<vmem>>, vector<1x256xf32>
    %104 = vector.broadcast %103 : vector<1x256xf32> to vector<8x256xf32>
    %105 = arith.addf %102, %104 : vector<8x256xf32>
    %cst_54 = arith.constant 0.000000e+00 : f32
    %106 = vector.broadcast %cst_54 : f32 to vector<8x256xf32>
    %107 = arith.maximumf %105, %106 : vector<8x256xf32>
    %108 = arith.truncf %107 : vector<8x256xf32> to vector<8x256xbf16>
    %c0_55 = arith.constant 0 : index
    %c0_56 = arith.constant 0 : index
    %109 = vector.load %arg17[%c0_55, %c0_56] : memref<256x256xbf16, #tpu.memory_space<vmem>>, vector<256x256xbf16>
    %cst_57 = arith.constant dense<0.000000e+00> : vector<8x256xf32>
    %110 = tpu.matmul %108, %109, %cst_57 {dimension_numbers = #tpu.dot_dimension_numbers<[1], [0], [0], [1], [0, 0, 1, 1], [], []>} : vector<8x256xbf16>, vector<256x256xbf16>, vector<8x256xf32> -> vector<8x256xf32>
    %c0_58 = arith.constant 0 : index
    %c0_59 = arith.constant 0 : index
    %111 = vector.load %arg18[%c0_58, %c0_59] : memref<1x256xf32, #tpu.memory_space<vmem>>, vector<1x256xf32>
    %112 = vector.broadcast %111 : vector<1x256xf32> to vector<8x256xf32>
    %113 = arith.addf %110, %112 : vector<8x256xf32>
    %114 = arith.addf %99, %113 : vector<8x256xf32>
    %cst_60 = arith.constant dense<0.000000e+00> : vector<8xf32>
    %115 = vector.multi_reduction <add>, %114, %cst_60 [1] : vector<8x256xf32> to vector<8xf32>
    %116 = vector.shape_cast %115 : vector<8xf32> to vector<8x1xf32>
    %cst_61 = arith.constant 2.560000e+02 : f32
    %117 = vector.broadcast %cst_61 : f32 to vector<8x1xf32>
    %118 = arith.divf %116, %117 : vector<8x1xf32>
    %119 = vector.broadcast %118 : vector<8x1xf32> to vector<8x256xf32>
    %120 = arith.subf %114, %119 : vector<8x256xf32>
    %121 = arith.mulf %120, %120 : vector<8x256xf32>
    %cst_62 = arith.constant dense<0.000000e+00> : vector<8xf32>
    %122 = vector.multi_reduction <add>, %121, %cst_62 [1] : vector<8x256xf32> to vector<8xf32>
    %123 = vector.shape_cast %122 : vector<8xf32> to vector<8x1xf32>
    %cst_63 = arith.constant 2.560000e+02 : f32
    %124 = vector.broadcast %cst_63 : f32 to vector<8x1xf32>
    %125 = arith.divf %123, %124 : vector<8x1xf32>
    %126 = vector.broadcast %118 : vector<8x1xf32> to vector<8x256xf32>
    %127 = arith.subf %114, %126 : vector<8x256xf32>
    %cst_64 = arith.constant 9.99999996E-13 : f32
    %128 = vector.broadcast %cst_64 : f32 to vector<8x1xf32>
    %129 = arith.addf %125, %128 : vector<8x1xf32>
    %130 = math.rsqrt %129 : vector<8x1xf32>
    %131 = vector.broadcast %130 : vector<8x1xf32> to vector<8x256xf32>
    %132 = arith.mulf %127, %131 : vector<8x256xf32>
    %c0_65 = arith.constant 0 : index
    %c0_66 = arith.constant 0 : index
    %133 = vector.load %arg19[%c0_65, %c0_66] : memref<1x256xf32, #tpu.memory_space<vmem>>, vector<1x256xf32>
    %134 = vector.broadcast %133 : vector<1x256xf32> to vector<8x256xf32>
    %135 = arith.mulf %134, %132 : vector<8x256xf32>
    %c0_67 = arith.constant 0 : index
    %c0_68 = arith.constant 0 : index
    %136 = vector.load %arg20[%c0_67, %c0_68] : memref<1x256xf32, #tpu.memory_space<vmem>>, vector<1x256xf32>
    %137 = vector.broadcast %136 : vector<1x256xf32> to vector<8x256xf32>
    %138 = arith.addf %135, %137 : vector<8x256xf32>
    %139 = arith.truncf %138 : vector<8x256xf32> to vector<8x256xbf16>
    %c0_69 = arith.constant 0 : index
    %c0_70 = arith.constant 0 : index
    %c0_71 = arith.constant 0 : index
    %140 = vector.load %arg21[%c0_69, %c0_70, %c0_71] : memref<1x8x256xbf16, #tpu.memory_space<vmem>>, vector<1x8x256xbf16>
    %141 = vector.shape_cast %140 : vector<1x8x256xbf16> to vector<8x256xbf16>
    %142 = vector.shape_cast %139 : vector<8x256xbf16> to vector<1x8x256xbf16>
    tpu.vector_store %arg21[%c0_69, %c0_70, %c0_71], %142 {strides = array<i32>} : memref<1x8x256xbf16, #tpu.memory_space<vmem>>, vector<1x8x256xbf16>,
    return
  }
  func.func @transform_0(%arg0: i32, %arg1: i32) -> (i32, i32, i32) {
    %c0_i32 = arith.constant 0 : i32
    %c0_i32_0 = arith.constant 0 : i32
    return %arg0, %arg1, %c0_i32 : i32, i32, i32
  }
  func.func @transform_1(%arg0: i32, %arg1: i32) -> (i32, i32, i32) {
    %c0_i32 = arith.constant 0 : i32
    %c0_i32_0 = arith.constant 0 : i32
    %c0_i32_1 = arith.constant 0 : i32
    return %arg0, %c0_i32, %c0_i32_0 : i32, i32, i32
  }
  func.func @transform_2(%arg0: i32, %arg1: i32) -> (i32, i32, i32) {
    %c0_i32 = arith.constant 0 : i32
    %c0_i32_0 = arith.constant 0 : i32
    %c0_i32_1 = arith.constant 0 : i32
    return %arg0, %c0_i32, %c0_i32_0 : i32, i32, i32
  }
  func.func @transform_3(%arg0: i32, %arg1: i32) -> (i32, i32) {
    %c0_i32 = arith.constant 0 : i32
    %c0_i32_0 = arith.constant 0 : i32
    %c0_i32_1 = arith.constant 0 : i32
    return %c0_i32, %c0_i32_0 : i32, i32
  }
  func.func @transform_4(%arg0: i32, %arg1: i32) -> (i32, i32) {
    %c0_i32 = arith.constant 0 : i32
    %c0_i32_0 = arith.constant 0 : i32
    %c0_i32_1 = arith.constant 0 : i32
    return %c0_i32, %c0_i32_0 : i32, i32
  }
  func.func @transform_5(%arg0: i32, %arg1: i32) -> (i32, i32) {
    %c0_i32 = arith.constant 0 : i32
    %c0_i32_0 = arith.constant 0 : i32
    %c0_i32_1 = arith.constant 0 : i32
    return %c0_i32, %c0_i32_0 : i32, i32
  }
  func.func @transform_6(%arg0: i32, %arg1: i32) -> (i32, i32) {
    %c0_i32 = arith.constant 0 : i32
    %c0_i32_0 = arith.constant 0 : i32
    %c0_i32_1 = arith.constant 0 : i32
    return %c0_i32, %c0_i32_0 : i32, i32
  }
  func.func @transform_7(%arg0: i32, %arg1: i32) -> (i32, i32) {
    %c0_i32 = arith.constant 0 : i32
    %c0_i32_0 = arith.constant 0 : i32
    %c0_i32_1 = arith.constant 0 : i32
    return %c0_i32, %c0_i32_0 : i32, i32
  }
  func.func @transform_8(%arg0: i32, %arg1: i32) -> (i32, i32) {
    %c0_i32 = arith.constant 0 : i32
    %c0_i32_0 = arith.constant 0 : i32
    %c0_i32_1 = arith.constant 0 : i32
    return %c0_i32, %c0_i32_0 : i32, i32
  }
  func.func @transform_9(%arg0: i32, %arg1: i32) -> (i32, i32, i32) {
    %c0_i32 = arith.constant 0 : i32
    %c0_i32_0 = arith.constant 0 : i32
    %c0_i32_1 = arith.constant 0 : i32
    %c0_i32_2 = arith.constant 0 : i32
    return %c0_i32, %c0_i32_0, %c0_i32_1 : i32, i32, i32
  }
  func.func @transform_10(%arg0: i32, %arg1: i32) -> (i32, i32) {
    %c0_i32 = arith.constant 0 : i32
    %c0_i32_0 = arith.constant 0 : i32
    %c0_i32_1 = arith.constant 0 : i32
    return %c0_i32, %c0_i32_0 : i32, i32
  }
  func.func @transform_11(%arg0: i32, %arg1: i32) -> (i32, i32) {
    %c0_i32 = arith.constant 0 : i32
    %c0_i32_0 = arith.constant 0 : i32
    %c0_i32_1 = arith.constant 0 : i32
    return %c0_i32, %c0_i32_0 : i32, i32
  }
  func.func @transform_12(%arg0: i32, %arg1: i32) -> (i32, i32) {
    %c0_i32 = arith.constant 0 : i32
    %c0_i32_0 = arith.constant 0 : i32
    %c0_i32_1 = arith.constant 0 : i32
    return %c0_i32, %c0_i32_0 : i32, i32
  }
  func.func @transform_13(%arg0: i32, %arg1: i32) -> (i32, i32) {
    %c0_i32 = arith.constant 0 : i32
    %c0_i32_0 = arith.constant 0 : i32
    %c0_i32_1 = arith.constant 0 : i32
    return %c0_i32, %c0_i32_0 : i32, i32
  }
  func.func @transform_14(%arg0: i32, %arg1: i32) -> (i32, i32) {
    %c0_i32 = arith.constant 0 : i32
    %c0_i32_0 = arith.constant 0 : i32
    %c0_i32_1 = arith.constant 0 : i32
    return %c0_i32, %c0_i32_0 : i32, i32
  }
  func.func @transform_15(%arg0: i32, %arg1: i32) -> (i32, i32) {
    %c0_i32 = arith.constant 0 : i32
    %c0_i32_0 = arith.constant 0 : i32
    %c0_i32_1 = arith.constant 0 : i32
    return %c0_i32, %c0_i32_0 : i32, i32
  }
  func.func @transform_16(%arg0: i32, %arg1: i32) -> (i32, i32) {
    %c0_i32 = arith.constant 0 : i32
    %c0_i32_0 = arith.constant 0 : i32
    %c0_i32_1 = arith.constant 0 : i32
    return %c0_i32, %c0_i32_0 : i32, i32
  }
  func.func @transform_17(%arg0: i32, %arg1: i32) -> (i32, i32) {
    %c0_i32 = arith.constant 0 : i32
    %c0_i32_0 = arith.constant 0 : i32
    %c0_i32_1 = arith.constant 0 : i32
    return %c0_i32, %c0_i32_0 : i32, i32
  }
  func.func @transform_18(%arg0: i32, %arg1: i32) -> (i32, i32) {
    %c0_i32 = arith.constant 0 : i32
    %c0_i32_0 = arith.constant 0 : i32
    %c0_i32_1 = arith.constant 0 : i32
    return %c0_i32, %c0_i32_0 : i32, i32
  }
  func.func @transform_19(%arg0: i32, %arg1: i32) -> (i32, i32, i32) {
    %c0_i32 = arith.constant 0 : i32
    %c0_i32_0 = arith.constant 0 : i32
    return %arg0, %arg1, %c0_i32 : i32, i32, i32
  }
}

module attributes {stable_mosaic.version = 11 : i64} {
  func.func @encoder_layer_kernel(%arg0: i32, %arg1: i32, %arg2: memref<1x8x256xbf16, #tpu.memory_space<vmem>>, %arg3: memref<1x8x256xbf16, #tpu.memory_space<vmem>>, %arg4: memref<1x1x8xf32, #tpu.memory_space<vmem>>, %arg5: memref<256x256xbf16, #tpu.memory_space<vmem>>, %arg6: memref<1x256xf32, #tpu.memory_space<vmem>>, %arg7: memref<256x256xbf16, #tpu.memory_space<vmem>>, %arg8: memref<1x256xf32, #tpu.memory_space<vmem>>, %arg9: memref<256x256xbf16, #tpu.memory_space<vmem>>, %arg10: memref<1x256xf32, #tpu.memory_space<vmem>>, %arg11: memref<2x128x256xbf16, #tpu.memory_space<vmem>>, %arg12: memref<1x256xf32, #tpu.memory_space<vmem>>, %arg13: memref<1x256xf32, #tpu.memory_space<vmem>>, %arg14: memref<1x256xf32, #tpu.memory_space<vmem>>, %arg15: memref<256x256xbf16, #tpu.memory_space<vmem>>, %arg16: memref<1x256xf32, #tpu.memory_space<vmem>>, %arg17: memref<256x256xbf16, #tpu.memory_space<vmem>>, %arg18: memref<1x256xf32, #tpu.memory_space<vmem>>, %arg19: memref<1x256xf32, #tpu.memory_space<vmem>>, %arg20: memref<1x256xf32, #tpu.memory_space<vmem>>, %arg21: memref<1x8x256xbf16, #tpu.memory_space<vmem>>) attributes {dimension_semantics = [#tpu.dimension_semantics<parallel>, #tpu.dimension_semantics<parallel>], iteration_bounds = array<i64: 2, 1>, scalar_prefetch = 0 : i64, scratch_operands = 0 : i64, tpu.core_type = #tpu.core_type<tc>, window_params = [{transform_indices = @transform_0, window_bounds = array<i64: 1, 8, 256>}, {transform_indices = @transform_1, window_bounds = array<i64: 1, 8, 256>}, {transform_indices = @transform_2, window_bounds = array<i64: 1, 1, 8>}, {pipeline_mode = #tpu.pipeline_mode<synchronous>, transform_indices = @transform_3, window_bounds = array<i64: 256, 256>}, {pipeline_mode = #tpu.pipeline_mode<synchronous>, transform_indices = @transform_4, window_bounds = array<i64: 1, 256>}, {pipeline_mode = #tpu.pipeline_mode<synchronous>, transform_indices = @transform_5, window_bounds = array<i64: 256, 256>}, {pipeline_mode = #tpu.pipeline_mode<synchronous>, transform_indices = @transform_6, window_bounds = array<i64: 1, 256>}, {pipeline_mode = #tpu.pipeline_mode<synchronous>, transform_indices = @transform_7, window_bounds = array<i64: 256, 256>}, {pipeline_mode = #tpu.pipeline_mode<synchronous>, transform_indices = @transform_8, window_bounds = array<i64: 1, 256>}, {pipeline_mode = #tpu.pipeline_mode<synchronous>, transform_indices = @transform_9, window_bounds = array<i64: 2, 128, 256>}, {pipeline_mode = #tpu.pipeline_mode<synchronous>, transform_indices = @transform_10, window_bounds = array<i64: 1, 256>}, {pipeline_mode = #tpu.pipeline_mode<synchronous>, transform_indices = @transform_11, window_bounds = array<i64: 1, 256>}, {pipeline_mode = #tpu.pipeline_mode<synchronous>, transform_indices = @transform_12, window_bounds = array<i64: 1, 256>}, {pipeline_mode = #tpu.pipeline_mode<synchronous>, transform_indices = @transform_13, window_bounds = array<i64: 256, 256>}, {pipeline_mode = #tpu.pipeline_mode<synchronous>, transform_indices = @transform_14, window_bounds = array<i64: 1, 256>}, {pipeline_mode = #tpu.pipeline_mode<synchronous>, transform_indices = @transform_15, window_bounds = array<i64: 256, 256>}, {pipeline_mode = #tpu.pipeline_mode<synchronous>, transform_indices = @transform_16, window_bounds = array<i64: 1, 256>}, {pipeline_mode = #tpu.pipeline_mode<synchronous>, transform_indices = @transform_17, window_bounds = array<i64: 1, 256>}, {pipeline_mode = #tpu.pipeline_mode<synchronous>, transform_indices = @transform_18, window_bounds = array<i64: 1, 256>}, {transform_indices = @transform_19, window_bounds = array<i64: 1, 8, 256>}]} {
    %c0 = arith.constant 0 : index
    %c0_0 = arith.constant 0 : index
    %c0_1 = arith.constant 0 : index
    %0 = vector.load %arg2[%c0, %c0_0, %c0_1] : memref<1x8x256xbf16, #tpu.memory_space<vmem>>, vector<1x8x256xbf16>
    %1 = vector.shape_cast %0 : vector<1x8x256xbf16> to vector<8x256xbf16>
    %c0_2 = arith.constant 0 : index
    %c0_3 = arith.constant 0 : index
    %c0_4 = arith.constant 0 : index
    %2 = vector.load %arg3[%c0_2, %c0_3, %c0_4] : memref<1x8x256xbf16, #tpu.memory_space<vmem>>, vector<1x8x256xbf16>
    %3 = vector.shape_cast %2 : vector<1x8x256xbf16> to vector<8x256xbf16>
    %c0_5 = arith.constant 0 : index
    %c0_6 = arith.constant 0 : index
    %c0_7 = arith.constant 0 : index
    %4 = vector.load %arg4[%c0_5, %c0_6, %c0_7] : memref<1x1x8xf32, #tpu.memory_space<vmem>>, vector<1x1x8xf32>
    %5 = vector.shape_cast %4 : vector<1x1x8xf32> to vector<1x8xf32>
    %6 = arith.extf %1 : vector<8x256xbf16> to vector<8x256xf32>
    %c0_8 = arith.constant 0 : index
    %c0_9 = arith.constant 0 : index
    %7 = vector.load %arg5[%c0_8, %c0_9] : memref<256x256xbf16, #tpu.memory_space<vmem>>, vector<256x256xbf16>
    %cst = arith.constant dense<0.000000e+00> : vector<8x256xf32>
    %8 = tpu.matmul %1, %7, %cst {dimension_numbers = #tpu.dot_dimension_numbers<[1], [0], [0], [1], [0, 0, 1, 1], [], []>} : vector<8x256xbf16>, vector<256x256xbf16>, vector<8x256xf32> -> vector<8x256xf32>
    %c0_10 = arith.constant 0 : index
    %c0_11 = arith.constant 0 : index
    %9 = vector.load %arg6[%c0_10, %c0_11] : memref<1x256xf32, #tpu.memory_space<vmem>>, vector<1x256xf32>
    %10 = vector.broadcast %9 : vector<1x256xf32> to vector<8x256xf32>
    %11 = arith.addf %8, %10 : vector<8x256xf32>
    %cst_12 = arith.constant 0.0883883461 : f32
    %12 = vector.broadcast %cst_12 : f32 to vector<8x256xf32>
    %13 = arith.mulf %11, %12 : vector<8x256xf32>
    %c0_13 = arith.constant 0 : index
    %c0_14 = arith.constant 0 : index
    %14 = vector.load %arg7[%c0_13, %c0_14] : memref<256x256xbf16, #tpu.memory_space<vmem>>, vector<256x256xbf16>
    %cst_15 = arith.constant dense<0.000000e+00> : vector<8x256xf32>
    %15 = tpu.matmul %3, %14, %cst_15 {dimension_numbers = #tpu.dot_dimension_numbers<[1], [0], [0], [1], [0, 0, 1, 1], [], []>} : vector<8x256xbf16>, vector<256x256xbf16>, vector<8x256xf32> -> vector<8x256xf32>
    %c0_16 = arith.constant 0 : index
    %c0_17 = arith.constant 0 : index
    %16 = vector.load %arg8[%c0_16, %c0_17] : memref<1x256xf32, #tpu.memory_space<vmem>>, vector<1x256xf32>
    %17 = vector.broadcast %16 : vector<1x256xf32> to vector<8x256xf32>
    %18 = arith.addf %15, %17 : vector<8x256xf32>
    %c0_18 = arith.constant 0 : index
    %c0_19 = arith.constant 0 : index
    %19 = vector.load %arg9[%c0_18, %c0_19] : memref<256x256xbf16, #tpu.memory_space<vmem>>, vector<256x256xbf16>
    %cst_20 = arith.constant dense<0.000000e+00> : vector<8x256xf32>
    %20 = tpu.matmul %3, %19, %cst_20 {dimension_numbers = #tpu.dot_dimension_numbers<[1], [0], [0], [1], [0, 0, 1, 1], [], []>} : vector<8x256xbf16>, vector<256x256xbf16>, vector<8x256xf32> -> vector<8x256xf32>
    %c0_21 = arith.constant 0 : index
    %c0_22 = arith.constant 0 : index
    %21 = vector.load %arg10[%c0_21, %c0_22] : memref<1x256xf32, #tpu.memory_space<vmem>>, vector<1x256xf32>
    %22 = vector.broadcast %21 : vector<1x256xf32> to vector<8x256xf32>
    %23 = arith.addf %20, %22 : vector<8x256xf32>
    %24 = arith.truncf %13 : vector<8x256xf32> to vector<8x256xbf16>
    %25 = arith.truncf %18 : vector<8x256xf32> to vector<8x256xbf16>
    %26 = arith.truncf %23 : vector<8x256xf32> to vector<8x256xbf16>
    %27 = vector.extract_strided_slice %24 {offsets = [0, 0], sizes = [8, 128], strides = [1, 1]} : vector<8x256xbf16> to vector<8x128xbf16>
    %28 = vector.extract_strided_slice %25 {offsets = [0, 0], sizes = [8, 128], strides = [1, 1]} : vector<8x256xbf16> to vector<8x128xbf16>
    %29 = vector.extract_strided_slice %26 {offsets = [0, 0], sizes = [8, 128], strides = [1, 1]} : vector<8x256xbf16> to vector<8x128xbf16>
    %cst_23 = arith.constant dense<0.000000e+00> : vector<8x8xf32>
    %30 = tpu.matmul %27, %28, %cst_23 {dimension_numbers = #tpu.dot_dimension_numbers<[1], [1], [0], [0], [0, 0, 1, 0], [], []>} : vector<8x128xbf16>, vector<8x128xbf16>, vector<8x8xf32> -> vector<8x8xf32>
    %31 = vector.broadcast %5 : vector<1x8xf32> to vector<8x8xf32>
    %32 = arith.addf %30, %31 : vector<8x8xf32>
    %cst_24 = arith.constant dense<0xFF800000> : vector<8xf32>
    %33 = vector.multi_reduction <maximumf>, %32, %cst_24 [1] : vector<8x8xf32> to vector<8xf32>
    %34 = vector.shape_cast %33 : vector<8xf32> to vector<8x1xf32>
    %35 = vector.broadcast %34 : vector<8x1xf32> to vector<8x8xf32>
    %36 = arith.subf %32, %35 : vector<8x8xf32>
    %37 = math.exp %36 : vector<8x8xf32>
    %cst_25 = arith.constant dense<0.000000e+00> : vector<8xf32>
    %38 = vector.multi_reduction <add>, %37, %cst_25 [1] : vector<8x8xf32> to vector<8xf32>
    %39 = vector.shape_cast %38 : vector<8xf32> to vector<8x1xf32>
    %40 = tpu.reciprocal %39 {approx = true} : vector<8x1xf32> -> vector<8x1xf32>
    %41 = vector.broadcast %40 : vector<8x1xf32> to vector<8x8xf32>
    %42 = arith.mulf %37, %41 : vector<8x8xf32>
    %43 = arith.truncf %42 : vector<8x8xf32> to vector<8x8xbf16>
    %cst_26 = arith.constant dense<0.000000e+00> : vector<8x128xf32>
    %44 = tpu.matmul %43, %29, %cst_26 {dimension_numbers = #tpu.dot_dimension_numbers<[1], [0], [0], [1], [0, 0, 1, 1], [], []>} : vector<8x8xbf16>, vector<8x128xbf16>, vector<8x128xf32> -> vector<8x128xf32>
    %45 = arith.truncf %44 : vector<8x128xf32> to vector<8x128xbf16>
    %c0_27 = arith.constant 0 : index
    %c0_28 = arith.constant 0 : index
    %c0_29 = arith.constant 0 : index
    %46 = vector.load %arg11[%c0_27, %c0_28, %c0_29] : memref<2x128x256xbf16, #tpu.memory_space<vmem>>, vector<1x128x256xbf16>
    %47 = vector.shape_cast %46 : vector<1x128x256xbf16> to vector<128x256xbf16>
    %cst_30 = arith.constant dense<0.000000e+00> : vector<8x256xf32>
    %48 = tpu.matmul %45, %47, %cst_30 {dimension_numbers = #tpu.dot_dimension_numbers<[1], [0], [0], [1], [0, 0, 1, 1], [], []>} : vector<8x128xbf16>, vector<128x256xbf16>, vector<8x256xf32> -> vector<8x256xf32>
    %49 = vector.extract_strided_slice %24 {offsets = [0, 128], sizes = [8, 128], strides = [1, 1]} : vector<8x256xbf16> to vector<8x128xbf16>
    %50 = vector.extract_strided_slice %25 {offsets = [0, 128], sizes = [8, 128], strides = [1, 1]} : vector<8x256xbf16> to vector<8x128xbf16>
    %51 = vector.extract_strided_slice %26 {offsets = [0, 128], sizes = [8, 128], strides = [1, 1]} : vector<8x256xbf16> to vector<8x128xbf16>
    %cst_31 = arith.constant dense<0.000000e+00> : vector<8x8xf32>
    %52 = tpu.matmul %49, %50, %cst_31 {dimension_numbers = #tpu.dot_dimension_numbers<[1], [1], [0], [0], [0, 0, 1, 0], [], []>} : vector<8x128xbf16>, vector<8x128xbf16>, vector<8x8xf32> -> vector<8x8xf32>
    %53 = vector.broadcast %5 : vector<1x8xf32> to vector<8x8xf32>
    %54 = arith.addf %52, %53 : vector<8x8xf32>
    %cst_32 = arith.constant dense<0xFF800000> : vector<8xf32>
    %55 = vector.multi_reduction <maximumf>, %54, %cst_32 [1] : vector<8x8xf32> to vector<8xf32>
    %56 = vector.shape_cast %55 : vector<8xf32> to vector<8x1xf32>
    %57 = vector.broadcast %56 : vector<8x1xf32> to vector<8x8xf32>
    %58 = arith.subf %54, %57 : vector<8x8xf32>
    %59 = math.exp %58 : vector<8x8xf32>
    %cst_33 = arith.constant dense<0.000000e+00> : vector<8xf32>
    %60 = vector.multi_reduction <add>, %59, %cst_33 [1] : vector<8x8xf32> to vector<8xf32>
    %61 = vector.shape_cast %60 : vector<8xf32> to vector<8x1xf32>
    %62 = tpu.reciprocal %61 {approx = true} : vector<8x1xf32> -> vector<8x1xf32>
    %63 = vector.broadcast %62 : vector<8x1xf32> to vector<8x8xf32>
    %64 = arith.mulf %59, %63 : vector<8x8xf32>
    %65 = arith.truncf %64 : vector<8x8xf32> to vector<8x8xbf16>
    %cst_34 = arith.constant dense<0.000000e+00> : vector<8x128xf32>
    %66 = tpu.matmul %65, %51, %cst_34 {dimension_numbers = #tpu.dot_dimension_numbers<[1], [0], [0], [1], [0, 0, 1, 1], [], []>} : vector<8x8xbf16>, vector<8x128xbf16>, vector<8x128xf32> -> vector<8x128xf32>
    %67 = arith.truncf %66 : vector<8x128xf32> to vector<8x128xbf16>
    %c1 = arith.constant 1 : index
    %c0_35 = arith.constant 0 : index
    %c0_36 = arith.constant 0 : index
    %68 = vector.load %arg11[%c1, %c0_35, %c0_36] : memref<2x128x256xbf16, #tpu.memory_space<vmem>>, vector<1x128x256xbf16>
    %69 = vector.shape_cast %68 : vector<1x128x256xbf16> to vector<128x256xbf16>
    %cst_37 = arith.constant dense<0.000000e+00> : vector<8x256xf32>
    %70 = tpu.matmul %67, %69, %cst_37 {dimension_numbers = #tpu.dot_dimension_numbers<[1], [0], [0], [1], [0, 0, 1, 1], [], []>} : vector<8x128xbf16>, vector<128x256xbf16>, vector<8x256xf32> -> vector<8x256xf32>
    %71 = arith.addf %48, %70 : vector<8x256xf32>
    %c0_38 = arith.constant 0 : index
    %c0_39 = arith.constant 0 : index
    %72 = vector.load %arg12[%c0_38, %c0_39] : memref<1x256xf32, #tpu.memory_space<vmem>>, vector<1x256xf32>
    %73 = vector.broadcast %72 : vector<1x256xf32> to vector<8x256xf32>
    %74 = arith.addf %71, %73 : vector<8x256xf32>
    %75 = arith.addf %6, %74 : vector<8x256xf32>
    %cst_40 = arith.constant dense<0.000000e+00> : vector<8xf32>
    %76 = vector.multi_reduction <add>, %75, %cst_40 [1] : vector<8x256xf32> to vector<8xf32>
    %77 = vector.shape_cast %76 : vector<8xf32> to vector<8x1xf32>
    %cst_41 = arith.constant 2.560000e+02 : f32
    %78 = vector.broadcast %cst_41 : f32 to vector<8x1xf32>
    %79 = arith.divf %77, %78 : vector<8x1xf32>
    %80 = vector.broadcast %79 : vector<8x1xf32> to vector<8x256xf32>
    %81 = arith.subf %75, %80 : vector<8x256xf32>
    %82 = arith.mulf %81, %81 : vector<8x256xf32>
    %cst_42 = arith.constant dense<0.000000e+00> : vector<8xf32>
    %83 = vector.multi_reduction <add>, %82, %cst_42 [1] : vector<8x256xf32> to vector<8xf32>
    %84 = vector.shape_cast %83 : vector<8xf32> to vector<8x1xf32>
    %cst_43 = arith.constant 2.560000e+02 : f32
    %85 = vector.broadcast %cst_43 : f32 to vector<8x1xf32>
    %86 = arith.divf %84, %85 : vector<8x1xf32>
    %87 = vector.broadcast %79 : vector<8x1xf32> to vector<8x256xf32>
    %88 = arith.subf %75, %87 : vector<8x256xf32>
    %cst_44 = arith.constant 9.99999996E-13 : f32
    %89 = vector.broadcast %cst_44 : f32 to vector<8x1xf32>
    %90 = arith.addf %86, %89 : vector<8x1xf32>
    %91 = math.rsqrt %90 : vector<8x1xf32>
    %92 = vector.broadcast %91 : vector<8x1xf32> to vector<8x256xf32>
    %93 = arith.mulf %88, %92 : vector<8x256xf32>
    %c0_45 = arith.constant 0 : index
    %c0_46 = arith.constant 0 : index
    %94 = vector.load %arg13[%c0_45, %c0_46] : memref<1x256xf32, #tpu.memory_space<vmem>>, vector<1x256xf32>
    %95 = vector.broadcast %94 : vector<1x256xf32> to vector<8x256xf32>
    %96 = arith.mulf %95, %93 : vector<8x256xf32>
    %c0_47 = arith.constant 0 : index
    %c0_48 = arith.constant 0 : index
    %97 = vector.load %arg14[%c0_47, %c0_48] : memref<1x256xf32, #tpu.memory_space<vmem>>, vector<1x256xf32>
    %98 = vector.broadcast %97 : vector<1x256xf32> to vector<8x256xf32>
    %99 = arith.addf %96, %98 : vector<8x256xf32>
    %100 = arith.truncf %99 : vector<8x256xf32> to vector<8x256xbf16>
    %c0_49 = arith.constant 0 : index
    %c0_50 = arith.constant 0 : index
    %101 = vector.load %arg15[%c0_49, %c0_50] : memref<256x256xbf16, #tpu.memory_space<vmem>>, vector<256x256xbf16>
    %cst_51 = arith.constant dense<0.000000e+00> : vector<8x256xf32>
    %102 = tpu.matmul %100, %101, %cst_51 {dimension_numbers = #tpu.dot_dimension_numbers<[1], [0], [0], [1], [0, 0, 1, 1], [], []>} : vector<8x256xbf16>, vector<256x256xbf16>, vector<8x256xf32> -> vector<8x256xf32>
    %c0_52 = arith.constant 0 : index
    %c0_53 = arith.constant 0 : index
    %103 = vector.load %arg16[%c0_52, %c0_53] : memref<1x256xf32, #tpu.memory_space<vmem>>, vector<1x256xf32>
    %104 = vector.broadcast %103 : vector<1x256xf32> to vector<8x256xf32>
    %105 = arith.addf %102, %104 : vector<8x256xf32>
    %cst_54 = arith.constant 0.000000e+00 : f32
    %106 = vector.broadcast %cst_54 : f32 to vector<8x256xf32>
    %107 = arith.maximumf %105, %106 : vector<8x256xf32>
    %108 = arith.truncf %107 : vector<8x256xf32> to vector<8x256xbf16>
    %c0_55 = arith.constant 0 : index
    %c0_56 = arith.constant 0 : index
    %109 = vector.load %arg17[%c0_55, %c0_56] : memref<256x256xbf16, #tpu.memory_space<vmem>>, vector<256x256xbf16>
    %cst_57 = arith.constant dense<0.000000e+00> : vector<8x256xf32>
    %110 = tpu.matmul %108, %109, %cst_57 {dimension_numbers = #tpu.dot_dimension_numbers<[1], [0], [0], [1], [0, 0, 1, 1], [], []>} : vector<8x256xbf16>, vector<256x256xbf16>, vector<8x256xf32> -> vector<8x256xf32>
    %c0_58 = arith.constant 0 : index
    %c0_59 = arith.constant 0 : index
    %111 = vector.load %arg18[%c0_58, %c0_59] : memref<1x256xf32, #tpu.memory_space<vmem>>, vector<1x256xf32>
    %112 = vector.broadcast %111 : vector<1x256xf32> to vector<8x256xf32>
    %113 = arith.addf %110, %112 : vector<8x256xf32>
    %114 = arith.addf %99, %113 : vector<8x256xf32>
    %cst_60 = arith.constant dense<0.000000e+00> : vector<8xf32>
    %115 = vector.multi_reduction <add>, %114, %cst_60 [1] : vector<8x256xf32> to vector<8xf32>
    %116 = vector.shape_cast %115 : vector<8xf32> to vector<8x1xf32>
    %cst_61 = arith.constant 2.560000e+02 : f32
    %117 = vector.broadcast %cst_61 : f32 to vector<8x1xf32>
    %118 = arith.divf %116, %117 : vector<8x1xf32>
    %119 = vector.broadcast %118 : vector<8x1xf32> to vector<8x256xf32>
    %120 = arith.subf %114, %119 : vector<8x256xf32>
    %121 = arith.mulf %120, %120 : vector<8x256xf32>
    %cst_62 = arith.constant dense<0.000000e+00> : vector<8xf32>
    %122 = vector.multi_reduction <add>, %121, %cst_62 [1] : vector<8x256xf32> to vector<8xf32>
    %123 = vector.shape_cast %122 : vector<8xf32> to vector<8x1xf32>
    %cst_63 = arith.constant 2.560000e+02 : f32
    %124 = vector.broadcast %cst_63 : f32 to vector<8x1xf32>
    %125 = arith.divf %123, %124 : vector<8x1xf32>
    %126 = vector.broadcast %118 : vector<8x1xf32> to vector<8x256xf32>
    %127 = arith.subf %114, %126 : vector<8x256xf32>
    %cst_64 = arith.constant 9.99999996E-13 : f32
    %128 = vector.broadcast %cst_64 : f32 to vector<8x1xf32>
    %129 = arith.addf %125, %128 : vector<8x1xf32>
    %130 = math.rsqrt %129 : vector<8x1xf32>
    %131 = vector.broadcast %130 : vector<8x1xf32> to vector<8x256xf32>
    %132 = arith.mulf %127, %131 : vector<8x256xf32>
    %c0_65 = arith.constant 0 : index
    %c0_66 = arith.constant 0 : index
    %133 = vector.load %arg19[%c0_65, %c0_66] : memref<1x256xf32, #tpu.memory_space<vmem>>, vector<1x256xf32>
    %134 = vector.broadcast %133 : vector<1x256xf32> to vector<8x256xf32>
    %135 = arith.mulf %134, %132 : vector<8x256xf32>
    %c0_67 = arith.constant 0 : index
    %c0_68 = arith.constant 0 : index
    %136 = vector.load %arg20[%c0_67, %c0_68] : memref<1x256xf32, #tpu.memory_space<vmem>>, vector<1x256xf32>
    %137 = vector.broadcast %136 : vector<1x256xf32> to vector<8x256xf32>
    %138 = arith.addf %135, %137 : vector<8x256xf32>
    %139 = arith.truncf %138 : vector<8x256xf32> to vector<8x256xbf16>
    %c0_69 = arith.constant 0 : index
    %c0_70 = arith.constant 0 : index
    %c0_71 = arith.constant 0 : index
    %140 = vector.load %arg21[%c0_69, %c0_70, %c0_71] : memref<1x8x256xbf16, #tpu.memory_space<vmem>>, vector<1x8x256xbf16>
    %141 = vector.shape_cast %140 : vector<1x8x256xbf16> to vector<8x256xbf16>
    %142 = vector.shape_cast %139 : vector<8x256xbf16> to vector<1x8x256xbf16>
    tpu.vector_store %arg21[%c0_69, %c0_70, %c0_71], %142 {strides = array<i32>} : memref<1x8x256xbf16, #tpu.memory_space<vmem>>, vector<1x8x256xbf16>,
    return
  }
  func.func @transform_0(%arg0: i32, %arg1: i32) -> (i32, i32, i32) {
    %c0_i32 = arith.constant 0 : i32
    %c0_i32_0 = arith.constant 0 : i32
    return %arg0, %arg1, %c0_i32 : i32, i32, i32
  }
  func.func @transform_1(%arg0: i32, %arg1: i32) -> (i32, i32, i32) {
    %c0_i32 = arith.constant 0 : i32
    %c0_i32_0 = arith.constant 0 : i32
    %c0_i32_1 = arith.constant 0 : i32
    return %arg0, %c0_i32, %c0_i32_0 : i32, i32, i32
  }
  func.func @transform_2(%arg0: i32, %arg1: i32) -> (i32, i32, i32) {
    %c0_i32 = arith.constant 0 : i32
    %c0_i32_0 = arith.constant 0 : i32
    %c0_i32_1 = arith.constant 0 : i32
    return %arg0, %c0_i32, %c0_i32_0 : i32, i32, i32
  }
  func.func @transform_3(%arg0: i32, %arg1: i32) -> (i32, i32) {
    %c0_i32 = arith.constant 0 : i32
    %c0_i32_0 = arith.constant 0 : i32
    %c0_i32_1 = arith.constant 0 : i32
    return %c0_i32, %c0_i32_0 : i32, i32
  }
  func.func @transform_4(%arg0: i32, %arg1: i32) -> (i32, i32) {
    %c0_i32 = arith.constant 0 : i32
    %c0_i32_0 = arith.constant 0 : i32
    %c0_i32_1 = arith.constant 0 : i32
    return %c0_i32, %c0_i32_0 : i32, i32
  }
  func.func @transform_5(%arg0: i32, %arg1: i32) -> (i32, i32) {
    %c0_i32 = arith.constant 0 : i32
    %c0_i32_0 = arith.constant 0 : i32
    %c0_i32_1 = arith.constant 0 : i32
    return %c0_i32, %c0_i32_0 : i32, i32
  }
  func.func @transform_6(%arg0: i32, %arg1: i32) -> (i32, i32) {
    %c0_i32 = arith.constant 0 : i32
    %c0_i32_0 = arith.constant 0 : i32
    %c0_i32_1 = arith.constant 0 : i32
    return %c0_i32, %c0_i32_0 : i32, i32
  }
  func.func @transform_7(%arg0: i32, %arg1: i32) -> (i32, i32) {
    %c0_i32 = arith.constant 0 : i32
    %c0_i32_0 = arith.constant 0 : i32
    %c0_i32_1 = arith.constant 0 : i32
    return %c0_i32, %c0_i32_0 : i32, i32
  }
  func.func @transform_8(%arg0: i32, %arg1: i32) -> (i32, i32) {
    %c0_i32 = arith.constant 0 : i32
    %c0_i32_0 = arith.constant 0 : i32
    %c0_i32_1 = arith.constant 0 : i32
    return %c0_i32, %c0_i32_0 : i32, i32
  }
  func.func @transform_9(%arg0: i32, %arg1: i32) -> (i32, i32, i32) {
    %c0_i32 = arith.constant 0 : i32
    %c0_i32_0 = arith.constant 0 : i32
    %c0_i32_1 = arith.constant 0 : i32
    %c0_i32_2 = arith.constant 0 : i32
    return %c0_i32, %c0_i32_0, %c0_i32_1 : i32, i32, i32
  }
  func.func @transform_10(%arg0: i32, %arg1: i32) -> (i32, i32) {
    %c0_i32 = arith.constant 0 : i32
    %c0_i32_0 = arith.constant 0 : i32
    %c0_i32_1 = arith.constant 0 : i32
    return %c0_i32, %c0_i32_0 : i32, i32
  }
  func.func @transform_11(%arg0: i32, %arg1: i32) -> (i32, i32) {
    %c0_i32 = arith.constant 0 : i32
    %c0_i32_0 = arith.constant 0 : i32
    %c0_i32_1 = arith.constant 0 : i32
    return %c0_i32, %c0_i32_0 : i32, i32
  }
  func.func @transform_12(%arg0: i32, %arg1: i32) -> (i32, i32) {
    %c0_i32 = arith.constant 0 : i32
    %c0_i32_0 = arith.constant 0 : i32
    %c0_i32_1 = arith.constant 0 : i32
    return %c0_i32, %c0_i32_0 : i32, i32
  }
  func.func @transform_13(%arg0: i32, %arg1: i32) -> (i32, i32) {
    %c0_i32 = arith.constant 0 : i32
    %c0_i32_0 = arith.constant 0 : i32
    %c0_i32_1 = arith.constant 0 : i32
    return %c0_i32, %c0_i32_0 : i32, i32
  }
  func.func @transform_14(%arg0: i32, %arg1: i32) -> (i32, i32) {
    %c0_i32 = arith.constant 0 : i32
    %c0_i32_0 = arith.constant 0 : i32
    %c0_i32_1 = arith.constant 0 : i32
    return %c0_i32, %c0_i32_0 : i32, i32
  }
  func.func @transform_15(%arg0: i32, %arg1: i32) -> (i32, i32) {
    %c0_i32 = arith.constant 0 : i32
    %c0_i32_0 = arith.constant 0 : i32
    %c0_i32_1 = arith.constant 0 : i32
    return %c0_i32, %c0_i32_0 : i32, i32
  }
  func.func @transform_16(%arg0: i32, %arg1: i32) -> (i32, i32) {
    %c0_i32 = arith.constant 0 : i32
    %c0_i32_0 = arith.constant 0 : i32
    %c0_i32_1 = arith.constant 0 : i32
    return %c0_i32, %c0_i32_0 : i32, i32
  }
  func.func @transform_17(%arg0: i32, %arg1: i32) -> (i32, i32) {
    %c0_i32 = arith.constant 0 : i32
    %c0_i32_0 = arith.constant 0 : i32
    %c0_i32_1 = arith.constant 0 : i32
    return %c0_i32, %c0_i32_0 : i32, i32
  }
  func.func @transform_18(%arg0: i32, %arg1: i32) -> (i32, i32) {
    %c0_i32 = arith.constant 0 : i32
    %c0_i32_0 = arith.constant 0 : i32
    %c0_i32_1 = arith.constant 0 : i32
    return %c0_i32, %c0_i32_0 : i32, i32
  }
  func.func @transform_19(%arg0: i32, %arg1: i32) -> (i32, i32, i32) {
    %c0_i32 = arith.constant 0 : i32
    %c0_i32_0 = arith.constant 0 : i32
    return %arg0, %arg1, %c0_i32 : i32, i32, i32
  }
}

module attributes {stable_mosaic.version = 11 : i64} {
  func.func @encoder_layer_kernel(%arg0: i32, %arg1: i32, %arg2: memref<1x8x256xbf16, #tpu.memory_space<vmem>>, %arg3: memref<1x24x256xbf16, #tpu.memory_space<vmem>>, %arg4: memref<1x1x24xf32, #tpu.memory_space<vmem>>, %arg5: memref<256x256xbf16, #tpu.memory_space<vmem>>, %arg6: memref<1x256xf32, #tpu.memory_space<vmem>>, %arg7: memref<256x256xbf16, #tpu.memory_space<vmem>>, %arg8: memref<1x256xf32, #tpu.memory_space<vmem>>, %arg9: memref<256x256xbf16, #tpu.memory_space<vmem>>, %arg10: memref<1x256xf32, #tpu.memory_space<vmem>>, %arg11: memref<2x128x256xbf16, #tpu.memory_space<vmem>>, %arg12: memref<1x256xf32, #tpu.memory_space<vmem>>, %arg13: memref<1x256xf32, #tpu.memory_space<vmem>>, %arg14: memref<1x256xf32, #tpu.memory_space<vmem>>, %arg15: memref<256x256xbf16, #tpu.memory_space<vmem>>, %arg16: memref<1x256xf32, #tpu.memory_space<vmem>>, %arg17: memref<256x256xbf16, #tpu.memory_space<vmem>>, %arg18: memref<1x256xf32, #tpu.memory_space<vmem>>, %arg19: memref<1x256xf32, #tpu.memory_space<vmem>>, %arg20: memref<1x256xf32, #tpu.memory_space<vmem>>, %arg21: memref<1x8x256xbf16, #tpu.memory_space<vmem>>) attributes {dimension_semantics = [#tpu.dimension_semantics<parallel>, #tpu.dimension_semantics<parallel>], iteration_bounds = array<i64: 2, 1>, scalar_prefetch = 0 : i64, scratch_operands = 0 : i64, tpu.core_type = #tpu.core_type<tc>, window_params = [{transform_indices = @transform_0, window_bounds = array<i64: 1, 8, 256>}, {transform_indices = @transform_1, window_bounds = array<i64: 1, 24, 256>}, {transform_indices = @transform_2, window_bounds = array<i64: 1, 1, 24>}, {pipeline_mode = #tpu.pipeline_mode<synchronous>, transform_indices = @transform_3, window_bounds = array<i64: 256, 256>}, {pipeline_mode = #tpu.pipeline_mode<synchronous>, transform_indices = @transform_4, window_bounds = array<i64: 1, 256>}, {pipeline_mode = #tpu.pipeline_mode<synchronous>, transform_indices = @transform_5, window_bounds = array<i64: 256, 256>}, {pipeline_mode = #tpu.pipeline_mode<synchronous>, transform_indices = @transform_6, window_bounds = array<i64: 1, 256>}, {pipeline_mode = #tpu.pipeline_mode<synchronous>, transform_indices = @transform_7, window_bounds = array<i64: 256, 256>}, {pipeline_mode = #tpu.pipeline_mode<synchronous>, transform_indices = @transform_8, window_bounds = array<i64: 1, 256>}, {pipeline_mode = #tpu.pipeline_mode<synchronous>, transform_indices = @transform_9, window_bounds = array<i64: 2, 128, 256>}, {pipeline_mode = #tpu.pipeline_mode<synchronous>, transform_indices = @transform_10, window_bounds = array<i64: 1, 256>}, {pipeline_mode = #tpu.pipeline_mode<synchronous>, transform_indices = @transform_11, window_bounds = array<i64: 1, 256>}, {pipeline_mode = #tpu.pipeline_mode<synchronous>, transform_indices = @transform_12, window_bounds = array<i64: 1, 256>}, {pipeline_mode = #tpu.pipeline_mode<synchronous>, transform_indices = @transform_13, window_bounds = array<i64: 256, 256>}, {pipeline_mode = #tpu.pipeline_mode<synchronous>, transform_indices = @transform_14, window_bounds = array<i64: 1, 256>}, {pipeline_mode = #tpu.pipeline_mode<synchronous>, transform_indices = @transform_15, window_bounds = array<i64: 256, 256>}, {pipeline_mode = #tpu.pipeline_mode<synchronous>, transform_indices = @transform_16, window_bounds = array<i64: 1, 256>}, {pipeline_mode = #tpu.pipeline_mode<synchronous>, transform_indices = @transform_17, window_bounds = array<i64: 1, 256>}, {pipeline_mode = #tpu.pipeline_mode<synchronous>, transform_indices = @transform_18, window_bounds = array<i64: 1, 256>}, {transform_indices = @transform_19, window_bounds = array<i64: 1, 8, 256>}]} {
    %c0 = arith.constant 0 : index
    %c0_0 = arith.constant 0 : index
    %c0_1 = arith.constant 0 : index
    %0 = vector.load %arg2[%c0, %c0_0, %c0_1] : memref<1x8x256xbf16, #tpu.memory_space<vmem>>, vector<1x8x256xbf16>
    %1 = vector.shape_cast %0 : vector<1x8x256xbf16> to vector<8x256xbf16>
    %c0_2 = arith.constant 0 : index
    %c0_3 = arith.constant 0 : index
    %c0_4 = arith.constant 0 : index
    %2 = vector.load %arg3[%c0_2, %c0_3, %c0_4] : memref<1x24x256xbf16, #tpu.memory_space<vmem>>, vector<1x24x256xbf16>
    %3 = vector.shape_cast %2 : vector<1x24x256xbf16> to vector<24x256xbf16>
    %c0_5 = arith.constant 0 : index
    %c0_6 = arith.constant 0 : index
    %c0_7 = arith.constant 0 : index
    %4 = vector.load %arg4[%c0_5, %c0_6, %c0_7] : memref<1x1x24xf32, #tpu.memory_space<vmem>>, vector<1x1x24xf32>
    %5 = vector.shape_cast %4 : vector<1x1x24xf32> to vector<1x24xf32>
    %6 = arith.extf %1 : vector<8x256xbf16> to vector<8x256xf32>
    %c0_8 = arith.constant 0 : index
    %c0_9 = arith.constant 0 : index
    %7 = vector.load %arg5[%c0_8, %c0_9] : memref<256x256xbf16, #tpu.memory_space<vmem>>, vector<256x256xbf16>
    %cst = arith.constant dense<0.000000e+00> : vector<8x256xf32>
    %8 = tpu.matmul %1, %7, %cst {dimension_numbers = #tpu.dot_dimension_numbers<[1], [0], [0], [1], [0, 0, 1, 1], [], []>} : vector<8x256xbf16>, vector<256x256xbf16>, vector<8x256xf32> -> vector<8x256xf32>
    %c0_10 = arith.constant 0 : index
    %c0_11 = arith.constant 0 : index
    %9 = vector.load %arg6[%c0_10, %c0_11] : memref<1x256xf32, #tpu.memory_space<vmem>>, vector<1x256xf32>
    %10 = vector.broadcast %9 : vector<1x256xf32> to vector<8x256xf32>
    %11 = arith.addf %8, %10 : vector<8x256xf32>
    %cst_12 = arith.constant 0.0883883461 : f32
    %12 = vector.broadcast %cst_12 : f32 to vector<8x256xf32>
    %13 = arith.mulf %11, %12 : vector<8x256xf32>
    %c0_13 = arith.constant 0 : index
    %c0_14 = arith.constant 0 : index
    %14 = vector.load %arg7[%c0_13, %c0_14] : memref<256x256xbf16, #tpu.memory_space<vmem>>, vector<256x256xbf16>
    %cst_15 = arith.constant dense<0.000000e+00> : vector<24x256xf32>
    %15 = tpu.matmul %3, %14, %cst_15 {dimension_numbers = #tpu.dot_dimension_numbers<[1], [0], [0], [1], [0, 0, 1, 1], [], []>} : vector<24x256xbf16>, vector<256x256xbf16>, vector<24x256xf32> -> vector<24x256xf32>
    %c0_16 = arith.constant 0 : index
    %c0_17 = arith.constant 0 : index
    %16 = vector.load %arg8[%c0_16, %c0_17] : memref<1x256xf32, #tpu.memory_space<vmem>>, vector<1x256xf32>
    %17 = vector.broadcast %16 : vector<1x256xf32> to vector<24x256xf32>
    %18 = arith.addf %15, %17 : vector<24x256xf32>
    %c0_18 = arith.constant 0 : index
    %c0_19 = arith.constant 0 : index
    %19 = vector.load %arg9[%c0_18, %c0_19] : memref<256x256xbf16, #tpu.memory_space<vmem>>, vector<256x256xbf16>
    %cst_20 = arith.constant dense<0.000000e+00> : vector<24x256xf32>
    %20 = tpu.matmul %3, %19, %cst_20 {dimension_numbers = #tpu.dot_dimension_numbers<[1], [0], [0], [1], [0, 0, 1, 1], [], []>} : vector<24x256xbf16>, vector<256x256xbf16>, vector<24x256xf32> -> vector<24x256xf32>
    %c0_21 = arith.constant 0 : index
    %c0_22 = arith.constant 0 : index
    %21 = vector.load %arg10[%c0_21, %c0_22] : memref<1x256xf32, #tpu.memory_space<vmem>>, vector<1x256xf32>
    %22 = vector.broadcast %21 : vector<1x256xf32> to vector<24x256xf32>
    %23 = arith.addf %20, %22 : vector<24x256xf32>
    %24 = arith.truncf %13 : vector<8x256xf32> to vector<8x256xbf16>
    %25 = arith.truncf %18 : vector<24x256xf32> to vector<24x256xbf16>
    %26 = arith.truncf %23 : vector<24x256xf32> to vector<24x256xbf16>
    %27 = vector.extract_strided_slice %24 {offsets = [0, 0], sizes = [8, 128], strides = [1, 1]} : vector<8x256xbf16> to vector<8x128xbf16>
    %28 = vector.extract_strided_slice %25 {offsets = [0, 0], sizes = [24, 128], strides = [1, 1]} : vector<24x256xbf16> to vector<24x128xbf16>
    %29 = vector.extract_strided_slice %26 {offsets = [0, 0], sizes = [24, 128], strides = [1, 1]} : vector<24x256xbf16> to vector<24x128xbf16>
    %cst_23 = arith.constant dense<0.000000e+00> : vector<8x24xf32>
    %30 = tpu.matmul %27, %28, %cst_23 {dimension_numbers = #tpu.dot_dimension_numbers<[1], [1], [0], [0], [0, 0, 1, 0], [], []>} : vector<8x128xbf16>, vector<24x128xbf16>, vector<8x24xf32> -> vector<8x24xf32>
    %31 = vector.broadcast %5 : vector<1x24xf32> to vector<8x24xf32>
    %32 = arith.addf %30, %31 : vector<8x24xf32>
    %cst_24 = arith.constant dense<0xFF800000> : vector<8xf32>
    %33 = vector.multi_reduction <maximumf>, %32, %cst_24 [1] : vector<8x24xf32> to vector<8xf32>
    %34 = vector.shape_cast %33 : vector<8xf32> to vector<8x1xf32>
    %35 = vector.broadcast %34 : vector<8x1xf32> to vector<8x24xf32>
    %36 = arith.subf %32, %35 : vector<8x24xf32>
    %37 = math.exp %36 : vector<8x24xf32>
    %cst_25 = arith.constant dense<0.000000e+00> : vector<8xf32>
    %38 = vector.multi_reduction <add>, %37, %cst_25 [1] : vector<8x24xf32> to vector<8xf32>
    %39 = vector.shape_cast %38 : vector<8xf32> to vector<8x1xf32>
    %40 = tpu.reciprocal %39 {approx = true} : vector<8x1xf32> -> vector<8x1xf32>
    %41 = vector.broadcast %40 : vector<8x1xf32> to vector<8x24xf32>
    %42 = arith.mulf %37, %41 : vector<8x24xf32>
    %43 = arith.truncf %42 : vector<8x24xf32> to vector<8x24xbf16>
    %cst_26 = arith.constant dense<0.000000e+00> : vector<8x128xf32>
    %44 = tpu.matmul %43, %29, %cst_26 {dimension_numbers = #tpu.dot_dimension_numbers<[1], [0], [0], [1], [0, 0, 1, 1], [], []>} : vector<8x24xbf16>, vector<24x128xbf16>, vector<8x128xf32> -> vector<8x128xf32>
    %45 = arith.truncf %44 : vector<8x128xf32> to vector<8x128xbf16>
    %c0_27 = arith.constant 0 : index
    %c0_28 = arith.constant 0 : index
    %c0_29 = arith.constant 0 : index
    %46 = vector.load %arg11[%c0_27, %c0_28, %c0_29] : memref<2x128x256xbf16, #tpu.memory_space<vmem>>, vector<1x128x256xbf16>
    %47 = vector.shape_cast %46 : vector<1x128x256xbf16> to vector<128x256xbf16>
    %cst_30 = arith.constant dense<0.000000e+00> : vector<8x256xf32>
    %48 = tpu.matmul %45, %47, %cst_30 {dimension_numbers = #tpu.dot_dimension_numbers<[1], [0], [0], [1], [0, 0, 1, 1], [], []>} : vector<8x128xbf16>, vector<128x256xbf16>, vector<8x256xf32> -> vector<8x256xf32>
    %49 = vector.extract_strided_slice %24 {offsets = [0, 128], sizes = [8, 128], strides = [1, 1]} : vector<8x256xbf16> to vector<8x128xbf16>
    %50 = vector.extract_strided_slice %25 {offsets = [0, 128], sizes = [24, 128], strides = [1, 1]} : vector<24x256xbf16> to vector<24x128xbf16>
    %51 = vector.extract_strided_slice %26 {offsets = [0, 128], sizes = [24, 128], strides = [1, 1]} : vector<24x256xbf16> to vector<24x128xbf16>
    %cst_31 = arith.constant dense<0.000000e+00> : vector<8x24xf32>
    %52 = tpu.matmul %49, %50, %cst_31 {dimension_numbers = #tpu.dot_dimension_numbers<[1], [1], [0], [0], [0, 0, 1, 0], [], []>} : vector<8x128xbf16>, vector<24x128xbf16>, vector<8x24xf32> -> vector<8x24xf32>
    %53 = vector.broadcast %5 : vector<1x24xf32> to vector<8x24xf32>
    %54 = arith.addf %52, %53 : vector<8x24xf32>
    %cst_32 = arith.constant dense<0xFF800000> : vector<8xf32>
    %55 = vector.multi_reduction <maximumf>, %54, %cst_32 [1] : vector<8x24xf32> to vector<8xf32>
    %56 = vector.shape_cast %55 : vector<8xf32> to vector<8x1xf32>
    %57 = vector.broadcast %56 : vector<8x1xf32> to vector<8x24xf32>
    %58 = arith.subf %54, %57 : vector<8x24xf32>
    %59 = math.exp %58 : vector<8x24xf32>
    %cst_33 = arith.constant dense<0.000000e+00> : vector<8xf32>
    %60 = vector.multi_reduction <add>, %59, %cst_33 [1] : vector<8x24xf32> to vector<8xf32>
    %61 = vector.shape_cast %60 : vector<8xf32> to vector<8x1xf32>
    %62 = tpu.reciprocal %61 {approx = true} : vector<8x1xf32> -> vector<8x1xf32>
    %63 = vector.broadcast %62 : vector<8x1xf32> to vector<8x24xf32>
    %64 = arith.mulf %59, %63 : vector<8x24xf32>
    %65 = arith.truncf %64 : vector<8x24xf32> to vector<8x24xbf16>
    %cst_34 = arith.constant dense<0.000000e+00> : vector<8x128xf32>
    %66 = tpu.matmul %65, %51, %cst_34 {dimension_numbers = #tpu.dot_dimension_numbers<[1], [0], [0], [1], [0, 0, 1, 1], [], []>} : vector<8x24xbf16>, vector<24x128xbf16>, vector<8x128xf32> -> vector<8x128xf32>
    %67 = arith.truncf %66 : vector<8x128xf32> to vector<8x128xbf16>
    %c1 = arith.constant 1 : index
    %c0_35 = arith.constant 0 : index
    %c0_36 = arith.constant 0 : index
    %68 = vector.load %arg11[%c1, %c0_35, %c0_36] : memref<2x128x256xbf16, #tpu.memory_space<vmem>>, vector<1x128x256xbf16>
    %69 = vector.shape_cast %68 : vector<1x128x256xbf16> to vector<128x256xbf16>
    %cst_37 = arith.constant dense<0.000000e+00> : vector<8x256xf32>
    %70 = tpu.matmul %67, %69, %cst_37 {dimension_numbers = #tpu.dot_dimension_numbers<[1], [0], [0], [1], [0, 0, 1, 1], [], []>} : vector<8x128xbf16>, vector<128x256xbf16>, vector<8x256xf32> -> vector<8x256xf32>
    %71 = arith.addf %48, %70 : vector<8x256xf32>
    %c0_38 = arith.constant 0 : index
    %c0_39 = arith.constant 0 : index
    %72 = vector.load %arg12[%c0_38, %c0_39] : memref<1x256xf32, #tpu.memory_space<vmem>>, vector<1x256xf32>
    %73 = vector.broadcast %72 : vector<1x256xf32> to vector<8x256xf32>
    %74 = arith.addf %71, %73 : vector<8x256xf32>
    %75 = arith.addf %6, %74 : vector<8x256xf32>
    %cst_40 = arith.constant dense<0.000000e+00> : vector<8xf32>
    %76 = vector.multi_reduction <add>, %75, %cst_40 [1] : vector<8x256xf32> to vector<8xf32>
    %77 = vector.shape_cast %76 : vector<8xf32> to vector<8x1xf32>
    %cst_41 = arith.constant 2.560000e+02 : f32
    %78 = vector.broadcast %cst_41 : f32 to vector<8x1xf32>
    %79 = arith.divf %77, %78 : vector<8x1xf32>
    %80 = vector.broadcast %79 : vector<8x1xf32> to vector<8x256xf32>
    %81 = arith.subf %75, %80 : vector<8x256xf32>
    %82 = arith.mulf %81, %81 : vector<8x256xf32>
    %cst_42 = arith.constant dense<0.000000e+00> : vector<8xf32>
    %83 = vector.multi_reduction <add>, %82, %cst_42 [1] : vector<8x256xf32> to vector<8xf32>
    %84 = vector.shape_cast %83 : vector<8xf32> to vector<8x1xf32>
    %cst_43 = arith.constant 2.560000e+02 : f32
    %85 = vector.broadcast %cst_43 : f32 to vector<8x1xf32>
    %86 = arith.divf %84, %85 : vector<8x1xf32>
    %87 = vector.broadcast %79 : vector<8x1xf32> to vector<8x256xf32>
    %88 = arith.subf %75, %87 : vector<8x256xf32>
    %cst_44 = arith.constant 9.99999996E-13 : f32
    %89 = vector.broadcast %cst_44 : f32 to vector<8x1xf32>
    %90 = arith.addf %86, %89 : vector<8x1xf32>
    %91 = math.rsqrt %90 : vector<8x1xf32>
    %92 = vector.broadcast %91 : vector<8x1xf32> to vector<8x256xf32>
    %93 = arith.mulf %88, %92 : vector<8x256xf32>
    %c0_45 = arith.constant 0 : index
    %c0_46 = arith.constant 0 : index
    %94 = vector.load %arg13[%c0_45, %c0_46] : memref<1x256xf32, #tpu.memory_space<vmem>>, vector<1x256xf32>
    %95 = vector.broadcast %94 : vector<1x256xf32> to vector<8x256xf32>
    %96 = arith.mulf %95, %93 : vector<8x256xf32>
    %c0_47 = arith.constant 0 : index
    %c0_48 = arith.constant 0 : index
    %97 = vector.load %arg14[%c0_47, %c0_48] : memref<1x256xf32, #tpu.memory_space<vmem>>, vector<1x256xf32>
    %98 = vector.broadcast %97 : vector<1x256xf32> to vector<8x256xf32>
    %99 = arith.addf %96, %98 : vector<8x256xf32>
    %100 = arith.truncf %99 : vector<8x256xf32> to vector<8x256xbf16>
    %c0_49 = arith.constant 0 : index
    %c0_50 = arith.constant 0 : index
    %101 = vector.load %arg15[%c0_49, %c0_50] : memref<256x256xbf16, #tpu.memory_space<vmem>>, vector<256x256xbf16>
    %cst_51 = arith.constant dense<0.000000e+00> : vector<8x256xf32>
    %102 = tpu.matmul %100, %101, %cst_51 {dimension_numbers = #tpu.dot_dimension_numbers<[1], [0], [0], [1], [0, 0, 1, 1], [], []>} : vector<8x256xbf16>, vector<256x256xbf16>, vector<8x256xf32> -> vector<8x256xf32>
    %c0_52 = arith.constant 0 : index
    %c0_53 = arith.constant 0 : index
    %103 = vector.load %arg16[%c0_52, %c0_53] : memref<1x256xf32, #tpu.memory_space<vmem>>, vector<1x256xf32>
    %104 = vector.broadcast %103 : vector<1x256xf32> to vector<8x256xf32>
    %105 = arith.addf %102, %104 : vector<8x256xf32>
    %cst_54 = arith.constant 0.000000e+00 : f32
    %106 = vector.broadcast %cst_54 : f32 to vector<8x256xf32>
    %107 = arith.maximumf %105, %106 : vector<8x256xf32>
    %108 = arith.truncf %107 : vector<8x256xf32> to vector<8x256xbf16>
    %c0_55 = arith.constant 0 : index
    %c0_56 = arith.constant 0 : index
    %109 = vector.load %arg17[%c0_55, %c0_56] : memref<256x256xbf16, #tpu.memory_space<vmem>>, vector<256x256xbf16>
    %cst_57 = arith.constant dense<0.000000e+00> : vector<8x256xf32>
    %110 = tpu.matmul %108, %109, %cst_57 {dimension_numbers = #tpu.dot_dimension_numbers<[1], [0], [0], [1], [0, 0, 1, 1], [], []>} : vector<8x256xbf16>, vector<256x256xbf16>, vector<8x256xf32> -> vector<8x256xf32>
    %c0_58 = arith.constant 0 : index
    %c0_59 = arith.constant 0 : index
    %111 = vector.load %arg18[%c0_58, %c0_59] : memref<1x256xf32, #tpu.memory_space<vmem>>, vector<1x256xf32>
    %112 = vector.broadcast %111 : vector<1x256xf32> to vector<8x256xf32>
    %113 = arith.addf %110, %112 : vector<8x256xf32>
    %114 = arith.addf %99, %113 : vector<8x256xf32>
    %cst_60 = arith.constant dense<0.000000e+00> : vector<8xf32>
    %115 = vector.multi_reduction <add>, %114, %cst_60 [1] : vector<8x256xf32> to vector<8xf32>
    %116 = vector.shape_cast %115 : vector<8xf32> to vector<8x1xf32>
    %cst_61 = arith.constant 2.560000e+02 : f32
    %117 = vector.broadcast %cst_61 : f32 to vector<8x1xf32>
    %118 = arith.divf %116, %117 : vector<8x1xf32>
    %119 = vector.broadcast %118 : vector<8x1xf32> to vector<8x256xf32>
    %120 = arith.subf %114, %119 : vector<8x256xf32>
    %121 = arith.mulf %120, %120 : vector<8x256xf32>
    %cst_62 = arith.constant dense<0.000000e+00> : vector<8xf32>
    %122 = vector.multi_reduction <add>, %121, %cst_62 [1] : vector<8x256xf32> to vector<8xf32>
    %123 = vector.shape_cast %122 : vector<8xf32> to vector<8x1xf32>
    %cst_63 = arith.constant 2.560000e+02 : f32
    %124 = vector.broadcast %cst_63 : f32 to vector<8x1xf32>
    %125 = arith.divf %123, %124 : vector<8x1xf32>
    %126 = vector.broadcast %118 : vector<8x1xf32> to vector<8x256xf32>
    %127 = arith.subf %114, %126 : vector<8x256xf32>
    %cst_64 = arith.constant 9.99999996E-13 : f32
    %128 = vector.broadcast %cst_64 : f32 to vector<8x1xf32>
    %129 = arith.addf %125, %128 : vector<8x1xf32>
    %130 = math.rsqrt %129 : vector<8x1xf32>
    %131 = vector.broadcast %130 : vector<8x1xf32> to vector<8x256xf32>
    %132 = arith.mulf %127, %131 : vector<8x256xf32>
    %c0_65 = arith.constant 0 : index
    %c0_66 = arith.constant 0 : index
    %133 = vector.load %arg19[%c0_65, %c0_66] : memref<1x256xf32, #tpu.memory_space<vmem>>, vector<1x256xf32>
    %134 = vector.broadcast %133 : vector<1x256xf32> to vector<8x256xf32>
    %135 = arith.mulf %134, %132 : vector<8x256xf32>
    %c0_67 = arith.constant 0 : index
    %c0_68 = arith.constant 0 : index
    %136 = vector.load %arg20[%c0_67, %c0_68] : memref<1x256xf32, #tpu.memory_space<vmem>>, vector<1x256xf32>
    %137 = vector.broadcast %136 : vector<1x256xf32> to vector<8x256xf32>
    %138 = arith.addf %135, %137 : vector<8x256xf32>
    %139 = arith.truncf %138 : vector<8x256xf32> to vector<8x256xbf16>
    %c0_69 = arith.constant 0 : index
    %c0_70 = arith.constant 0 : index
    %c0_71 = arith.constant 0 : index
    %140 = vector.load %arg21[%c0_69, %c0_70, %c0_71] : memref<1x8x256xbf16, #tpu.memory_space<vmem>>, vector<1x8x256xbf16>
    %141 = vector.shape_cast %140 : vector<1x8x256xbf16> to vector<8x256xbf16>
    %142 = vector.shape_cast %139 : vector<8x256xbf16> to vector<1x8x256xbf16>
    tpu.vector_store %arg21[%c0_69, %c0_70, %c0_71], %142 {strides = array<i32>} : memref<1x8x256xbf16, #tpu.memory_space<vmem>>, vector<1x8x256xbf16>,
    return
  }
  func.func @transform_0(%arg0: i32, %arg1: i32) -> (i32, i32, i32) {
    %c0_i32 = arith.constant 0 : i32
    %c0_i32_0 = arith.constant 0 : i32
    return %arg0, %arg1, %c0_i32 : i32, i32, i32
  }
  func.func @transform_1(%arg0: i32, %arg1: i32) -> (i32, i32, i32) {
    %c0_i32 = arith.constant 0 : i32
    %c0_i32_0 = arith.constant 0 : i32
    %c0_i32_1 = arith.constant 0 : i32
    return %arg0, %c0_i32, %c0_i32_0 : i32, i32, i32
  }
  func.func @transform_2(%arg0: i32, %arg1: i32) -> (i32, i32, i32) {
    %c0_i32 = arith.constant 0 : i32
    %c0_i32_0 = arith.constant 0 : i32
    %c0_i32_1 = arith.constant 0 : i32
    return %arg0, %c0_i32, %c0_i32_0 : i32, i32, i32
  }
  func.func @transform_3(%arg0: i32, %arg1: i32) -> (i32, i32) {
    %c0_i32 = arith.constant 0 : i32
    %c0_i32_0 = arith.constant 0 : i32
    %c0_i32_1 = arith.constant 0 : i32
    return %c0_i32, %c0_i32_0 : i32, i32
  }
  func.func @transform_4(%arg0: i32, %arg1: i32) -> (i32, i32) {
    %c0_i32 = arith.constant 0 : i32
    %c0_i32_0 = arith.constant 0 : i32
    %c0_i32_1 = arith.constant 0 : i32
    return %c0_i32, %c0_i32_0 : i32, i32
  }
  func.func @transform_5(%arg0: i32, %arg1: i32) -> (i32, i32) {
    %c0_i32 = arith.constant 0 : i32
    %c0_i32_0 = arith.constant 0 : i32
    %c0_i32_1 = arith.constant 0 : i32
    return %c0_i32, %c0_i32_0 : i32, i32
  }
  func.func @transform_6(%arg0: i32, %arg1: i32) -> (i32, i32) {
    %c0_i32 = arith.constant 0 : i32
    %c0_i32_0 = arith.constant 0 : i32
    %c0_i32_1 = arith.constant 0 : i32
    return %c0_i32, %c0_i32_0 : i32, i32
  }
  func.func @transform_7(%arg0: i32, %arg1: i32) -> (i32, i32) {
    %c0_i32 = arith.constant 0 : i32
    %c0_i32_0 = arith.constant 0 : i32
    %c0_i32_1 = arith.constant 0 : i32
    return %c0_i32, %c0_i32_0 : i32, i32
  }
  func.func @transform_8(%arg0: i32, %arg1: i32) -> (i32, i32) {
    %c0_i32 = arith.constant 0 : i32
    %c0_i32_0 = arith.constant 0 : i32
    %c0_i32_1 = arith.constant 0 : i32
    return %c0_i32, %c0_i32_0 : i32, i32
  }
  func.func @transform_9(%arg0: i32, %arg1: i32) -> (i32, i32, i32) {
    %c0_i32 = arith.constant 0 : i32
    %c0_i32_0 = arith.constant 0 : i32
    %c0_i32_1 = arith.constant 0 : i32
    %c0_i32_2 = arith.constant 0 : i32
    return %c0_i32, %c0_i32_0, %c0_i32_1 : i32, i32, i32
  }
  func.func @transform_10(%arg0: i32, %arg1: i32) -> (i32, i32) {
    %c0_i32 = arith.constant 0 : i32
    %c0_i32_0 = arith.constant 0 : i32
    %c0_i32_1 = arith.constant 0 : i32
    return %c0_i32, %c0_i32_0 : i32, i32
  }
  func.func @transform_11(%arg0: i32, %arg1: i32) -> (i32, i32) {
    %c0_i32 = arith.constant 0 : i32
    %c0_i32_0 = arith.constant 0 : i32
    %c0_i32_1 = arith.constant 0 : i32
    return %c0_i32, %c0_i32_0 : i32, i32
  }
  func.func @transform_12(%arg0: i32, %arg1: i32) -> (i32, i32) {
    %c0_i32 = arith.constant 0 : i32
    %c0_i32_0 = arith.constant 0 : i32
    %c0_i32_1 = arith.constant 0 : i32
    return %c0_i32, %c0_i32_0 : i32, i32
  }
  func.func @transform_13(%arg0: i32, %arg1: i32) -> (i32, i32) {
    %c0_i32 = arith.constant 0 : i32
    %c0_i32_0 = arith.constant 0 : i32
    %c0_i32_1 = arith.constant 0 : i32
    return %c0_i32, %c0_i32_0 : i32, i32
  }
  func.func @transform_14(%arg0: i32, %arg1: i32) -> (i32, i32) {
    %c0_i32 = arith.constant 0 : i32
    %c0_i32_0 = arith.constant 0 : i32
    %c0_i32_1 = arith.constant 0 : i32
    return %c0_i32, %c0_i32_0 : i32, i32
  }
  func.func @transform_15(%arg0: i32, %arg1: i32) -> (i32, i32) {
    %c0_i32 = arith.constant 0 : i32
    %c0_i32_0 = arith.constant 0 : i32
    %c0_i32_1 = arith.constant 0 : i32
    return %c0_i32, %c0_i32_0 : i32, i32
  }
  func.func @transform_16(%arg0: i32, %arg1: i32) -> (i32, i32) {
    %c0_i32 = arith.constant 0 : i32
    %c0_i32_0 = arith.constant 0 : i32
    %c0_i32_1 = arith.constant 0 : i32
    return %c0_i32, %c0_i32_0 : i32, i32
  }
  func.func @transform_17(%arg0: i32, %arg1: i32) -> (i32, i32) {
    %c0_i32 = arith.constant 0 : i32
    %c0_i32_0 = arith.constant 0 : i32
    %c0_i32_1 = arith.constant 0 : i32
    return %c0_i32, %c0_i32_0 : i32, i32
  }
  func.func @transform_18(%arg0: i32, %arg1: i32) -> (i32, i32) {
    %c0_i32 = arith.constant 0 : i32
    %c0_i32_0 = arith.constant 0 : i32
    %c0_i32_1 = arith.constant 0 : i32
    return %c0_i32, %c0_i32_0 : i32, i32
  }
  func.func @transform_19(%arg0: i32, %arg1: i32) -> (i32, i32, i32) {
    %c0_i32 = arith.constant 0 : i32
    %c0_i32_0 = arith.constant 0 : i32
    return %arg0, %arg1, %c0_i32 : i32, i32, i32
  }
}

</mosaic_0001>

<llo_original>
// kernel: encoder_forward.17
$region0: #{encoder_forward.17}
  #allocation0 [shape = 'u32[]', space=smem, size = 0x4, offset = 0x4, fixed_abs, tag = 'smem constant byte address 0x4 - core index']
  #allocation1 [shape = 'u32[144,128]{1,0:T(1,128)}', space=vmem, size = 0x12000, scoped, tag = 'internal scratch']
  %s0 = inlined_call_operand.vmem [shape: bf16[2,8,256], index: 0, kind: input, shape index: {}]
  %s1 = inlined_call_operand.vmem [shape: bf16[2,24,256], index: 1, kind: input, shape index: {}]
  %s2 = inlined_call_operand.vmem [shape: f32[2,1,24], index: 2, kind: input, shape index: {}]
  %s3 = inlined_call_operand.vmem [shape: bf16[256,256], index: 3, kind: input, shape index: {}]
  %s4 = inlined_call_operand.vmem [shape: f32[1,256], index: 4, kind: input, shape index: {}]
  %s5 = inlined_call_operand.vmem [shape: bf16[256,256], index: 5, kind: input, shape index: {}]
  %s6 = inlined_call_operand.vmem [shape: f32[1,256], index: 6, kind: input, shape index: {}]
  %s7 = inlined_call_operand.vmem [shape: bf16[256,256], index: 7, kind: input, shape index: {}]
  %s8 = inlined_call_operand.vmem [shape: f32[1,256], index: 8, kind: input, shape index: {}]
  %s9 = inlined_call_operand.vmem [shape: bf16[2,128,256], index: 9, kind: input, shape index: {}]
  %s10 = inlined_call_operand.vmem [shape: f32[1,256], index: 10, kind: input, shape index: {}]
  %s11 = inlined_call_operand.vmem [shape: f32[1,256], index: 11, kind: input, shape index: {}]
  %s12 = inlined_call_operand.vmem [shape: f32[1,256], index: 12, kind: input, shape index: {}]
  %s13 = inlined_call_operand.vmem [shape: bf16[256,256], index: 13, kind: input, shape index: {}]
  %s14 = inlined_call_operand.vmem [shape: f32[1,256], index: 14, kind: input, shape index: {}]
  %s15 = inlined_call_operand.vmem [shape: bf16[256,256], index: 15, kind: input, shape index: {}]
  %s16 = inlined_call_operand.vmem [shape: f32[1,256], index: 16, kind: input, shape index: {}]
  %s17 = inlined_call_operand.vmem [shape: f32[1,256], index: 17, kind: input, shape index: {}]
  %s18 = inlined_call_operand.vmem [shape: f32[1,256], index: 18, kind: input, shape index: {}]
  %s19 = inlined_call_operand.vmem [shape: bf16[2,8,256], index: 19, kind: output, shape index: {}]
  %s20 = sld [smem:[#allocation0]]
  $region109: #{encoder_forward.17} parent=0
    _
  %s22 = ssub.s32 1, %s20
  %s23 = scalar_select 0, %s22, %s20
  loop: start=0, step=1, limit=4
  $region2: #{encoder_forward.17} parent=0 // loop_pre_header
    _
  $region3: #{encoder_forward.17} parent=0 // loop_header
    %s25 = sphi 0, %s29
    %p26 = scmp.ge.s32.totalorder %s25, 4
    %s32 = sphi 0, %s44
    %s33 = sphi 0, %s40
    %s34 = sphi 0, %s32
    %s35 = sphi 0, %s33
    %s36 = sphi 0, %s34
    %s37 = sphi 0, %s35
    %s49 = sphi 0, %s51
    %s52 = sphi 0, %s49
    %s53 = sphi 0, %s52
    %s69 = sphi 0, %s53
    %s75 = sphi 0, %s77
    %s78 = sphi 0, %s75
    %s79 = sphi 0, %s78
    %s95 = sphi 0, %s79
    %s101 = sphi 0, %s103
    %s104 = sphi 0, %s101
    %s105 = sphi 0, %s104
    %s121 = sphi 0, %s105
    %s125 = sphi 0, %s125
    %s127 = sphi 0, %s125
    %s128 = sphi 0, %s127
    %s142 = sphi 0, %s128
    %s146 = sphi 0, %s146
    %s148 = sphi 0, %s146
    %s149 = sphi 0, %s148
    %s163 = sphi 0, %s149
    %s167 = sphi 0, %s167
    %s169 = sphi 0, %s167
    %s170 = sphi 0, %s169
    %s184 = sphi 0, %s170
    %s188 = sphi 0, %s188
    %s190 = sphi 0, %s188
    %s191 = sphi 0, %s190
    %s205 = sphi 0, %s191
    %s209 = sphi 0, %s209
    %s211 = sphi 0, %s209
    %s212 = sphi 0, %s211
    %s226 = sphi 0, %s212
    %s230 = sphi 0, %s230
    %s232 = sphi 0, %s230
    %s233 = sphi 0, %s232
    %s247 = sphi 0, %s233
    %s251 = sphi 0, %s251
    %s253 = sphi 0, %s251
    %s254 = sphi 0, %s253
    %s268 = sphi 0, %s254
    %s272 = sphi 0, %s272
    %s274 = sphi 0, %s272
    %s275 = sphi 0, %s274
    %s289 = sphi 0, %s275
    %s293 = sphi 0, %s293
    %s295 = sphi 0, %s293
    %s296 = sphi 0, %s295
    %s310 = sphi 0, %s296
    %s314 = sphi 0, %s314
    %s316 = sphi 0, %s314
    %s317 = sphi 0, %s316
    %s331 = sphi 0, %s317
    %s335 = sphi 0, %s335
    %s337 = sphi 0, %s335
    %s338 = sphi 0, %s337
    %s352 = sphi 0, %s338
    %s356 = sphi 0, %s356
    %s358 = sphi 0, %s356
    %s359 = sphi 0, %s358
    %s373 = sphi 0, %s359
    %s377 = sphi 0, %s377
    %s379 = sphi 0, %s377
    %s380 = sphi 0, %s379
    %s394 = sphi 0, %s380
    %s398 = sphi 0, %s398
    %s400 = sphi 0, %s398
    %s401 = sphi 0, %s400
    %s415 = sphi 0, %s401
    %s419 = sphi 0, %s419
    %s421 = sphi 0, %s419
    %s422 = sphi 0, %s421
    %s436 = sphi 0, %s422
    %s440 = sphi 0, %s440
    %s442 = sphi 0, %s440
    %s443 = sphi 0, %s442
    %s457 = sphi 0, %s443
    %s465 = sphi 0, %s467
    %s468 = sphi 0, %s465
    %s469 = sphi 0, %s468
    %s485 = sphi 0, %s469
  $region4: #{encoder_forward.17} parent=0 // loop_header_branch
    %28 = sbr.rel (%p26) target = $region8
  $region5: #{encoder_forward.17} parent=0 // loop_body
    %s30 = ssub.s32 %s25, 1
    %s31 = ssub.s32 %s25, 2
    %s38 = sadd.s32 1, %s33
    %p39 = scmp.ge.s32.totalorder %s38, 1
    %s40 = scalar_select %p39, 0, %s38
    %s41 = sadd.s32 1, %s32
    %s42 = scalar_select %p39, %s41, %s32
    %p43 = scmp.ge.s32.totalorder %s42, 2
    %s44 = scalar_select %p43, 0, %s42
    %s45 = ssub.s32 %s32, %s44
    %s46 = ssub.s32 %s33, %s40
    %s47 = sor.u32 %s45, %s46
    %p48 = scmp.eq.s32.totalorder %s47, 0
    %s50 = sadd.s32 %s49, 1
    %s51 = scalar_select %p48, %s49, %s50
    %p54 = pneg %p48
    %p55 = scmp.eq.s32.totalorder %s25, 1
    %p56 = por %p54, %p55
    %p57 = scmp.ne.s32.totalorder %s49, %s52
    %p58 = scmp.eq.s32.totalorder %s25, 0
    %p59 = por %p57, %p58
    %p60 = scmp.ne.s32.totalorder %s49, %s52
    %p61 = scmp.eq.s32.totalorder %s30, 1
    %p62 = por %p60, %p61
    %p63 = scmp.ne.s32.totalorder %s52, %s53
    %p64 = scmp.eq.s32.totalorder %s30, 0
    %p65 = por %p63, %p64
    %p66 = scmp.ne.s32.totalorder %s52, %s53
    %p67 = scmp.eq.s32.totalorder %s31, 1
    %p68 = por %p66, %p67
    %p70 = scmp.ne.s32.totalorder %s53, %s69
    %p71 = scmp.eq.s32.totalorder %s31, 0
    %p72 = por %p70, %p71
    %s73 = ssub.s32 %s32, %s44
    %p74 = scmp.eq.s32.totalorder %s73, 0
    %s76 = sadd.s32 %s75, 1
    %s77 = scalar_select %p74, %s75, %s76
    %p80 = pneg %p74
    %p81 = scmp.eq.s32.totalorder %s25, 1
    %p82 = por %p80, %p81
    %p83 = scmp.ne.s32.totalorder %s75, %s78
    %p84 = scmp.eq.s32.totalorder %s25, 0
    %p85 = por %p83, %p84
    %p86 = scmp.ne.s32.totalorder %s75, %s78
    %p87 = scmp.eq.s32.totalorder %s30, 1
    %p88 = por %p86, %p87
    %p89 = scmp.ne.s32.totalorder %s78, %s79
    %p90 = scmp.eq.s32.totalorder %s30, 0
    %p91 = por %p89, %p90
    %p92 = scmp.ne.s32.totalorder %s78, %s79
    %p93 = scmp.eq.s32.totalorder %s31, 1
    %p94 = por %p92, %p93
    %p96 = scmp.ne.s32.totalorder %s79, %s95
    %p97 = scmp.eq.s32.totalorder %s31, 0
    %p98 = por %p96, %p97
    %s99 = ssub.s32 %s32, %s44
    %p100 = scmp.eq.s32.totalorder %s99, 0
    %s102 = sadd.s32 %s101, 1
    %s103 = scalar_select %p100, %s101, %s102
    %p106 = pneg %p100
    %p107 = scmp.eq.s32.totalorder %s25, 1
    %p108 = por %p106, %p107
    %p109 = scmp.ne.s32.totalorder %s101, %s104
    %p110 = scmp.eq.s32.totalorder %s25, 0
    %p111 = por %p109, %p110
    %p112 = scmp.ne.s32.totalorder %s101, %s104
    %p113 = scmp.eq.s32.totalorder %s30, 1
    %p114 = por %p112, %p113
    %p115 = scmp.ne.s32.totalorder %s104, %s105
    %p116 = scmp.eq.s32.totalorder %s30, 0
    %p117 = por %p115, %p116
    %p118 = scmp.ne.s32.totalorder %s104, %s105
    %p119 = scmp.eq.s32.totalorder %s31, 1
    %p120 = por %p118, %p119
    %p122 = scmp.ne.s32.totalorder %s105, %s121
    %p123 = scmp.eq.s32.totalorder %s31, 0
    %p124 = por %p122, %p123
    %s126 = sadd.s32 %s125, 1
    %p129 = scmp.eq.s32.totalorder %s25, 1
    %p130 = scmp.ne.s32.totalorder %s125, %s127
    %p131 = scmp.eq.s32.totalorder %s25, 0
    %p132 = por %p130, %p131
    %p133 = scmp.ne.s32.totalorder %s125, %s127
    %p134 = scmp.eq.s32.totalorder %s30, 1
    %p135 = por %p133, %p134
    %p136 = scmp.ne.s32.totalorder %s127, %s128
    %p137 = scmp.eq.s32.totalorder %s30, 0
    %p138 = por %p136, %p137
    %p139 = scmp.ne.s32.totalorder %s127, %s128
    %p140 = scmp.eq.s32.totalorder %s31, 1
    %p141 = por %p139, %p140
    %p143 = scmp.ne.s32.totalorder %s128, %s142
    %p144 = scmp.eq.s32.totalorder %s31, 0
    %p145 = por %p143, %p144
    %s147 = sadd.s32 %s146, 1
    %p150 = scmp.eq.s32.totalorder %s25, 1
    %p151 = scmp.ne.s32.totalorder %s146, %s148
    %p152 = scmp.eq.s32.totalorder %s25, 0
    %p153 = por %p151, %p152
    %p154 = scmp.ne.s32.totalorder %s146, %s148
    %p155 = scmp.eq.s32.totalorder %s30, 1
    %p156 = por %p154, %p155
    %p157 = scmp.ne.s32.totalorder %s148, %s149
    %p158 = scmp.eq.s32.totalorder %s30, 0
    %p159 = por %p157, %p158
    %p160 = scmp.ne.s32.totalorder %s148, %s149
    %p161 = scmp.eq.s32.totalorder %s31, 1
    %p162 = por %p160, %p161
    %p164 = scmp.ne.s32.totalorder %s149, %s163
    %p165 = scmp.eq.s32.totalorder %s31, 0
    %p166 = por %p164, %p165
    %s168 = sadd.s32 %s167, 1
    %p171 = scmp.eq.s32.totalorder %s25, 1
    %p172 = scmp.ne.s32.totalorder %s167, %s169
    %p173 = scmp.eq.s32.totalorder %s25, 0
    %p174 = por %p172, %p173
    %p175 = scmp.ne.s32.totalorder %s167, %s169
    %p176 = scmp.eq.s32.totalorder %s30, 1
    %p177 = por %p175, %p176
    %p178 = scmp.ne.s32.totalorder %s169, %s170
    %p179 = scmp.eq.s32.totalorder %s30, 0
    %p180 = por %p178, %p179
    %p181 = scmp.ne.s32.totalorder %s169, %s170
    %p182 = scmp.eq.s32.totalorder %s31, 1
    %p183 = por %p181, %p182
    %p185 = scmp.ne.s32.totalorder %s170, %s184
    %p186 = scmp.eq.s32.totalorder %s31, 0
    %p187 = por %p185, %p186
    %s189 = sadd.s32 %s188, 1
    %p192 = scmp.eq.s32.totalorder %s25, 1
    %p193 = scmp.ne.s32.totalorder %s188, %s190
    %p194 = scmp.eq.s32.totalorder %s25, 0
    %p195 = por %p193, %p194
    %p196 = scmp.ne.s32.totalorder %s188, %s190
    %p197 = scmp.eq.s32.totalorder %s30, 1
    %p198 = por %p196, %p197
    %p199 = scmp.ne.s32.totalorder %s190, %s191
    %p200 = scmp.eq.s32.totalorder %s30, 0
    %p201 = por %p199, %p200
    %p202 = scmp.ne.s32.totalorder %s190, %s191
    %p203 = scmp.eq.s32.totalorder %s31, 1
    %p204 = por %p202, %p203
    %p206 = scmp.ne.s32.totalorder %s191, %s205
    %p207 = scmp.eq.s32.totalorder %s31, 0
    %p208 = por %p206, %p207
    %s210 = sadd.s32 %s209, 1
    %p213 = scmp.eq.s32.totalorder %s25, 1
    %p214 = scmp.ne.s32.totalorder %s209, %s211
    %p215 = scmp.eq.s32.totalorder %s25, 0
    %p216 = por %p214, %p215
    %p217 = scmp.ne.s32.totalorder %s209, %s211
    %p218 = scmp.eq.s32.totalorder %s30, 1
    %p219 = por %p217, %p218
    %p220 = scmp.ne.s32.totalorder %s211, %s212
    %p221 = scmp.eq.s32.totalorder %s30, 0
    %p222 = por %p220, %p221
    %p223 = scmp.ne.s32.totalorder %s211, %s212
    %p224 = scmp.eq.s32.totalorder %s31, 1
    %p225 = por %p223, %p224
    %p227 = scmp.ne.s32.totalorder %s212, %s226
    %p228 = scmp.eq.s32.totalorder %s31, 0
    %p229 = por %p227, %p228
    %s231 = sadd.s32 %s230, 1
    %p234 = scmp.eq.s32.totalorder %s25, 1
    %p235 = scmp.ne.s32.totalorder %s230, %s232
    %p236 = scmp.eq.s32.totalorder %s25, 0
    %p237 = por %p235, %p236
    %p238 = scmp.ne.s32.totalorder %s230, %s232
    %p239 = scmp.eq.s32.totalorder %s30, 1
    %p240 = por %p238, %p239
    %p241 = scmp.ne.s32.totalorder %s232, %s233
    %p242 = scmp.eq.s32.totalorder %s30, 0
    %p243 = por %p241, %p242
    %p244 = scmp.ne.s32.totalorder %s232, %s233
    %p245 = scmp.eq.s32.totalorder %s31, 1
    %p246 = por %p244, %p245
    %p248 = scmp.ne.s32.totalorder %s233, %s247
    %p249 = scmp.eq.s32.totalorder %s31, 0
    %p250 = por %p248, %p249
    %s252 = sadd.s32 %s251, 1
    %p255 = scmp.eq.s32.totalorder %s25, 1
    %p256 = scmp.ne.s32.totalorder %s251, %s253
    %p257 = scmp.eq.s32.totalorder %s25, 0
    %p258 = por %p256, %p257
    %p259 = scmp.ne.s32.totalorder %s251, %s253
    %p260 = scmp.eq.s32.totalorder %s30, 1
    %p261 = por %p259, %p260
    %p262 = scmp.ne.s32.totalorder %s253, %s254
    %p263 = scmp.eq.s32.totalorder %s30, 0
    %p264 = por %p262, %p263
    %p265 = scmp.ne.s32.totalorder %s253, %s254
    %p266 = scmp.eq.s32.totalorder %s31, 1
    %p267 = por %p265, %p266
    %p269 = scmp.ne.s32.totalorder %s254, %s268
    %p270 = scmp.eq.s32.totalorder %s31, 0
    %p271 = por %p269, %p270
    %s273 = sadd.s32 %s272, 1
    %p276 = scmp.eq.s32.totalorder %s25, 1
    %p277 = scmp.ne.s32.totalorder %s272, %s274
    %p278 = scmp.eq.s32.totalorder %s25, 0
    %p279 = por %p277, %p278
    %p280 = scmp.ne.s32.totalorder %s272, %s274
    %p281 = scmp.eq.s32.totalorder %s30, 1
    %p282 = por %p280, %p281
    %p283 = scmp.ne.s32.totalorder %s274, %s275
    %p284 = scmp.eq.s32.totalorder %s30, 0
    %p285 = por %p283, %p284
    %p286 = scmp.ne.s32.totalorder %s274, %s275
    %p287 = scmp.eq.s32.totalorder %s31, 1
    %p288 = por %p286, %p287
    %p290 = scmp.ne.s32.totalorder %s275, %s289
    %p291 = scmp.eq.s32.totalorder %s31, 0
    %p292 = por %p290, %p291
    %s294 = sadd.s32 %s293, 1
    %p297 = scmp.eq.s32.totalorder %s25, 1
    %p298 = scmp.ne.s32.totalorder %s293, %s295
    %p299 = scmp.eq.s32.totalorder %s25, 0
    %p300 = por %p298, %p299
    %p301 = scmp.ne.s32.totalorder %s293, %s295
    %p302 = scmp.eq.s32.totalorder %s30, 1
    %p303 = por %p301, %p302
    %p304 = scmp.ne.s32.totalorder %s295, %s296
    %p305 = scmp.eq.s32.totalorder %s30, 0
    %p306 = por %p304, %p305
    %p307 = scmp.ne.s32.totalorder %s295, %s296
    %p308 = scmp.eq.s32.totalorder %s31, 1
    %p309 = por %p307, %p308
    %p311 = scmp.ne.s32.totalorder %s296, %s310
    %p312 = scmp.eq.s32.totalorder %s31, 0
    %p313 = por %p311, %p312
    %s315 = sadd.s32 %s314, 1
    %p318 = scmp.eq.s32.totalorder %s25, 1
    %p319 = scmp.ne.s32.totalorder %s314, %s316
    %p320 = scmp.eq.s32.totalorder %s25, 0
    %p321 = por %p319, %p320
    %p322 = scmp.ne.s32.totalorder %s314, %s316
    %p323 = scmp.eq.s32.totalorder %s30, 1
    %p324 = por %p322, %p323
    %p325 = scmp.ne.s32.totalorder %s316, %s317
    %p326 = scmp.eq.s32.totalorder %s30, 0
    %p327 = por %p325, %p326
    %p328 = scmp.ne.s32.totalorder %s316, %s317
    %p329 = scmp.eq.s32.totalorder %s31, 1
    %p330 = por %p328, %p329
    %p332 = scmp.ne.s32.totalorder %s317, %s331
    %p333 = scmp.eq.s32.totalorder %s31, 0
    %p334 = por %p332, %p333
    %s336 = sadd.s32 %s335, 1
    %p339 = scmp.eq.s32.totalorder %s25, 1
    %p340 = scmp.ne.s32.totalorder %s335, %s337
    %p341 = scmp.eq.s32.totalorder %s25, 0
    %p342 = por %p340, %p341
    %p343 = scmp.ne.s32.totalorder %s335, %s337
    %p344 = scmp.eq.s32.totalorder %s30, 1
    %p345 = por %p343, %p344
    %p346 = scmp.ne.s32.totalorder %s337, %s338
    %p347 = scmp.eq.s32.totalorder %s30, 0
    %p348 = por %p346, %p347
    %p349 = scmp.ne.s32.totalorder %s337, %s338
    %p350 = scmp.eq.s32.totalorder %s31, 1
    %p351 = por %p349, %p350
    %p353 = scmp.ne.s32.totalorder %s338, %s352
    %p354 = scmp.eq.s32.totalorder %s31, 0
    %p355 = por %p353, %p354
    %s357 = sadd.s32 %s356, 1
    %p360 = scmp.eq.s32.totalorder %s25, 1
    %p361 = scmp.ne.s32.totalorder %s356, %s358
    %p362 = scmp.eq.s32.totalorder %s25, 0
    %p363 = por %p361, %p362
    %p364 = scmp.ne.s32.totalorder %s356, %s358
    %p365 = scmp.eq.s32.totalorder %s30, 1
    %p366 = por %p364, %p365
    %p367 = scmp.ne.s32.totalorder %s358, %s359
    %p368 = scmp.eq.s32.totalorder %s30, 0
    %p369 = por %p367, %p368
    %p370 = scmp.ne.s32.totalorder %s358, %s359
    %p371 = scmp.eq.s32.totalorder %s31, 1
    %p372 = por %p370, %p371
    %p374 = scmp.ne.s32.totalorder %s359, %s373
    %p375 = scmp.eq.s32.totalorder %s31, 0
    %p376 = por %p374, %p375
    %s378 = sadd.s32 %s377, 1
    %p381 = scmp.eq.s32.totalorder %s25, 1
    %p382 = scmp.ne.s32.totalorder %s377, %s379
    %p383 = scmp.eq.s32.totalorder %s25, 0
    %p384 = por %p382, %p383
    %p385 = scmp.ne.s32.totalorder %s377, %s379
    %p386 = scmp.eq.s32.totalorder %s30, 1
    %p387 = por %p385, %p386
    %p388 = scmp.ne.s32.totalorder %s379, %s380
    %p389 = scmp.eq.s32.totalorder %s30, 0
    %p390 = por %p388, %p389
    %p391 = scmp.ne.s32.totalorder %s379, %s380
    %p392 = scmp.eq.s32.totalorder %s31, 1
    %p393 = por %p391, %p392
    %p395 = scmp.ne.s32.totalorder %s380, %s394
    %p396 = scmp.eq.s32.totalorder %s31, 0
    %p397 = por %p395, %p396
    %s399 = sadd.s32 %s398, 1
    %p402 = scmp.eq.s32.totalorder %s25, 1
    %p403 = scmp.ne.s32.totalorder %s398, %s400
    %p404 = scmp.eq.s32.totalorder %s25, 0
    %p405 = por %p403, %p404
    %p406 = scmp.ne.s32.totalorder %s398, %s400
    %p407 = scmp.eq.s32.totalorder %s30, 1
    %p408 = por %p406, %p407
    %p409 = scmp.ne.s32.totalorder %s400, %s401
    %p410 = scmp.eq.s32.totalorder %s30, 0
    %p411 = por %p409, %p410
    %p412 = scmp.ne.s32.totalorder %s400, %s401
    %p413 = scmp.eq.s32.totalorder %s31, 1
    %p414 = por %p412, %p413
    %p416 = scmp.ne.s32.totalorder %s401, %s415
    %p417 = scmp.eq.s32.totalorder %s31, 0
    %p418 = por %p416, %p417
    %s420 = sadd.s32 %s419, 1
    %p423 = scmp.eq.s32.totalorder %s25, 1
    %p424 = scmp.ne.s32.totalorder %s419, %s421
    %p425 = scmp.eq.s32.totalorder %s25, 0
    %p426 = por %p424, %p425
    %p427 = scmp.ne.s32.totalorder %s419, %s421
    %p428 = scmp.eq.s32.totalorder %s30, 1
    %p429 = por %p427, %p428
    %p430 = scmp.ne.s32.totalorder %s421, %s422
    %p431 = scmp.eq.s32.totalorder %s30, 0
    %p432 = por %p430, %p431
    %p433 = scmp.ne.s32.totalorder %s421, %s422
    %p434 = scmp.eq.s32.totalorder %s31, 1
    %p435 = por %p433, %p434
    %p437 = scmp.ne.s32.totalorder %s422, %s436
    %p438 = scmp.eq.s32.totalorder %s31, 0
    %p439 = por %p437, %p438
    %s441 = sadd.s32 %s440, 1
    %p444 = scmp.eq.s32.totalorder %s25, 1
    %p445 = scmp.ne.s32.totalorder %s440, %s442
    %p446 = scmp.eq.s32.totalorder %s25, 0
    %p447 = por %p445, %p446
    %p448 = scmp.ne.s32.totalorder %s440, %s442
    %p449 = scmp.eq.s32.totalorder %s30, 1
    %p450 = por %p448, %p449
    %p451 = scmp.ne.s32.totalorder %s442, %s443
    %p452 = scmp.eq.s32.totalorder %s30, 0
    %p453 = por %p451, %p452
    %p454 = scmp.ne.s32.totalorder %s442, %s443
    %p455 = scmp.eq.s32.totalorder %s31, 1
    %p456 = por %p454, %p455
    %p458 = scmp.ne.s32.totalorder %s443, %s457
    %p459 = scmp.eq.s32.totalorder %s31, 0
    %p460 = por %p458, %p459
    %s461 = ssub.s32 %s32, %s44
    %s462 = ssub.s32 %s33, %s40
    %s463 = sor.u32 %s461, %s462
    %p464 = scmp.eq.s32.totalorder %s463, 0
    %s466 = sadd.s32 %s465, 1
    %s467 = scalar_select %p464, %s465, %s466
    %p470 = pneg %p464
    %p471 = scmp.eq.s32.totalorder %s25, 1
    %p472 = por %p470, %p471
    %p473 = scmp.ne.s32.totalorder %s465, %s468
    %p474 = scmp.eq.s32.totalorder %s25, 0
    %p475 = por %p473, %p474
    %p476 = scmp.ne.s32.totalorder %s465, %s468
    %p477 = scmp.eq.s32.totalorder %s30, 1
    %p478 = por %p476, %p477
    %p479 = scmp.ne.s32.totalorder %s468, %s469
    %p480 = scmp.eq.s32.totalorder %s30, 0
    %p481 = por %p479, %p480
    %p482 = scmp.ne.s32.totalorder %s468, %s469
    %p483 = scmp.eq.s32.totalorder %s31, 1
    %p484 = por %p482, %p483
    %p486 = scmp.ne.s32.totalorder %s469, %s485
    %p487 = scmp.eq.s32.totalorder %s31, 0
    %p488 = por %p486, %p487
    %p489 = scmp.le.s32.totalorder 1, %s25
    %p490 = scmp.lt.s32.totalorder %s25, 3
    %p491 = pnand %p489, %p490
    %p492 = pneg %p491
    // Predicated region
    $region9: #{encoder_forward.17} parent=5 // pred_check
      _
    $region10: #{encoder_forward.17} parent=5 // pred_check_branch
      %494 = sbr.rel (%p491) target = $region12
    $region11: #{encoder_forward.17} parent=5 // pred_region
      %s495 = ssub.s32 %s25, 1
      // Predicated region
      $region13: #{encoder_forward.17} parent=11 // pred_check
        %p496 = pneg %p138
      $region14: #{encoder_forward.17} parent=11 // pred_check_branch
        %498 = sbr.rel (%p496) target = $region16
      $region15: #{encoder_forward.17} parent=11 // pred_region
        _
      $region16: #{encoder_forward.17} parent=11 // pred_fallthru
        _
      // Predicated region
      $region17: #{encoder_forward.17} parent=11 // pred_check
        %p499 = pneg %p159
      $region18: #{encoder_forward.17} parent=11 // pred_check_branch
        %501 = sbr.rel (%p499) target = $region20
      $region19: #{encoder_forward.17} parent=11 // pred_region
        _
      $region20: #{encoder_forward.17} parent=11 // pred_fallthru
        _
      // Predicated region
      $region21: #{encoder_forward.17} parent=11 // pred_check
        %p502 = pneg %p180
      $region22: #{encoder_forward.17} parent=11 // pred_check_branch
        %504 = sbr.rel (%p502) target = $region24
      $region23: #{encoder_forward.17} parent=11 // pred_region
        _
      $region24: #{encoder_forward.17} parent=11 // pred_fallthru
        _
      // Predicated region
      $region25: #{encoder_forward.17} parent=11 // pred_check
        %p505 = pneg %p201
      $region26: #{encoder_forward.17} parent=11 // pred_check_branch
        %507 = sbr.rel (%p505) target = $region28
      $region27: #{encoder_forward.17} parent=11 // pred_region
        _
      $region28: #{encoder_forward.17} parent=11 // pred_fallthru
        _
      // Predicated region
      $region29: #{encoder_forward.17} parent=11 // pred_check
        %p508 = pneg %p222
      $region30: #{encoder_forward.17} parent=11 // pred_check_branch
        %510 = sbr.rel (%p508) target = $region32
      $region31: #{encoder_forward.17} parent=11 // pred_region
        _
      $region32: #{encoder_forward.17} parent=11 // pred_fallthru
        _
      // Predicated region
      $region33: #{encoder_forward.17} parent=11 // pred_check
        %p511 = pneg %p243
      $region34: #{encoder_forward.17} parent=11 // pred_check_branch
        %513 = sbr.rel (%p511) target = $region36
      $region35: #{encoder_forward.17} parent=11 // pred_region
        _
      $region36: #{encoder_forward.17} parent=11 // pred_fallthru
        _
      // Predicated region
      $region37: #{encoder_forward.17} parent=11 // pred_check
        %p514 = pneg %p264
      $region38: #{encoder_forward.17} parent=11 // pred_check_branch
        %516 = sbr.rel (%p514) target = $region40
      $region39: #{encoder_forward.17} parent=11 // pred_region
        _
      $region40: #{encoder_forward.17} parent=11 // pred_fallthru
        _
      // Predicated region
      $region41: #{encoder_forward.17} parent=11 // pred_check
        %p517 = pneg %p285
      $region42: #{encoder_forward.17} parent=11 // pred_check_branch
        %519 = sbr.rel (%p517) target = $region44
      $region43: #{encoder_forward.17} parent=11 // pred_region
        _
      $region44: #{encoder_forward.17} parent=11 // pred_fallthru
        _
      // Predicated region
      $region45: #{encoder_forward.17} parent=11 // pred_check
        %p520 = pneg %p306
      $region46: #{encoder_forward.17} parent=11 // pred_check_branch
        %522 = sbr.rel (%p520) target = $region48
      $region47: #{encoder_forward.17} parent=11 // pred_region
        _
      $region48: #{encoder_forward.17} parent=11 // pred_fallthru
        _
      // Predicated region
      $region49: #{encoder_forward.17} parent=11 // pred_check
        %p523 = pneg %p327
      $region50: #{encoder_forward.17} parent=11 // pred_check_branch
        %525 = sbr.rel (%p523) target = $region52
      $region51: #{encoder_forward.17} parent=11 // pred_region
        _
      $region52: #{encoder_forward.17} parent=11 // pred_fallthru
        _
      // Predicated region
      $region53: #{encoder_forward.17} parent=11 // pred_check
        %p526 = pneg %p348
      $region54: #{encoder_forward.17} parent=11 // pred_check_branch
        %528 = sbr.rel (%p526) target = $region56
      $region55: #{encoder_forward.17} parent=11 // pred_region
        _
      $region56: #{encoder_forward.17} parent=11 // pred_fallthru
        _
      // Predicated region
      $region57: #{encoder_forward.17} parent=11 // pred_check
        %p529 = pneg %p369
      $region58: #{encoder_forward.17} parent=11 // pred_check_branch
        %531 = sbr.rel (%p529) target = $region60
      $region59: #{encoder_forward.17} parent=11 // pred_region
        _
      $region60: #{encoder_forward.17} parent=11 // pred_fallthru
        _
      // Predicated region
      $region61: #{encoder_forward.17} parent=11 // pred_check
        %p532 = pneg %p390
      $region62: #{encoder_forward.17} parent=11 // pred_check_branch
        %534 = sbr.rel (%p532) target = $region64
      $region63: #{encoder_forward.17} parent=11 // pred_region
        _
      $region64: #{encoder_forward.17} parent=11 // pred_fallthru
        _
      // Predicated region
      $region65: #{encoder_forward.17} parent=11 // pred_check
        %p535 = pneg %p411
      $region66: #{encoder_forward.17} parent=11 // pred_check_branch
        %537 = sbr.rel (%p535) target = $region68
      $region67: #{encoder_forward.17} parent=11 // pred_region
        _
      $region68: #{encoder_forward.17} parent=11 // pred_fallthru
        _
      // Predicated region
      $region69: #{encoder_forward.17} parent=11 // pred_check
        %p538 = pneg %p432
      $region70: #{encoder_forward.17} parent=11 // pred_check_branch
        %540 = sbr.rel (%p538) target = $region72
      $region71: #{encoder_forward.17} parent=11 // pred_region
        _
      $region72: #{encoder_forward.17} parent=11 // pred_fallthru
        _
      // Predicated region
      $region73: #{encoder_forward.17} parent=11 // pred_check
        %p541 = pneg %p453
      $region74: #{encoder_forward.17} parent=11 // pred_check_branch
        %543 = sbr.rel (%p541) target = $region76
      $region75: #{encoder_forward.17} parent=11 // pred_region
        _
      $region76: #{encoder_forward.17} parent=11 // pred_fallthru
        _
    $region12: #{encoder_forward.17} parent=5 // pred_fallthru
      _
    %p544 = scmp.lt.s32.totalorder %s25, 2
    // Predicated region
    $region77: #{encoder_forward.17} parent=5 // pred_check
      %p545 = pneg %p544
    $region78: #{encoder_forward.17} parent=5 // pred_check_branch
      %547 = sbr.rel (%p545) target = $region80
    $region79: #{encoder_forward.17} parent=5 // pred_region
      // Predicated region
      $region81: #{encoder_forward.17} parent=79 // pred_check
        %p548 = pneg %p59
      $region82: #{encoder_forward.17} parent=79 // pred_check_branch
        %550 = sbr.rel (%p548) target = $region84
      $region83: #{encoder_forward.17} parent=79 // pred_region
        %p551 = scmp.lt.s32.totalorder %s32, 1
        %s552 = scalar_select %p551, %s32, 1
        %p553 = scmp.lt.s32.totalorder %s33, 0
        %s554 = scalar_select %p553, %s33, 0
        %s555 = smul.addr %s554, 2
        %s556 = smul.addr %s552, 2
        %s557 = sadd.s32 %s555, %s556
        %s558 = smul.addr %s557, 4
        %s559 = scalar_lea.vmem %s0, %s558
      $region84: #{encoder_forward.17} parent=79 // pred_fallthru
        _
      // Predicated region
      $region85: #{encoder_forward.17} parent=79 // pred_check
        %p560 = pneg %p85
      $region86: #{encoder_forward.17} parent=79 // pred_check_branch
        %562 = sbr.rel (%p560) target = $region88
      $region87: #{encoder_forward.17} parent=79 // pred_region
        %p563 = scmp.lt.s32.totalorder %s32, 1
        %s564 = scalar_select %p563, %s32, 1
        %s565 = smul.addr %s564, 6
        %s566 = smul.addr %s565, 4
        %s567 = scalar_lea.vmem %s1, %s566
      $region88: #{encoder_forward.17} parent=79 // pred_fallthru
        _
      // Predicated region
      $region89: #{encoder_forward.17} parent=79 // pred_check
        %p568 = pneg %p111
      $region90: #{encoder_forward.17} parent=79 // pred_check_branch
        %570 = sbr.rel (%p568) target = $region92
      $region91: #{encoder_forward.17} parent=79 // pred_region
        %p571 = scmp.lt.s32.totalorder %s32, 1
        %s572 = scalar_select %p571, %s32, 1
        %s573 = scalar_lea.vmem %s2, %s572
      $region92: #{encoder_forward.17} parent=79 // pred_fallthru
        _
    $region80: #{encoder_forward.17} parent=5 // pred_fallthru
      _
    %p574 = scmp.le.s32.totalorder 1, %s25
    %p575 = scmp.lt.s32.totalorder %s25, 3
    %p576 = pnand %p574, %p575
    %p577 = pneg %p576
    // Predicated region
    $region93: #{encoder_forward.17} parent=5 // pred_check
      _
    $region94: #{encoder_forward.17} parent=5 // pred_check_branch
      %579 = sbr.rel (%p576) target = $region96
    $region95: #{encoder_forward.17} parent=5 // pred_region
      %s580 = ssub.s32 %s25, 1
      %p581 = scmp.lt.s32.totalorder %s34, 1
      %s582 = scalar_select %p581, %s34, 1
      %p583 = scmp.lt.s32.totalorder %s35, 0
      %s584 = scalar_select %p583, %s35, 0
      %s585 = smul.addr %s584, 2
      %s586 = smul.addr %s582, 2
      %s587 = sadd.s32 %s585, %s586
      %s588 = smul.addr %s587, 4
      %s589 = scalar_lea.vmem %s0, %s588
      %p590 = pneg %p65
      %p591 = pneg %p62
      %p592 = scmp.lt.s32.totalorder %s34, 1
      %s593 = scalar_select %p592, %s34, 1
      %s594 = smul.addr %s593, 6
      %s595 = smul.addr %s594, 4
      %s596 = scalar_lea.vmem %s1, %s595
      %p597 = pneg %p91
      %p598 = pneg %p88
      %p599 = scmp.lt.s32.totalorder %s34, 1
      %s600 = scalar_select %p599, %s34, 1
      %s601 = scalar_lea.vmem %s2, %s600
      %p602 = pneg %p117
      %p603 = pneg %p114
      %p604 = pneg %p138
      %p605 = pneg %p135
      %p606 = pneg %p159
      %p607 = pneg %p156
      %p608 = pneg %p180
      %p609 = pneg %p177
      %p610 = pneg %p201
      %p611 = pneg %p198
      %p612 = pneg %p222
      %p613 = pneg %p219
      %p614 = pneg %p243
      %p615 = pneg %p240
      %p616 = pneg %p264
      %p617 = pneg %p261
      %p618 = pneg %p285
      %p619 = pneg %p282
      %p620 = pneg %p306
      %p621 = pneg %p303
      %p622 = pneg %p327
      %p623 = pneg %p324
      %p624 = pneg %p348
      %p625 = pneg %p345
      %p626 = pneg %p369
      %p627 = pneg %p366
      %p628 = pneg %p390
      %p629 = pneg %p387
      %p630 = pneg %p411
      %p631 = pneg %p408
      %p632 = pneg %p432
      %p633 = pneg %p429
      %p634 = pneg %p453
      %p635 = pneg %p450
      %p636 = pneg %p481
      %p637 = pneg %p478
      %p638 = scmp.lt.s32.totalorder %s34, 1
      %s639 = scalar_select %p638, %s34, 1
      %p640 = scmp.lt.s32.totalorder %s35, 0
      %s641 = scalar_select %p640, %s35, 0
      %s642 = smul.addr %s641, 2
      %s643 = smul.addr %s639, 2
      %s644 = sadd.s32 %s642, %s643
      %s645 = smul.addr %s644, 4
      %s646 = scalar_lea.vmem %s19, %s645
      %p647 = scmp.lt.s32.totalorder %s34, 1
      %s648 = scalar_select %p647, %s34, 1
      %p649 = scmp.lt.s32.totalorder %s35, 0
      %s650 = scalar_select %p649, %s35, 0
      %s651 = smul.addr %s650, 2
      %s652 = smul.addr %s648, 2
      %s653 = sadd.s32 %s651, %s652
      %s654 = smul.addr %s653, 4
      %s655 = scalar_lea.vmem %s0, %s654
      %p656 = scmp.lt.s32.totalorder %s34, 1
      %s657 = scalar_select %p656, %s34, 1
      %s658 = smul.addr %s657, 6
      %s659 = smul.addr %s658, 4
      %s660 = scalar_lea.vmem %s1, %s659
      %p661 = scmp.lt.s32.totalorder %s34, 1
      %s662 = scalar_select %p661, %s34, 1
      %s663 = scalar_lea.vmem %s2, %s662
      %p664 = scmp.lt.s32.totalorder %s34, 1
      %s665 = scalar_select %p664, %s34, 1
      %p666 = scmp.lt.s32.totalorder %s35, 0
      %s667 = scalar_select %p666, %s35, 0
      %s668 = smul.addr %s667, 2
      %s669 = smul.addr %s665, 2
      %s670 = sadd.s32 %s668, %s669
      %s671 = smul.addr %s670, 4
      %s672 = scalar_lea.vmem %s19, %s671
      %v674 = vld [vmem:[%s655] sm:$0xff]
      %v675 = vld [vmem:[%s660] sm:$0xff]
      %v676 = vld [vmem:[%s660 + $0x8] sm:$0xff]
      %v677 = vld [vmem:[%s660 + $0x10] sm:$0xff]
      %v678 = vld [vmem:[%s663] sm:$0x1]
      %v679 = vunpack.c.l.bf16 %v674
      %v680 = vunpack.c.h.bf16 %v674
      %v681 = vld [vmem:[%s3] sm:$0xff]
      %v682 = vld [vmem:[%s3 + $0x8] sm:$0xff]
      %v683 = vld [vmem:[%s3 + $0x10] sm:$0xff]
      %v684 = vld [vmem:[%s3 + $0x18] sm:$0xff]
      %v685 = vld [vmem:[%s3 + $0x20] sm:$0xff]
      %v686 = vld [vmem:[%s3 + $0x28] sm:$0xff]
      %v687 = vld [vmem:[%s3 + $0x30] sm:$0xff]
      %v688 = vld [vmem:[%s3 + $0x38] sm:$0xff]
      %v689 = vld [vmem:[%s3 + $0x40] sm:$0xff]
      %v690 = vld [vmem:[%s3 + $0x48] sm:$0xff]
      %v691 = vld [vmem:[%s3 + $0x50] sm:$0xff]
      %v692 = vld [vmem:[%s3 + $0x58] sm:$0xff]
      %v693 = vld [vmem:[%s3 + $0x60] sm:$0xff]
      %v694 = vld [vmem:[%s3 + $0x68] sm:$0xff]
      %v695 = vld [vmem:[%s3 + $0x70] sm:$0xff]
      %v696 = vld [vmem:[%s3 + $0x78] sm:$0xff]
      %v697 = vld [vmem:[%s3 + $0x80] sm:$0xff]
      %v698 = vld [vmem:[%s3 + $0x88] sm:$0xff]
      %v699 = vld [vmem:[%s3 + $0x90] sm:$0xff]
      %v700 = vld [vmem:[%s3 + $0x98] sm:$0xff]
      %v701 = vld [vmem:[%s3 + $0xa0] sm:$0xff]
      %v702 = vld [vmem:[%s3 + $0xa8] sm:$0xff]
      %v703 = vld [vmem:[%s3 + $0xb0] sm:$0xff]
      %v704 = vld [vmem:[%s3 + $0xb8] sm:$0xff]
      %v705 = vld [vmem:[%s3 + $0xc0] sm:$0xff]
      %v706 = vld [vmem:[%s3 + $0xc8] sm:$0xff]
      %v707 = vld [vmem:[%s3 + $0xd0] sm:$0xff]
      %v708 = vld [vmem:[%s3 + $0xd8] sm:$0xff]
      %v709 = vld [vmem:[%s3 + $0xe0] sm:$0xff]
      %v710 = vld [vmem:[%s3 + $0xe8] sm:$0xff]
      %v711 = vld [vmem:[%s3 + $0xf0] sm:$0xff]
      %v712 = vld [vmem:[%s3 + $0xf8] sm:$0xff]
      %v713 = vld [vmem:[%s4] sm:$0x3]
      %v715 = vlaneseq
      %v716 = vshrl.u32 %v715, 7
      %v717 = vsub.s32 0, %v716
      %v718 = vrot.slane %v713, %v717
      %v719 = vlaneseq
      %v720 = vshrl.u32 %v719, 7
      %v721 = vsub.s32 1, %v720
      %v722 = vrot.slane %v713, %v721
      %v726 = vunpack.c.l.b16 %v674
      %v727 = vunpack.c.h.b16 %v674
      %v728 = vpack.c.b16 %v726, %v726
      %v729 = vpack.c.b16 %v727, %v727
      %v764 = vunpack.c.l.b16 %v681
      %v765 = vunpack.c.h.b16 %v681
      %v766 = vunpack.c.l.b16 %v682
      %v767 = vunpack.c.h.b16 %v682
      %v768 = vunpack.c.l.b16 %v683
      %v769 = vunpack.c.h.b16 %v683
      %v770 = vunpack.c.l.b16 %v684
      %v771 = vunpack.c.h.b16 %v684
      %v772 = vunpack.c.l.b16 %v685
      %v773 = vunpack.c.h.b16 %v685
      %v774 = vunpack.c.l.b16 %v686
      %v775 = vunpack.c.h.b16 %v686
      %v776 = vunpack.c.l.b16 %v687
      %v777 = vunpack.c.h.b16 %v687
      %v778 = vunpack.c.l.b16 %v688
      %v779 = vunpack.c.h.b16 %v688
      %v780 = vunpack.c.l.b16 %v689
      %v781 = vunpack.c.h.b16 %v689
      %v782 = vunpack.c.l.b16 %v690
      %v783 = vunpack.c.h.b16 %v690
      %v784 = vunpack.c.l.b16 %v691
      %v785 = vunpack.c.h.b16 %v691
      %v786 = vunpack.c.l.b16 %v692
      %v787 = vunpack.c.h.b16 %v692
      %v788 = vunpack.c.l.b16 %v693
      %v789 = vunpack.c.h.b16 %v693
      %v790 = vunpack.c.l.b16 %v694
      %v791 = vunpack.c.h.b16 %v694
      %v792 = vunpack.c.l.b16 %v695
      %v793 = vunpack.c.h.b16 %v695
      %v794 = vunpack.c.l.b16 %v696
      %v795 = vunpack.c.h.b16 %v696
      %v796 = vunpack.c.l.b16 %v697
      %v797 = vunpack.c.h.b16 %v697
      %v798 = vunpack.c.l.b16 %v698
      %v799 = vunpack.c.h.b16 %v698
      %v800 = vunpack.c.l.b16 %v699
      %v801 = vunpack.c.h.b16 %v699
      %v802 = vunpack.c.l.b16 %v700
      %v803 = vunpack.c.h.b16 %v700
      %v804 = vunpack.c.l.b16 %v701
      %v805 = vunpack.c.h.b16 %v701
      %v806 = vunpack.c.l.b16 %v702
      %v807 = vunpack.c.h.b16 %v702
      %v808 = vunpack.c.l.b16 %v703
      %v809 = vunpack.c.h.b16 %v703
      %v810 = vunpack.c.l.b16 %v704
      %v811 = vunpack.c.h.b16 %v704
      %v812 = vunpack.c.l.b16 %v705
      %v813 = vunpack.c.h.b16 %v705
      %v814 = vunpack.c.l.b16 %v706
      %v815 = vunpack.c.h.b16 %v706
      %v816 = vunpack.c.l.b16 %v707
      %v817 = vunpack.c.h.b16 %v707
      %v818 = vunpack.c.l.b16 %v708
      %v819 = vunpack.c.h.b16 %v708
      %v820 = vunpack.c.l.b16 %v709
      %v821 = vunpack.c.h.b16 %v709
      %v822 = vunpack.c.l.b16 %v710
      %v823 = vunpack.c.h.b16 %v710
      %v824 = vunpack.c.l.b16 %v711
      %v825 = vunpack.c.h.b16 %v711
      %v826 = vunpack.c.l.b16 %v712
      %v827 = vunpack.c.h.b16 %v712
      %v828 = vpack.c.b16 %v766, %v764
      %v829 = vpack.c.b16 %v767, %v765
      %v830 = vpack.c.b16 %v770, %v768
      %v831 = vpack.c.b16 %v771, %v769
      %v832 = vpack.c.b16 %v774, %v772
      %v833 = vpack.c.b16 %v775, %v773
      %v834 = vpack.c.b16 %v778, %v776
      %v835 = vpack.c.b16 %v779, %v777
      %v836 = vpack.c.b16 %v782, %v780
      %v837 = vpack.c.b16 %v783, %v781
      %v838 = vpack.c.b16 %v786, %v784
      %v839 = vpack.c.b16 %v787, %v785
      %v840 = vpack.c.b16 %v790, %v788
      %v841 = vpack.c.b16 %v791, %v789
      %v842 = vpack.c.b16 %v794, %v792
      %v843 = vpack.c.b16 %v795, %v793
      %v844 = vpack.c.b16 %v798, %v796
      %v845 = vpack.c.b16 %v799, %v797
      %v846 = vpack.c.b16 %v802, %v800
      %v847 = vpack.c.b16 %v803, %v801
      %v848 = vpack.c.b16 %v806, %v804
      %v849 = vpack.c.b16 %v807, %v805
      %v850 = vpack.c.b16 %v810, %v808
      %v851 = vpack.c.b16 %v811, %v809
      %v852 = vpack.c.b16 %v814, %v812
      %v853 = vpack.c.b16 %v815, %v813
      %v854 = vpack.c.b16 %v818, %v816
      %v855 = vpack.c.b16 %v819, %v817
      %v856 = vpack.c.b16 %v822, %v820
      %v857 = vpack.c.b16 %v823, %v821
      %v858 = vpack.c.b16 %v826, %v824
      %v859 = vpack.c.b16 %v827, %v825
      %892 = vmatprep.subr.bf16.mxu0 %v829
      %893 = vmatpush1.bf16.msra.mxu0 %v828
      %894 = vmatprep.subr.bf16.mxu0 %v831
      %895 = vmatpush1.bf16.msra.mxu0 %v830
      %896 = vmatprep.subr.bf16.mxu0 %v833
      %897 = vmatpush1.bf16.msra.mxu0 %v832
      %898 = vmatprep.subr.bf16.mxu0 %v835
      %899 = vmatpush1.bf16.msra.mxu0 %v834
      %900 = vmatprep.subr.bf16.mxu0 %v837
      %901 = vmatpush1.bf16.msra.mxu0 %v836
      %902 = vmatprep.subr.bf16.mxu0 %v839
      %903 = vmatpush1.bf16.msra.mxu0 %v838
      %904 = vmatprep.subr.bf16.mxu0 %v841
      %905 = vmatpush1.bf16.msra.mxu0 %v840
      %906 = vmatprep.subr.bf16.mxu0 %v843
      %907 = vmatpush1.bf16.msra.mxu0 %v842
      %908 = vmatprep.subr.bf16.mxu0 %v845
      %909 = vmatpush1.bf16.msra.mxu0 %v844
      %910 = vmatprep.subr.bf16.mxu0 %v847
      %911 = vmatpush1.bf16.msra.mxu0 %v846
      %912 = vmatprep.subr.bf16.mxu0 %v849
      %913 = vmatpush1.bf16.msra.mxu0 %v848
      %914 = vmatprep.subr.bf16.mxu0 %v851
      %915 = vmatpush1.bf16.msra.mxu0 %v850
      %916 = vmatprep.subr.bf16.mxu0 %v853
      %917 = vmatpush1.bf16.msra.mxu0 %v852
      %918 = vmatprep.subr.bf16.mxu0 %v855
      %919 = vmatpush1.bf16.msra.mxu0 %v854
      %920 = vmatprep.subr.bf16.mxu0 %v857
      %921 = vmatpush1.bf16.msra.mxu0 %v856
      %922 = vmatprep.subr.bf16.mxu0 %v859
      %923 = vmatpush1.bf16.msra.mxu0 %v858
      %924 = vmatprep.mubr.bf16.mxu0 %v729
      %925 = vmatmul.mubr.bf16.gmra.mrb[0].mxu0 %v728
      %v926 = vpop.f32.mrb[0].mxu0
      %v927 = vadd.f32 %v718, %v926
      %v928 = vpop.f32.mrb[0].mxu0
      %v929 = vadd.f32 %v722, %v928
      %v930 = vpop.f32.mrb[0].mxu0
      %v931 = vpop.f32.mrb[0].mxu0
      %932 = vdwg.mxu0
      %v933 = vmul.f32 %v927, 0.088388346
      %v934 = vmul.f32 %v929, 0.088388346
      %v935 = vld [vmem:[%s5] sm:$0xff]
      %v936 = vld [vmem:[%s5 + $0x8] sm:$0xff]
      %v937 = vld [vmem:[%s5 + $0x10] sm:$0xff]
      %v938 = vld [vmem:[%s5 + $0x18] sm:$0xff]
      %v939 = vld [vmem:[%s5 + $0x20] sm:$0xff]
      %v940 = vld [vmem:[%s5 + $0x28] sm:$0xff]
      %v941 = vld [vmem:[%s5 + $0x30] sm:$0xff]
      %v942 = vld [vmem:[%s5 + $0x38] sm:$0xff]
      %v943 = vld [vmem:[%s5 + $0x40] sm:$0xff]
      %v944 = vld [vmem:[%s5 + $0x48] sm:$0xff]
      %v945 = vld [vmem:[%s5 + $0x50] sm:$0xff]
      %v946 = vld [vmem:[%s5 + $0x58] sm:$0xff]
      %v947 = vld [vmem:[%s5 + $0x60] sm:$0xff]
      %v948 = vld [vmem:[%s5 + $0x68] sm:$0xff]
      %v949 = vld [vmem:[%s5 + $0x70] sm:$0xff]
      %v950 = vld [vmem:[%s5 + $0x78] sm:$0xff]
      %v951 = vld [vmem:[%s5 + $0x80] sm:$0xff]
      %v952 = vld [vmem:[%s5 + $0x88] sm:$0xff]
      %v953 = vld [vmem:[%s5 + $0x90] sm:$0xff]
      %v954 = vld [vmem:[%s5 + $0x98] sm:$0xff]
      %v955 = vld [vmem:[%s5 + $0xa0] sm:$0xff]
      %v956 = vld [vmem:[%s5 + $0xa8] sm:$0xff]
      %v957 = vld [vmem:[%s5 + $0xb0] sm:$0xff]
      %v958 = vld [vmem:[%s5 + $0xb8] sm:$0xff]
      %v959 = vld [vmem:[%s5 + $0xc0] sm:$0xff]
      %v960 = vld [vmem:[%s5 + $0xc8] sm:$0xff]
      %v961 = vld [vmem:[%s5 + $0xd0] sm:$0xff]
      %v962 = vld [vmem:[%s5 + $0xd8] sm:$0xff]
      %v963 = vld [vmem:[%s5 + $0xe0] sm:$0xff]
      %v964 = vld [vmem:[%s5 + $0xe8] sm:$0xff]
      %v965 = vld [vmem:[%s5 + $0xf0] sm:$0xff]
      %v966 = vld [vmem:[%s5 + $0xf8] sm:$0xff]
      %v967 = vld [vmem:[%s6] sm:$0x3]
      %v969 = vlaneseq
      %v970 = vshrl.u32 %v969, 7
      %v971 = vsub.s32 0, %v970
      %v972 = vrot.slane %v967, %v971
      %v973 = vlaneseq
      %v974 = vshrl.u32 %v973, 7
      %v975 = vsub.s32 1, %v974
      %v976 = vrot.slane %v967, %v975
      %v982 = vunpack.c.l.b16 %v675
      %v983 = vunpack.c.h.b16 %v675
      %v984 = vunpack.c.l.b16 %v676
      %v985 = vunpack.c.h.b16 %v676
      %v986 = vunpack.c.l.b16 %v677
      %v987 = vunpack.c.h.b16 %v677
      %v988 = vpack.c.b16 %v984, %v982
      %v989 = vpack.c.b16 %v985, %v983
      %v990 = vpack.c.b16 %v986, %v986
      %v991 = vpack.c.b16 %v987, %v987
      %v1028 = vunpack.c.l.b16 %v935
      %v1029 = vunpack.c.h.b16 %v935
      %v1030 = vunpack.c.l.b16 %v936
      %v1031 = vunpack.c.h.b16 %v936
      %v1032 = vunpack.c.l.b16 %v937
      %v1033 = vunpack.c.h.b16 %v937
      %v1034 = vunpack.c.l.b16 %v938
      %v1035 = vunpack.c.h.b16 %v938
      %v1036 = vunpack.c.l.b16 %v939
      %v1037 = vunpack.c.h.b16 %v939
      %v1038 = vunpack.c.l.b16 %v940
      %v1039 = vunpack.c.h.b16 %v940
      %v1040 = vunpack.c.l.b16 %v941
      %v1041 = vunpack.c.h.b16 %v941
      %v1042 = vunpack.c.l.b16 %v942
      %v1043 = vunpack.c.h.b16 %v942
      %v1044 = vunpack.c.l.b16 %v943
      %v1045 = vunpack.c.h.b16 %v943
      %v1046 = vunpack.c.l.b16 %v944
      %v1047 = vunpack.c.h.b16 %v944
      %v1048 = vunpack.c.l.b16 %v945
      %v1049 = vunpack.c.h.b16 %v945
      %v1050 = vunpack.c.l.b16 %v946
      %v1051 = vunpack.c.h.b16 %v946
      %v1052 = vunpack.c.l.b16 %v947
      %v1053 = vunpack.c.h.b16 %v947
      %v1054 = vunpack.c.l.b16 %v948
      %v1055 = vunpack.c.h.b16 %v948
      %v1056 = vunpack.c.l.b16 %v949
      %v1057 = vunpack.c.h.b16 %v949
      %v1058 = vunpack.c.l.b16 %v950
      %v1059 = vunpack.c.h.b16 %v950
      %v1060 = vunpack.c.l.b16 %v951
      %v1061 = vunpack.c.h.b16 %v951
      %v1062 = vunpack.c.l.b16 %v952
      %v1063 = vunpack.c.h.b16 %v952
      %v1064 = vunpack.c.l.b16 %v953
      %v1065 = vunpack.c.h.b16 %v953
      %v1066 = vunpack.c.l.b16 %v954
      %v1067 = vunpack.c.h.b16 %v954
      %v1068 = vunpack.c.l.b16 %v955
      %v1069 = vunpack.c.h.b16 %v955
      %v1070 = vunpack.c.l.b16 %v956
      %v1071 = vunpack.c.h.b16 %v956
      %v1072 = vunpack.c.l.b16 %v957
      %v1073 = vunpack.c.h.b16 %v957
      %v1074 = vunpack.c.l.b16 %v958
      %v1075 = vunpack.c.h.b16 %v958
      %v1076 = vunpack.c.l.b16 %v959
      %v1077 = vunpack.c.h.b16 %v959
      %v1078 = vunpack.c.l.b16 %v960
      %v1079 = vunpack.c.h.b16 %v960
      %v1080 = vunpack.c.l.b16 %v961
      %v1081 = vunpack.c.h.b16 %v961
      %v1082 = vunpack.c.l.b16 %v962
      %v1083 = vunpack.c.h.b16 %v962
      %v1084 = vunpack.c.l.b16 %v963
      %v1085 = vunpack.c.h.b16 %v963
      %v1086 = vunpack.c.l.b16 %v964
      %v1087 = vunpack.c.h.b16 %v964
      %v1088 = vunpack.c.l.b16 %v965
      %v1089 = vunpack.c.h.b16 %v965
      %v1090 = vunpack.c.l.b16 %v966
      %v1091 = vunpack.c.h.b16 %v966
      %v1092 = vpack.c.b16 %v1030, %v1028
      %v1093 = vpack.c.b16 %v1031, %v1029
      %v1094 = vpack.c.b16 %v1034, %v1032
      %v1095 = vpack.c.b16 %v1035, %v1033
      %v1096 = vpack.c.b16 %v1038, %v1036
      %v1097 = vpack.c.b16 %v1039, %v1037
      %v1098 = vpack.c.b16 %v1042, %v1040
      %v1099 = vpack.c.b16 %v1043, %v1041
      %v1100 = vpack.c.b16 %v1046, %v1044
      %v1101 = vpack.c.b16 %v1047, %v1045
      %v1102 = vpack.c.b16 %v1050, %v1048
      %v1103 = vpack.c.b16 %v1051, %v1049
      %v1104 = vpack.c.b16 %v1054, %v1052
      %v1105 = vpack.c.b16 %v1055, %v1053
      %v1106 = vpack.c.b16 %v1058, %v1056
      %v1107 = vpack.c.b16 %v1059, %v1057
      %v1108 = vpack.c.b16 %v1062, %v1060
      %v1109 = vpack.c.b16 %v1063, %v1061
      %v1110 = vpack.c.b16 %v1066, %v1064
      %v1111 = vpack.c.b16 %v1067, %v1065
      %v1112 = vpack.c.b16 %v1070, %v1068
      %v1113 = vpack.c.b16 %v1071, %v1069
      %v1114 = vpack.c.b16 %v1074, %v1072
      %v1115 = vpack.c.b16 %v1075, %v1073
      %v1116 = vpack.c.b16 %v1078, %v1076
      %v1117 = vpack.c.b16 %v1079, %v1077
      %v1118 = vpack.c.b16 %v1082, %v1080
      %v1119 = vpack.c.b16 %v1083, %v1081
      %v1120 = vpack.c.b16 %v1086, %v1084
      %v1121 = vpack.c.b16 %v1087, %v1085
      %v1122 = vpack.c.b16 %v1090, %v1088
      %v1123 = vpack.c.b16 %v1091, %v1089
      %1156 = vmatprep.subr.bf16.mxu0 %v1093
      %1157 = vmatpush1.bf16.msra.mxu0 %v1092
      %1158 = vmatprep.subr.bf16.mxu0 %v1095
      %1159 = vmatpush1.bf16.msra.mxu0 %v1094
      %1160 = vmatprep.subr.bf16.mxu0 %v1097
      %1161 = vmatpush1.bf16.msra.mxu0 %v1096
      %1162 = vmatprep.subr.bf16.mxu0 %v1099
      %1163 = vmatpush1.bf16.msra.mxu0 %v1098
      %1164 = vmatprep.subr.bf16.mxu0 %v1101
      %1165 = vmatpush1.bf16.msra.mxu0 %v1100
      %1166 = vmatprep.subr.bf16.mxu0 %v1103
      %1167 = vmatpush1.bf16.msra.mxu0 %v1102
      %1168 = vmatprep.subr.bf16.mxu0 %v1105
      %1169 = vmatpush1.bf16.msra.mxu0 %v1104
      %1170 = vmatprep.subr.bf16.mxu0 %v1107
      %1171 = vmatpush1.bf16.msra.mxu0 %v1106
      %1172 = vmatprep.subr.bf16.mxu0 %v1109
      %1173 = vmatpush1.bf16.msra.mxu0 %v1108
      %1174 = vmatprep.subr.bf16.mxu0 %v1111
      %1175 = vmatpush1.bf16.msra.mxu0 %v1110
      %1176 = vmatprep.subr.bf16.mxu0 %v1113
      %1177 = vmatpush1.bf16.msra.mxu0 %v1112
      %1178 = vmatprep.subr.bf16.mxu0 %v1115
      %1179 = vmatpush1.bf16.msra.mxu0 %v1114
      %1180 = vmatprep.subr.bf16.mxu0 %v1117
      %1181 = vmatpush1.bf16.msra.mxu0 %v1116
      %1182 = vmatprep.subr.bf16.mxu0 %v1119
      %1183 = vmatpush1.bf16.msra.mxu0 %v1118
      %1184 = vmatprep.subr.bf16.mxu0 %v1121
      %1185 = vmatpush1.bf16.msra.mxu0 %v1120
      %1186 = vmatprep.subr.bf16.mxu0 %v1123
      %1187 = vmatpush1.bf16.msra.mxu0 %v1122
      %1188 = vmatprep.mubr.bf16.mxu0 %v989
      %1189 = vmatmul.mubr.bf16.gmra.mrb[0].mxu0 %v988
      %v1190 = vpop.f32.mrb[0].mxu0
      %v1191 = vadd.f32 %v972, %v1190
      %v1192 = vpop.f32.mrb[0].mxu0
      %v1193 = vadd.f32 %v976, %v1192
      %v1194 = vpop.f32.mrb[0].mxu0
      %v1195 = vadd.f32 %v972, %v1194
      %v1196 = vpop.f32.mrb[0].mxu0
      %v1197 = vadd.f32 %v976, %v1196
      %1198 = vmatprep.mubr.bf16.mxu0 %v991
      %1199 = vmatmul.mubr.bf16.gmra.mrb[0].mxu0 %v990
      %v1200 = vpop.f32.mrb[0].mxu0
      %v1201 = vadd.f32 %v972, %v1200
      %v1202 = vpop.f32.mrb[0].mxu0
      %v1203 = vadd.f32 %v976, %v1202
      %v1204 = vpop.f32.mrb[0].mxu0
      %v1205 = vpop.f32.mrb[0].mxu0
      %1206 = vdwg.mxu0
      %v1207 = vld [vmem:[%s7] sm:$0xff]
      %v1208 = vld [vmem:[%s7 + $0x8] sm:$0xff]
      %v1209 = vld [vmem:[%s7 + $0x10] sm:$0xff]
      %v1210 = vld [vmem:[%s7 + $0x18] sm:$0xff]
      %v1211 = vld [vmem:[%s7 + $0x20] sm:$0xff]
      %v1212 = vld [vmem:[%s7 + $0x28] sm:$0xff]
      %v1213 = vld [vmem:[%s7 + $0x30] sm:$0xff]
      %v1214 = vld [vmem:[%s7 + $0x38] sm:$0xff]
      %v1215 = vld [vmem:[%s7 + $0x40] sm:$0xff]
      %v1216 = vld [vmem:[%s7 + $0x48] sm:$0xff]
      %v1217 = vld [vmem:[%s7 + $0x50] sm:$0xff]
      %v1218 = vld [vmem:[%s7 + $0x58] sm:$0xff]
      %v1219 = vld [vmem:[%s7 + $0x60] sm:$0xff]
      %v1220 = vld [vmem:[%s7 + $0x68] sm:$0xff]
      %v1221 = vld [vmem:[%s7 + $0x70] sm:$0xff]
      %v1222 = vld [vmem:[%s7 + $0x78] sm:$0xff]
      %v1223 = vld [vmem:[%s7 + $0x80] sm:$0xff]
      %v1224 = vld [vmem:[%s7 + $0x88] sm:$0xff]
      %v1225 = vld [vmem:[%s7 + $0x90] sm:$0xff]
      %v1226 = vld [vmem:[%s7 + $0x98] sm:$0xff]
      %v1227 = vld [vmem:[%s7 + $0xa0] sm:$0xff]
      %v1228 = vld [vmem:[%s7 + $0xa8] sm:$0xff]
      %v1229 = vld [vmem:[%s7 + $0xb0] sm:$0xff]
      %v1230 = vld [vmem:[%s7 + $0xb8] sm:$0xff]
      %v1231 = vld [vmem:[%s7 + $0xc0] sm:$0xff]
      %v1232 = vld [vmem:[%s7 + $0xc8] sm:$0xff]
      %v1233 = vld [vmem:[%s7 + $0xd0] sm:$0xff]
      %v1234 = vld [vmem:[%s7 + $0xd8] sm:$0xff]
      %v1235 = vld [vmem:[%s7 + $0xe0] sm:$0xff]
      %v1236 = vld [vmem:[%s7 + $0xe8] sm:$0xff]
      %v1237 = vld [vmem:[%s7 + $0xf0] sm:$0xff]
      %v1238 = vld [vmem:[%s7 + $0xf8] sm:$0xff]
      %v1239 = vld [vmem:[%s8] sm:$0x3]
      %v1241 = vlaneseq
      %v1242 = vshrl.u32 %v1241, 7
      %v1243 = vsub.s32 0, %v1242
      %v1244 = vrot.slane %v1239, %v1243
      %v1245 = vlaneseq
      %v1246 = vshrl.u32 %v1245, 7
      %v1247 = vsub.s32 1, %v1246
      %v1248 = vrot.slane %v1239, %v1247
      %v1283 = vunpack.c.l.b16 %v1207
      %v1284 = vunpack.c.h.b16 %v1207
      %v1285 = vunpack.c.l.b16 %v1208
      %v1286 = vunpack.c.h.b16 %v1208
      %v1287 = vunpack.c.l.b16 %v1209
      %v1288 = vunpack.c.h.b16 %v1209
      %v1289 = vunpack.c.l.b16 %v1210
      %v1290 = vunpack.c.h.b16 %v1210
      %v1291 = vunpack.c.l.b16 %v1211
      %v1292 = vunpack.c.h.b16 %v1211
      %v1293 = vunpack.c.l.b16 %v1212
      %v1294 = vunpack.c.h.b16 %v1212
      %v1295 = vunpack.c.l.b16 %v1213
      %v1296 = vunpack.c.h.b16 %v1213
      %v1297 = vunpack.c.l.b16 %v1214
      %v1298 = vunpack.c.h.b16 %v1214
      %v1299 = vunpack.c.l.b16 %v1215
      %v1300 = vunpack.c.h.b16 %v1215
      %v1301 = vunpack.c.l.b16 %v1216
      %v1302 = vunpack.c.h.b16 %v1216
      %v1303 = vunpack.c.l.b16 %v1217
      %v1304 = vunpack.c.h.b16 %v1217
      %v1305 = vunpack.c.l.b16 %v1218
      %v1306 = vunpack.c.h.b16 %v1218
      %v1307 = vunpack.c.l.b16 %v1219
      %v1308 = vunpack.c.h.b16 %v1219
      %v1309 = vunpack.c.l.b16 %v1220
      %v1310 = vunpack.c.h.b16 %v1220
      %v1311 = vunpack.c.l.b16 %v1221
      %v1312 = vunpack.c.h.b16 %v1221
      %v1313 = vunpack.c.l.b16 %v1222
      %v1314 = vunpack.c.h.b16 %v1222
      %v1315 = vunpack.c.l.b16 %v1223
      %v1316 = vunpack.c.h.b16 %v1223
      %v1317 = vunpack.c.l.b16 %v1224
      %v1318 = vunpack.c.h.b16 %v1224
      %v1319 = vunpack.c.l.b16 %v1225
      %v1320 = vunpack.c.h.b16 %v1225
      %v1321 = vunpack.c.l.b16 %v1226
      %v1322 = vunpack.c.h.b16 %v1226
      %v1323 = vunpack.c.l.b16 %v1227
      %v1324 = vunpack.c.h.b16 %v1227
      %v1325 = vunpack.c.l.b16 %v1228
      %v1326 = vunpack.c.h.b16 %v1228
      %v1327 = vunpack.c.l.b16 %v1229
      %v1328 = vunpack.c.h.b16 %v1229
      %v1329 = vunpack.c.l.b16 %v1230
      %v1330 = vunpack.c.h.b16 %v1230
      %v1331 = vunpack.c.l.b16 %v1231
      %v1332 = vunpack.c.h.b16 %v1231
      %v1333 = vunpack.c.l.b16 %v1232
      %v1334 = vunpack.c.h.b16 %v1232
      %v1335 = vunpack.c.l.b16 %v1233
      %v1336 = vunpack.c.h.b16 %v1233
      %v1337 = vunpack.c.l.b16 %v1234
      %v1338 = vunpack.c.h.b16 %v1234
      %v1339 = vunpack.c.l.b16 %v1235
      %v1340 = vunpack.c.h.b16 %v1235
      %v1341 = vunpack.c.l.b16 %v1236
      %v1342 = vunpack.c.h.b16 %v1236
      %v1343 = vunpack.c.l.b16 %v1237
      %v1344 = vunpack.c.h.b16 %v1237
      %v1345 = vunpack.c.l.b16 %v1238
      %v1346 = vunpack.c.h.b16 %v1238
      %v1347 = vpack.c.b16 %v1285, %v1283
      %v1348 = vpack.c.b16 %v1286, %v1284
      %v1349 = vpack.c.b16 %v1289, %v1287
      %v1350 = vpack.c.b16 %v1290, %v1288
      %v1351 = vpack.c.b16 %v1293, %v1291
      %v1352 = vpack.c.b16 %v1294, %v1292
      %v1353 = vpack.c.b16 %v1297, %v1295
      %v1354 = vpack.c.b16 %v1298, %v1296
      %v1355 = vpack.c.b16 %v1301, %v1299
      %v1356 = vpack.c.b16 %v1302, %v1300
      %v1357 = vpack.c.b16 %v1305, %v1303
      %v1358 = vpack.c.b16 %v1306, %v1304
      %v1359 = vpack.c.b16 %v1309, %v1307
      %v1360 = vpack.c.b16 %v1310, %v1308
      %v1361 = vpack.c.b16 %v1313, %v1311
      %v1362 = vpack.c.b16 %v1314, %v1312
      %v1363 = vpack.c.b16 %v1317, %v1315
      %v1364 = vpack.c.b16 %v1318, %v1316
      %v1365 = vpack.c.b16 %v1321, %v1319
      %v1366 = vpack.c.b16 %v1322, %v1320
      %v1367 = vpack.c.b16 %v1325, %v1323
      %v1368 = vpack.c.b16 %v1326, %v1324
      %v1369 = vpack.c.b16 %v1329, %v1327
      %v1370 = vpack.c.b16 %v1330, %v1328
      %v1371 = vpack.c.b16 %v1333, %v1331
      %v1372 = vpack.c.b16 %v1334, %v1332
      %v1373 = vpack.c.b16 %v1337, %v1335
      %v1374 = vpack.c.b16 %v1338, %v1336
      %v1375 = vpack.c.b16 %v1341, %v1339
      %v1376 = vpack.c.b16 %v1342, %v1340
      %v1377 = vpack.c.b16 %v1345, %v1343
      %v1378 = vpack.c.b16 %v1346, %v1344
      %1411 = vmatprep.subr.bf16.mxu0 %v1348
      %1412 = vmatpush1.bf16.msra.mxu0 %v1347
      %1413 = vmatprep.subr.bf16.mxu0 %v1350
      %1414 = vmatpush1.bf16.msra.mxu0 %v1349
      %1415 = vmatprep.subr.bf16.mxu0 %v1352
      %1416 = vmatpush1.bf16.msra.mxu0 %v1351
      %1417 = vmatprep.subr.bf16.mxu0 %v1354
      %1418 = vmatpush1.bf16.msra.mxu0 %v1353
      %1419 = vmatprep.subr.bf16.mxu0 %v1356
      %1420 = vmatpush1.bf16.msra.mxu0 %v1355
      %1421 = vmatprep.subr.bf16.mxu0 %v1358
      %1422 = vmatpush1.bf16.msra.mxu0 %v1357
      %1423 = vmatprep.subr.bf16.mxu0 %v1360
      %1424 = vmatpush1.bf16.msra.mxu0 %v1359
      %1425 = vmatprep.subr.bf16.mxu0 %v1362
      %1426 = vmatpush1.bf16.msra.mxu0 %v1361
      %1427 = vmatprep.subr.bf16.mxu0 %v1364
      %1428 = vmatpush1.bf16.msra.mxu0 %v1363
      %1429 = vmatprep.subr.bf16.mxu0 %v1366
      %1430 = vmatpush1.bf16.msra.mxu0 %v1365
      %1431 = vmatprep.subr.bf16.mxu0 %v1368
      %1432 = vmatpush1.bf16.msra.mxu0 %v1367
      %1433 = vmatprep.subr.bf16.mxu0 %v1370
      %1434 = vmatpush1.bf16.msra.mxu0 %v1369
      %1435 = vmatprep.subr.bf16.mxu0 %v1372
      %1436 = vmatpush1.bf16.msra.mxu0 %v1371
      %1437 = vmatprep.subr.bf16.mxu0 %v1374
      %1438 = vmatpush1.bf16.msra.mxu0 %v1373
      %1439 = vmatprep.subr.bf16.mxu0 %v1376
      %1440 = vmatpush1.bf16.msra.mxu0 %v1375
      %1441 = vmatprep.subr.bf16.mxu0 %v1378
      %1442 = vmatpush1.bf16.msra.mxu0 %v1377
      %1443 = vmatprep.mubr.bf16.mxu0 %v989
      %1444 = vmatmul.mubr.bf16.gmra.mrb[0].mxu0 %v988
      %v1445 = vpop.f32.mrb[0].mxu0
      %v1446 = vadd.f32 %v1244, %v1445
      %v1447 = vpop.f32.mrb[0].mxu0
      %v1448 = vadd.f32 %v1248, %v1447
      %v1449 = vpop.f32.mrb[0].mxu0
      %v1450 = vadd.f32 %v1244, %v1449
      %v1451 = vpop.f32.mrb[0].mxu0
      %v1452 = vadd.f32 %v1248, %v1451
      %1453 = vmatprep.mubr.bf16.mxu0 %v991
      %1454 = vmatmul.mubr.bf16.gmra.mrb[0].mxu0 %v990
      %v1455 = vpop.f32.mrb[0].mxu0
      %v1456 = vadd.f32 %v1244, %v1455
      %v1457 = vpop.f32.mrb[0].mxu0
      %v1458 = vadd.f32 %v1248, %v1457
      %v1459 = vpop.f32.mrb[0].mxu0
      %v1460 = vpop.f32.mrb[0].mxu0
      %1461 = vdwg.mxu0
      %v1462 = vpack.c.bf16 %v933, %v933
      %v1463 = vpack.c.bf16 %v934, %v934
      %v1464 = vpack.c.bf16 %v1195, %v1191
      %v1465 = vpack.c.bf16 %v1197, %v1193
      %v1466 = vpack.c.bf16 %v1201, %v1201
      %v1467 = vpack.c.bf16 %v1203, %v1203
      %v1468 = vpack.c.bf16 %v1450, %v1446
      %v1469 = vpack.c.bf16 %v1452, %v1448
      %v1470 = vpack.c.bf16 %v1456, %v1456
      %v1471 = vpack.c.bf16 %v1458, %v1458
      %v1473 = vlaneseq
      %v1474 = vshrl.u32 %v1473, 7
      %v1475 = vsub.s32 0, %v1474
      %v1476 = vrot.slane %v678, %v1475
      %1478 = vmatprep.subr.bf16.mxu0 0
      %1479 = vmatpush1.bf16.xpose.msra.mxu0 %v1464
      %1480 = vmatprep.subr.bf16.mxu0 0
      %1481 = vmatpush1.bf16.xpose.msra.mxu0 %v1466
      %1482 = vmatprep.subr.bf16.mxu0 0
      %1483 = vmatpush1.bf16.xpose.msra.mxu0 0
      %1484 = vmatprep.subr.bf16.mxu0 0
      %1485 = vmatpush1.bf16.xpose.msra.mxu0 0
      %1486 = vmatprep.subr.bf16.mxu0 0
      %1487 = vmatpush1.bf16.xpose.msra.mxu0 0
      %1488 = vmatprep.subr.bf16.mxu0 0
      %1489 = vmatpush1.bf16.xpose.msra.mxu0 0
      %1490 = vmatprep.subr.bf16.mxu0 0
      %1491 = vmatpush1.bf16.xpose.msra.mxu0 0
      %1492 = vmatprep.subr.bf16.mxu0 0
      %1493 = vmatpush1.bf16.xpose.msra.mxu0 0
      %1494 = vmatprep.subr.bf16.mxu0 0
      %1495 = vmatpush1.bf16.xpose.msra.mxu0 0
      %1496 = vmatprep.subr.bf16.mxu0 0
      %1497 = vmatpush1.bf16.xpose.msra.mxu0 0
      %1498 = vmatprep.subr.bf16.mxu0 0
      %1499 = vmatpush1.bf16.xpose.msra.mxu0 0
      %1500 = vmatprep.subr.bf16.mxu0 0
      %1501 = vmatpush1.bf16.xpose.msra.mxu0 0
      %1502 = vmatprep.subr.bf16.mxu0 0
      %1503 = vmatpush1.bf16.xpose.msra.mxu0 0
      %1504 = vmatprep.subr.bf16.mxu0 0
      %1505 = vmatpush1.bf16.xpose.msra.mxu0 0
      %1506 = vmatprep.subr.bf16.mxu0 0
      %1507 = vmatpush1.bf16.xpose.msra.mxu0 0
      %1508 = vmatprep.subr.bf16.mxu0 0
      %1509 = vmatpush1.bf16.xpose.msra.mxu0 0
      %1510 = vmatprep.mubr.bf16.mxu0 0
      %1511 = vmatmul.mubr.bf16.gmra.mrb[0].mxu0 %v1462
      %v1512 = vpop.f32.mrb[0].mxu0
      %v1513 = vadd.f32 %v1476, %v1512
      %v1514 = vpop.f32.mrb[0].mxu0
      %v1515 = vpop.f32.mrb[0].mxu0
      %v1516 = vpop.f32.mrb[0].mxu0
      %1517 = vdwg.mxu0
      %vm1518 = vcmask 195584
      %v1519 = vsel %vm1518, %v1513, -inf
      %1520 = vmax.xlane.f32.xlu0 %v1519
      %v1521 = vpop.xlane.xlu0 %1520
      %v1522 = vsub.f32 %v1513, %v1521
      %v1523 = vmul.f32 %v1522, 1.442695
      %v1524 = vpow.pop %v1523
      %v1525 = vsel %vm1518, %v1524, 0.0
      %1526 = vadd.xlane.f32.xlu0 %v1525
      %v1527 = vpop.xlane.xlu0 %1526
      %v1528 = vrcp.pop %v1527
      %v1529 = vmul.f32 %v1524, %v1528
      %v1530 = vpack.c.bf16 %v1529, %v1529
      %v1532 = vsel %vm1518, %v1530, 0
      %vm1534 = vcmask 1043456
      %v1536 = vsel %vm1534, %v1470, 0
      %1538 = vmatprep.subr.bf16.mxu0 0
      %1539 = vmatpush1.bf16.msra.mxu0 %v1468
      %1540 = vmatprep.subr.bf16.mxu0 0
      %1541 = vmatpush1.bf16.msra.mxu0 %v1536
      %1542 = vmatprep.subr.bf16.mxu0 0
      %1543 = vmatpush1.bf16.msra.mxu0 0
      %1544 = vmatprep.subr.bf16.mxu0 0
      %1545 = vmatpush1.bf16.msra.mxu0 0
      %1546 = vmatprep.subr.bf16.mxu0 0
      %1547 = vmatpush1.bf16.msra.mxu0 0
      %1548 = vmatprep.subr.bf16.mxu0 0
      %1549 = vmatpush1.bf16.msra.mxu0 0
      %1550 = vmatprep.subr.bf16.mxu0 0
      %1551 = vmatpush1.bf16.msra.mxu0 0
      %1552 = vmatprep.subr.bf16.mxu0 0
      %1553 = vmatpush1.bf16.msra.mxu0 0
      %1554 = vmatprep.subr.bf16.mxu0 0
      %1555 = vmatpush1.bf16.msra.mxu0 0
      %1556 = vmatprep.subr.bf16.mxu0 0
      %1557 = vmatpush1.bf16.msra.mxu0 0
      %1558 = vmatprep.subr.bf16.mxu0 0
      %1559 = vmatpush1.bf16.msra.mxu0 0
      %1560 = vmatprep.subr.bf16.mxu0 0
      %1561 = vmatpush1.bf16.msra.mxu0 0
      %1562 = vmatprep.subr.bf16.mxu0 0
      %1563 = vmatpush1.bf16.msra.mxu0 0
      %1564 = vmatprep.subr.bf16.mxu0 0
      %1565 = vmatpush1.bf16.msra.mxu0 0
      %1566 = vmatprep.subr.bf16.mxu0 0
      %1567 = vmatpush1.bf16.msra.mxu0 0
      %1568 = vmatprep.subr.bf16.mxu0 0
      %1569 = vmatpush1.bf16.msra.mxu0 0
      %1570 = vmatprep.mubr.bf16.mxu0 0
      %1571 = vmatmul.mubr.bf16.gmra.mrb[0].mxu0 %v1532
      %v1572 = vpop.f32.mrb[0].mxu0
      %v1573 = vadd.f32 0.0, %v1572
      %v1574 = vpop.f32.mrb[0].mxu0
      %v1575 = vpop.f32.mrb[0].mxu0
      %v1576 = vpop.f32.mrb[0].mxu0
      %1577 = vdwg.mxu0
      %v1578 = vpack.c.bf16 %v1573, %v1573
      %v1579 = vld [vmem:[%s9] sm:$0xff]
      %v1580 = vld [vmem:[%s9 + $0x8] sm:$0xff]
      %v1581 = vld [vmem:[%s9 + $0x10] sm:$0xff]
      %v1582 = vld [vmem:[%s9 + $0x18] sm:$0xff]
      %v1583 = vld [vmem:[%s9 + $0x20] sm:$0xff]
      %v1584 = vld [vmem:[%s9 + $0x28] sm:$0xff]
      %v1585 = vld [vmem:[%s9 + $0x30] sm:$0xff]
      %v1586 = vld [vmem:[%s9 + $0x38] sm:$0xff]
      %v1587 = vld [vmem:[%s9 + $0x40] sm:$0xff]
      %v1588 = vld [vmem:[%s9 + $0x48] sm:$0xff]
      %v1589 = vld [vmem:[%s9 + $0x50] sm:$0xff]
      %v1590 = vld [vmem:[%s9 + $0x58] sm:$0xff]
      %v1591 = vld [vmem:[%s9 + $0x60] sm:$0xff]
      %v1592 = vld [vmem:[%s9 + $0x68] sm:$0xff]
      %v1593 = vld [vmem:[%s9 + $0x70] sm:$0xff]
      %v1594 = vld [vmem:[%s9 + $0x78] sm:$0xff]
      %1595 = vmatprep.subr.bf16.mxu0 0
      %1596 = vmatpush1.bf16.xpose.msra.mxu0 %v1465
      %1597 = vmatprep.subr.bf16.mxu0 0
      %1598 = vmatpush1.bf16.xpose.msra.mxu0 %v1467
      %1599 = vmatprep.subr.bf16.mxu0 0
      %1600 = vmatpush1.bf16.xpose.msra.mxu0 0
      %1601 = vmatprep.subr.bf16.mxu0 0
      %1602 = vmatpush1.bf16.xpose.msra.mxu0 0
      %1603 = vmatprep.subr.bf16.mxu0 0
      %1604 = vmatpush1.bf16.xpose.msra.mxu0 0
      %1605 = vmatprep.subr.bf16.mxu0 0
      %1606 = vmatpush1.bf16.xpose.msra.mxu0 0
      %1607 = vmatprep.subr.bf16.mxu0 0
      %1608 = vmatpush1.bf16.xpose.msra.mxu0 0
      %1609 = vmatprep.subr.bf16.mxu0 0
      %1610 = vmatpush1.bf16.xpose.msra.mxu0 0
      %1611 = vmatprep.subr.bf16.mxu0 0
      %1612 = vmatpush1.bf16.xpose.msra.mxu0 0
      %1613 = vmatprep.subr.bf16.mxu0 0
      %1614 = vmatpush1.bf16.xpose.msra.mxu0 0
      %1615 = vmatprep.subr.bf16.mxu0 0
      %1616 = vmatpush1.bf16.xpose.msra.mxu0 0
      %1617 = vmatprep.subr.bf16.mxu0 0
      %1618 = vmatpush1.bf16.xpose.msra.mxu0 0
      %1619 = vmatprep.subr.bf16.mxu0 0
      %1620 = vmatpush1.bf16.xpose.msra.mxu0 0
      %1621 = vmatprep.subr.bf16.mxu0 0
      %1622 = vmatpush1.bf16.xpose.msra.mxu0 0
      %1623 = vmatprep.subr.bf16.mxu0 0
      %1624 = vmatpush1.bf16.xpose.msra.mxu0 0
      %1625 = vmatprep.subr.bf16.mxu0 0
      %1626 = vmatpush1.bf16.xpose.msra.mxu0 0
      %1627 = vmatprep.mubr.bf16.mxu0 0
      %1628 = vmatmul.mubr.bf16.gmra.mrb[0].mxu0 %v1463
      %v1629 = vpop.f32.mrb[0].mxu0
      %v1630 = vadd.f32 %v1476, %v1629
      %v1631 = vpop.f32.mrb[0].mxu0
      %v1632 = vpop.f32.mrb[0].mxu0
      %v1633 = vpop.f32.mrb[0].mxu0
      %1634 = vdwg.mxu0
      %v1635 = vsel %vm1518, %v1630, -inf
      %1636 = vmax.xlane.f32.xlu0 %v1635
      %v1637 = vpop.xlane.xlu0 %1636
      %v1638 = vsub.f32 %v1630, %v1637
      %v1639 = vmul.f32 %v1638, 1.442695
      %v1640 = vpow.pop %v1639
      %v1641 = vsel %vm1518, %v1640, 0.0
      %1642 = vadd.xlane.f32.xlu0 %v1641
      %v1643 = vpop.xlane.xlu0 %1642
      %v1644 = vrcp.pop %v1643
      %v1645 = vmul.f32 %v1640, %v1644
      %v1646 = vpack.c.bf16 %v1645, %v1645
      %v1648 = vsel %vm1518, %v1646, 0
      %v1651 = vsel %vm1534, %v1471, 0
      %1653 = vmatprep.subr.bf16.mxu0 0
      %1654 = vmatpush1.bf16.msra.mxu0 %v1469
      %1655 = vmatprep.subr.bf16.mxu0 0
      %1656 = vmatpush1.bf16.msra.mxu0 %v1651
      %1657 = vmatprep.subr.bf16.mxu0 0
      %1658 = vmatpush1.bf16.msra.mxu0 0
      %1659 = vmatprep.subr.bf16.mxu0 0
      %1660 = vmatpush1.bf16.msra.mxu0 0
      %1661 = vmatprep.subr.bf16.mxu0 0
      %1662 = vmatpush1.bf16.msra.mxu0 0
      %1663 = vmatprep.subr.bf16.mxu0 0
      %1664 = vmatpush1.bf16.msra.mxu0 0
      %1665 = vmatprep.subr.bf16.mxu0 0
      %1666 = vmatpush1.bf16.msra.mxu0 0
      %1667 = vmatprep.subr.bf16.mxu0 0
      %1668 = vmatpush1.bf16.msra.mxu0 0
      %1669 = vmatprep.subr.bf16.mxu0 0
      %1670 = vmatpush1.bf16.msra.mxu0 0
      %1671 = vmatprep.subr.bf16.mxu0 0
      %1672 = vmatpush1.bf16.msra.mxu0 0
      %1673 = vmatprep.subr.bf16.mxu0 0
      %1674 = vmatpush1.bf16.msra.mxu0 0
      %1675 = vmatprep.subr.bf16.mxu0 0
      %1676 = vmatpush1.bf16.msra.mxu0 0
      %1677 = vmatprep.subr.bf16.mxu0 0
      %1678 = vmatpush1.bf16.msra.mxu0 0
      %1679 = vmatprep.subr.bf16.mxu0 0
      %1680 = vmatpush1.bf16.msra.mxu0 0
      %1681 = vmatprep.subr.bf16.mxu0 0
      %1682 = vmatpush1.bf16.msra.mxu0 0
      %1683 = vmatprep.subr.bf16.mxu0 0
      %1684 = vmatpush1.bf16.msra.mxu0 0
      %1685 = vmatprep.mubr.bf16.mxu0 0
      %1686 = vmatmul.mubr.bf16.gmra.mrb[0].mxu0 %v1648
      %v1687 = vpop.f32.mrb[0].mxu0
      %v1688 = vadd.f32 0.0, %v1687
      %v1689 = vpop.f32.mrb[0].mxu0
      %v1690 = vpop.f32.mrb[0].mxu0
      %v1691 = vpop.f32.mrb[0].mxu0
      %1692 = vdwg.mxu0
      %v1693 = vpack.c.bf16 %v1688, %v1688
      %s1694 = scalar_lea.vmem %s9, 128
      %v1695 = vld [vmem:[%s1694] sm:$0xff]
      %v1696 = vld [vmem:[%s1694 + $0x8] sm:$0xff]
      %v1697 = vld [vmem:[%s1694 + $0x10] sm:$0xff]
      %v1698 = vld [vmem:[%s1694 + $0x18] sm:$0xff]
      %v1699 = vld [vmem:[%s1694 + $0x20] sm:$0xff]
      %v1700 = vld [vmem:[%s1694 + $0x28] sm:$0xff]
      %v1701 = vld [vmem:[%s1694 + $0x30] sm:$0xff]
      %v1702 = vld [vmem:[%s1694 + $0x38] sm:$0xff]
      %v1703 = vld [vmem:[%s1694 + $0x40] sm:$0xff]
      %v1704 = vld [vmem:[%s1694 + $0x48] sm:$0xff]
      %v1705 = vld [vmem:[%s1694 + $0x50] sm:$0xff]
      %v1706 = vld [vmem:[%s1694 + $0x58] sm:$0xff]
      %v1707 = vld [vmem:[%s1694 + $0x60] sm:$0xff]
      %v1708 = vld [vmem:[%s1694 + $0x68] sm:$0xff]
      %v1709 = vld [vmem:[%s1694 + $0x70] sm:$0xff]
      %v1710 = vld [vmem:[%s1694 + $0x78] sm:$0xff]
      %v1727 = vunpack.c.l.b16 %v1695
      %v1728 = vunpack.c.h.b16 %v1695
      %v1729 = vunpack.c.l.b16 %v1696
      %v1730 = vunpack.c.h.b16 %v1696
      %v1731 = vunpack.c.l.b16 %v1697
      %v1732 = vunpack.c.h.b16 %v1697
      %v1733 = vunpack.c.l.b16 %v1698
      %v1734 = vunpack.c.h.b16 %v1698
      %v1735 = vunpack.c.l.b16 %v1699
      %v1736 = vunpack.c.h.b16 %v1699
      %v1737 = vunpack.c.l.b16 %v1700
      %v1738 = vunpack.c.h.b16 %v1700
      %v1739 = vunpack.c.l.b16 %v1701
      %v1740 = vunpack.c.h.b16 %v1701
      %v1741 = vunpack.c.l.b16 %v1702
      %v1742 = vunpack.c.h.b16 %v1702
      %v1743 = vunpack.c.l.b16 %v1703
      %v1744 = vunpack.c.h.b16 %v1703
      %v1745 = vunpack.c.l.b16 %v1704
      %v1746 = vunpack.c.h.b16 %v1704
      %v1747 = vunpack.c.l.b16 %v1705
      %v1748 = vunpack.c.h.b16 %v1705
      %v1749 = vunpack.c.l.b16 %v1706
      %v1750 = vunpack.c.h.b16 %v1706
      %v1751 = vunpack.c.l.b16 %v1707
      %v1752 = vunpack.c.h.b16 %v1707
      %v1753 = vunpack.c.l.b16 %v1708
      %v1754 = vunpack.c.h.b16 %v1708
      %v1755 = vunpack.c.l.b16 %v1709
      %v1756 = vunpack.c.h.b16 %v1709
      %v1757 = vunpack.c.l.b16 %v1710
      %v1758 = vunpack.c.h.b16 %v1710
      %v1759 = vpack.c.b16 %v1729, %v1727
      %v1760 = vpack.c.b16 %v1730, %v1728
      %v1761 = vpack.c.b16 %v1733, %v1731
      %v1762 = vpack.c.b16 %v1734, %v1732
      %v1763 = vpack.c.b16 %v1737, %v1735
      %v1764 = vpack.c.b16 %v1738, %v1736
      %v1765 = vpack.c.b16 %v1741, %v1739
      %v1766 = vpack.c.b16 %v1742, %v1740
      %v1767 = vpack.c.b16 %v1745, %v1743
      %v1768 = vpack.c.b16 %v1746, %v1744
      %v1769 = vpack.c.b16 %v1749, %v1747
      %v1770 = vpack.c.b16 %v1750, %v1748
      %v1771 = vpack.c.b16 %v1753, %v1751
      %v1772 = vpack.c.b16 %v1754, %v1752
      %v1773 = vpack.c.b16 %v1757, %v1755
      %v1774 = vpack.c.b16 %v1758, %v1756
      %1791 = vmatprep.subr.bf16.mxu0 %v1760
      %1792 = vmatpush1.bf16.msra.mxu0 %v1759
      %1793 = vmatprep.subr.bf16.mxu0 %v1762
      %1794 = vmatpush1.bf16.msra.mxu0 %v1761
      %1795 = vmatprep.subr.bf16.mxu0 %v1764
      %1796 = vmatpush1.bf16.msra.mxu0 %v1763
      %1797 = vmatprep.subr.bf16.mxu0 %v1766
      %1798 = vmatpush1.bf16.msra.mxu0 %v1765
      %1799 = vmatprep.subr.bf16.mxu0 %v1768
      %1800 = vmatpush1.bf16.msra.mxu0 %v1767
      %1801 = vmatprep.subr.bf16.mxu0 %v1770
      %1802 = vmatpush1.bf16.msra.mxu0 %v1769
      %1803 = vmatprep.subr.bf16.mxu0 %v1772
      %1804 = vmatpush1.bf16.msra.mxu0 %v1771
      %1805 = vmatprep.subr.bf16.mxu0 %v1774
      %1806 = vmatpush1.bf16.msra.mxu0 %v1773
      %1807 = vmatprep.subr.bf16.mxu0 0
      %1808 = vmatpush1.bf16.msra.mxu0 0
      %1809 = vmatprep.subr.bf16.mxu0 0
      %1810 = vmatpush1.bf16.msra.mxu0 0
      %1811 = vmatprep.subr.bf16.mxu0 0
      %1812 = vmatpush1.bf16.msra.mxu0 0
      %1813 = vmatprep.subr.bf16.mxu0 0
      %1814 = vmatpush1.bf16.msra.mxu0 0
      %1815 = vmatprep.subr.bf16.mxu0 0
      %1816 = vmatpush1.bf16.msra.mxu0 0
      %1817 = vmatprep.subr.bf16.mxu0 0
      %1818 = vmatpush1.bf16.msra.mxu0 0
      %1819 = vmatprep.subr.bf16.mxu0 0
      %1820 = vmatpush1.bf16.msra.mxu0 0
      %1821 = vmatprep.subr.bf16.mxu0 0
      %1822 = vmatpush1.bf16.msra.mxu0 0
      %1823 = vmatprep.mubr.bf16.mxu0 0
      %1824 = vmatmul.mubr.bf16.gmra.mrb[0].mxu0 %v1693
      %v1825 = vpop.f32.mrb[0].mxu0
      %v1826 = vadd.f32 0.0, %v1825
      %v1827 = vpop.f32.mrb[0].mxu0
      %v1828 = vadd.f32 0.0, %v1827
      %v1829 = vpop.f32.mrb[0].mxu0
      %v1830 = vpop.f32.mrb[0].mxu0
      %1831 = vdwg.mxu0
      %v1848 = vunpack.c.l.b16 %v1579
      %v1849 = vunpack.c.h.b16 %v1579
      %v1850 = vunpack.c.l.b16 %v1580
      %v1851 = vunpack.c.h.b16 %v1580
      %v1852 = vunpack.c.l.b16 %v1581
      %v1853 = vunpack.c.h.b16 %v1581
      %v1854 = vunpack.c.l.b16 %v1582
      %v1855 = vunpack.c.h.b16 %v1582
      %v1856 = vunpack.c.l.b16 %v1583
      %v1857 = vunpack.c.h.b16 %v1583
      %v1858 = vunpack.c.l.b16 %v1584
      %v1859 = vunpack.c.h.b16 %v1584
      %v1860 = vunpack.c.l.b16 %v1585
      %v1861 = vunpack.c.h.b16 %v1585
      %v1862 = vunpack.c.l.b16 %v1586
      %v1863 = vunpack.c.h.b16 %v1586
      %v1864 = vunpack.c.l.b16 %v1587
      %v1865 = vunpack.c.h.b16 %v1587
      %v1866 = vunpack.c.l.b16 %v1588
      %v1867 = vunpack.c.h.b16 %v1588
      %v1868 = vunpack.c.l.b16 %v1589
      %v1869 = vunpack.c.h.b16 %v1589
      %v1870 = vunpack.c.l.b16 %v1590
      %v1871 = vunpack.c.h.b16 %v1590
      %v1872 = vunpack.c.l.b16 %v1591
      %v1873 = vunpack.c.h.b16 %v1591
      %v1874 = vunpack.c.l.b16 %v1592
      %v1875 = vunpack.c.h.b16 %v1592
      %v1876 = vunpack.c.l.b16 %v1593
      %v1877 = vunpack.c.h.b16 %v1593
      %v1878 = vunpack.c.l.b16 %v1594
      %v1879 = vunpack.c.h.b16 %v1594
      %v1880 = vpack.c.b16 %v1850, %v1848
      %v1881 = vpack.c.b16 %v1851, %v1849
      %v1882 = vpack.c.b16 %v1854, %v1852
      %v1883 = vpack.c.b16 %v1855, %v1853
      %v1884 = vpack.c.b16 %v1858, %v1856
      %v1885 = vpack.c.b16 %v1859, %v1857
      %v1886 = vpack.c.b16 %v1862, %v1860
      %v1887 = vpack.c.b16 %v1863, %v1861
      %v1888 = vpack.c.b16 %v1866, %v1864
      %v1889 = vpack.c.b16 %v1867, %v1865
      %v1890 = vpack.c.b16 %v1870, %v1868
      %v1891 = vpack.c.b16 %v1871, %v1869
      %v1892 = vpack.c.b16 %v1874, %v1872
      %v1893 = vpack.c.b16 %v1875, %v1873
      %v1894 = vpack.c.b16 %v1878, %v1876
      %v1895 = vpack.c.b16 %v1879, %v1877
      %1912 = vmatprep.subr.bf16.mxu0 %v1881
      %1913 = vmatpush1.bf16.msra.mxu0 %v1880
      %1914 = vmatprep.subr.bf16.mxu0 %v1883
      %1915 = vmatpush1.bf16.msra.mxu0 %v1882
      %1916 = vmatprep.subr.bf16.mxu0 %v1885
      %1917 = vmatpush1.bf16.msra.mxu0 %v1884
      %1918 = vmatprep.subr.bf16.mxu0 %v1887
      %1919 = vmatpush1.bf16.msra.mxu0 %v1886
      %1920 = vmatprep.subr.bf16.mxu0 %v1889
      %1921 = vmatpush1.bf16.msra.mxu0 %v1888
      %1922 = vmatprep.subr.bf16.mxu0 %v1891
      %1923 = vmatpush1.bf16.msra.mxu0 %v1890
      %1924 = vmatprep.subr.bf16.mxu0 %v1893
      %1925 = vmatpush1.bf16.msra.mxu0 %v1892
      %1926 = vmatprep.subr.bf16.mxu0 %v1895
      %1927 = vmatpush1.bf16.msra.mxu0 %v1894
      %1928 = vmatprep.subr.bf16.mxu0 0
      %1929 = vmatpush1.bf16.msra.mxu0 0
      %1930 = vmatprep.subr.bf16.mxu0 0
      %1931 = vmatpush1.bf16.msra.mxu0 0
      %1932 = vmatprep.subr.bf16.mxu0 0
      %1933 = vmatpush1.bf16.msra.mxu0 0
      %1934 = vmatprep.subr.bf16.mxu0 0
      %1935 = vmatpush1.bf16.msra.mxu0 0
      %1936 = vmatprep.subr.bf16.mxu0 0
      %1937 = vmatpush1.bf16.msra.mxu0 0
      %1938 = vmatprep.subr.bf16.mxu0 0
      %1939 = vmatpush1.bf16.msra.mxu0 0
      %1940 = vmatprep.subr.bf16.mxu0 0
      %1941 = vmatpush1.bf16.msra.mxu0 0
      %1942 = vmatprep.subr.bf16.mxu0 0
      %1943 = vmatpush1.bf16.msra.mxu0 0
      %1944 = vmatprep.mubr.bf16.mxu0 0
      %1945 = vmatmul.mubr.bf16.gmra.mrb[0].mxu0 %v1578
      %v1946 = vpop.f32.mrb[0].mxu0
      %v1947 = vadd.f32 %v1826, %v1946
      %v1948 = vpop.f32.mrb[0].mxu0
      %v1949 = vadd.f32 %v1828, %v1948
      %v1950 = vpop.f32.mrb[0].mxu0
      %v1951 = vpop.f32.mrb[0].mxu0
      %1952 = vdwg.mxu0
      %v1953 = vld [vmem:[%s10] sm:$0x3]
      %v1955 = vlaneseq
      %v1956 = vshrl.u32 %v1955, 7
      %v1957 = vsub.s32 0, %v1956
      %v1958 = vrot.slane %v1953, %v1957
      %v1959 = vlaneseq
      %v1960 = vshrl.u32 %v1959, 7
      %v1961 = vsub.s32 1, %v1960
      %v1962 = vrot.slane %v1953, %v1961
      %v1965 = vadd.f32 %v1947, %v1958
      %v1966 = vadd.f32 %v1949, %v1962
      %v1967 = vadd.f32 %v679, %v1965
      %v1968 = vadd.f32 %v680, %v1966
      %v1969 = vadd.f32 %v1967, %v1968
      %1970 = vadd.xlane.f32.xlu0 %v1969
      %v1971 = vpop.xlane.xlu0 %1970
      %v1972 = vrcp.pop 256.0
      %v1973 = vmul.f32 %v1971, %v1972
      %v1974 = vsub.f32 %v1967, %v1973
      %v1975 = vsub.f32 %v1968, %v1973
      %v1976 = vmul.f32 %v1974, %v1974
      %v1977 = vmul.f32 %v1975, %v1975
      %v1978 = vadd.f32 %v1976, %v1977
      %1979 = vadd.xlane.f32.xlu0 %v1978
      %v1980 = vpop.xlane.xlu0 %1979
      %v1981 = vmul.f32 %v1980, %v1972
      %v1982 = vadd.f32 %v1981, 1e-12
      %v1983 = vrsqrt.pop %v1982
      %v1984 = vmul.f32 %v1974, %v1983
      %v1985 = vmul.f32 %v1975, %v1983
      %v1986 = vld [vmem:[%s11] sm:$0x3]
      %v1988 = vlaneseq
      %v1989 = vshrl.u32 %v1988, 7
      %v1990 = vsub.s32 0, %v1989
      %v1991 = vrot.slane %v1986, %v1990
      %v1992 = vlaneseq
      %v1993 = vshrl.u32 %v1992, 7
      %v1994 = vsub.s32 1, %v1993
      %v1995 = vrot.slane %v1986, %v1994
      %v1998 = vmul.f32 %v1991, %v1984
      %v1999 = vmul.f32 %v1995, %v1985
      %v2000 = vld [vmem:[%s12] sm:$0x3]
      %v2002 = vlaneseq
      %v2003 = vshrl.u32 %v2002, 7
      %v2004 = vsub.s32 0, %v2003
      %v2005 = vrot.slane %v2000, %v2004
      %v2006 = vlaneseq
      %v2007 = vshrl.u32 %v2006, 7
      %v2008 = vsub.s32 1, %v2007
      %v2009 = vrot.slane %v2000, %v2008
      %v2012 = vadd.f32 %v1998, %v2005
      %v2013 = vadd.f32 %v1999, %v2009
      %v2014 = vpack.c.bf16 %v2012, %v2012
      %v2015 = vpack.c.bf16 %v2013, %v2013
      %v2016 = vld [vmem:[%s13] sm:$0xff]
      %v2017 = vld [vmem:[%s13 + $0x8] sm:$0xff]
      %v2018 = vld [vmem:[%s13 + $0x10] sm:$0xff]
      %v2019 = vld [vmem:[%s13 + $0x18] sm:$0xff]
      %v2020 = vld [vmem:[%s13 + $0x20] sm:$0xff]
      %v2021 = vld [vmem:[%s13 + $0x28] sm:$0xff]
      %v2022 = vld [vmem:[%s13 + $0x30] sm:$0xff]
      %v2023 = vld [vmem:[%s13 + $0x38] sm:$0xff]
      %v2024 = vld [vmem:[%s13 + $0x40] sm:$0xff]
      %v2025 = vld [vmem:[%s13 + $0x48] sm:$0xff]
      %v2026 = vld [vmem:[%s13 + $0x50] sm:$0xff]
      %v2027 = vld [vmem:[%s13 + $0x58] sm:$0xff]
      %v2028 = vld [vmem:[%s13 + $0x60] sm:$0xff]
      %v2029 = vld [vmem:[%s13 + $0x68] sm:$0xff]
      %v2030 = vld [vmem:[%s13 + $0x70] sm:$0xff]
      %v2031 = vld [vmem:[%s13 + $0x78] sm:$0xff]
      %v2032 = vld [vmem:[%s13 + $0x80] sm:$0xff]
      %v2033 = vld [vmem:[%s13 + $0x88] sm:$0xff]
      %v2034 = vld [vmem:[%s13 + $0x90] sm:$0xff]
      %v2035 = vld [vmem:[%s13 + $0x98] sm:$0xff]
      %v2036 = vld [vmem:[%s13 + $0xa0] sm:$0xff]
      %v2037 = vld [vmem:[%s13 + $0xa8] sm:$0xff]
      %v2038 = vld [vmem:[%s13 + $0xb0] sm:$0xff]
      %v2039 = vld [vmem:[%s13 + $0xb8] sm:$0xff]
      %v2040 = vld [vmem:[%s13 + $0xc0] sm:$0xff]
      %v2041 = vld [vmem:[%s13 + $0xc8] sm:$0xff]
      %v2042 = vld [vmem:[%s13 + $0xd0] sm:$0xff]
      %v2043 = vld [vmem:[%s13 + $0xd8] sm:$0xff]
      %v2044 = vld [vmem:[%s13 + $0xe0] sm:$0xff]
      %v2045 = vld [vmem:[%s13 + $0xe8] sm:$0xff]
      %v2046 = vld [vmem:[%s13 + $0xf0] sm:$0xff]
      %v2047 = vld [vmem:[%s13 + $0xf8] sm:$0xff]
      %v2048 = vld [vmem:[%s14] sm:$0x3]
      %v2050 = vlaneseq
      %v2051 = vshrl.u32 %v2050, 7
      %v2052 = vsub.s32 0, %v2051
      %v2053 = vrot.slane %v2048, %v2052
      %v2054 = vlaneseq
      %v2055 = vshrl.u32 %v2054, 7
      %v2056 = vsub.s32 1, %v2055
      %v2057 = vrot.slane %v2048, %v2056
      %v2092 = vunpack.c.l.b16 %v2016
      %v2093 = vunpack.c.h.b16 %v2016
      %v2094 = vunpack.c.l.b16 %v2017
      %v2095 = vunpack.c.h.b16 %v2017
      %v2096 = vunpack.c.l.b16 %v2018
      %v2097 = vunpack.c.h.b16 %v2018
      %v2098 = vunpack.c.l.b16 %v2019
      %v2099 = vunpack.c.h.b16 %v2019
      %v2100 = vunpack.c.l.b16 %v2020
      %v2101 = vunpack.c.h.b16 %v2020
      %v2102 = vunpack.c.l.b16 %v2021
      %v2103 = vunpack.c.h.b16 %v2021
      %v2104 = vunpack.c.l.b16 %v2022
      %v2105 = vunpack.c.h.b16 %v2022
      %v2106 = vunpack.c.l.b16 %v2023
      %v2107 = vunpack.c.h.b16 %v2023
      %v2108 = vunpack.c.l.b16 %v2024
      %v2109 = vunpack.c.h.b16 %v2024
      %v2110 = vunpack.c.l.b16 %v2025
      %v2111 = vunpack.c.h.b16 %v2025
      %v2112 = vunpack.c.l.b16 %v2026
      %v2113 = vunpack.c.h.b16 %v2026
      %v2114 = vunpack.c.l.b16 %v2027
      %v2115 = vunpack.c.h.b16 %v2027
      %v2116 = vunpack.c.l.b16 %v2028
      %v2117 = vunpack.c.h.b16 %v2028
      %v2118 = vunpack.c.l.b16 %v2029
      %v2119 = vunpack.c.h.b16 %v2029
      %v2120 = vunpack.c.l.b16 %v2030
      %v2121 = vunpack.c.h.b16 %v2030
      %v2122 = vunpack.c.l.b16 %v2031
      %v2123 = vunpack.c.h.b16 %v2031
      %v2124 = vunpack.c.l.b16 %v2032
      %v2125 = vunpack.c.h.b16 %v2032
      %v2126 = vunpack.c.l.b16 %v2033
      %v2127 = vunpack.c.h.b16 %v2033
      %v2128 = vunpack.c.l.b16 %v2034
      %v2129 = vunpack.c.h.b16 %v2034
      %v2130 = vunpack.c.l.b16 %v2035
      %v2131 = vunpack.c.h.b16 %v2035
      %v2132 = vunpack.c.l.b16 %v2036
      %v2133 = vunpack.c.h.b16 %v2036
      %v2134 = vunpack.c.l.b16 %v2037
      %v2135 = vunpack.c.h.b16 %v2037
      %v2136 = vunpack.c.l.b16 %v2038
      %v2137 = vunpack.c.h.b16 %v2038
      %v2138 = vunpack.c.l.b16 %v2039
      %v2139 = vunpack.c.h.b16 %v2039
      %v2140 = vunpack.c.l.b16 %v2040
      %v2141 = vunpack.c.h.b16 %v2040
      %v2142 = vunpack.c.l.b16 %v2041
      %v2143 = vunpack.c.h.b16 %v2041
      %v2144 = vunpack.c.l.b16 %v2042
      %v2145 = vunpack.c.h.b16 %v2042
      %v2146 = vunpack.c.l.b16 %v2043
      %v2147 = vunpack.c.h.b16 %v2043
      %v2148 = vunpack.c.l.b16 %v2044
      %v2149 = vunpack.c.h.b16 %v2044
      %v2150 = vunpack.c.l.b16 %v2045
      %v2151 = vunpack.c.h.b16 %v2045
      %v2152 = vunpack.c.l.b16 %v2046
      %v2153 = vunpack.c.h.b16 %v2046
      %v2154 = vunpack.c.l.b16 %v2047
      %v2155 = vunpack.c.h.b16 %v2047
      %v2156 = vpack.c.b16 %v2094, %v2092
      %v2157 = vpack.c.b16 %v2095, %v2093
      %v2158 = vpack.c.b16 %v2098, %v2096
      %v2159 = vpack.c.b16 %v2099, %v2097
      %v2160 = vpack.c.b16 %v2102, %v2100
      %v2161 = vpack.c.b16 %v2103, %v2101
      %v2162 = vpack.c.b16 %v2106, %v2104
      %v2163 = vpack.c.b16 %v2107, %v2105
      %v2164 = vpack.c.b16 %v2110, %v2108
      %v2165 = vpack.c.b16 %v2111, %v2109
      %v2166 = vpack.c.b16 %v2114, %v2112
      %v2167 = vpack.c.b16 %v2115, %v2113
      %v2168 = vpack.c.b16 %v2118, %v2116
      %v2169 = vpack.c.b16 %v2119, %v2117
      %v2170 = vpack.c.b16 %v2122, %v2120
      %v2171 = vpack.c.b16 %v2123, %v2121
      %v2172 = vpack.c.b16 %v2126, %v2124
      %v2173 = vpack.c.b16 %v2127, %v2125
      %v2174 = vpack.c.b16 %v2130, %v2128
      %v2175 = vpack.c.b16 %v2131, %v2129
      %v2176 = vpack.c.b16 %v2134, %v2132
      %v2177 = vpack.c.b16 %v2135, %v2133
      %v2178 = vpack.c.b16 %v2138, %v2136
      %v2179 = vpack.c.b16 %v2139, %v2137
      %v2180 = vpack.c.b16 %v2142, %v2140
      %v2181 = vpack.c.b16 %v2143, %v2141
      %v2182 = vpack.c.b16 %v2146, %v2144
      %v2183 = vpack.c.b16 %v2147, %v2145
      %v2184 = vpack.c.b16 %v2150, %v2148
      %v2185 = vpack.c.b16 %v2151, %v2149
      %v2186 = vpack.c.b16 %v2154, %v2152
      %v2187 = vpack.c.b16 %v2155, %v2153
      %2220 = vmatprep.subr.bf16.mxu0 %v2157
      %2221 = vmatpush1.bf16.msra.mxu0 %v2156
      %2222 = vmatprep.subr.bf16.mxu0 %v2159
      %2223 = vmatpush1.bf16.msra.mxu0 %v2158
      %2224 = vmatprep.subr.bf16.mxu0 %v2161
      %2225 = vmatpush1.bf16.msra.mxu0 %v2160
      %2226 = vmatprep.subr.bf16.mxu0 %v2163
      %2227 = vmatpush1.bf16.msra.mxu0 %v2162
      %2228 = vmatprep.subr.bf16.mxu0 %v2165
      %2229 = vmatpush1.bf16.msra.mxu0 %v2164
      %2230 = vmatprep.subr.bf16.mxu0 %v2167
      %2231 = vmatpush1.bf16.msra.mxu0 %v2166
      %2232 = vmatprep.subr.bf16.mxu0 %v2169
      %2233 = vmatpush1.bf16.msra.mxu0 %v2168
      %2234 = vmatprep.subr.bf16.mxu0 %v2171
      %2235 = vmatpush1.bf16.msra.mxu0 %v2170
      %2236 = vmatprep.subr.bf16.mxu0 %v2173
      %2237 = vmatpush1.bf16.msra.mxu0 %v2172
      %2238 = vmatprep.subr.bf16.mxu0 %v2175
      %2239 = vmatpush1.bf16.msra.mxu0 %v2174
      %2240 = vmatprep.subr.bf16.mxu0 %v2177
      %2241 = vmatpush1.bf16.msra.mxu0 %v2176
      %2242 = vmatprep.subr.bf16.mxu0 %v2179
      %2243 = vmatpush1.bf16.msra.mxu0 %v2178
      %2244 = vmatprep.subr.bf16.mxu0 %v2181
      %2245 = vmatpush1.bf16.msra.mxu0 %v2180
      %2246 = vmatprep.subr.bf16.mxu0 %v2183
      %2247 = vmatpush1.bf16.msra.mxu0 %v2182
      %2248 = vmatprep.subr.bf16.mxu0 %v2185
      %2249 = vmatpush1.bf16.msra.mxu0 %v2184
      %2250 = vmatprep.subr.bf16.mxu0 %v2187
      %2251 = vmatpush1.bf16.msra.mxu0 %v2186
      %2252 = vmatprep.mubr.bf16.mxu0 %v2015
      %2253 = vmatmul.mubr.bf16.gmra.mrb[0].mxu0 %v2014
      %v2254 = vpop.f32.mrb[0].mxu0
      %v2255 = vadd.f32 %v2053, %v2254
      %v2256 = vpop.f32.mrb[0].mxu0
      %v2257 = vadd.f32 %v2057, %v2256
      %v2258 = vpop.f32.mrb[0].mxu0
      %v2259 = vpop.f32.mrb[0].mxu0
      %2260 = vdwg.mxu0
      %v2261 = vmax.f32 %v2255, 0.0
      %v2262 = vmax.f32 %v2257, 0.0
      %v2263 = vpack.c.bf16 %v2261, %v2261
      %v2264 = vpack.c.bf16 %v2262, %v2262
      %v2265 = vld [vmem:[%s15] sm:$0xff]
      %v2266 = vld [vmem:[%s15 + $0x8] sm:$0xff]
      %v2267 = vld [vmem:[%s15 + $0x10] sm:$0xff]
      %v2268 = vld [vmem:[%s15 + $0x18] sm:$0xff]
      %v2269 = vld [vmem:[%s15 + $0x20] sm:$0xff]
      %v2270 = vld [vmem:[%s15 + $0x28] sm:$0xff]
      %v2271 = vld [vmem:[%s15 + $0x30] sm:$0xff]
      %v2272 = vld [vmem:[%s15 + $0x38] sm:$0xff]
      %v2273 = vld [vmem:[%s15 + $0x40] sm:$0xff]
      %v2274 = vld [vmem:[%s15 + $0x48] sm:$0xff]
      %v2275 = vld [vmem:[%s15 + $0x50] sm:$0xff]
      %v2276 = vld [vmem:[%s15 + $0x58] sm:$0xff]
      %v2277 = vld [vmem:[%s15 + $0x60] sm:$0xff]
      %v2278 = vld [vmem:[%s15 + $0x68] sm:$0xff]
      %v2279 = vld [vmem:[%s15 + $0x70] sm:$0xff]
      %v2280 = vld [vmem:[%s15 + $0x78] sm:$0xff]
      %v2281 = vld [vmem:[%s15 + $0x80] sm:$0xff]
      %v2282 = vld [vmem:[%s15 + $0x88] sm:$0xff]
      %v2283 = vld [vmem:[%s15 + $0x90] sm:$0xff]
      %v2284 = vld [vmem:[%s15 + $0x98] sm:$0xff]
      %v2285 = vld [vmem:[%s15 + $0xa0] sm:$0xff]
      %v2286 = vld [vmem:[%s15 + $0xa8] sm:$0xff]
      %v2287 = vld [vmem:[%s15 + $0xb0] sm:$0xff]
      %v2288 = vld [vmem:[%s15 + $0xb8] sm:$0xff]
      %v2289 = vld [vmem:[%s15 + $0xc0] sm:$0xff]
      %v2290 = vld [vmem:[%s15 + $0xc8] sm:$0xff]
      %v2291 = vld [vmem:[%s15 + $0xd0] sm:$0xff]
      %v2292 = vld [vmem:[%s15 + $0xd8] sm:$0xff]
      %v2293 = vld [vmem:[%s15 + $0xe0] sm:$0xff]
      %v2294 = vld [vmem:[%s15 + $0xe8] sm:$0xff]
      %v2295 = vld [vmem:[%s15 + $0xf0] sm:$0xff]
      %v2296 = vld [vmem:[%s15 + $0xf8] sm:$0xff]
      %v2297 = vld [vmem:[%s16] sm:$0x3]
      %v2299 = vlaneseq
      %v2300 = vshrl.u32 %v2299, 7
      %v2301 = vsub.s32 0, %v2300
      %v2302 = vrot.slane %v2297, %v2301
      %v2303 = vlaneseq
      %v2304 = vshrl.u32 %v2303, 7
      %v2305 = vsub.s32 1, %v2304
      %v2306 = vrot.slane %v2297, %v2305
      %v2341 = vunpack.c.l.b16 %v2265
      %v2342 = vunpack.c.h.b16 %v2265
      %v2343 = vunpack.c.l.b16 %v2266
      %v2344 = vunpack.c.h.b16 %v2266
      %v2345 = vunpack.c.l.b16 %v2267
      %v2346 = vunpack.c.h.b16 %v2267
      %v2347 = vunpack.c.l.b16 %v2268
      %v2348 = vunpack.c.h.b16 %v2268
      %v2349 = vunpack.c.l.b16 %v2269
      %v2350 = vunpack.c.h.b16 %v2269
      %v2351 = vunpack.c.l.b16 %v2270
      %v2352 = vunpack.c.h.b16 %v2270
      %v2353 = vunpack.c.l.b16 %v2271
      %v2354 = vunpack.c.h.b16 %v2271
      %v2355 = vunpack.c.l.b16 %v2272
      %v2356 = vunpack.c.h.b16 %v2272
      %v2357 = vunpack.c.l.b16 %v2273
      %v2358 = vunpack.c.h.b16 %v2273
      %v2359 = vunpack.c.l.b16 %v2274
      %v2360 = vunpack.c.h.b16 %v2274
      %v2361 = vunpack.c.l.b16 %v2275
      %v2362 = vunpack.c.h.b16 %v2275
      %v2363 = vunpack.c.l.b16 %v2276
      %v2364 = vunpack.c.h.b16 %v2276
      %v2365 = vunpack.c.l.b16 %v2277
      %v2366 = vunpack.c.h.b16 %v2277
      %v2367 = vunpack.c.l.b16 %v2278
      %v2368 = vunpack.c.h.b16 %v2278
      %v2369 = vunpack.c.l.b16 %v2279
      %v2370 = vunpack.c.h.b16 %v2279
      %v2371 = vunpack.c.l.b16 %v2280
      %v2372 = vunpack.c.h.b16 %v2280
      %v2373 = vunpack.c.l.b16 %v2281
      %v2374 = vunpack.c.h.b16 %v2281
      %v2375 = vunpack.c.l.b16 %v2282
      %v2376 = vunpack.c.h.b16 %v2282
      %v2377 = vunpack.c.l.b16 %v2283
      %v2378 = vunpack.c.h.b16 %v2283
      %v2379 = vunpack.c.l.b16 %v2284
      %v2380 = vunpack.c.h.b16 %v2284
      %v2381 = vunpack.c.l.b16 %v2285
      %v2382 = vunpack.c.h.b16 %v2285
      %v2383 = vunpack.c.l.b16 %v2286
      %v2384 = vunpack.c.h.b16 %v2286
      %v2385 = vunpack.c.l.b16 %v2287
      %v2386 = vunpack.c.h.b16 %v2287
      %v2387 = vunpack.c.l.b16 %v2288
      %v2388 = vunpack.c.h.b16 %v2288
      %v2389 = vunpack.c.l.b16 %v2289
      %v2390 = vunpack.c.h.b16 %v2289
      %v2391 = vunpack.c.l.b16 %v2290
      %v2392 = vunpack.c.h.b16 %v2290
      %v2393 = vunpack.c.l.b16 %v2291
      %v2394 = vunpack.c.h.b16 %v2291
      %v2395 = vunpack.c.l.b16 %v2292
      %v2396 = vunpack.c.h.b16 %v2292
      %v2397 = vunpack.c.l.b16 %v2293
      %v2398 = vunpack.c.h.b16 %v2293
      %v2399 = vunpack.c.l.b16 %v2294
      %v2400 = vunpack.c.h.b16 %v2294
      %v2401 = vunpack.c.l.b16 %v2295
      %v2402 = vunpack.c.h.b16 %v2295
      %v2403 = vunpack.c.l.b16 %v2296
      %v2404 = vunpack.c.h.b16 %v2296
      %v2405 = vpack.c.b16 %v2343, %v2341
      %v2406 = vpack.c.b16 %v2344, %v2342
      %v2407 = vpack.c.b16 %v2347, %v2345
      %v2408 = vpack.c.b16 %v2348, %v2346
      %v2409 = vpack.c.b16 %v2351, %v2349
      %v2410 = vpack.c.b16 %v2352, %v2350
      %v2411 = vpack.c.b16 %v2355, %v2353
      %v2412 = vpack.c.b16 %v2356, %v2354
      %v2413 = vpack.c.b16 %v2359, %v2357
      %v2414 = vpack.c.b16 %v2360, %v2358
      %v2415 = vpack.c.b16 %v2363, %v2361
      %v2416 = vpack.c.b16 %v2364, %v2362
      %v2417 = vpack.c.b16 %v2367, %v2365
      %v2418 = vpack.c.b16 %v2368, %v2366
      %v2419 = vpack.c.b16 %v2371, %v2369
      %v2420 = vpack.c.b16 %v2372, %v2370
      %v2421 = vpack.c.b16 %v2375, %v2373
      %v2422 = vpack.c.b16 %v2376, %v2374
      %v2423 = vpack.c.b16 %v2379, %v2377
      %v2424 = vpack.c.b16 %v2380, %v2378
      %v2425 = vpack.c.b16 %v2383, %v2381
      %v2426 = vpack.c.b16 %v2384, %v2382
      %v2427 = vpack.c.b16 %v2387, %v2385
      %v2428 = vpack.c.b16 %v2388, %v2386
      %v2429 = vpack.c.b16 %v2391, %v2389
      %v2430 = vpack.c.b16 %v2392, %v2390
      %v2431 = vpack.c.b16 %v2395, %v2393
      %v2432 = vpack.c.b16 %v2396, %v2394
      %v2433 = vpack.c.b16 %v2399, %v2397
      %v2434 = vpack.c.b16 %v2400, %v2398
      %v2435 = vpack.c.b16 %v2403, %v2401
      %v2436 = vpack.c.b16 %v2404, %v2402
      %2469 = vmatprep.subr.bf16.mxu0 %v2406
      %2470 = vmatpush1.bf16.msra.mxu0 %v2405
      %2471 = vmatprep.subr.bf16.mxu0 %v2408
      %2472 = vmatpush1.bf16.msra.mxu0 %v2407
      %2473 = vmatprep.subr.bf16.mxu0 %v2410
      %2474 = vmatpush1.bf16.msra.mxu0 %v2409
      %2475 = vmatprep.subr.bf16.mxu0 %v2412
      %2476 = vmatpush1.bf16.msra.mxu0 %v2411
      %2477 = vmatprep.subr.bf16.mxu0 %v2414
      %2478 = vmatpush1.bf16.msra.mxu0 %v2413
      %2479 = vmatprep.subr.bf16.mxu0 %v2416
      %2480 = vmatpush1.bf16.msra.mxu0 %v2415
      %2481 = vmatprep.subr.bf16.mxu0 %v2418
      %2482 = vmatpush1.bf16.msra.mxu0 %v2417
      %2483 = vmatprep.subr.bf16.mxu0 %v2420
      %2484 = vmatpush1.bf16.msra.mxu0 %v2419
      %2485 = vmatprep.subr.bf16.mxu0 %v2422
      %2486 = vmatpush1.bf16.msra.mxu0 %v2421
      %2487 = vmatprep.subr.bf16.mxu0 %v2424
      %2488 = vmatpush1.bf16.msra.mxu0 %v2423
      %2489 = vmatprep.subr.bf16.mxu0 %v2426
      %2490 = vmatpush1.bf16.msra.mxu0 %v2425
      %2491 = vmatprep.subr.bf16.mxu0 %v2428
      %2492 = vmatpush1.bf16.msra.mxu0 %v2427
      %2493 = vmatprep.subr.bf16.mxu0 %v2430
      %2494 = vmatpush1.bf16.msra.mxu0 %v2429
      %2495 = vmatprep.subr.bf16.mxu0 %v2432
      %2496 = vmatpush1.bf16.msra.mxu0 %v2431
      %2497 = vmatprep.subr.bf16.mxu0 %v2434
      %2498 = vmatpush1.bf16.msra.mxu0 %v2433
      %2499 = vmatprep.subr.bf16.mxu0 %v2436
      %2500 = vmatpush1.bf16.msra.mxu0 %v2435
      %2501 = vmatprep.mubr.bf16.mxu0 %v2264
      %2502 = vmatmul.mubr.bf16.gmra.mrb[0].mxu0 %v2263
      %v2503 = vpop.f32.mrb[0].mxu0
      %v2504 = vadd.f32 %v2302, %v2503
      %v2505 = vpop.f32.mrb[0].mxu0
      %v2506 = vadd.f32 %v2306, %v2505
      %v2507 = vpop.f32.mrb[0].mxu0
      %v2508 = vpop.f32.mrb[0].mxu0
      %2509 = vdwg.mxu0
      %v2510 = vadd.f32 %v2012, %v2504
      %v2511 = vadd.f32 %v2013, %v2506
      %v2512 = vadd.f32 %v2510, %v2511
      %2513 = vadd.xlane.f32.xlu0 %v2512
      %v2514 = vpop.xlane.xlu0 %2513
      %v2515 = vmul.f32 %v2514, %v1972
      %v2516 = vsub.f32 %v2510, %v2515
      %v2517 = vsub.f32 %v2511, %v2515
      %v2518 = vmul.f32 %v2516, %v2516
      %v2519 = vmul.f32 %v2517, %v2517
      %v2520 = vadd.f32 %v2518, %v2519
      %2521 = vadd.xlane.f32.xlu0 %v2520
      %v2522 = vpop.xlane.xlu0 %2521
      %v2523 = vmul.f32 %v2522, %v1972
      %v2524 = vadd.f32 %v2523, 1e-12
      %v2525 = vrsqrt.pop %v2524
      %v2526 = vmul.f32 %v2516, %v2525
      %v2527 = vmul.f32 %v2517, %v2525
      %v2528 = vld [vmem:[%s17] sm:$0x3]
      %v2530 = vlaneseq
      %v2531 = vshrl.u32 %v2530, 7
      %v2532 = vsub.s32 0, %v2531
      %v2533 = vrot.slane %v2528, %v2532
      %v2534 = vlaneseq
      %v2535 = vshrl.u32 %v2534, 7
      %v2536 = vsub.s32 1, %v2535
      %v2537 = vrot.slane %v2528, %v2536
      %v2540 = vmul.f32 %v2533, %v2526
      %v2541 = vmul.f32 %v2537, %v2527
      %v2542 = vld [vmem:[%s18] sm:$0x3]
      %v2544 = vlaneseq
      %v2545 = vshrl.u32 %v2544, 7
      %v2546 = vsub.s32 0, %v2545
      %v2547 = vrot.slane %v2542, %v2546
      %v2548 = vlaneseq
      %v2549 = vshrl.u32 %v2548, 7
      %v2550 = vsub.s32 1, %v2549
      %v2551 = vrot.slane %v2542, %v2550
      %v2554 = vadd.f32 %v2540, %v2547
      %v2555 = vadd.f32 %v2541, %v2551
      %v2556 = vpack.c.bf16 %v2554, %v2554
      %v2557 = vpack.c.bf16 %v2555, %v2555
      %v2560 = vunpack.c.l.b16 %v2556
      %v2561 = vunpack.c.l.b16 %v2557
      %v2562 = vpack.c.b16 %v2561, %v2560
      %2564 = vst [vmem:[%s672] sm:$0xff] %v2562
      %p2565 = scmp.lt.s32.totalorder %s34, 1
      %s2566 = scalar_select %p2565, %s34, 1
      %p2567 = scmp.lt.s32.totalorder %s35, 0
      %s2568 = scalar_select %p2567, %s35, 0
      %s2569 = smul.addr %s2568, 2
      %s2570 = smul.addr %s2566, 2
      %s2571 = sadd.s32 %s2569, %s2570
      %s2572 = smul.addr %s2571, 4
      %s2573 = scalar_lea.vmem %s19, %s2572
      // Predicated region
      $region97: #{encoder_forward.17} parent=95 // pred_check
        %p2574 = pneg %p478
      $region98: #{encoder_forward.17} parent=95 // pred_check_branch
        %2576 = sbr.rel (%p2574) target = $region100
      $region99: #{encoder_forward.17} parent=95 // pred_region
        _
      $region100: #{encoder_forward.17} parent=95 // pred_fallthru
        _
    $region96: #{encoder_forward.17} parent=5 // pred_fallthru
      _
    %p2577 = scmp.le.s32.totalorder 2, %s25
    // Predicated region
    $region101: #{encoder_forward.17} parent=5 // pred_check
      %p2578 = pneg %p2577
    $region102: #{encoder_forward.17} parent=5 // pred_check_branch
      %2580 = sbr.rel (%p2578) target = $region104
    $region103: #{encoder_forward.17} parent=5 // pred_region
      %s2581 = ssub.s32 %s25, 2
      // Predicated region
      $region105: #{encoder_forward.17} parent=103 // pred_check
        %p2582 = pneg %p484
      $region106: #{encoder_forward.17} parent=103 // pred_check_branch
        %2584 = sbr.rel (%p2582) target = $region108
      $region107: #{encoder_forward.17} parent=103 // pred_region
        %p2585 = scmp.lt.s32.totalorder %s36, 1
        %s2586 = scalar_select %p2585, %s36, 1
        %p2587 = scmp.lt.s32.totalorder %s37, 0
        %s2588 = scalar_select %p2587, %s37, 0
        %s2589 = smul.addr %s2588, 2
        %s2590 = smul.addr %s2586, 2
        %s2591 = sadd.s32 %s2589, %s2590
        %s2592 = smul.addr %s2591, 4
        %s2593 = scalar_lea.vmem %s19, %s2592
      $region108: #{encoder_forward.17} parent=103 // pred_fallthru
        _
    $region104: #{encoder_forward.17} parent=5 // pred_fallthru
      _
  $region6: #{encoder_forward.17} parent=0 // loop_footer
    %s29 = sadd.s32 1, %s25
  $region7: #{encoder_forward.17} parent=0 // loop_footer_branch
    %24 = sbr.rel target = $region3
  $region8: #{encoder_forward.17} parent=0 // loop_exit
    _

// kernel: encoder_forward.14
$region0: #{encoder_forward.14}
  #allocation0 [shape = 'u32[]', space=smem, size = 0x4, offset = 0x4, fixed_abs, tag = 'smem constant byte address 0x4 - core index']
  #allocation1 [shape = 'u32[144,128]{1,0:T(1,128)}', space=vmem, size = 0x12000, scoped, tag = 'internal scratch']
  %s0 = inlined_call_operand.vmem [shape: bf16[2,8,256], index: 0, kind: input, shape index: {}, may-alias: {0,1}]
  %s1 = inlined_call_operand.vmem [shape: bf16[2,8,256], index: 1, kind: input, shape index: {}, may-alias: {0,1}]
  %s2 = inlined_call_operand.vmem [shape: f32[2,1,8], index: 2, kind: input, shape index: {}]
  %s3 = inlined_call_operand.vmem [shape: bf16[256,256], index: 3, kind: input, shape index: {}]
  %s4 = inlined_call_operand.vmem [shape: f32[1,256], index: 4, kind: input, shape index: {}]
  %s5 = inlined_call_operand.vmem [shape: bf16[256,256], index: 5, kind: input, shape index: {}]
  %s6 = inlined_call_operand.vmem [shape: f32[1,256], index: 6, kind: input, shape index: {}]
  %s7 = inlined_call_operand.vmem [shape: bf16[256,256], index: 7, kind: input, shape index: {}]
  %s8 = inlined_call_operand.vmem [shape: f32[1,256], index: 8, kind: input, shape index: {}]
  %s9 = inlined_call_operand.vmem [shape: bf16[2,128,256], index: 9, kind: input, shape index: {}]
  %s10 = inlined_call_operand.vmem [shape: f32[1,256], index: 10, kind: input, shape index: {}]
  %s11 = inlined_call_operand.vmem [shape: f32[1,256], index: 11, kind: input, shape index: {}]
  %s12 = inlined_call_operand.vmem [shape: f32[1,256], index: 12, kind: input, shape index: {}]
  %s13 = inlined_call_operand.vmem [shape: bf16[256,256], index: 13, kind: input, shape index: {}]
  %s14 = inlined_call_operand.vmem [shape: f32[1,256], index: 14, kind: input, shape index: {}]
  %s15 = inlined_call_operand.vmem [shape: bf16[256,256], index: 15, kind: input, shape index: {}]
  %s16 = inlined_call_operand.vmem [shape: f32[1,256], index: 16, kind: input, shape index: {}]
  %s17 = inlined_call_operand.vmem [shape: f32[1,256], index: 17, kind: input, shape index: {}]
  %s18 = inlined_call_operand.vmem [shape: f32[1,256], index: 18, kind: input, shape index: {}]
  %s19 = inlined_call_operand.vmem [shape: bf16[2,8,256], index: 19, kind: output, shape index: {}]
  %s20 = sld [smem:[#allocation0]]
  $region109: #{encoder_forward.14} parent=0
    _
  %s22 = ssub.s32 1, %s20
  %s23 = scalar_select 0, %s22, %s20
  loop: start=0, step=1, limit=4
  $region2: #{encoder_forward.14} parent=0 // loop_pre_header
    _
  $region3: #{encoder_forward.14} parent=0 // loop_header
    %s25 = sphi 0, %s29
    %p26 = scmp.ge.s32.totalorder %s25, 4
    %s32 = sphi 0, %s44
    %s33 = sphi 0, %s40
    %s34 = sphi 0, %s32
    %s35 = sphi 0, %s33
    %s36 = sphi 0, %s34
    %s37 = sphi 0, %s35
    %s49 = sphi 0, %s51
    %s52 = sphi 0, %s49
    %s53 = sphi 0, %s52
    %s69 = sphi 0, %s53
    %s75 = sphi 0, %s77
    %s78 = sphi 0, %s75
    %s79 = sphi 0, %s78
    %s95 = sphi 0, %s79
    %s101 = sphi 0, %s103
    %s104 = sphi 0, %s101
    %s105 = sphi 0, %s104
    %s121 = sphi 0, %s105
    %s125 = sphi 0, %s125
    %s127 = sphi 0, %s125
    %s128 = sphi 0, %s127
    %s142 = sphi 0, %s128
    %s146 = sphi 0, %s146
    %s148 = sphi 0, %s146
    %s149 = sphi 0, %s148
    %s163 = sphi 0, %s149
    %s167 = sphi 0, %s167
    %s169 = sphi 0, %s167
    %s170 = sphi 0, %s169
    %s184 = sphi 0, %s170
    %s188 = sphi 0, %s188
    %s190 = sphi 0, %s188
    %s191 = sphi 0, %s190
    %s205 = sphi 0, %s191
    %s209 = sphi 0, %s209
    %s211 = sphi 0, %s209
    %s212 = sphi 0, %s211
    %s226 = sphi 0, %s212
    %s230 = sphi 0, %s230
    %s232 = sphi 0, %s230
    %s233 = sphi 0, %s232
    %s247 = sphi 0, %s233
    %s251 = sphi 0, %s251
    %s253 = sphi 0, %s251
    %s254 = sphi 0, %s253
    %s268 = sphi 0, %s254
    %s272 = sphi 0, %s272
    %s274 = sphi 0, %s272
    %s275 = sphi 0, %s274
    %s289 = sphi 0, %s275
    %s293 = sphi 0, %s293
    %s295 = sphi 0, %s293
    %s296 = sphi 0, %s295
    %s310 = sphi 0, %s296
    %s314 = sphi 0, %s314
    %s316 = sphi 0, %s314
    %s317 = sphi 0, %s316
    %s331 = sphi 0, %s317
    %s335 = sphi 0, %s335
    %s337 = sphi 0, %s335
    %s338 = sphi 0, %s337
    %s352 = sphi 0, %s338
    %s356 = sphi 0, %s356
    %s358 = sphi 0, %s356
    %s359 = sphi 0, %s358
    %s373 = sphi 0, %s359
    %s377 = sphi 0, %s377
    %s379 = sphi 0, %s377
    %s380 = sphi 0, %s379
    %s394 = sphi 0, %s380
    %s398 = sphi 0, %s398
    %s400 = sphi 0, %s398
    %s401 = sphi 0, %s400
    %s415 = sphi 0, %s401
    %s419 = sphi 0, %s419
    %s421 = sphi 0, %s419
    %s422 = sphi 0, %s421
    %s436 = sphi 0, %s422
    %s440 = sphi 0, %s440
    %s442 = sphi 0, %s440
    %s443 = sphi 0, %s442
    %s457 = sphi 0, %s443
    %s465 = sphi 0, %s467
    %s468 = sphi 0, %s465
    %s469 = sphi 0, %s468
    %s485 = sphi 0, %s469
  $region4: #{encoder_forward.14} parent=0 // loop_header_branch
    %28 = sbr.rel (%p26) target = $region8
  $region5: #{encoder_forward.14} parent=0 // loop_body
    %s30 = ssub.s32 %s25, 1
    %s31 = ssub.s32 %s25, 2
    %s38 = sadd.s32 1, %s33
    %p39 = scmp.ge.s32.totalorder %s38, 1
    %s40 = scalar_select %p39, 0, %s38
    %s41 = sadd.s32 1, %s32
    %s42 = scalar_select %p39, %s41, %s32
    %p43 = scmp.ge.s32.totalorder %s42, 2
    %s44 = scalar_select %p43, 0, %s42
    %s45 = ssub.s32 %s32, %s44
    %s46 = ssub.s32 %s33, %s40
    %s47 = sor.u32 %s45, %s46
    %p48 = scmp.eq.s32.totalorder %s47, 0
    %s50 = sadd.s32 %s49, 1
    %s51 = scalar_select %p48, %s49, %s50
    %p54 = pneg %p48
    %p55 = scmp.eq.s32.totalorder %s25, 1
    %p56 = por %p54, %p55
    %p57 = scmp.ne.s32.totalorder %s49, %s52
    %p58 = scmp.eq.s32.totalorder %s25, 0
    %p59 = por %p57, %p58
    %p60 = scmp.ne.s32.totalorder %s49, %s52
    %p61 = scmp.eq.s32.totalorder %s30, 1
    %p62 = por %p60, %p61
    %p63 = scmp.ne.s32.totalorder %s52, %s53
    %p64 = scmp.eq.s32.totalorder %s30, 0
    %p65 = por %p63, %p64
    %p66 = scmp.ne.s32.totalorder %s52, %s53
    %p67 = scmp.eq.s32.totalorder %s31, 1
    %p68 = por %p66, %p67
    %p70 = scmp.ne.s32.totalorder %s53, %s69
    %p71 = scmp.eq.s32.totalorder %s31, 0
    %p72 = por %p70, %p71
    %s73 = ssub.s32 %s32, %s44
    %p74 = scmp.eq.s32.totalorder %s73, 0
    %s76 = sadd.s32 %s75, 1
    %s77 = scalar_select %p74, %s75, %s76
    %p80 = pneg %p74
    %p81 = scmp.eq.s32.totalorder %s25, 1
    %p82 = por %p80, %p81
    %p83 = scmp.ne.s32.totalorder %s75, %s78
    %p84 = scmp.eq.s32.totalorder %s25, 0
    %p85 = por %p83, %p84
    %p86 = scmp.ne.s32.totalorder %s75, %s78
    %p87 = scmp.eq.s32.totalorder %s30, 1
    %p88 = por %p86, %p87
    %p89 = scmp.ne.s32.totalorder %s78, %s79
    %p90 = scmp.eq.s32.totalorder %s30, 0
    %p91 = por %p89, %p90
    %p92 = scmp.ne.s32.totalorder %s78, %s79
    %p93 = scmp.eq.s32.totalorder %s31, 1
    %p94 = por %p92, %p93
    %p96 = scmp.ne.s32.totalorder %s79, %s95
    %p97 = scmp.eq.s32.totalorder %s31, 0
    %p98 = por %p96, %p97
    %s99 = ssub.s32 %s32, %s44
    %p100 = scmp.eq.s32.totalorder %s99, 0
    %s102 = sadd.s32 %s101, 1
    %s103 = scalar_select %p100, %s101, %s102
    %p106 = pneg %p100
    %p107 = scmp.eq.s32.totalorder %s25, 1
    %p108 = por %p106, %p107
    %p109 = scmp.ne.s32.totalorder %s101, %s104
    %p110 = scmp.eq.s32.totalorder %s25, 0
    %p111 = por %p109, %p110
    %p112 = scmp.ne.s32.totalorder %s101, %s104
    %p113 = scmp.eq.s32.totalorder %s30, 1
    %p114 = por %p112, %p113
    %p115 = scmp.ne.s32.totalorder %s104, %s105
    %p116 = scmp.eq.s32.totalorder %s30, 0
    %p117 = por %p115, %p116
    %p118 = scmp.ne.s32.totalorder %s104, %s105
    %p119 = scmp.eq.s32.totalorder %s31, 1
    %p120 = por %p118, %p119
    %p122 = scmp.ne.s32.totalorder %s105, %s121
    %p123 = scmp.eq.s32.totalorder %s31, 0
    %p124 = por %p122, %p123
    %s126 = sadd.s32 %s125, 1
    %p129 = scmp.eq.s32.totalorder %s25, 1
    %p130 = scmp.ne.s32.totalorder %s125, %s127
    %p131 = scmp.eq.s32.totalorder %s25, 0
    %p132 = por %p130, %p131
    %p133 = scmp.ne.s32.totalorder %s125, %s127
    %p134 = scmp.eq.s32.totalorder %s30, 1
    %p135 = por %p133, %p134
    %p136 = scmp.ne.s32.totalorder %s127, %s128
    %p137 = scmp.eq.s32.totalorder %s30, 0
    %p138 = por %p136, %p137
    %p139 = scmp.ne.s32.totalorder %s127, %s128
    %p140 = scmp.eq.s32.totalorder %s31, 1
    %p141 = por %p139, %p140
    %p143 = scmp.ne.s32.totalorder %s128, %s142
    %p144 = scmp.eq.s32.totalorder %s31, 0
    %p145 = por %p143, %p144
    %s147 = sadd.s32 %s146, 1
    %p150 = scmp.eq.s32.totalorder %s25, 1
    %p151 = scmp.ne.s32.totalorder %s146, %s148
    %p152 = scmp.eq.s32.totalorder %s25, 0
    %p153 = por %p151, %p152
    %p154 = scmp.ne.s32.totalorder %s146, %s148
    %p155 = scmp.eq.s32.totalorder %s30, 1
    %p156 = por %p154, %p155
    %p157 = scmp.ne.s32.totalorder %s148, %s149
    %p158 = scmp.eq.s32.totalorder %s30, 0
    %p159 = por %p157, %p158
    %p160 = scmp.ne.s32.totalorder %s148, %s149
    %p161 = scmp.eq.s32.totalorder %s31, 1
    %p162 = por %p160, %p161
    %p164 = scmp.ne.s32.totalorder %s149, %s163
    %p165 = scmp.eq.s32.totalorder %s31, 0
    %p166 = por %p164, %p165
    %s168 = sadd.s32 %s167, 1
    %p171 = scmp.eq.s32.totalorder %s25, 1
    %p172 = scmp.ne.s32.totalorder %s167, %s169
    %p173 = scmp.eq.s32.totalorder %s25, 0
    %p174 = por %p172, %p173
    %p175 = scmp.ne.s32.totalorder %s167, %s169
    %p176 = scmp.eq.s32.totalorder %s30, 1
    %p177 = por %p175, %p176
    %p178 = scmp.ne.s32.totalorder %s169, %s170
    %p179 = scmp.eq.s32.totalorder %s30, 0
    %p180 = por %p178, %p179
    %p181 = scmp.ne.s32.totalorder %s169, %s170
    %p182 = scmp.eq.s32.totalorder %s31, 1
    %p183 = por %p181, %p182
    %p185 = scmp.ne.s32.totalorder %s170, %s184
    %p186 = scmp.eq.s32.totalorder %s31, 0
    %p187 = por %p185, %p186
    %s189 = sadd.s32 %s188, 1
    %p192 = scmp.eq.s32.totalorder %s25, 1
    %p193 = scmp.ne.s32.totalorder %s188, %s190
    %p194 = scmp.eq.s32.totalorder %s25, 0
    %p195 = por %p193, %p194
    %p196 = scmp.ne.s32.totalorder %s188, %s190
    %p197 = scmp.eq.s32.totalorder %s30, 1
    %p198 = por %p196, %p197
    %p199 = scmp.ne.s32.totalorder %s190, %s191
    %p200 = scmp.eq.s32.totalorder %s30, 0
    %p201 = por %p199, %p200
    %p202 = scmp.ne.s32.totalorder %s190, %s191
    %p203 = scmp.eq.s32.totalorder %s31, 1
    %p204 = por %p202, %p203
    %p206 = scmp.ne.s32.totalorder %s191, %s205
    %p207 = scmp.eq.s32.totalorder %s31, 0
    %p208 = por %p206, %p207
    %s210 = sadd.s32 %s209, 1
    %p213 = scmp.eq.s32.totalorder %s25, 1
    %p214 = scmp.ne.s32.totalorder %s209, %s211
    %p215 = scmp.eq.s32.totalorder %s25, 0
    %p216 = por %p214, %p215
    %p217 = scmp.ne.s32.totalorder %s209, %s211
    %p218 = scmp.eq.s32.totalorder %s30, 1
    %p219 = por %p217, %p218
    %p220 = scmp.ne.s32.totalorder %s211, %s212
    %p221 = scmp.eq.s32.totalorder %s30, 0
    %p222 = por %p220, %p221
    %p223 = scmp.ne.s32.totalorder %s211, %s212
    %p224 = scmp.eq.s32.totalorder %s31, 1
    %p225 = por %p223, %p224
    %p227 = scmp.ne.s32.totalorder %s212, %s226
    %p228 = scmp.eq.s32.totalorder %s31, 0
    %p229 = por %p227, %p228
    %s231 = sadd.s32 %s230, 1
    %p234 = scmp.eq.s32.totalorder %s25, 1
    %p235 = scmp.ne.s32.totalorder %s230, %s232
    %p236 = scmp.eq.s32.totalorder %s25, 0
    %p237 = por %p235, %p236
    %p238 = scmp.ne.s32.totalorder %s230, %s232
    %p239 = scmp.eq.s32.totalorder %s30, 1
    %p240 = por %p238, %p239
    %p241 = scmp.ne.s32.totalorder %s232, %s233
    %p242 = scmp.eq.s32.totalorder %s30, 0
    %p243 = por %p241, %p242
    %p244 = scmp.ne.s32.totalorder %s232, %s233
    %p245 = scmp.eq.s32.totalorder %s31, 1
    %p246 = por %p244, %p245
    %p248 = scmp.ne.s32.totalorder %s233, %s247
    %p249 = scmp.eq.s32.totalorder %s31, 0
    %p250 = por %p248, %p249
    %s252 = sadd.s32 %s251, 1
    %p255 = scmp.eq.s32.totalorder %s25, 1
    %p256 = scmp.ne.s32.totalorder %s251, %s253
    %p257 = scmp.eq.s32.totalorder %s25, 0
    %p258 = por %p256, %p257
    %p259 = scmp.ne.s32.totalorder %s251, %s253
    %p260 = scmp.eq.s32.totalorder %s30, 1
    %p261 = por %p259, %p260
    %p262 = scmp.ne.s32.totalorder %s253, %s254
    %p263 = scmp.eq.s32.totalorder %s30, 0
    %p264 = por %p262, %p263
    %p265 = scmp.ne.s32.totalorder %s253, %s254
    %p266 = scmp.eq.s32.totalorder %s31, 1
    %p267 = por %p265, %p266
    %p269 = scmp.ne.s32.totalorder %s254, %s268
    %p270 = scmp.eq.s32.totalorder %s31, 0
    %p271 = por %p269, %p270
    %s273 = sadd.s32 %s272, 1
    %p276 = scmp.eq.s32.totalorder %s25, 1
    %p277 = scmp.ne.s32.totalorder %s272, %s274
    %p278 = scmp.eq.s32.totalorder %s25, 0
    %p279 = por %p277, %p278
    %p280 = scmp.ne.s32.totalorder %s272, %s274
    %p281 = scmp.eq.s32.totalorder %s30, 1
    %p282 = por %p280, %p281
    %p283 = scmp.ne.s32.totalorder %s274, %s275
    %p284 = scmp.eq.s32.totalorder %s30, 0
    %p285 = por %p283, %p284
    %p286 = scmp.ne.s32.totalorder %s274, %s275
    %p287 = scmp.eq.s32.totalorder %s31, 1
    %p288 = por %p286, %p287
    %p290 = scmp.ne.s32.totalorder %s275, %s289
    %p291 = scmp.eq.s32.totalorder %s31, 0
    %p292 = por %p290, %p291
    %s294 = sadd.s32 %s293, 1
    %p297 = scmp.eq.s32.totalorder %s25, 1
    %p298 = scmp.ne.s32.totalorder %s293, %s295
    %p299 = scmp.eq.s32.totalorder %s25, 0
    %p300 = por %p298, %p299
    %p301 = scmp.ne.s32.totalorder %s293, %s295
    %p302 = scmp.eq.s32.totalorder %s30, 1
    %p303 = por %p301, %p302
    %p304 = scmp.ne.s32.totalorder %s295, %s296
    %p305 = scmp.eq.s32.totalorder %s30, 0
    %p306 = por %p304, %p305
    %p307 = scmp.ne.s32.totalorder %s295, %s296
    %p308 = scmp.eq.s32.totalorder %s31, 1
    %p309 = por %p307, %p308
    %p311 = scmp.ne.s32.totalorder %s296, %s310
    %p312 = scmp.eq.s32.totalorder %s31, 0
    %p313 = por %p311, %p312
    %s315 = sadd.s32 %s314, 1
    %p318 = scmp.eq.s32.totalorder %s25, 1
    %p319 = scmp.ne.s32.totalorder %s314, %s316
    %p320 = scmp.eq.s32.totalorder %s25, 0
    %p321 = por %p319, %p320
    %p322 = scmp.ne.s32.totalorder %s314, %s316
    %p323 = scmp.eq.s32.totalorder %s30, 1
    %p324 = por %p322, %p323
    %p325 = scmp.ne.s32.totalorder %s316, %s317
    %p326 = scmp.eq.s32.totalorder %s30, 0
    %p327 = por %p325, %p326
    %p328 = scmp.ne.s32.totalorder %s316, %s317
    %p329 = scmp.eq.s32.totalorder %s31, 1
    %p330 = por %p328, %p329
    %p332 = scmp.ne.s32.totalorder %s317, %s331
    %p333 = scmp.eq.s32.totalorder %s31, 0
    %p334 = por %p332, %p333
    %s336 = sadd.s32 %s335, 1
    %p339 = scmp.eq.s32.totalorder %s25, 1
    %p340 = scmp.ne.s32.totalorder %s335, %s337
    %p341 = scmp.eq.s32.totalorder %s25, 0
    %p342 = por %p340, %p341
    %p343 = scmp.ne.s32.totalorder %s335, %s337
    %p344 = scmp.eq.s32.totalorder %s30, 1
    %p345 = por %p343, %p344
    %p346 = scmp.ne.s32.totalorder %s337, %s338
    %p347 = scmp.eq.s32.totalorder %s30, 0
    %p348 = por %p346, %p347
    %p349 = scmp.ne.s32.totalorder %s337, %s338
    %p350 = scmp.eq.s32.totalorder %s31, 1
    %p351 = por %p349, %p350
    %p353 = scmp.ne.s32.totalorder %s338, %s352
    %p354 = scmp.eq.s32.totalorder %s31, 0
    %p355 = por %p353, %p354
    %s357 = sadd.s32 %s356, 1
    %p360 = scmp.eq.s32.totalorder %s25, 1
    %p361 = scmp.ne.s32.totalorder %s356, %s358
    %p362 = scmp.eq.s32.totalorder %s25, 0
    %p363 = por %p361, %p362
    %p364 = scmp.ne.s32.totalorder %s356, %s358
    %p365 = scmp.eq.s32.totalorder %s30, 1
    %p366 = por %p364, %p365
    %p367 = scmp.ne.s32.totalorder %s358, %s359
    %p368 = scmp.eq.s32.totalorder %s30, 0
    %p369 = por %p367, %p368
    %p370 = scmp.ne.s32.totalorder %s358, %s359
    %p371 = scmp.eq.s32.totalorder %s31, 1
    %p372 = por %p370, %p371
    %p374 = scmp.ne.s32.totalorder %s359, %s373
    %p375 = scmp.eq.s32.totalorder %s31, 0
    %p376 = por %p374, %p375
    %s378 = sadd.s32 %s377, 1
    %p381 = scmp.eq.s32.totalorder %s25, 1
    %p382 = scmp.ne.s32.totalorder %s377, %s379
    %p383 = scmp.eq.s32.totalorder %s25, 0
    %p384 = por %p382, %p383
    %p385 = scmp.ne.s32.totalorder %s377, %s379
    %p386 = scmp.eq.s32.totalorder %s30, 1
    %p387 = por %p385, %p386
    %p388 = scmp.ne.s32.totalorder %s379, %s380
    %p389 = scmp.eq.s32.totalorder %s30, 0
    %p390 = por %p388, %p389
    %p391 = scmp.ne.s32.totalorder %s379, %s380
    %p392 = scmp.eq.s32.totalorder %s31, 1
    %p393 = por %p391, %p392
    %p395 = scmp.ne.s32.totalorder %s380, %s394
    %p396 = scmp.eq.s32.totalorder %s31, 0
    %p397 = por %p395, %p396
    %s399 = sadd.s32 %s398, 1
    %p402 = scmp.eq.s32.totalorder %s25, 1
    %p403 = scmp.ne.s32.totalorder %s398, %s400
    %p404 = scmp.eq.s32.totalorder %s25, 0
    %p405 = por %p403, %p404
    %p406 = scmp.ne.s32.totalorder %s398, %s400
    %p407 = scmp.eq.s32.totalorder %s30, 1
    %p408 = por %p406, %p407
    %p409 = scmp.ne.s32.totalorder %s400, %s401
    %p410 = scmp.eq.s32.totalorder %s30, 0
    %p411 = por %p409, %p410
    %p412 = scmp.ne.s32.totalorder %s400, %s401
    %p413 = scmp.eq.s32.totalorder %s31, 1
    %p414 = por %p412, %p413
    %p416 = scmp.ne.s32.totalorder %s401, %s415
    %p417 = scmp.eq.s32.totalorder %s31, 0
    %p418 = por %p416, %p417
    %s420 = sadd.s32 %s419, 1
    %p423 = scmp.eq.s32.totalorder %s25, 1
    %p424 = scmp.ne.s32.totalorder %s419, %s421
    %p425 = scmp.eq.s32.totalorder %s25, 0
    %p426 = por %p424, %p425
    %p427 = scmp.ne.s32.totalorder %s419, %s421
    %p428 = scmp.eq.s32.totalorder %s30, 1
    %p429 = por %p427, %p428
    %p430 = scmp.ne.s32.totalorder %s421, %s422
    %p431 = scmp.eq.s32.totalorder %s30, 0
    %p432 = por %p430, %p431
    %p433 = scmp.ne.s32.totalorder %s421, %s422
    %p434 = scmp.eq.s32.totalorder %s31, 1
    %p435 = por %p433, %p434
    %p437 = scmp.ne.s32.totalorder %s422, %s436
    %p438 = scmp.eq.s32.totalorder %s31, 0
    %p439 = por %p437, %p438
    %s441 = sadd.s32 %s440, 1
    %p444 = scmp.eq.s32.totalorder %s25, 1
    %p445 = scmp.ne.s32.totalorder %s440, %s442
    %p446 = scmp.eq.s32.totalorder %s25, 0
    %p447 = por %p445, %p446
    %p448 = scmp.ne.s32.totalorder %s440, %s442
    %p449 = scmp.eq.s32.totalorder %s30, 1
    %p450 = por %p448, %p449
    %p451 = scmp.ne.s32.totalorder %s442, %s443
    %p452 = scmp.eq.s32.totalorder %s30, 0
    %p453 = por %p451, %p452
    %p454 = scmp.ne.s32.totalorder %s442, %s443
    %p455 = scmp.eq.s32.totalorder %s31, 1
    %p456 = por %p454, %p455
    %p458 = scmp.ne.s32.totalorder %s443, %s457
    %p459 = scmp.eq.s32.totalorder %s31, 0
    %p460 = por %p458, %p459
    %s461 = ssub.s32 %s32, %s44
    %s462 = ssub.s32 %s33, %s40
    %s463 = sor.u32 %s461, %s462
    %p464 = scmp.eq.s32.totalorder %s463, 0
    %s466 = sadd.s32 %s465, 1
    %s467 = scalar_select %p464, %s465, %s466
    %p470 = pneg %p464
    %p471 = scmp.eq.s32.totalorder %s25, 1
    %p472 = por %p470, %p471
    %p473 = scmp.ne.s32.totalorder %s465, %s468
    %p474 = scmp.eq.s32.totalorder %s25, 0
    %p475 = por %p473, %p474
    %p476 = scmp.ne.s32.totalorder %s465, %s468
    %p477 = scmp.eq.s32.totalorder %s30, 1
    %p478 = por %p476, %p477
    %p479 = scmp.ne.s32.totalorder %s468, %s469
    %p480 = scmp.eq.s32.totalorder %s30, 0
    %p481 = por %p479, %p480
    %p482 = scmp.ne.s32.totalorder %s468, %s469
    %p483 = scmp.eq.s32.totalorder %s31, 1
    %p484 = por %p482, %p483
    %p486 = scmp.ne.s32.totalorder %s469, %s485
    %p487 = scmp.eq.s32.totalorder %s31, 0
    %p488 = por %p486, %p487
    %p489 = scmp.le.s32.totalorder 1, %s25
    %p490 = scmp.lt.s32.totalorder %s25, 3
    %p491 = pnand %p489, %p490
    %p492 = pneg %p491
    // Predicated region
    $region9: #{encoder_forward.14} parent=5 // pred_check
      _
    $region10: #{encoder_forward.14} parent=5 // pred_check_branch
      %494 = sbr.rel (%p491) target = $region12
    $region11: #{encoder_forward.14} parent=5 // pred_region
      %s495 = ssub.s32 %s25, 1
      // Predicated region
      $region13: #{encoder_forward.14} parent=11 // pred_check
        %p496 = pneg %p138
      $region14: #{encoder_forward.14} parent=11 // pred_check_branch
        %498 = sbr.rel (%p496) target = $region16
      $region15: #{encoder_forward.14} parent=11 // pred_region
        _
      $region16: #{encoder_forward.14} parent=11 // pred_fallthru
        _
      // Predicated region
      $region17: #{encoder_forward.14} parent=11 // pred_check
        %p499 = pneg %p159
      $region18: #{encoder_forward.14} parent=11 // pred_check_branch
        %501 = sbr.rel (%p499) target = $region20
      $region19: #{encoder_forward.14} parent=11 // pred_region
        _
      $region20: #{encoder_forward.14} parent=11 // pred_fallthru
        _
      // Predicated region
      $region21: #{encoder_forward.14} parent=11 // pred_check
        %p502 = pneg %p180
      $region22: #{encoder_forward.14} parent=11 // pred_check_branch
        %504 = sbr.rel (%p502) target = $region24
      $region23: #{encoder_forward.14} parent=11 // pred_region
        _
      $region24: #{encoder_forward.14} parent=11 // pred_fallthru
        _
      // Predicated region
      $region25: #{encoder_forward.14} parent=11 // pred_check
        %p505 = pneg %p201
      $region26: #{encoder_forward.14} parent=11 // pred_check_branch
        %507 = sbr.rel (%p505) target = $region28
      $region27: #{encoder_forward.14} parent=11 // pred_region
        _
      $region28: #{encoder_forward.14} parent=11 // pred_fallthru
        _
      // Predicated region
      $region29: #{encoder_forward.14} parent=11 // pred_check
        %p508 = pneg %p222
      $region30: #{encoder_forward.14} parent=11 // pred_check_branch
        %510 = sbr.rel (%p508) target = $region32
      $region31: #{encoder_forward.14} parent=11 // pred_region
        _
      $region32: #{encoder_forward.14} parent=11 // pred_fallthru
        _
      // Predicated region
      $region33: #{encoder_forward.14} parent=11 // pred_check
        %p511 = pneg %p243
      $region34: #{encoder_forward.14} parent=11 // pred_check_branch
        %513 = sbr.rel (%p511) target = $region36
      $region35: #{encoder_forward.14} parent=11 // pred_region
        _
      $region36: #{encoder_forward.14} parent=11 // pred_fallthru
        _
      // Predicated region
      $region37: #{encoder_forward.14} parent=11 // pred_check
        %p514 = pneg %p264
      $region38: #{encoder_forward.14} parent=11 // pred_check_branch
        %516 = sbr.rel (%p514) target = $region40
      $region39: #{encoder_forward.14} parent=11 // pred_region
        _
      $region40: #{encoder_forward.14} parent=11 // pred_fallthru
        _
      // Predicated region
      $region41: #{encoder_forward.14} parent=11 // pred_check
        %p517 = pneg %p285
      $region42: #{encoder_forward.14} parent=11 // pred_check_branch
        %519 = sbr.rel (%p517) target = $region44
      $region43: #{encoder_forward.14} parent=11 // pred_region
        _
      $region44: #{encoder_forward.14} parent=11 // pred_fallthru
        _
      // Predicated region
      $region45: #{encoder_forward.14} parent=11 // pred_check
        %p520 = pneg %p306
      $region46: #{encoder_forward.14} parent=11 // pred_check_branch
        %522 = sbr.rel (%p520) target = $region48
      $region47: #{encoder_forward.14} parent=11 // pred_region
        _
      $region48: #{encoder_forward.14} parent=11 // pred_fallthru
        _
      // Predicated region
      $region49: #{encoder_forward.14} parent=11 // pred_check
        %p523 = pneg %p327
      $region50: #{encoder_forward.14} parent=11 // pred_check_branch
        %525 = sbr.rel (%p523) target = $region52
      $region51: #{encoder_forward.14} parent=11 // pred_region
        _
      $region52: #{encoder_forward.14} parent=11 // pred_fallthru
        _
      // Predicated region
      $region53: #{encoder_forward.14} parent=11 // pred_check
        %p526 = pneg %p348
      $region54: #{encoder_forward.14} parent=11 // pred_check_branch
        %528 = sbr.rel (%p526) target = $region56
      $region55: #{encoder_forward.14} parent=11 // pred_region
        _
      $region56: #{encoder_forward.14} parent=11 // pred_fallthru
        _
      // Predicated region
      $region57: #{encoder_forward.14} parent=11 // pred_check
        %p529 = pneg %p369
      $region58: #{encoder_forward.14} parent=11 // pred_check_branch
        %531 = sbr.rel (%p529) target = $region60
      $region59: #{encoder_forward.14} parent=11 // pred_region
        _
      $region60: #{encoder_forward.14} parent=11 // pred_fallthru
        _
      // Predicated region
      $region61: #{encoder_forward.14} parent=11 // pred_check
        %p532 = pneg %p390
      $region62: #{encoder_forward.14} parent=11 // pred_check_branch
        %534 = sbr.rel (%p532) target = $region64
      $region63: #{encoder_forward.14} parent=11 // pred_region
        _
      $region64: #{encoder_forward.14} parent=11 // pred_fallthru
        _
      // Predicated region
      $region65: #{encoder_forward.14} parent=11 // pred_check
        %p535 = pneg %p411
      $region66: #{encoder_forward.14} parent=11 // pred_check_branch
        %537 = sbr.rel (%p535) target = $region68
      $region67: #{encoder_forward.14} parent=11 // pred_region
        _
      $region68: #{encoder_forward.14} parent=11 // pred_fallthru
        _
      // Predicated region
      $region69: #{encoder_forward.14} parent=11 // pred_check
        %p538 = pneg %p432
      $region70: #{encoder_forward.14} parent=11 // pred_check_branch
        %540 = sbr.rel (%p538) target = $region72
      $region71: #{encoder_forward.14} parent=11 // pred_region
        _
      $region72: #{encoder_forward.14} parent=11 // pred_fallthru
        _
      // Predicated region
      $region73: #{encoder_forward.14} parent=11 // pred_check
        %p541 = pneg %p453
      $region74: #{encoder_forward.14} parent=11 // pred_check_branch
        %543 = sbr.rel (%p541) target = $region76
      $region75: #{encoder_forward.14} parent=11 // pred_region
        _
      $region76: #{encoder_forward.14} parent=11 // pred_fallthru
        _
    $region12: #{encoder_forward.14} parent=5 // pred_fallthru
      _
    %p544 = scmp.lt.s32.totalorder %s25, 2
    // Predicated region
    $region77: #{encoder_forward.14} parent=5 // pred_check
      %p545 = pneg %p544
    $region78: #{encoder_forward.14} parent=5 // pred_check_branch
      %547 = sbr.rel (%p545) target = $region80
    $region79: #{encoder_forward.14} parent=5 // pred_region
      // Predicated region
      $region81: #{encoder_forward.14} parent=79 // pred_check
        %p548 = pneg %p59
      $region82: #{encoder_forward.14} parent=79 // pred_check_branch
        %550 = sbr.rel (%p548) target = $region84
      $region83: #{encoder_forward.14} parent=79 // pred_region
        %p551 = scmp.lt.s32.totalorder %s32, 1
        %s552 = scalar_select %p551, %s32, 1
        %p553 = scmp.lt.s32.totalorder %s33, 0
        %s554 = scalar_select %p553, %s33, 0
        %s555 = smul.addr %s554, 2
        %s556 = smul.addr %s552, 2
        %s557 = sadd.s32 %s555, %s556
        %s558 = smul.addr %s557, 4
        %s559 = scalar_lea.vmem %s0, %s558
      $region84: #{encoder_forward.14} parent=79 // pred_fallthru
        _
      // Predicated region
      $region85: #{encoder_forward.14} parent=79 // pred_check
        %p560 = pneg %p85
      $region86: #{encoder_forward.14} parent=79 // pred_check_branch
        %562 = sbr.rel (%p560) target = $region88
      $region87: #{encoder_forward.14} parent=79 // pred_region
        %p563 = scmp.lt.s32.totalorder %s32, 1
        %s564 = scalar_select %p563, %s32, 1
        %s565 = smul.addr %s564, 2
        %s566 = smul.addr %s565, 4
        %s567 = scalar_lea.vmem %s1, %s566
      $region88: #{encoder_forward.14} parent=79 // pred_fallthru
        _
      // Predicated region
      $region89: #{encoder_forward.14} parent=79 // pred_check
        %p568 = pneg %p111
      $region90: #{encoder_forward.14} parent=79 // pred_check_branch
        %570 = sbr.rel (%p568) target = $region92
      $region91: #{encoder_forward.14} parent=79 // pred_region
        %p571 = scmp.lt.s32.totalorder %s32, 1
        %s572 = scalar_select %p571, %s32, 1
        %s573 = scalar_lea.vmem %s2, %s572
      $region92: #{encoder_forward.14} parent=79 // pred_fallthru
        _
    $region80: #{encoder_forward.14} parent=5 // pred_fallthru
      _
    %p574 = scmp.le.s32.totalorder 1, %s25
    %p575 = scmp.lt.s32.totalorder %s25, 3
    %p576 = pnand %p574, %p575
    %p577 = pneg %p576
    // Predicated region
    $region93: #{encoder_forward.14} parent=5 // pred_check
      _
    $region94: #{encoder_forward.14} parent=5 // pred_check_branch
      %579 = sbr.rel (%p576) target = $region96
    $region95: #{encoder_forward.14} parent=5 // pred_region
      %s580 = ssub.s32 %s25, 1
      %p581 = scmp.lt.s32.totalorder %s34, 1
      %s582 = scalar_select %p581, %s34, 1
      %p583 = scmp.lt.s32.totalorder %s35, 0
      %s584 = scalar_select %p583, %s35, 0
      %s585 = smul.addr %s584, 2
      %s586 = smul.addr %s582, 2
      %s587 = sadd.s32 %s585, %s586
      %s588 = smul.addr %s587, 4
      %s589 = scalar_lea.vmem %s0, %s588
      %p590 = pneg %p65
      %p591 = pneg %p62
      %p592 = scmp.lt.s32.totalorder %s34, 1
      %s593 = scalar_select %p592, %s34, 1
      %s594 = smul.addr %s593, 2
      %s595 = smul.addr %s594, 4
      %s596 = scalar_lea.vmem %s1, %s595
      %p597 = pneg %p91
      %p598 = pneg %p88
      %p599 = scmp.lt.s32.totalorder %s34, 1
      %s600 = scalar_select %p599, %s34, 1
      %s601 = scalar_lea.vmem %s2, %s600
      %p602 = pneg %p117
      %p603 = pneg %p114
      %p604 = pneg %p138
      %p605 = pneg %p135
      %p606 = pneg %p159
      %p607 = pneg %p156
      %p608 = pneg %p180
      %p609 = pneg %p177
      %p610 = pneg %p201
      %p611 = pneg %p198
      %p612 = pneg %p222
      %p613 = pneg %p219
      %p614 = pneg %p243
      %p615 = pneg %p240
      %p616 = pneg %p264
      %p617 = pneg %p261
      %p618 = pneg %p285
      %p619 = pneg %p282
      %p620 = pneg %p306
      %p621 = pneg %p303
      %p622 = pneg %p327
      %p623 = pneg %p324
      %p624 = pneg %p348
      %p625 = pneg %p345
      %p626 = pneg %p369
      %p627 = pneg %p366
      %p628 = pneg %p390
      %p629 = pneg %p387
      %p630 = pneg %p411
      %p631 = pneg %p408
      %p632 = pneg %p432
      %p633 = pneg %p429
      %p634 = pneg %p453
      %p635 = pneg %p450
      %p636 = pneg %p481
      %p637 = pneg %p478
      %p638 = scmp.lt.s32.totalorder %s34, 1
      %s639 = scalar_select %p638, %s34, 1
      %p640 = scmp.lt.s32.totalorder %s35, 0
      %s641 = scalar_select %p640, %s35, 0
      %s642 = smul.addr %s641, 2
      %s643 = smul.addr %s639, 2
      %s644 = sadd.s32 %s642, %s643
      %s645 = smul.addr %s644, 4
      %s646 = scalar_lea.vmem %s19, %s645
      %p647 = scmp.lt.s32.totalorder %s34, 1
      %s648 = scalar_select %p647, %s34, 1
      %p649 = scmp.lt.s32.totalorder %s35, 0
      %s650 = scalar_select %p649, %s35, 0
      %s651 = smul.addr %s650, 2
      %s652 = smul.addr %s648, 2
      %s653 = sadd.s32 %s651, %s652
      %s654 = smul.addr %s653, 4
      %s655 = scalar_lea.vmem %s0, %s654
      %p656 = scmp.lt.s32.totalorder %s34, 1
      %s657 = scalar_select %p656, %s34, 1
      %s658 = smul.addr %s657, 2
      %s659 = smul.addr %s658, 4
      %s660 = scalar_lea.vmem %s1, %s659
      %p661 = scmp.lt.s32.totalorder %s34, 1
      %s662 = scalar_select %p661, %s34, 1
      %s663 = scalar_lea.vmem %s2, %s662
      %p664 = scmp.lt.s32.totalorder %s34, 1
      %s665 = scalar_select %p664, %s34, 1
      %p666 = scmp.lt.s32.totalorder %s35, 0
      %s667 = scalar_select %p666, %s35, 0
      %s668 = smul.addr %s667, 2
      %s669 = smul.addr %s665, 2
      %s670 = sadd.s32 %s668, %s669
      %s671 = smul.addr %s670, 4
      %s672 = scalar_lea.vmem %s19, %s671
      %v674 = vld [vmem:[%s655] sm:$0xff]
      %v675 = vld [vmem:[%s660] sm:$0xff]
      %v676 = vld [vmem:[%s663] sm:$0x1]
      %v677 = vunpack.c.l.bf16 %v674
      %v678 = vunpack.c.h.bf16 %v674
      %v679 = vld [vmem:[%s3] sm:$0xff]
      %v680 = vld [vmem:[%s3 + $0x8] sm:$0xff]
      %v681 = vld [vmem:[%s3 + $0x10] sm:$0xff]
      %v682 = vld [vmem:[%s3 + $0x18] sm:$0xff]
      %v683 = vld [vmem:[%s3 + $0x20] sm:$0xff]
      %v684 = vld [vmem:[%s3 + $0x28] sm:$0xff]
      %v685 = vld [vmem:[%s3 + $0x30] sm:$0xff]
      %v686 = vld [vmem:[%s3 + $0x38] sm:$0xff]
      %v687 = vld [vmem:[%s3 + $0x40] sm:$0xff]
      %v688 = vld [vmem:[%s3 + $0x48] sm:$0xff]
      %v689 = vld [vmem:[%s3 + $0x50] sm:$0xff]
      %v690 = vld [vmem:[%s3 + $0x58] sm:$0xff]
      %v691 = vld [vmem:[%s3 + $0x60] sm:$0xff]
      %v692 = vld [vmem:[%s3 + $0x68] sm:$0xff]
      %v693 = vld [vmem:[%s3 + $0x70] sm:$0xff]
      %v694 = vld [vmem:[%s3 + $0x78] sm:$0xff]
      %v695 = vld [vmem:[%s3 + $0x80] sm:$0xff]
      %v696 = vld [vmem:[%s3 + $0x88] sm:$0xff]
      %v697 = vld [vmem:[%s3 + $0x90] sm:$0xff]
      %v698 = vld [vmem:[%s3 + $0x98] sm:$0xff]
      %v699 = vld [vmem:[%s3 + $0xa0] sm:$0xff]
      %v700 = vld [vmem:[%s3 + $0xa8] sm:$0xff]
      %v701 = vld [vmem:[%s3 + $0xb0] sm:$0xff]
      %v702 = vld [vmem:[%s3 + $0xb8] sm:$0xff]
      %v703 = vld [vmem:[%s3 + $0xc0] sm:$0xff]
      %v704 = vld [vmem:[%s3 + $0xc8] sm:$0xff]
      %v705 = vld [vmem:[%s3 + $0xd0] sm:$0xff]
      %v706 = vld [vmem:[%s3 + $0xd8] sm:$0xff]
      %v707 = vld [vmem:[%s3 + $0xe0] sm:$0xff]
      %v708 = vld [vmem:[%s3 + $0xe8] sm:$0xff]
      %v709 = vld [vmem:[%s3 + $0xf0] sm:$0xff]
      %v710 = vld [vmem:[%s3 + $0xf8] sm:$0xff]
      %v711 = vld [vmem:[%s4] sm:$0x3]
      %v713 = vlaneseq
      %v714 = vshrl.u32 %v713, 7
      %v715 = vsub.s32 0, %v714
      %v716 = vrot.slane %v711, %v715
      %v717 = vlaneseq
      %v718 = vshrl.u32 %v717, 7
      %v719 = vsub.s32 1, %v718
      %v720 = vrot.slane %v711, %v719
      %v724 = vunpack.c.l.b16 %v674
      %v725 = vunpack.c.h.b16 %v674
      %v726 = vpack.c.b16 %v724, %v724
      %v727 = vpack.c.b16 %v725, %v725
      %v762 = vunpack.c.l.b16 %v679
      %v763 = vunpack.c.h.b16 %v679
      %v764 = vunpack.c.l.b16 %v680
      %v765 = vunpack.c.h.b16 %v680
      %v766 = vunpack.c.l.b16 %v681
      %v767 = vunpack.c.h.b16 %v681
      %v768 = vunpack.c.l.b16 %v682
      %v769 = vunpack.c.h.b16 %v682
      %v770 = vunpack.c.l.b16 %v683
      %v771 = vunpack.c.h.b16 %v683
      %v772 = vunpack.c.l.b16 %v684
      %v773 = vunpack.c.h.b16 %v684
      %v774 = vunpack.c.l.b16 %v685
      %v775 = vunpack.c.h.b16 %v685
      %v776 = vunpack.c.l.b16 %v686
      %v777 = vunpack.c.h.b16 %v686
      %v778 = vunpack.c.l.b16 %v687
      %v779 = vunpack.c.h.b16 %v687
      %v780 = vunpack.c.l.b16 %v688
      %v781 = vunpack.c.h.b16 %v688
      %v782 = vunpack.c.l.b16 %v689
      %v783 = vunpack.c.h.b16 %v689
      %v784 = vunpack.c.l.b16 %v690
      %v785 = vunpack.c.h.b16 %v690
      %v786 = vunpack.c.l.b16 %v691
      %v787 = vunpack.c.h.b16 %v691
      %v788 = vunpack.c.l.b16 %v692
      %v789 = vunpack.c.h.b16 %v692
      %v790 = vunpack.c.l.b16 %v693
      %v791 = vunpack.c.h.b16 %v693
      %v792 = vunpack.c.l.b16 %v694
      %v793 = vunpack.c.h.b16 %v694
      %v794 = vunpack.c.l.b16 %v695
      %v795 = vunpack.c.h.b16 %v695
      %v796 = vunpack.c.l.b16 %v696
      %v797 = vunpack.c.h.b16 %v696
      %v798 = vunpack.c.l.b16 %v697
      %v799 = vunpack.c.h.b16 %v697
      %v800 = vunpack.c.l.b16 %v698
      %v801 = vunpack.c.h.b16 %v698
      %v802 = vunpack.c.l.b16 %v699
      %v803 = vunpack.c.h.b16 %v699
      %v804 = vunpack.c.l.b16 %v700
      %v805 = vunpack.c.h.b16 %v700
      %v806 = vunpack.c.l.b16 %v701
      %v807 = vunpack.c.h.b16 %v701
      %v808 = vunpack.c.l.b16 %v702
      %v809 = vunpack.c.h.b16 %v702
      %v810 = vunpack.c.l.b16 %v703
      %v811 = vunpack.c.h.b16 %v703
      %v812 = vunpack.c.l.b16 %v704
      %v813 = vunpack.c.h.b16 %v704
      %v814 = vunpack.c.l.b16 %v705
      %v815 = vunpack.c.h.b16 %v705
      %v816 = vunpack.c.l.b16 %v706
      %v817 = vunpack.c.h.b16 %v706
      %v818 = vunpack.c.l.b16 %v707
      %v819 = vunpack.c.h.b16 %v707
      %v820 = vunpack.c.l.b16 %v708
      %v821 = vunpack.c.h.b16 %v708
      %v822 = vunpack.c.l.b16 %v709
      %v823 = vunpack.c.h.b16 %v709
      %v824 = vunpack.c.l.b16 %v710
      %v825 = vunpack.c.h.b16 %v710
      %v826 = vpack.c.b16 %v764, %v762
      %v827 = vpack.c.b16 %v765, %v763
      %v828 = vpack.c.b16 %v768, %v766
      %v829 = vpack.c.b16 %v769, %v767
      %v830 = vpack.c.b16 %v772, %v770
      %v831 = vpack.c.b16 %v773, %v771
      %v832 = vpack.c.b16 %v776, %v774
      %v833 = vpack.c.b16 %v777, %v775
      %v834 = vpack.c.b16 %v780, %v778
      %v835 = vpack.c.b16 %v781, %v779
      %v836 = vpack.c.b16 %v784, %v782
      %v837 = vpack.c.b16 %v785, %v783
      %v838 = vpack.c.b16 %v788, %v786
      %v839 = vpack.c.b16 %v789, %v787
      %v840 = vpack.c.b16 %v792, %v790
      %v841 = vpack.c.b16 %v793, %v791
      %v842 = vpack.c.b16 %v796, %v794
      %v843 = vpack.c.b16 %v797, %v795
      %v844 = vpack.c.b16 %v800, %v798
      %v845 = vpack.c.b16 %v801, %v799
      %v846 = vpack.c.b16 %v804, %v802
      %v847 = vpack.c.b16 %v805, %v803
      %v848 = vpack.c.b16 %v808, %v806
      %v849 = vpack.c.b16 %v809, %v807
      %v850 = vpack.c.b16 %v812, %v810
      %v851 = vpack.c.b16 %v813, %v811
      %v852 = vpack.c.b16 %v816, %v814
      %v853 = vpack.c.b16 %v817, %v815
      %v854 = vpack.c.b16 %v820, %v818
      %v855 = vpack.c.b16 %v821, %v819
      %v856 = vpack.c.b16 %v824, %v822
      %v857 = vpack.c.b16 %v825, %v823
      %890 = vmatprep.subr.bf16.mxu0 %v827
      %891 = vmatpush1.bf16.msra.mxu0 %v826
      %892 = vmatprep.subr.bf16.mxu0 %v829
      %893 = vmatpush1.bf16.msra.mxu0 %v828
      %894 = vmatprep.subr.bf16.mxu0 %v831
      %895 = vmatpush1.bf16.msra.mxu0 %v830
      %896 = vmatprep.subr.bf16.mxu0 %v833
      %897 = vmatpush1.bf16.msra.mxu0 %v832
      %898 = vmatprep.subr.bf16.mxu0 %v835
      %899 = vmatpush1.bf16.msra.mxu0 %v834
      %900 = vmatprep.subr.bf16.mxu0 %v837
      %901 = vmatpush1.bf16.msra.mxu0 %v836
      %902 = vmatprep.subr.bf16.mxu0 %v839
      %903 = vmatpush1.bf16.msra.mxu0 %v838
      %904 = vmatprep.subr.bf16.mxu0 %v841
      %905 = vmatpush1.bf16.msra.mxu0 %v840
      %906 = vmatprep.subr.bf16.mxu0 %v843
      %907 = vmatpush1.bf16.msra.mxu0 %v842
      %908 = vmatprep.subr.bf16.mxu0 %v845
      %909 = vmatpush1.bf16.msra.mxu0 %v844
      %910 = vmatprep.subr.bf16.mxu0 %v847
      %911 = vmatpush1.bf16.msra.mxu0 %v846
      %912 = vmatprep.subr.bf16.mxu0 %v849
      %913 = vmatpush1.bf16.msra.mxu0 %v848
      %914 = vmatprep.subr.bf16.mxu0 %v851
      %915 = vmatpush1.bf16.msra.mxu0 %v850
      %916 = vmatprep.subr.bf16.mxu0 %v853
      %917 = vmatpush1.bf16.msra.mxu0 %v852
      %918 = vmatprep.subr.bf16.mxu0 %v855
      %919 = vmatpush1.bf16.msra.mxu0 %v854
      %920 = vmatprep.subr.bf16.mxu0 %v857
      %921 = vmatpush1.bf16.msra.mxu0 %v856
      %922 = vmatprep.mubr.bf16.mxu0 %v727
      %923 = vmatmul.mubr.bf16.gmra.mrb[0].mxu0 %v726
      %v924 = vpop.f32.mrb[0].mxu0
      %v925 = vadd.f32 %v716, %v924
      %v926 = vpop.f32.mrb[0].mxu0
      %v927 = vadd.f32 %v720, %v926
      %v928 = vpop.f32.mrb[0].mxu0
      %v929 = vpop.f32.mrb[0].mxu0
      %930 = vdwg.mxu0
      %v931 = vmul.f32 %v925, 0.088388346
      %v932 = vmul.f32 %v927, 0.088388346
      %v933 = vld [vmem:[%s5] sm:$0xff]
      %v934 = vld [vmem:[%s5 + $0x8] sm:$0xff]
      %v935 = vld [vmem:[%s5 + $0x10] sm:$0xff]
      %v936 = vld [vmem:[%s5 + $0x18] sm:$0xff]
      %v937 = vld [vmem:[%s5 + $0x20] sm:$0xff]
      %v938 = vld [vmem:[%s5 + $0x28] sm:$0xff]
      %v939 = vld [vmem:[%s5 + $0x30] sm:$0xff]
      %v940 = vld [vmem:[%s5 + $0x38] sm:$0xff]
      %v941 = vld [vmem:[%s5 + $0x40] sm:$0xff]
      %v942 = vld [vmem:[%s5 + $0x48] sm:$0xff]
      %v943 = vld [vmem:[%s5 + $0x50] sm:$0xff]
      %v944 = vld [vmem:[%s5 + $0x58] sm:$0xff]
      %v945 = vld [vmem:[%s5 + $0x60] sm:$0xff]
      %v946 = vld [vmem:[%s5 + $0x68] sm:$0xff]
      %v947 = vld [vmem:[%s5 + $0x70] sm:$0xff]
      %v948 = vld [vmem:[%s5 + $0x78] sm:$0xff]
      %v949 = vld [vmem:[%s5 + $0x80] sm:$0xff]
      %v950 = vld [vmem:[%s5 + $0x88] sm:$0xff]
      %v951 = vld [vmem:[%s5 + $0x90] sm:$0xff]
      %v952 = vld [vmem:[%s5 + $0x98] sm:$0xff]
      %v953 = vld [vmem:[%s5 + $0xa0] sm:$0xff]
      %v954 = vld [vmem:[%s5 + $0xa8] sm:$0xff]
      %v955 = vld [vmem:[%s5 + $0xb0] sm:$0xff]
      %v956 = vld [vmem:[%s5 + $0xb8] sm:$0xff]
      %v957 = vld [vmem:[%s5 + $0xc0] sm:$0xff]
      %v958 = vld [vmem:[%s5 + $0xc8] sm:$0xff]
      %v959 = vld [vmem:[%s5 + $0xd0] sm:$0xff]
      %v960 = vld [vmem:[%s5 + $0xd8] sm:$0xff]
      %v961 = vld [vmem:[%s5 + $0xe0] sm:$0xff]
      %v962 = vld [vmem:[%s5 + $0xe8] sm:$0xff]
      %v963 = vld [vmem:[%s5 + $0xf0] sm:$0xff]
      %v964 = vld [vmem:[%s5 + $0xf8] sm:$0xff]
      %v965 = vld [vmem:[%s6] sm:$0x3]
      %v967 = vlaneseq
      %v968 = vshrl.u32 %v967, 7
      %v969 = vsub.s32 0, %v968
      %v970 = vrot.slane %v965, %v969
      %v971 = vlaneseq
      %v972 = vshrl.u32 %v971, 7
      %v973 = vsub.s32 1, %v972
      %v974 = vrot.slane %v965, %v973
      %v978 = vunpack.c.l.b16 %v675
      %v979 = vunpack.c.h.b16 %v675
      %v980 = vpack.c.b16 %v978, %v978
      %v981 = vpack.c.b16 %v979, %v979
      %v1016 = vunpack.c.l.b16 %v933
      %v1017 = vunpack.c.h.b16 %v933
      %v1018 = vunpack.c.l.b16 %v934
      %v1019 = vunpack.c.h.b16 %v934
      %v1020 = vunpack.c.l.b16 %v935
      %v1021 = vunpack.c.h.b16 %v935
      %v1022 = vunpack.c.l.b16 %v936
      %v1023 = vunpack.c.h.b16 %v936
      %v1024 = vunpack.c.l.b16 %v937
      %v1025 = vunpack.c.h.b16 %v937
      %v1026 = vunpack.c.l.b16 %v938
      %v1027 = vunpack.c.h.b16 %v938
      %v1028 = vunpack.c.l.b16 %v939
      %v1029 = vunpack.c.h.b16 %v939
      %v1030 = vunpack.c.l.b16 %v940
      %v1031 = vunpack.c.h.b16 %v940
      %v1032 = vunpack.c.l.b16 %v941
      %v1033 = vunpack.c.h.b16 %v941
      %v1034 = vunpack.c.l.b16 %v942
      %v1035 = vunpack.c.h.b16 %v942
      %v1036 = vunpack.c.l.b16 %v943
      %v1037 = vunpack.c.h.b16 %v943
      %v1038 = vunpack.c.l.b16 %v944
      %v1039 = vunpack.c.h.b16 %v944
      %v1040 = vunpack.c.l.b16 %v945
      %v1041 = vunpack.c.h.b16 %v945
      %v1042 = vunpack.c.l.b16 %v946
      %v1043 = vunpack.c.h.b16 %v946
      %v1044 = vunpack.c.l.b16 %v947
      %v1045 = vunpack.c.h.b16 %v947
      %v1046 = vunpack.c.l.b16 %v948
      %v1047 = vunpack.c.h.b16 %v948
      %v1048 = vunpack.c.l.b16 %v949
      %v1049 = vunpack.c.h.b16 %v949
      %v1050 = vunpack.c.l.b16 %v950
      %v1051 = vunpack.c.h.b16 %v950
      %v1052 = vunpack.c.l.b16 %v951
      %v1053 = vunpack.c.h.b16 %v951
      %v1054 = vunpack.c.l.b16 %v952
      %v1055 = vunpack.c.h.b16 %v952
      %v1056 = vunpack.c.l.b16 %v953
      %v1057 = vunpack.c.h.b16 %v953
      %v1058 = vunpack.c.l.b16 %v954
      %v1059 = vunpack.c.h.b16 %v954
      %v1060 = vunpack.c.l.b16 %v955
      %v1061 = vunpack.c.h.b16 %v955
      %v1062 = vunpack.c.l.b16 %v956
      %v1063 = vunpack.c.h.b16 %v956
      %v1064 = vunpack.c.l.b16 %v957
      %v1065 = vunpack.c.h.b16 %v957
      %v1066 = vunpack.c.l.b16 %v958
      %v1067 = vunpack.c.h.b16 %v958
      %v1068 = vunpack.c.l.b16 %v959
      %v1069 = vunpack.c.h.b16 %v959
      %v1070 = vunpack.c.l.b16 %v960
      %v1071 = vunpack.c.h.b16 %v960
      %v1072 = vunpack.c.l.b16 %v961
      %v1073 = vunpack.c.h.b16 %v961
      %v1074 = vunpack.c.l.b16 %v962
      %v1075 = vunpack.c.h.b16 %v962
      %v1076 = vunpack.c.l.b16 %v963
      %v1077 = vunpack.c.h.b16 %v963
      %v1078 = vunpack.c.l.b16 %v964
      %v1079 = vunpack.c.h.b16 %v964
      %v1080 = vpack.c.b16 %v1018, %v1016
      %v1081 = vpack.c.b16 %v1019, %v1017
      %v1082 = vpack.c.b16 %v1022, %v1020
      %v1083 = vpack.c.b16 %v1023, %v1021
      %v1084 = vpack.c.b16 %v1026, %v1024
      %v1085 = vpack.c.b16 %v1027, %v1025
      %v1086 = vpack.c.b16 %v1030, %v1028
      %v1087 = vpack.c.b16 %v1031, %v1029
      %v1088 = vpack.c.b16 %v1034, %v1032
      %v1089 = vpack.c.b16 %v1035, %v1033
      %v1090 = vpack.c.b16 %v1038, %v1036
      %v1091 = vpack.c.b16 %v1039, %v1037
      %v1092 = vpack.c.b16 %v1042, %v1040
      %v1093 = vpack.c.b16 %v1043, %v1041
      %v1094 = vpack.c.b16 %v1046, %v1044
      %v1095 = vpack.c.b16 %v1047, %v1045
      %v1096 = vpack.c.b16 %v1050, %v1048
      %v1097 = vpack.c.b16 %v1051, %v1049
      %v1098 = vpack.c.b16 %v1054, %v1052
      %v1099 = vpack.c.b16 %v1055, %v1053
      %v1100 = vpack.c.b16 %v1058, %v1056
      %v1101 = vpack.c.b16 %v1059, %v1057
      %v1102 = vpack.c.b16 %v1062, %v1060
      %v1103 = vpack.c.b16 %v1063, %v1061
      %v1104 = vpack.c.b16 %v1066, %v1064
      %v1105 = vpack.c.b16 %v1067, %v1065
      %v1106 = vpack.c.b16 %v1070, %v1068
      %v1107 = vpack.c.b16 %v1071, %v1069
      %v1108 = vpack.c.b16 %v1074, %v1072
      %v1109 = vpack.c.b16 %v1075, %v1073
      %v1110 = vpack.c.b16 %v1078, %v1076
      %v1111 = vpack.c.b16 %v1079, %v1077
      %1144 = vmatprep.subr.bf16.mxu0 %v1081
      %1145 = vmatpush1.bf16.msra.mxu0 %v1080
      %1146 = vmatprep.subr.bf16.mxu0 %v1083
      %1147 = vmatpush1.bf16.msra.mxu0 %v1082
      %1148 = vmatprep.subr.bf16.mxu0 %v1085
      %1149 = vmatpush1.bf16.msra.mxu0 %v1084
      %1150 = vmatprep.subr.bf16.mxu0 %v1087
      %1151 = vmatpush1.bf16.msra.mxu0 %v1086
      %1152 = vmatprep.subr.bf16.mxu0 %v1089
      %1153 = vmatpush1.bf16.msra.mxu0 %v1088
      %1154 = vmatprep.subr.bf16.mxu0 %v1091
      %1155 = vmatpush1.bf16.msra.mxu0 %v1090
      %1156 = vmatprep.subr.bf16.mxu0 %v1093
      %1157 = vmatpush1.bf16.msra.mxu0 %v1092
      %1158 = vmatprep.subr.bf16.mxu0 %v1095
      %1159 = vmatpush1.bf16.msra.mxu0 %v1094
      %1160 = vmatprep.subr.bf16.mxu0 %v1097
      %1161 = vmatpush1.bf16.msra.mxu0 %v1096
      %1162 = vmatprep.subr.bf16.mxu0 %v1099
      %1163 = vmatpush1.bf16.msra.mxu0 %v1098
      %1164 = vmatprep.subr.bf16.mxu0 %v1101
      %1165 = vmatpush1.bf16.msra.mxu0 %v1100
      %1166 = vmatprep.subr.bf16.mxu0 %v1103
      %1167 = vmatpush1.bf16.msra.mxu0 %v1102
      %1168 = vmatprep.subr.bf16.mxu0 %v1105
      %1169 = vmatpush1.bf16.msra.mxu0 %v1104
      %1170 = vmatprep.subr.bf16.mxu0 %v1107
      %1171 = vmatpush1.bf16.msra.mxu0 %v1106
      %1172 = vmatprep.subr.bf16.mxu0 %v1109
      %1173 = vmatpush1.bf16.msra.mxu0 %v1108
      %1174 = vmatprep.subr.bf16.mxu0 %v1111
      %1175 = vmatpush1.bf16.msra.mxu0 %v1110
      %1176 = vmatprep.mubr.bf16.mxu0 %v981
      %1177 = vmatmul.mubr.bf16.gmra.mrb[0].mxu0 %v980
      %v1178 = vpop.f32.mrb[0].mxu0
      %v1179 = vadd.f32 %v970, %v1178
      %v1180 = vpop.f32.mrb[0].mxu0
      %v1181 = vadd.f32 %v974, %v1180
      %v1182 = vpop.f32.mrb[0].mxu0
      %v1183 = vpop.f32.mrb[0].mxu0
      %1184 = vdwg.mxu0
      %v1185 = vld [vmem:[%s7] sm:$0xff]
      %v1186 = vld [vmem:[%s7 + $0x8] sm:$0xff]
      %v1187 = vld [vmem:[%s7 + $0x10] sm:$0xff]
      %v1188 = vld [vmem:[%s7 + $0x18] sm:$0xff]
      %v1189 = vld [vmem:[%s7 + $0x20] sm:$0xff]
      %v1190 = vld [vmem:[%s7 + $0x28] sm:$0xff]
      %v1191 = vld [vmem:[%s7 + $0x30] sm:$0xff]
      %v1192 = vld [vmem:[%s7 + $0x38] sm:$0xff]
      %v1193 = vld [vmem:[%s7 + $0x40] sm:$0xff]
      %v1194 = vld [vmem:[%s7 + $0x48] sm:$0xff]
      %v1195 = vld [vmem:[%s7 + $0x50] sm:$0xff]
      %v1196 = vld [vmem:[%s7 + $0x58] sm:$0xff]
      %v1197 = vld [vmem:[%s7 + $0x60] sm:$0xff]
      %v1198 = vld [vmem:[%s7 + $0x68] sm:$0xff]
      %v1199 = vld [vmem:[%s7 + $0x70] sm:$0xff]
      %v1200 = vld [vmem:[%s7 + $0x78] sm:$0xff]
      %v1201 = vld [vmem:[%s7 + $0x80] sm:$0xff]
      %v1202 = vld [vmem:[%s7 + $0x88] sm:$0xff]
      %v1203 = vld [vmem:[%s7 + $0x90] sm:$0xff]
      %v1204 = vld [vmem:[%s7 + $0x98] sm:$0xff]
      %v1205 = vld [vmem:[%s7 + $0xa0] sm:$0xff]
      %v1206 = vld [vmem:[%s7 + $0xa8] sm:$0xff]
      %v1207 = vld [vmem:[%s7 + $0xb0] sm:$0xff]
      %v1208 = vld [vmem:[%s7 + $0xb8] sm:$0xff]
      %v1209 = vld [vmem:[%s7 + $0xc0] sm:$0xff]
      %v1210 = vld [vmem:[%s7 + $0xc8] sm:$0xff]
      %v1211 = vld [vmem:[%s7 + $0xd0] sm:$0xff]
      %v1212 = vld [vmem:[%s7 + $0xd8] sm:$0xff]
      %v1213 = vld [vmem:[%s7 + $0xe0] sm:$0xff]
      %v1214 = vld [vmem:[%s7 + $0xe8] sm:$0xff]
      %v1215 = vld [vmem:[%s7 + $0xf0] sm:$0xff]
      %v1216 = vld [vmem:[%s7 + $0xf8] sm:$0xff]
      %v1217 = vld [vmem:[%s8] sm:$0x3]
      %v1219 = vlaneseq
      %v1220 = vshrl.u32 %v1219, 7
      %v1221 = vsub.s32 0, %v1220
      %v1222 = vrot.slane %v1217, %v1221
      %v1223 = vlaneseq
      %v1224 = vshrl.u32 %v1223, 7
      %v1225 = vsub.s32 1, %v1224
      %v1226 = vrot.slane %v1217, %v1225
      %v1261 = vunpack.c.l.b16 %v1185
      %v1262 = vunpack.c.h.b16 %v1185
      %v1263 = vunpack.c.l.b16 %v1186
      %v1264 = vunpack.c.h.b16 %v1186
      %v1265 = vunpack.c.l.b16 %v1187
      %v1266 = vunpack.c.h.b16 %v1187
      %v1267 = vunpack.c.l.b16 %v1188
      %v1268 = vunpack.c.h.b16 %v1188
      %v1269 = vunpack.c.l.b16 %v1189
      %v1270 = vunpack.c.h.b16 %v1189
      %v1271 = vunpack.c.l.b16 %v1190
      %v1272 = vunpack.c.h.b16 %v1190
      %v1273 = vunpack.c.l.b16 %v1191
      %v1274 = vunpack.c.h.b16 %v1191
      %v1275 = vunpack.c.l.b16 %v1192
      %v1276 = vunpack.c.h.b16 %v1192
      %v1277 = vunpack.c.l.b16 %v1193
      %v1278 = vunpack.c.h.b16 %v1193
      %v1279 = vunpack.c.l.b16 %v1194
      %v1280 = vunpack.c.h.b16 %v1194
      %v1281 = vunpack.c.l.b16 %v1195
      %v1282 = vunpack.c.h.b16 %v1195
      %v1283 = vunpack.c.l.b16 %v1196
      %v1284 = vunpack.c.h.b16 %v1196
      %v1285 = vunpack.c.l.b16 %v1197
      %v1286 = vunpack.c.h.b16 %v1197
      %v1287 = vunpack.c.l.b16 %v1198
      %v1288 = vunpack.c.h.b16 %v1198
      %v1289 = vunpack.c.l.b16 %v1199
      %v1290 = vunpack.c.h.b16 %v1199
      %v1291 = vunpack.c.l.b16 %v1200
      %v1292 = vunpack.c.h.b16 %v1200
      %v1293 = vunpack.c.l.b16 %v1201
      %v1294 = vunpack.c.h.b16 %v1201
      %v1295 = vunpack.c.l.b16 %v1202
      %v1296 = vunpack.c.h.b16 %v1202
      %v1297 = vunpack.c.l.b16 %v1203
      %v1298 = vunpack.c.h.b16 %v1203
      %v1299 = vunpack.c.l.b16 %v1204
      %v1300 = vunpack.c.h.b16 %v1204
      %v1301 = vunpack.c.l.b16 %v1205
      %v1302 = vunpack.c.h.b16 %v1205
      %v1303 = vunpack.c.l.b16 %v1206
      %v1304 = vunpack.c.h.b16 %v1206
      %v1305 = vunpack.c.l.b16 %v1207
      %v1306 = vunpack.c.h.b16 %v1207
      %v1307 = vunpack.c.l.b16 %v1208
      %v1308 = vunpack.c.h.b16 %v1208
      %v1309 = vunpack.c.l.b16 %v1209
      %v1310 = vunpack.c.h.b16 %v1209
      %v1311 = vunpack.c.l.b16 %v1210
      %v1312 = vunpack.c.h.b16 %v1210
      %v1313 = vunpack.c.l.b16 %v1211
      %v1314 = vunpack.c.h.b16 %v1211
      %v1315 = vunpack.c.l.b16 %v1212
      %v1316 = vunpack.c.h.b16 %v1212
      %v1317 = vunpack.c.l.b16 %v1213
      %v1318 = vunpack.c.h.b16 %v1213
      %v1319 = vunpack.c.l.b16 %v1214
      %v1320 = vunpack.c.h.b16 %v1214
      %v1321 = vunpack.c.l.b16 %v1215
      %v1322 = vunpack.c.h.b16 %v1215
      %v1323 = vunpack.c.l.b16 %v1216
      %v1324 = vunpack.c.h.b16 %v1216
      %v1325 = vpack.c.b16 %v1263, %v1261
      %v1326 = vpack.c.b16 %v1264, %v1262
      %v1327 = vpack.c.b16 %v1267, %v1265
      %v1328 = vpack.c.b16 %v1268, %v1266
      %v1329 = vpack.c.b16 %v1271, %v1269
      %v1330 = vpack.c.b16 %v1272, %v1270
      %v1331 = vpack.c.b16 %v1275, %v1273
      %v1332 = vpack.c.b16 %v1276, %v1274
      %v1333 = vpack.c.b16 %v1279, %v1277
      %v1334 = vpack.c.b16 %v1280, %v1278
      %v1335 = vpack.c.b16 %v1283, %v1281
      %v1336 = vpack.c.b16 %v1284, %v1282
      %v1337 = vpack.c.b16 %v1287, %v1285
      %v1338 = vpack.c.b16 %v1288, %v1286
      %v1339 = vpack.c.b16 %v1291, %v1289
      %v1340 = vpack.c.b16 %v1292, %v1290
      %v1341 = vpack.c.b16 %v1295, %v1293
      %v1342 = vpack.c.b16 %v1296, %v1294
      %v1343 = vpack.c.b16 %v1299, %v1297
      %v1344 = vpack.c.b16 %v1300, %v1298
      %v1345 = vpack.c.b16 %v1303, %v1301
      %v1346 = vpack.c.b16 %v1304, %v1302
      %v1347 = vpack.c.b16 %v1307, %v1305
      %v1348 = vpack.c.b16 %v1308, %v1306
      %v1349 = vpack.c.b16 %v1311, %v1309
      %v1350 = vpack.c.b16 %v1312, %v1310
      %v1351 = vpack.c.b16 %v1315, %v1313
      %v1352 = vpack.c.b16 %v1316, %v1314
      %v1353 = vpack.c.b16 %v1319, %v1317
      %v1354 = vpack.c.b16 %v1320, %v1318
      %v1355 = vpack.c.b16 %v1323, %v1321
      %v1356 = vpack.c.b16 %v1324, %v1322
      %1389 = vmatprep.subr.bf16.mxu0 %v1326
      %1390 = vmatpush1.bf16.msra.mxu0 %v1325
      %1391 = vmatprep.subr.bf16.mxu0 %v1328
      %1392 = vmatpush1.bf16.msra.mxu0 %v1327
      %1393 = vmatprep.subr.bf16.mxu0 %v1330
      %1394 = vmatpush1.bf16.msra.mxu0 %v1329
      %1395 = vmatprep.subr.bf16.mxu0 %v1332
      %1396 = vmatpush1.bf16.msra.mxu0 %v1331
      %1397 = vmatprep.subr.bf16.mxu0 %v1334
      %1398 = vmatpush1.bf16.msra.mxu0 %v1333
      %1399 = vmatprep.subr.bf16.mxu0 %v1336
      %1400 = vmatpush1.bf16.msra.mxu0 %v1335
      %1401 = vmatprep.subr.bf16.mxu0 %v1338
      %1402 = vmatpush1.bf16.msra.mxu0 %v1337
      %1403 = vmatprep.subr.bf16.mxu0 %v1340
      %1404 = vmatpush1.bf16.msra.mxu0 %v1339
      %1405 = vmatprep.subr.bf16.mxu0 %v1342
      %1406 = vmatpush1.bf16.msra.mxu0 %v1341
      %1407 = vmatprep.subr.bf16.mxu0 %v1344
      %1408 = vmatpush1.bf16.msra.mxu0 %v1343
      %1409 = vmatprep.subr.bf16.mxu0 %v1346
      %1410 = vmatpush1.bf16.msra.mxu0 %v1345
      %1411 = vmatprep.subr.bf16.mxu0 %v1348
      %1412 = vmatpush1.bf16.msra.mxu0 %v1347
      %1413 = vmatprep.subr.bf16.mxu0 %v1350
      %1414 = vmatpush1.bf16.msra.mxu0 %v1349
      %1415 = vmatprep.subr.bf16.mxu0 %v1352
      %1416 = vmatpush1.bf16.msra.mxu0 %v1351
      %1417 = vmatprep.subr.bf16.mxu0 %v1354
      %1418 = vmatpush1.bf16.msra.mxu0 %v1353
      %1419 = vmatprep.subr.bf16.mxu0 %v1356
      %1420 = vmatpush1.bf16.msra.mxu0 %v1355
      %1421 = vmatprep.mubr.bf16.mxu0 %v981
      %1422 = vmatmul.mubr.bf16.gmra.mrb[0].mxu0 %v980
      %v1423 = vpop.f32.mrb[0].mxu0
      %v1424 = vadd.f32 %v1222, %v1423
      %v1425 = vpop.f32.mrb[0].mxu0
      %v1426 = vadd.f32 %v1226, %v1425
      %v1427 = vpop.f32.mrb[0].mxu0
      %v1428 = vpop.f32.mrb[0].mxu0
      %1429 = vdwg.mxu0
      %v1430 = vpack.c.bf16 %v931, %v931
      %v1431 = vpack.c.bf16 %v932, %v932
      %v1432 = vpack.c.bf16 %v1179, %v1179
      %v1433 = vpack.c.bf16 %v1181, %v1181
      %v1434 = vpack.c.bf16 %v1424, %v1424
      %v1435 = vpack.c.bf16 %v1426, %v1426
      %v1437 = vlaneseq
      %v1438 = vshrl.u32 %v1437, 7
      %v1439 = vsub.s32 0, %v1438
      %v1440 = vrot.slane %v676, %v1439
      %1442 = vmatprep.subr.bf16.mxu0 0
      %1443 = vmatpush1.bf16.xpose.msra.mxu0 %v1432
      %1444 = vmatprep.subr.bf16.mxu0 0
      %1445 = vmatpush1.bf16.xpose.msra.mxu0 0
      %1446 = vmatprep.subr.bf16.mxu0 0
      %1447 = vmatpush1.bf16.xpose.msra.mxu0 0
      %1448 = vmatprep.subr.bf16.mxu0 0
      %1449 = vmatpush1.bf16.xpose.msra.mxu0 0
      %1450 = vmatprep.subr.bf16.mxu0 0
      %1451 = vmatpush1.bf16.xpose.msra.mxu0 0
      %1452 = vmatprep.subr.bf16.mxu0 0
      %1453 = vmatpush1.bf16.xpose.msra.mxu0 0
      %1454 = vmatprep.subr.bf16.mxu0 0
      %1455 = vmatpush1.bf16.xpose.msra.mxu0 0
      %1456 = vmatprep.subr.bf16.mxu0 0
      %1457 = vmatpush1.bf16.xpose.msra.mxu0 0
      %1458 = vmatprep.subr.bf16.mxu0 0
      %1459 = vmatpush1.bf16.xpose.msra.mxu0 0
      %1460 = vmatprep.subr.bf16.mxu0 0
      %1461 = vmatpush1.bf16.xpose.msra.mxu0 0
      %1462 = vmatprep.subr.bf16.mxu0 0
      %1463 = vmatpush1.bf16.xpose.msra.mxu0 0
      %1464 = vmatprep.subr.bf16.mxu0 0
      %1465 = vmatpush1.bf16.xpose.msra.mxu0 0
      %1466 = vmatprep.subr.bf16.mxu0 0
      %1467 = vmatpush1.bf16.xpose.msra.mxu0 0
      %1468 = vmatprep.subr.bf16.mxu0 0
      %1469 = vmatpush1.bf16.xpose.msra.mxu0 0
      %1470 = vmatprep.subr.bf16.mxu0 0
      %1471 = vmatpush1.bf16.xpose.msra.mxu0 0
      %1472 = vmatprep.subr.bf16.mxu0 0
      %1473 = vmatpush1.bf16.xpose.msra.mxu0 0
      %1474 = vmatprep.mubr.bf16.mxu0 0
      %1475 = vmatmul.mubr.bf16.gmra.mrb[0].mxu0 %v1430
      %v1476 = vpop.f32.mrb[0].mxu0
      %v1477 = vadd.f32 %v1440, %v1476
      %v1478 = vpop.f32.mrb[0].mxu0
      %v1479 = vpop.f32.mrb[0].mxu0
      %v1480 = vpop.f32.mrb[0].mxu0
      %1481 = vdwg.mxu0
      %vm1482 = vcmask 64512
      %v1483 = vsel %vm1482, %v1477, -inf
      %1484 = vmax.xlane.f32.xlu0 %v1483
      %v1485 = vpop.xlane.xlu0 %1484
      %v1486 = vsub.f32 %v1477, %v1485
      %v1487 = vmul.f32 %v1486, 1.442695
      %v1488 = vpow.pop %v1487
      %v1489 = vsel %vm1482, %v1488, 0.0
      %1490 = vadd.xlane.f32.xlu0 %v1489
      %v1491 = vpop.xlane.xlu0 %1490
      %v1492 = vrcp.pop %v1491
      %v1493 = vmul.f32 %v1488, %v1492
      %v1494 = vpack.c.bf16 %v1493, %v1493
      %v1496 = vsel %vm1482, %v1494, 0
      %vm1498 = vcmask 1043456
      %v1500 = vsel %vm1498, %v1434, 0
      %1502 = vmatprep.subr.bf16.mxu0 0
      %1503 = vmatpush1.bf16.msra.mxu0 %v1500
      %1504 = vmatprep.subr.bf16.mxu0 0
      %1505 = vmatpush1.bf16.msra.mxu0 0
      %1506 = vmatprep.subr.bf16.mxu0 0
      %1507 = vmatpush1.bf16.msra.mxu0 0
      %1508 = vmatprep.subr.bf16.mxu0 0
      %1509 = vmatpush1.bf16.msra.mxu0 0
      %1510 = vmatprep.subr.bf16.mxu0 0
      %1511 = vmatpush1.bf16.msra.mxu0 0
      %1512 = vmatprep.subr.bf16.mxu0 0
      %1513 = vmatpush1.bf16.msra.mxu0 0
      %1514 = vmatprep.subr.bf16.mxu0 0
      %1515 = vmatpush1.bf16.msra.mxu0 0
      %1516 = vmatprep.subr.bf16.mxu0 0
      %1517 = vmatpush1.bf16.msra.mxu0 0
      %1518 = vmatprep.subr.bf16.mxu0 0
      %1519 = vmatpush1.bf16.msra.mxu0 0
      %1520 = vmatprep.subr.bf16.mxu0 0
      %1521 = vmatpush1.bf16.msra.mxu0 0
      %1522 = vmatprep.subr.bf16.mxu0 0
      %1523 = vmatpush1.bf16.msra.mxu0 0
      %1524 = vmatprep.subr.bf16.mxu0 0
      %1525 = vmatpush1.bf16.msra.mxu0 0
      %1526 = vmatprep.subr.bf16.mxu0 0
      %1527 = vmatpush1.bf16.msra.mxu0 0
      %1528 = vmatprep.subr.bf16.mxu0 0
      %1529 = vmatpush1.bf16.msra.mxu0 0
      %1530 = vmatprep.subr.bf16.mxu0 0
      %1531 = vmatpush1.bf16.msra.mxu0 0
      %1532 = vmatprep.subr.bf16.mxu0 0
      %1533 = vmatpush1.bf16.msra.mxu0 0
      %1534 = vmatprep.mubr.bf16.mxu0 0
      %1535 = vmatmul.mubr.bf16.gmra.mrb[0].mxu0 %v1496
      %v1536 = vpop.f32.mrb[0].mxu0
      %v1537 = vadd.f32 0.0, %v1536
      %v1538 = vpop.f32.mrb[0].mxu0
      %v1539 = vpop.f32.mrb[0].mxu0
      %v1540 = vpop.f32.mrb[0].mxu0
      %1541 = vdwg.mxu0
      %v1542 = vpack.c.bf16 %v1537, %v1537
      %v1543 = vld [vmem:[%s9] sm:$0xff]
      %v1544 = vld [vmem:[%s9 + $0x8] sm:$0xff]
      %v1545 = vld [vmem:[%s9 + $0x10] sm:$0xff]
      %v1546 = vld [vmem:[%s9 + $0x18] sm:$0xff]
      %v1547 = vld [vmem:[%s9 + $0x20] sm:$0xff]
      %v1548 = vld [vmem:[%s9 + $0x28] sm:$0xff]
      %v1549 = vld [vmem:[%s9 + $0x30] sm:$0xff]
      %v1550 = vld [vmem:[%s9 + $0x38] sm:$0xff]
      %v1551 = vld [vmem:[%s9 + $0x40] sm:$0xff]
      %v1552 = vld [vmem:[%s9 + $0x48] sm:$0xff]
      %v1553 = vld [vmem:[%s9 + $0x50] sm:$0xff]
      %v1554 = vld [vmem:[%s9 + $0x58] sm:$0xff]
      %v1555 = vld [vmem:[%s9 + $0x60] sm:$0xff]
      %v1556 = vld [vmem:[%s9 + $0x68] sm:$0xff]
      %v1557 = vld [vmem:[%s9 + $0x70] sm:$0xff]
      %v1558 = vld [vmem:[%s9 + $0x78] sm:$0xff]
      %1559 = vmatprep.subr.bf16.mxu0 0
      %1560 = vmatpush1.bf16.xpose.msra.mxu0 %v1433
      %1561 = vmatprep.subr.bf16.mxu0 0
      %1562 = vmatpush1.bf16.xpose.msra.mxu0 0
      %1563 = vmatprep.subr.bf16.mxu0 0
      %1564 = vmatpush1.bf16.xpose.msra.mxu0 0
      %1565 = vmatprep.subr.bf16.mxu0 0
      %1566 = vmatpush1.bf16.xpose.msra.mxu0 0
      %1567 = vmatprep.subr.bf16.mxu0 0
      %1568 = vmatpush1.bf16.xpose.msra.mxu0 0
      %1569 = vmatprep.subr.bf16.mxu0 0
      %1570 = vmatpush1.bf16.xpose.msra.mxu0 0
      %1571 = vmatprep.subr.bf16.mxu0 0
      %1572 = vmatpush1.bf16.xpose.msra.mxu0 0
      %1573 = vmatprep.subr.bf16.mxu0 0
      %1574 = vmatpush1.bf16.xpose.msra.mxu0 0
      %1575 = vmatprep.subr.bf16.mxu0 0
      %1576 = vmatpush1.bf16.xpose.msra.mxu0 0
      %1577 = vmatprep.subr.bf16.mxu0 0
      %1578 = vmatpush1.bf16.xpose.msra.mxu0 0
      %1579 = vmatprep.subr.bf16.mxu0 0
      %1580 = vmatpush1.bf16.xpose.msra.mxu0 0
      %1581 = vmatprep.subr.bf16.mxu0 0
      %1582 = vmatpush1.bf16.xpose.msra.mxu0 0
      %1583 = vmatprep.subr.bf16.mxu0 0
      %1584 = vmatpush1.bf16.xpose.msra.mxu0 0
      %1585 = vmatprep.subr.bf16.mxu0 0
      %1586 = vmatpush1.bf16.xpose.msra.mxu0 0
      %1587 = vmatprep.subr.bf16.mxu0 0
      %1588 = vmatpush1.bf16.xpose.msra.mxu0 0
      %1589 = vmatprep.subr.bf16.mxu0 0
      %1590 = vmatpush1.bf16.xpose.msra.mxu0 0
      %1591 = vmatprep.mubr.bf16.mxu0 0
      %1592 = vmatmul.mubr.bf16.gmra.mrb[0].mxu0 %v1431
      %v1593 = vpop.f32.mrb[0].mxu0
      %v1594 = vadd.f32 %v1440, %v1593
      %v1595 = vpop.f32.mrb[0].mxu0
      %v1596 = vpop.f32.mrb[0].mxu0
      %v1597 = vpop.f32.mrb[0].mxu0
      %1598 = vdwg.mxu0
      %v1599 = vsel %vm1482, %v1594, -inf
      %1600 = vmax.xlane.f32.xlu0 %v1599
      %v1601 = vpop.xlane.xlu0 %1600
      %v1602 = vsub.f32 %v1594, %v1601
      %v1603 = vmul.f32 %v1602, 1.442695
      %v1604 = vpow.pop %v1603
      %v1605 = vsel %vm1482, %v1604, 0.0
      %1606 = vadd.xlane.f32.xlu0 %v1605
      %v1607 = vpop.xlane.xlu0 %1606
      %v1608 = vrcp.pop %v1607
      %v1609 = vmul.f32 %v1604, %v1608
      %v1610 = vpack.c.bf16 %v1609, %v1609
      %v1612 = vsel %vm1482, %v1610, 0
      %v1615 = vsel %vm1498, %v1435, 0
      %1617 = vmatprep.subr.bf16.mxu0 0
      %1618 = vmatpush1.bf16.msra.mxu0 %v1615
      %1619 = vmatprep.subr.bf16.mxu0 0
      %1620 = vmatpush1.bf16.msra.mxu0 0
      %1621 = vmatprep.subr.bf16.mxu0 0
      %1622 = vmatpush1.bf16.msra.mxu0 0
      %1623 = vmatprep.subr.bf16.mxu0 0
      %1624 = vmatpush1.bf16.msra.mxu0 0
      %1625 = vmatprep.subr.bf16.mxu0 0
      %1626 = vmatpush1.bf16.msra.mxu0 0
      %1627 = vmatprep.subr.bf16.mxu0 0
      %1628 = vmatpush1.bf16.msra.mxu0 0
      %1629 = vmatprep.subr.bf16.mxu0 0
      %1630 = vmatpush1.bf16.msra.mxu0 0
      %1631 = vmatprep.subr.bf16.mxu0 0
      %1632 = vmatpush1.bf16.msra.mxu0 0
      %1633 = vmatprep.subr.bf16.mxu0 0
      %1634 = vmatpush1.bf16.msra.mxu0 0
      %1635 = vmatprep.subr.bf16.mxu0 0
      %1636 = vmatpush1.bf16.msra.mxu0 0
      %1637 = vmatprep.subr.bf16.mxu0 0
      %1638 = vmatpush1.bf16.msra.mxu0 0
      %1639 = vmatprep.subr.bf16.mxu0 0
      %1640 = vmatpush1.bf16.msra.mxu0 0
      %1641 = vmatprep.subr.bf16.mxu0 0
      %1642 = vmatpush1.bf16.msra.mxu0 0
      %1643 = vmatprep.subr.bf16.mxu0 0
      %1644 = vmatpush1.bf16.msra.mxu0 0
      %1645 = vmatprep.subr.bf16.mxu0 0
      %1646 = vmatpush1.bf16.msra.mxu0 0
      %1647 = vmatprep.subr.bf16.mxu0 0
      %1648 = vmatpush1.bf16.msra.mxu0 0
      %1649 = vmatprep.mubr.bf16.mxu0 0
      %1650 = vmatmul.mubr.bf16.gmra.mrb[0].mxu0 %v1612
      %v1651 = vpop.f32.mrb[0].mxu0
      %v1652 = vadd.f32 0.0, %v1651
      %v1653 = vpop.f32.mrb[0].mxu0
      %v1654 = vpop.f32.mrb[0].mxu0
      %v1655 = vpop.f32.mrb[0].mxu0
      %1656 = vdwg.mxu0
      %v1657 = vpack.c.bf16 %v1652, %v1652
      %s1658 = scalar_lea.vmem %s9, 128
      %v1659 = vld [vmem:[%s1658] sm:$0xff]
      %v1660 = vld [vmem:[%s1658 + $0x8] sm:$0xff]
      %v1661 = vld [vmem:[%s1658 + $0x10] sm:$0xff]
      %v1662 = vld [vmem:[%s1658 + $0x18] sm:$0xff]
      %v1663 = vld [vmem:[%s1658 + $0x20] sm:$0xff]
      %v1664 = vld [vmem:[%s1658 + $0x28] sm:$0xff]
      %v1665 = vld [vmem:[%s1658 + $0x30] sm:$0xff]
      %v1666 = vld [vmem:[%s1658 + $0x38] sm:$0xff]
      %v1667 = vld [vmem:[%s1658 + $0x40] sm:$0xff]
      %v1668 = vld [vmem:[%s1658 + $0x48] sm:$0xff]
      %v1669 = vld [vmem:[%s1658 + $0x50] sm:$0xff]
      %v1670 = vld [vmem:[%s1658 + $0x58] sm:$0xff]
      %v1671 = vld [vmem:[%s1658 + $0x60] sm:$0xff]
      %v1672 = vld [vmem:[%s1658 + $0x68] sm:$0xff]
      %v1673 = vld [vmem:[%s1658 + $0x70] sm:$0xff]
      %v1674 = vld [vmem:[%s1658 + $0x78] sm:$0xff]
      %v1691 = vunpack.c.l.b16 %v1659
      %v1692 = vunpack.c.h.b16 %v1659
      %v1693 = vunpack.c.l.b16 %v1660
      %v1694 = vunpack.c.h.b16 %v1660
      %v1695 = vunpack.c.l.b16 %v1661
      %v1696 = vunpack.c.h.b16 %v1661
      %v1697 = vunpack.c.l.b16 %v1662
      %v1698 = vunpack.c.h.b16 %v1662
      %v1699 = vunpack.c.l.b16 %v1663
      %v1700 = vunpack.c.h.b16 %v1663
      %v1701 = vunpack.c.l.b16 %v1664
      %v1702 = vunpack.c.h.b16 %v1664
      %v1703 = vunpack.c.l.b16 %v1665
      %v1704 = vunpack.c.h.b16 %v1665
      %v1705 = vunpack.c.l.b16 %v1666
      %v1706 = vunpack.c.h.b16 %v1666
      %v1707 = vunpack.c.l.b16 %v1667
      %v1708 = vunpack.c.h.b16 %v1667
      %v1709 = vunpack.c.l.b16 %v1668
      %v1710 = vunpack.c.h.b16 %v1668
      %v1711 = vunpack.c.l.b16 %v1669
      %v1712 = vunpack.c.h.b16 %v1669
      %v1713 = vunpack.c.l.b16 %v1670
      %v1714 = vunpack.c.h.b16 %v1670
      %v1715 = vunpack.c.l.b16 %v1671
      %v1716 = vunpack.c.h.b16 %v1671
      %v1717 = vunpack.c.l.b16 %v1672
      %v1718 = vunpack.c.h.b16 %v1672
      %v1719 = vunpack.c.l.b16 %v1673
      %v1720 = vunpack.c.h.b16 %v1673
      %v1721 = vunpack.c.l.b16 %v1674
      %v1722 = vunpack.c.h.b16 %v1674
      %v1723 = vpack.c.b16 %v1693, %v1691
      %v1724 = vpack.c.b16 %v1694, %v1692
      %v1725 = vpack.c.b16 %v1697, %v1695
      %v1726 = vpack.c.b16 %v1698, %v1696
      %v1727 = vpack.c.b16 %v1701, %v1699
      %v1728 = vpack.c.b16 %v1702, %v1700
      %v1729 = vpack.c.b16 %v1705, %v1703
      %v1730 = vpack.c.b16 %v1706, %v1704
      %v1731 = vpack.c.b16 %v1709, %v1707
      %v1732 = vpack.c.b16 %v1710, %v1708
      %v1733 = vpack.c.b16 %v1713, %v1711
      %v1734 = vpack.c.b16 %v1714, %v1712
      %v1735 = vpack.c.b16 %v1717, %v1715
      %v1736 = vpack.c.b16 %v1718, %v1716
      %v1737 = vpack.c.b16 %v1721, %v1719
      %v1738 = vpack.c.b16 %v1722, %v1720
      %1755 = vmatprep.subr.bf16.mxu0 %v1724
      %1756 = vmatpush1.bf16.msra.mxu0 %v1723
      %1757 = vmatprep.subr.bf16.mxu0 %v1726
      %1758 = vmatpush1.bf16.msra.mxu0 %v1725
      %1759 = vmatprep.subr.bf16.mxu0 %v1728
      %1760 = vmatpush1.bf16.msra.mxu0 %v1727
      %1761 = vmatprep.subr.bf16.mxu0 %v1730
      %1762 = vmatpush1.bf16.msra.mxu0 %v1729
      %1763 = vmatprep.subr.bf16.mxu0 %v1732
      %1764 = vmatpush1.bf16.msra.mxu0 %v1731
      %1765 = vmatprep.subr.bf16.mxu0 %v1734
      %1766 = vmatpush1.bf16.msra.mxu0 %v1733
      %1767 = vmatprep.subr.bf16.mxu0 %v1736
      %1768 = vmatpush1.bf16.msra.mxu0 %v1735
      %1769 = vmatprep.subr.bf16.mxu0 %v1738
      %1770 = vmatpush1.bf16.msra.mxu0 %v1737
      %1771 = vmatprep.subr.bf16.mxu0 0
      %1772 = vmatpush1.bf16.msra.mxu0 0
      %1773 = vmatprep.subr.bf16.mxu0 0
      %1774 = vmatpush1.bf16.msra.mxu0 0
      %1775 = vmatprep.subr.bf16.mxu0 0
      %1776 = vmatpush1.bf16.msra.mxu0 0
      %1777 = vmatprep.subr.bf16.mxu0 0
      %1778 = vmatpush1.bf16.msra.mxu0 0
      %1779 = vmatprep.subr.bf16.mxu0 0
      %1780 = vmatpush1.bf16.msra.mxu0 0
      %1781 = vmatprep.subr.bf16.mxu0 0
      %1782 = vmatpush1.bf16.msra.mxu0 0
      %1783 = vmatprep.subr.bf16.mxu0 0
      %1784 = vmatpush1.bf16.msra.mxu0 0
      %1785 = vmatprep.subr.bf16.mxu0 0
      %1786 = vmatpush1.bf16.msra.mxu0 0
      %1787 = vmatprep.mubr.bf16.mxu0 0
      %1788 = vmatmul.mubr.bf16.gmra.mrb[0].mxu0 %v1657
      %v1789 = vpop.f32.mrb[0].mxu0
      %v1790 = vadd.f32 0.0, %v1789
      %v1791 = vpop.f32.mrb[0].mxu0
      %v1792 = vadd.f32 0.0, %v1791
      %v1793 = vpop.f32.mrb[0].mxu0
      %v1794 = vpop.f32.mrb[0].mxu0
      %1795 = vdwg.mxu0
      %v1812 = vunpack.c.l.b16 %v1543
      %v1813 = vunpack.c.h.b16 %v1543
      %v1814 = vunpack.c.l.b16 %v1544
      %v1815 = vunpack.c.h.b16 %v1544
      %v1816 = vunpack.c.l.b16 %v1545
      %v1817 = vunpack.c.h.b16 %v1545
      %v1818 = vunpack.c.l.b16 %v1546
      %v1819 = vunpack.c.h.b16 %v1546
      %v1820 = vunpack.c.l.b16 %v1547
      %v1821 = vunpack.c.h.b16 %v1547
      %v1822 = vunpack.c.l.b16 %v1548
      %v1823 = vunpack.c.h.b16 %v1548
      %v1824 = vunpack.c.l.b16 %v1549
      %v1825 = vunpack.c.h.b16 %v1549
      %v1826 = vunpack.c.l.b16 %v1550
      %v1827 = vunpack.c.h.b16 %v1550
      %v1828 = vunpack.c.l.b16 %v1551
      %v1829 = vunpack.c.h.b16 %v1551
      %v1830 = vunpack.c.l.b16 %v1552
      %v1831 = vunpack.c.h.b16 %v1552
      %v1832 = vunpack.c.l.b16 %v1553
      %v1833 = vunpack.c.h.b16 %v1553
      %v1834 = vunpack.c.l.b16 %v1554
      %v1835 = vunpack.c.h.b16 %v1554
      %v1836 = vunpack.c.l.b16 %v1555
      %v1837 = vunpack.c.h.b16 %v1555
      %v1838 = vunpack.c.l.b16 %v1556
      %v1839 = vunpack.c.h.b16 %v1556
      %v1840 = vunpack.c.l.b16 %v1557
      %v1841 = vunpack.c.h.b16 %v1557
      %v1842 = vunpack.c.l.b16 %v1558
      %v1843 = vunpack.c.h.b16 %v1558
      %v1844 = vpack.c.b16 %v1814, %v1812
      %v1845 = vpack.c.b16 %v1815, %v1813
      %v1846 = vpack.c.b16 %v1818, %v1816
      %v1847 = vpack.c.b16 %v1819, %v1817
      %v1848 = vpack.c.b16 %v1822, %v1820
      %v1849 = vpack.c.b16 %v1823, %v1821
      %v1850 = vpack.c.b16 %v1826, %v1824
      %v1851 = vpack.c.b16 %v1827, %v1825
      %v1852 = vpack.c.b16 %v1830, %v1828
      %v1853 = vpack.c.b16 %v1831, %v1829
      %v1854 = vpack.c.b16 %v1834, %v1832
      %v1855 = vpack.c.b16 %v1835, %v1833
      %v1856 = vpack.c.b16 %v1838, %v1836
      %v1857 = vpack.c.b16 %v1839, %v1837
      %v1858 = vpack.c.b16 %v1842, %v1840
      %v1859 = vpack.c.b16 %v1843, %v1841
      %1876 = vmatprep.subr.bf16.mxu0 %v1845
      %1877 = vmatpush1.bf16.msra.mxu0 %v1844
      %1878 = vmatprep.subr.bf16.mxu0 %v1847
      %1879 = vmatpush1.bf16.msra.mxu0 %v1846
      %1880 = vmatprep.subr.bf16.mxu0 %v1849
      %1881 = vmatpush1.bf16.msra.mxu0 %v1848
      %1882 = vmatprep.subr.bf16.mxu0 %v1851
      %1883 = vmatpush1.bf16.msra.mxu0 %v1850
      %1884 = vmatprep.subr.bf16.mxu0 %v1853
      %1885 = vmatpush1.bf16.msra.mxu0 %v1852
      %1886 = vmatprep.subr.bf16.mxu0 %v1855
      %1887 = vmatpush1.bf16.msra.mxu0 %v1854
      %1888 = vmatprep.subr.bf16.mxu0 %v1857
      %1889 = vmatpush1.bf16.msra.mxu0 %v1856
      %1890 = vmatprep.subr.bf16.mxu0 %v1859
      %1891 = vmatpush1.bf16.msra.mxu0 %v1858
      %1892 = vmatprep.subr.bf16.mxu0 0
      %1893 = vmatpush1.bf16.msra.mxu0 0
      %1894 = vmatprep.subr.bf16.mxu0 0
      %1895 = vmatpush1.bf16.msra.mxu0 0
      %1896 = vmatprep.subr.bf16.mxu0 0
      %1897 = vmatpush1.bf16.msra.mxu0 0
      %1898 = vmatprep.subr.bf16.mxu0 0
      %1899 = vmatpush1.bf16.msra.mxu0 0
      %1900 = vmatprep.subr.bf16.mxu0 0
      %1901 = vmatpush1.bf16.msra.mxu0 0
      %1902 = vmatprep.subr.bf16.mxu0 0
      %1903 = vmatpush1.bf16.msra.mxu0 0
      %1904 = vmatprep.subr.bf16.mxu0 0
      %1905 = vmatpush1.bf16.msra.mxu0 0
      %1906 = vmatprep.subr.bf16.mxu0 0
      %1907 = vmatpush1.bf16.msra.mxu0 0
      %1908 = vmatprep.mubr.bf16.mxu0 0
      %1909 = vmatmul.mubr.bf16.gmra.mrb[0].mxu0 %v1542
      %v1910 = vpop.f32.mrb[0].mxu0
      %v1911 = vadd.f32 %v1790, %v1910
      %v1912 = vpop.f32.mrb[0].mxu0
      %v1913 = vadd.f32 %v1792, %v1912
      %v1914 = vpop.f32.mrb[0].mxu0
      %v1915 = vpop.f32.mrb[0].mxu0
      %1916 = vdwg.mxu0
      %v1917 = vld [vmem:[%s10] sm:$0x3]
      %v1919 = vlaneseq
      %v1920 = vshrl.u32 %v1919, 7
      %v1921 = vsub.s32 0, %v1920
      %v1922 = vrot.slane %v1917, %v1921
      %v1923 = vlaneseq
      %v1924 = vshrl.u32 %v1923, 7
      %v1925 = vsub.s32 1, %v1924
      %v1926 = vrot.slane %v1917, %v1925
      %v1929 = vadd.f32 %v1911, %v1922
      %v1930 = vadd.f32 %v1913, %v1926
      %v1931 = vadd.f32 %v677, %v1929
      %v1932 = vadd.f32 %v678, %v1930
      %v1933 = vadd.f32 %v1931, %v1932
      %1934 = vadd.xlane.f32.xlu0 %v1933
      %v1935 = vpop.xlane.xlu0 %1934
      %v1936 = vrcp.pop 256.0
      %v1937 = vmul.f32 %v1935, %v1936
      %v1938 = vsub.f32 %v1931, %v1937
      %v1939 = vsub.f32 %v1932, %v1937
      %v1940 = vmul.f32 %v1938, %v1938
      %v1941 = vmul.f32 %v1939, %v1939
      %v1942 = vadd.f32 %v1940, %v1941
      %1943 = vadd.xlane.f32.xlu0 %v1942
      %v1944 = vpop.xlane.xlu0 %1943
      %v1945 = vmul.f32 %v1944, %v1936
      %v1946 = vadd.f32 %v1945, 1e-12
      %v1947 = vrsqrt.pop %v1946
      %v1948 = vmul.f32 %v1938, %v1947
      %v1949 = vmul.f32 %v1939, %v1947
      %v1950 = vld [vmem:[%s11] sm:$0x3]
      %v1952 = vlaneseq
      %v1953 = vshrl.u32 %v1952, 7
      %v1954 = vsub.s32 0, %v1953
      %v1955 = vrot.slane %v1950, %v1954
      %v1956 = vlaneseq
      %v1957 = vshrl.u32 %v1956, 7
      %v1958 = vsub.s32 1, %v1957
      %v1959 = vrot.slane %v1950, %v1958
      %v1962 = vmul.f32 %v1955, %v1948
      %v1963 = vmul.f32 %v1959, %v1949
      %v1964 = vld [vmem:[%s12] sm:$0x3]
      %v1966 = vlaneseq
      %v1967 = vshrl.u32 %v1966, 7
      %v1968 = vsub.s32 0, %v1967
      %v1969 = vrot.slane %v1964, %v1968
      %v1970 = vlaneseq
      %v1971 = vshrl.u32 %v1970, 7
      %v1972 = vsub.s32 1, %v1971
      %v1973 = vrot.slane %v1964, %v1972
      %v1976 = vadd.f32 %v1962, %v1969
      %v1977 = vadd.f32 %v1963, %v1973
      %v1978 = vpack.c.bf16 %v1976, %v1976
      %v1979 = vpack.c.bf16 %v1977, %v1977
      %v1980 = vld [vmem:[%s13] sm:$0xff]
      %v1981 = vld [vmem:[%s13 + $0x8] sm:$0xff]
      %v1982 = vld [vmem:[%s13 + $0x10] sm:$0xff]
      %v1983 = vld [vmem:[%s13 + $0x18] sm:$0xff]
      %v1984 = vld [vmem:[%s13 + $0x20] sm:$0xff]
      %v1985 = vld [vmem:[%s13 + $0x28] sm:$0xff]
      %v1986 = vld [vmem:[%s13 + $0x30] sm:$0xff]
      %v1987 = vld [vmem:[%s13 + $0x38] sm:$0xff]
      %v1988 = vld [vmem:[%s13 + $0x40] sm:$0xff]
      %v1989 = vld [vmem:[%s13 + $0x48] sm:$0xff]
      %v1990 = vld [vmem:[%s13 + $0x50] sm:$0xff]
      %v1991 = vld [vmem:[%s13 + $0x58] sm:$0xff]
      %v1992 = vld [vmem:[%s13 + $0x60] sm:$0xff]
      %v1993 = vld [vmem:[%s13 + $0x68] sm:$0xff]
      %v1994 = vld [vmem:[%s13 + $0x70] sm:$0xff]
      %v1995 = vld [vmem:[%s13 + $0x78] sm:$0xff]
      %v1996 = vld [vmem:[%s13 + $0x80] sm:$0xff]
      %v1997 = vld [vmem:[%s13 + $0x88] sm:$0xff]
      %v1998 = vld [vmem:[%s13 + $0x90] sm:$0xff]
      %v1999 = vld [vmem:[%s13 + $0x98] sm:$0xff]
      %v2000 = vld [vmem:[%s13 + $0xa0] sm:$0xff]
      %v2001 = vld [vmem:[%s13 + $0xa8] sm:$0xff]
      %v2002 = vld [vmem:[%s13 + $0xb0] sm:$0xff]
      %v2003 = vld [vmem:[%s13 + $0xb8] sm:$0xff]
      %v2004 = vld [vmem:[%s13 + $0xc0] sm:$0xff]
      %v2005 = vld [vmem:[%s13 + $0xc8] sm:$0xff]
      %v2006 = vld [vmem:[%s13 + $0xd0] sm:$0xff]
      %v2007 = vld [vmem:[%s13 + $0xd8] sm:$0xff]
      %v2008 = vld [vmem:[%s13 + $0xe0] sm:$0xff]
      %v2009 = vld [vmem:[%s13 + $0xe8] sm:$0xff]
      %v2010 = vld [vmem:[%s13 + $0xf0] sm:$0xff]
      %v2011 = vld [vmem:[%s13 + $0xf8] sm:$0xff]
      %v2012 = vld [vmem:[%s14] sm:$0x3]
      %v2014 = vlaneseq
      %v2015 = vshrl.u32 %v2014, 7
      %v2016 = vsub.s32 0, %v2015
      %v2017 = vrot.slane %v2012, %v2016
      %v2018 = vlaneseq
      %v2019 = vshrl.u32 %v2018, 7
      %v2020 = vsub.s32 1, %v2019
      %v2021 = vrot.slane %v2012, %v2020
      %v2056 = vunpack.c.l.b16 %v1980
      %v2057 = vunpack.c.h.b16 %v1980
      %v2058 = vunpack.c.l.b16 %v1981
      %v2059 = vunpack.c.h.b16 %v1981
      %v2060 = vunpack.c.l.b16 %v1982
      %v2061 = vunpack.c.h.b16 %v1982
      %v2062 = vunpack.c.l.b16 %v1983
      %v2063 = vunpack.c.h.b16 %v1983
      %v2064 = vunpack.c.l.b16 %v1984
      %v2065 = vunpack.c.h.b16 %v1984
      %v2066 = vunpack.c.l.b16 %v1985
      %v2067 = vunpack.c.h.b16 %v1985
      %v2068 = vunpack.c.l.b16 %v1986
      %v2069 = vunpack.c.h.b16 %v1986
      %v2070 = vunpack.c.l.b16 %v1987
      %v2071 = vunpack.c.h.b16 %v1987
      %v2072 = vunpack.c.l.b16 %v1988
      %v2073 = vunpack.c.h.b16 %v1988
      %v2074 = vunpack.c.l.b16 %v1989
      %v2075 = vunpack.c.h.b16 %v1989
      %v2076 = vunpack.c.l.b16 %v1990
      %v2077 = vunpack.c.h.b16 %v1990
      %v2078 = vunpack.c.l.b16 %v1991
      %v2079 = vunpack.c.h.b16 %v1991
      %v2080 = vunpack.c.l.b16 %v1992
      %v2081 = vunpack.c.h.b16 %v1992
      %v2082 = vunpack.c.l.b16 %v1993
      %v2083 = vunpack.c.h.b16 %v1993
      %v2084 = vunpack.c.l.b16 %v1994
      %v2085 = vunpack.c.h.b16 %v1994
      %v2086 = vunpack.c.l.b16 %v1995
      %v2087 = vunpack.c.h.b16 %v1995
      %v2088 = vunpack.c.l.b16 %v1996
      %v2089 = vunpack.c.h.b16 %v1996
      %v2090 = vunpack.c.l.b16 %v1997
      %v2091 = vunpack.c.h.b16 %v1997
      %v2092 = vunpack.c.l.b16 %v1998
      %v2093 = vunpack.c.h.b16 %v1998
      %v2094 = vunpack.c.l.b16 %v1999
      %v2095 = vunpack.c.h.b16 %v1999
      %v2096 = vunpack.c.l.b16 %v2000
      %v2097 = vunpack.c.h.b16 %v2000
      %v2098 = vunpack.c.l.b16 %v2001
      %v2099 = vunpack.c.h.b16 %v2001
      %v2100 = vunpack.c.l.b16 %v2002
      %v2101 = vunpack.c.h.b16 %v2002
      %v2102 = vunpack.c.l.b16 %v2003
      %v2103 = vunpack.c.h.b16 %v2003
      %v2104 = vunpack.c.l.b16 %v2004
      %v2105 = vunpack.c.h.b16 %v2004
      %v2106 = vunpack.c.l.b16 %v2005
      %v2107 = vunpack.c.h.b16 %v2005
      %v2108 = vunpack.c.l.b16 %v2006
      %v2109 = vunpack.c.h.b16 %v2006
      %v2110 = vunpack.c.l.b16 %v2007
      %v2111 = vunpack.c.h.b16 %v2007
      %v2112 = vunpack.c.l.b16 %v2008
      %v2113 = vunpack.c.h.b16 %v2008
      %v2114 = vunpack.c.l.b16 %v2009
      %v2115 = vunpack.c.h.b16 %v2009
      %v2116 = vunpack.c.l.b16 %v2010
      %v2117 = vunpack.c.h.b16 %v2010
      %v2118 = vunpack.c.l.b16 %v2011
      %v2119 = vunpack.c.h.b16 %v2011
      %v2120 = vpack.c.b16 %v2058, %v2056
      %v2121 = vpack.c.b16 %v2059, %v2057
      %v2122 = vpack.c.b16 %v2062, %v2060
      %v2123 = vpack.c.b16 %v2063, %v2061
      %v2124 = vpack.c.b16 %v2066, %v2064
      %v2125 = vpack.c.b16 %v2067, %v2065
      %v2126 = vpack.c.b16 %v2070, %v2068
      %v2127 = vpack.c.b16 %v2071, %v2069
      %v2128 = vpack.c.b16 %v2074, %v2072
      %v2129 = vpack.c.b16 %v2075, %v2073
      %v2130 = vpack.c.b16 %v2078, %v2076
      %v2131 = vpack.c.b16 %v2079, %v2077
      %v2132 = vpack.c.b16 %v2082, %v2080
      %v2133 = vpack.c.b16 %v2083, %v2081
      %v2134 = vpack.c.b16 %v2086, %v2084
      %v2135 = vpack.c.b16 %v2087, %v2085
      %v2136 = vpack.c.b16 %v2090, %v2088
      %v2137 = vpack.c.b16 %v2091, %v2089
      %v2138 = vpack.c.b16 %v2094, %v2092
      %v2139 = vpack.c.b16 %v2095, %v2093
      %v2140 = vpack.c.b16 %v2098, %v2096
      %v2141 = vpack.c.b16 %v2099, %v2097
      %v2142 = vpack.c.b16 %v2102, %v2100
      %v2143 = vpack.c.b16 %v2103, %v2101
      %v2144 = vpack.c.b16 %v2106, %v2104
      %v2145 = vpack.c.b16 %v2107, %v2105
      %v2146 = vpack.c.b16 %v2110, %v2108
      %v2147 = vpack.c.b16 %v2111, %v2109
      %v2148 = vpack.c.b16 %v2114, %v2112
      %v2149 = vpack.c.b16 %v2115, %v2113
      %v2150 = vpack.c.b16 %v2118, %v2116
      %v2151 = vpack.c.b16 %v2119, %v2117
      %2184 = vmatprep.subr.bf16.mxu0 %v2121
      %2185 = vmatpush1.bf16.msra.mxu0 %v2120
      %2186 = vmatprep.subr.bf16.mxu0 %v2123
      %2187 = vmatpush1.bf16.msra.mxu0 %v2122
      %2188 = vmatprep.subr.bf16.mxu0 %v2125
      %2189 = vmatpush1.bf16.msra.mxu0 %v2124
      %2190 = vmatprep.subr.bf16.mxu0 %v2127
      %2191 = vmatpush1.bf16.msra.mxu0 %v2126
      %2192 = vmatprep.subr.bf16.mxu0 %v2129
      %2193 = vmatpush1.bf16.msra.mxu0 %v2128
      %2194 = vmatprep.subr.bf16.mxu0 %v2131
      %2195 = vmatpush1.bf16.msra.mxu0 %v2130
      %2196 = vmatprep.subr.bf16.mxu0 %v2133
      %2197 = vmatpush1.bf16.msra.mxu0 %v2132
      %2198 = vmatprep.subr.bf16.mxu0 %v2135
      %2199 = vmatpush1.bf16.msra.mxu0 %v2134
      %2200 = vmatprep.subr.bf16.mxu0 %v2137
      %2201 = vmatpush1.bf16.msra.mxu0 %v2136
      %2202 = vmatprep.subr.bf16.mxu0 %v2139
      %2203 = vmatpush1.bf16.msra.mxu0 %v2138
      %2204 = vmatprep.subr.bf16.mxu0 %v2141
      %2205 = vmatpush1.bf16.msra.mxu0 %v2140
      %2206 = vmatprep.subr.bf16.mxu0 %v2143
      %2207 = vmatpush1.bf16.msra.mxu0 %v2142
      %2208 = vmatprep.subr.bf16.mxu0 %v2145
      %2209 = vmatpush1.bf16.msra.mxu0 %v2144
      %2210 = vmatprep.subr.bf16.mxu0 %v2147
      %2211 = vmatpush1.bf16.msra.mxu0 %v2146
      %2212 = vmatprep.subr.bf16.mxu0 %v2149
      %2213 = vmatpush1.bf16.msra.mxu0 %v2148
      %2214 = vmatprep.subr.bf16.mxu0 %v2151
      %2215 = vmatpush1.bf16.msra.mxu0 %v2150
      %2216 = vmatprep.mubr.bf16.mxu0 %v1979
      %2217 = vmatmul.mubr.bf16.gmra.mrb[0].mxu0 %v1978
      %v2218 = vpop.f32.mrb[0].mxu0
      %v2219 = vadd.f32 %v2017, %v2218
      %v2220 = vpop.f32.mrb[0].mxu0
      %v2221 = vadd.f32 %v2021, %v2220
      %v2222 = vpop.f32.mrb[0].mxu0
      %v2223 = vpop.f32.mrb[0].mxu0
      %2224 = vdwg.mxu0
      %v2225 = vmax.f32 %v2219, 0.0
      %v2226 = vmax.f32 %v2221, 0.0
      %v2227 = vpack.c.bf16 %v2225, %v2225
      %v2228 = vpack.c.bf16 %v2226, %v2226
      %v2229 = vld [vmem:[%s15] sm:$0xff]
      %v2230 = vld [vmem:[%s15 + $0x8] sm:$0xff]
      %v2231 = vld [vmem:[%s15 + $0x10] sm:$0xff]
      %v2232 = vld [vmem:[%s15 + $0x18] sm:$0xff]
      %v2233 = vld [vmem:[%s15 + $0x20] sm:$0xff]
      %v2234 = vld [vmem:[%s15 + $0x28] sm:$0xff]
      %v2235 = vld [vmem:[%s15 + $0x30] sm:$0xff]
      %v2236 = vld [vmem:[%s15 + $0x38] sm:$0xff]
      %v2237 = vld [vmem:[%s15 + $0x40] sm:$0xff]
      %v2238 = vld [vmem:[%s15 + $0x48] sm:$0xff]
      %v2239 = vld [vmem:[%s15 + $0x50] sm:$0xff]
      %v2240 = vld [vmem:[%s15 + $0x58] sm:$0xff]
      %v2241 = vld [vmem:[%s15 + $0x60] sm:$0xff]
      %v2242 = vld [vmem:[%s15 + $0x68] sm:$0xff]
      %v2243 = vld [vmem:[%s15 + $0x70] sm:$0xff]
      %v2244 = vld [vmem:[%s15 + $0x78] sm:$0xff]
      %v2245 = vld [vmem:[%s15 + $0x80] sm:$0xff]
      %v2246 = vld [vmem:[%s15 + $0x88] sm:$0xff]
      %v2247 = vld [vmem:[%s15 + $0x90] sm:$0xff]
      %v2248 = vld [vmem:[%s15 + $0x98] sm:$0xff]
      %v2249 = vld [vmem:[%s15 + $0xa0] sm:$0xff]
      %v2250 = vld [vmem:[%s15 + $0xa8] sm:$0xff]
      %v2251 = vld [vmem:[%s15 + $0xb0] sm:$0xff]
      %v2252 = vld [vmem:[%s15 + $0xb8] sm:$0xff]
      %v2253 = vld [vmem:[%s15 + $0xc0] sm:$0xff]
      %v2254 = vld [vmem:[%s15 + $0xc8] sm:$0xff]
      %v2255 = vld [vmem:[%s15 + $0xd0] sm:$0xff]
      %v2256 = vld [vmem:[%s15 + $0xd8] sm:$0xff]
      %v2257 = vld [vmem:[%s15 + $0xe0] sm:$0xff]
      %v2258 = vld [vmem:[%s15 + $0xe8] sm:$0xff]
      %v2259 = vld [vmem:[%s15 + $0xf0] sm:$0xff]
      %v2260 = vld [vmem:[%s15 + $0xf8] sm:$0xff]
      %v2261 = vld [vmem:[%s16] sm:$0x3]
      %v2263 = vlaneseq
      %v2264 = vshrl.u32 %v2263, 7
      %v2265 = vsub.s32 0, %v2264
      %v2266 = vrot.slane %v2261, %v2265
      %v2267 = vlaneseq
      %v2268 = vshrl.u32 %v2267, 7
      %v2269 = vsub.s32 1, %v2268
      %v2270 = vrot.slane %v2261, %v2269
      %v2305 = vunpack.c.l.b16 %v2229
      %v2306 = vunpack.c.h.b16 %v2229
      %v2307 = vunpack.c.l.b16 %v2230
      %v2308 = vunpack.c.h.b16 %v2230
      %v2309 = vunpack.c.l.b16 %v2231
      %v2310 = vunpack.c.h.b16 %v2231
      %v2311 = vunpack.c.l.b16 %v2232
      %v2312 = vunpack.c.h.b16 %v2232
      %v2313 = vunpack.c.l.b16 %v2233
      %v2314 = vunpack.c.h.b16 %v2233
      %v2315 = vunpack.c.l.b16 %v2234
      %v2316 = vunpack.c.h.b16 %v2234
      %v2317 = vunpack.c.l.b16 %v2235
      %v2318 = vunpack.c.h.b16 %v2235
      %v2319 = vunpack.c.l.b16 %v2236
      %v2320 = vunpack.c.h.b16 %v2236
      %v2321 = vunpack.c.l.b16 %v2237
      %v2322 = vunpack.c.h.b16 %v2237
      %v2323 = vunpack.c.l.b16 %v2238
      %v2324 = vunpack.c.h.b16 %v2238
      %v2325 = vunpack.c.l.b16 %v2239
      %v2326 = vunpack.c.h.b16 %v2239
      %v2327 = vunpack.c.l.b16 %v2240
      %v2328 = vunpack.c.h.b16 %v2240
      %v2329 = vunpack.c.l.b16 %v2241
      %v2330 = vunpack.c.h.b16 %v2241
      %v2331 = vunpack.c.l.b16 %v2242
      %v2332 = vunpack.c.h.b16 %v2242
      %v2333 = vunpack.c.l.b16 %v2243
      %v2334 = vunpack.c.h.b16 %v2243
      %v2335 = vunpack.c.l.b16 %v2244
      %v2336 = vunpack.c.h.b16 %v2244
      %v2337 = vunpack.c.l.b16 %v2245
      %v2338 = vunpack.c.h.b16 %v2245
      %v2339 = vunpack.c.l.b16 %v2246
      %v2340 = vunpack.c.h.b16 %v2246
      %v2341 = vunpack.c.l.b16 %v2247
      %v2342 = vunpack.c.h.b16 %v2247
      %v2343 = vunpack.c.l.b16 %v2248
      %v2344 = vunpack.c.h.b16 %v2248
      %v2345 = vunpack.c.l.b16 %v2249
      %v2346 = vunpack.c.h.b16 %v2249
      %v2347 = vunpack.c.l.b16 %v2250
      %v2348 = vunpack.c.h.b16 %v2250
      %v2349 = vunpack.c.l.b16 %v2251
      %v2350 = vunpack.c.h.b16 %v2251
      %v2351 = vunpack.c.l.b16 %v2252
      %v2352 = vunpack.c.h.b16 %v2252
      %v2353 = vunpack.c.l.b16 %v2253
      %v2354 = vunpack.c.h.b16 %v2253
      %v2355 = vunpack.c.l.b16 %v2254
      %v2356 = vunpack.c.h.b16 %v2254
      %v2357 = vunpack.c.l.b16 %v2255
      %v2358 = vunpack.c.h.b16 %v2255
      %v2359 = vunpack.c.l.b16 %v2256
      %v2360 = vunpack.c.h.b16 %v2256
      %v2361 = vunpack.c.l.b16 %v2257
      %v2362 = vunpack.c.h.b16 %v2257
      %v2363 = vunpack.c.l.b16 %v2258
      %v2364 = vunpack.c.h.b16 %v2258
      %v2365 = vunpack.c.l.b16 %v2259
      %v2366 = vunpack.c.h.b16 %v2259
      %v2367 = vunpack.c.l.b16 %v2260
      %v2368 = vunpack.c.h.b16 %v2260
      %v2369 = vpack.c.b16 %v2307, %v2305
      %v2370 = vpack.c.b16 %v2308, %v2306
      %v2371 = vpack.c.b16 %v2311, %v2309
      %v2372 = vpack.c.b16 %v2312, %v2310
      %v2373 = vpack.c.b16 %v2315, %v2313
      %v2374 = vpack.c.b16 %v2316, %v2314
      %v2375 = vpack.c.b16 %v2319, %v2317
      %v2376 = vpack.c.b16 %v2320, %v2318
      %v2377 = vpack.c.b16 %v2323, %v2321
      %v2378 = vpack.c.b16 %v2324, %v2322
      %v2379 = vpack.c.b16 %v2327, %v2325
      %v2380 = vpack.c.b16 %v2328, %v2326
      %v2381 = vpack.c.b16 %v2331, %v2329
      %v2382 = vpack.c.b16 %v2332, %v2330
      %v2383 = vpack.c.b16 %v2335, %v2333
      %v2384 = vpack.c.b16 %v2336, %v2334
      %v2385 = vpack.c.b16 %v2339, %v2337
      %v2386 = vpack.c.b16 %v2340, %v2338
      %v2387 = vpack.c.b16 %v2343, %v2341
      %v2388 = vpack.c.b16 %v2344, %v2342
      %v2389 = vpack.c.b16 %v2347, %v2345
      %v2390 = vpack.c.b16 %v2348, %v2346
      %v2391 = vpack.c.b16 %v2351, %v2349
      %v2392 = vpack.c.b16 %v2352, %v2350
      %v2393 = vpack.c.b16 %v2355, %v2353
      %v2394 = vpack.c.b16 %v2356, %v2354
      %v2395 = vpack.c.b16 %v2359, %v2357
      %v2396 = vpack.c.b16 %v2360, %v2358
      %v2397 = vpack.c.b16 %v2363, %v2361
      %v2398 = vpack.c.b16 %v2364, %v2362
      %v2399 = vpack.c.b16 %v2367, %v2365
      %v2400 = vpack.c.b16 %v2368, %v2366
      %2433 = vmatprep.subr.bf16.mxu0 %v2370
      %2434 = vmatpush1.bf16.msra.mxu0 %v2369
      %2435 = vmatprep.subr.bf16.mxu0 %v2372
      %2436 = vmatpush1.bf16.msra.mxu0 %v2371
      %2437 = vmatprep.subr.bf16.mxu0 %v2374
      %2438 = vmatpush1.bf16.msra.mxu0 %v2373
      %2439 = vmatprep.subr.bf16.mxu0 %v2376
      %2440 = vmatpush1.bf16.msra.mxu0 %v2375
      %2441 = vmatprep.subr.bf16.mxu0 %v2378
      %2442 = vmatpush1.bf16.msra.mxu0 %v2377
      %2443 = vmatprep.subr.bf16.mxu0 %v2380
      %2444 = vmatpush1.bf16.msra.mxu0 %v2379
      %2445 = vmatprep.subr.bf16.mxu0 %v2382
      %2446 = vmatpush1.bf16.msra.mxu0 %v2381
      %2447 = vmatprep.subr.bf16.mxu0 %v2384
      %2448 = vmatpush1.bf16.msra.mxu0 %v2383
      %2449 = vmatprep.subr.bf16.mxu0 %v2386
      %2450 = vmatpush1.bf16.msra.mxu0 %v2385
      %2451 = vmatprep.subr.bf16.mxu0 %v2388
      %2452 = vmatpush1.bf16.msra.mxu0 %v2387
      %2453 = vmatprep.subr.bf16.mxu0 %v2390
      %2454 = vmatpush1.bf16.msra.mxu0 %v2389
      %2455 = vmatprep.subr.bf16.mxu0 %v2392
      %2456 = vmatpush1.bf16.msra.mxu0 %v2391
      %2457 = vmatprep.subr.bf16.mxu0 %v2394
      %2458 = vmatpush1.bf16.msra.mxu0 %v2393
      %2459 = vmatprep.subr.bf16.mxu0 %v2396
      %2460 = vmatpush1.bf16.msra.mxu0 %v2395
      %2461 = vmatprep.subr.bf16.mxu0 %v2398
      %2462 = vmatpush1.bf16.msra.mxu0 %v2397
      %2463 = vmatprep.subr.bf16.mxu0 %v2400
      %2464 = vmatpush1.bf16.msra.mxu0 %v2399
      %2465 = vmatprep.mubr.bf16.mxu0 %v2228
      %2466 = vmatmul.mubr.bf16.gmra.mrb[0].mxu0 %v2227
      %v2467 = vpop.f32.mrb[0].mxu0
      %v2468 = vadd.f32 %v2266, %v2467
      %v2469 = vpop.f32.mrb[0].mxu0
      %v2470 = vadd.f32 %v2270, %v2469
      %v2471 = vpop.f32.mrb[0].mxu0
      %v2472 = vpop.f32.mrb[0].mxu0
      %2473 = vdwg.mxu0
      %v2474 = vadd.f32 %v1976, %v2468
      %v2475 = vadd.f32 %v1977, %v2470
      %v2476 = vadd.f32 %v2474, %v2475
      %2477 = vadd.xlane.f32.xlu0 %v2476
      %v2478 = vpop.xlane.xlu0 %2477
      %v2479 = vmul.f32 %v2478, %v1936
      %v2480 = vsub.f32 %v2474, %v2479
      %v2481 = vsub.f32 %v2475, %v2479
      %v2482 = vmul.f32 %v2480, %v2480
      %v2483 = vmul.f32 %v2481, %v2481
      %v2484 = vadd.f32 %v2482, %v2483
      %2485 = vadd.xlane.f32.xlu0 %v2484
      %v2486 = vpop.xlane.xlu0 %2485
      %v2487 = vmul.f32 %v2486, %v1936
      %v2488 = vadd.f32 %v2487, 1e-12
      %v2489 = vrsqrt.pop %v2488
      %v2490 = vmul.f32 %v2480, %v2489
      %v2491 = vmul.f32 %v2481, %v2489
      %v2492 = vld [vmem:[%s17] sm:$0x3]
      %v2494 = vlaneseq
      %v2495 = vshrl.u32 %v2494, 7
      %v2496 = vsub.s32 0, %v2495
      %v2497 = vrot.slane %v2492, %v2496
      %v2498 = vlaneseq
      %v2499 = vshrl.u32 %v2498, 7
      %v2500 = vsub.s32 1, %v2499
      %v2501 = vrot.slane %v2492, %v2500
      %v2504 = vmul.f32 %v2497, %v2490
      %v2505 = vmul.f32 %v2501, %v2491
      %v2506 = vld [vmem:[%s18] sm:$0x3]
      %v2508 = vlaneseq
      %v2509 = vshrl.u32 %v2508, 7
      %v2510 = vsub.s32 0, %v2509
      %v2511 = vrot.slane %v2506, %v2510
      %v2512 = vlaneseq
      %v2513 = vshrl.u32 %v2512, 7
      %v2514 = vsub.s32 1, %v2513
      %v2515 = vrot.slane %v2506, %v2514
      %v2518 = vadd.f32 %v2504, %v2511
      %v2519 = vadd.f32 %v2505, %v2515
      %v2520 = vpack.c.bf16 %v2518, %v2518
      %v2521 = vpack.c.bf16 %v2519, %v2519
      %v2524 = vunpack.c.l.b16 %v2520
      %v2525 = vunpack.c.l.b16 %v2521
      %v2526 = vpack.c.b16 %v2525, %v2524
      %2528 = vst [vmem:[%s672] sm:$0xff] %v2526
      %p2529 = scmp.lt.s32.totalorder %s34, 1
      %s2530 = scalar_select %p2529, %s34, 1
      %p2531 = scmp.lt.s32.totalorder %s35, 0
      %s2532 = scalar_select %p2531, %s35, 0
      %s2533 = smul.addr %s2532, 2
      %s2534 = smul.addr %s2530, 2
      %s2535 = sadd.s32 %s2533, %s2534
      %s2536 = smul.addr %s2535, 4
      %s2537 = scalar_lea.vmem %s19, %s2536
      // Predicated region
      $region97: #{encoder_forward.14} parent=95 // pred_check
        %p2538 = pneg %p478
      $region98: #{encoder_forward.14} parent=95 // pred_check_branch
        %2540 = sbr.rel (%p2538) target = $region100
      $region99: #{encoder_forward.14} parent=95 // pred_region
        _
      $region100: #{encoder_forward.14} parent=95 // pred_fallthru
        _
    $region96: #{encoder_forward.14} parent=5 // pred_fallthru
      _
    %p2541 = scmp.le.s32.totalorder 2, %s25
    // Predicated region
    $region101: #{encoder_forward.14} parent=5 // pred_check
      %p2542 = pneg %p2541
    $region102: #{encoder_forward.14} parent=5 // pred_check_branch
      %2544 = sbr.rel (%p2542) target = $region104
    $region103: #{encoder_forward.14} parent=5 // pred_region
      %s2545 = ssub.s32 %s25, 2
      // Predicated region
      $region105: #{encoder_forward.14} parent=103 // pred_check
        %p2546 = pneg %p484
      $region106: #{encoder_forward.14} parent=103 // pred_check_branch
        %2548 = sbr.rel (%p2546) target = $region108
      $region107: #{encoder_forward.14} parent=103 // pred_region
        %p2549 = scmp.lt.s32.totalorder %s36, 1
        %s2550 = scalar_select %p2549, %s36, 1
        %p2551 = scmp.lt.s32.totalorder %s37, 0
        %s2552 = scalar_select %p2551, %s37, 0
        %s2553 = smul.addr %s2552, 2
        %s2554 = smul.addr %s2550, 2
        %s2555 = sadd.s32 %s2553, %s2554
        %s2556 = smul.addr %s2555, 4
        %s2557 = scalar_lea.vmem %s19, %s2556
      $region108: #{encoder_forward.14} parent=103 // pred_fallthru
        _
    $region104: #{encoder_forward.14} parent=5 // pred_fallthru
      _
  $region6: #{encoder_forward.14} parent=0 // loop_footer
    %s29 = sadd.s32 1, %s25
  $region7: #{encoder_forward.14} parent=0 // loop_footer_branch
    %24 = sbr.rel target = $region3
  $region8: #{encoder_forward.14} parent=0 // loop_exit
    _

// kernel: encoder_forward.13
$region0: #{encoder_forward.13}
  #allocation0 [shape = 'u32[]', space=smem, size = 0x4, offset = 0x4, fixed_abs, tag = 'smem constant byte address 0x4 - core index']
  #allocation1 [shape = 'u32[144,128]{1,0:T(1,128)}', space=vmem, size = 0x12000, scoped, tag = 'internal scratch']
  %s0 = inlined_call_operand.vmem [shape: bf16[2,8,256], index: 0, kind: input, shape index: {}, may-alias: {0,1}]
  %s1 = inlined_call_operand.vmem [shape: bf16[2,8,256], index: 1, kind: input, shape index: {}, may-alias: {0,1}]
  %s2 = inlined_call_operand.vmem [shape: f32[2,1,8], index: 2, kind: input, shape index: {}]
  %s3 = inlined_call_operand.vmem [shape: bf16[256,256], index: 3, kind: input, shape index: {}]
  %s4 = inlined_call_operand.vmem [shape: f32[1,256], index: 4, kind: input, shape index: {}]
  %s5 = inlined_call_operand.vmem [shape: bf16[256,256], index: 5, kind: input, shape index: {}]
  %s6 = inlined_call_operand.vmem [shape: f32[1,256], index: 6, kind: input, shape index: {}]
  %s7 = inlined_call_operand.vmem [shape: bf16[256,256], index: 7, kind: input, shape index: {}]
  %s8 = inlined_call_operand.vmem [shape: f32[1,256], index: 8, kind: input, shape index: {}]
  %s9 = inlined_call_operand.vmem [shape: bf16[2,128,256], index: 9, kind: input, shape index: {}]
  %s10 = inlined_call_operand.vmem [shape: f32[1,256], index: 10, kind: input, shape index: {}]
  %s11 = inlined_call_operand.vmem [shape: f32[1,256], index: 11, kind: input, shape index: {}]
  %s12 = inlined_call_operand.vmem [shape: f32[1,256], index: 12, kind: input, shape index: {}]
  %s13 = inlined_call_operand.vmem [shape: bf16[256,256], index: 13, kind: input, shape index: {}]
  %s14 = inlined_call_operand.vmem [shape: f32[1,256], index: 14, kind: input, shape index: {}]
  %s15 = inlined_call_operand.hbm [shape: bf16[256,256], index: 15, kind: input, shape index: {}]
  %s16 = inlined_call_operand.vmem [shape: f32[1,256], index: 16, kind: input, shape index: {}]
  %s17 = inlined_call_operand.vmem [shape: f32[1,256], index: 17, kind: input, shape index: {}]
  %s18 = inlined_call_operand.vmem [shape: f32[1,256], index: 18, kind: input, shape index: {}]
  %s19 = inlined_call_operand.vmem [shape: bf16[2,8,256], index: 19, kind: output, shape index: {}]
  %s20 = sld [smem:[#allocation0]]
  $region113: #{encoder_forward.13} parent=0
    _
  %s22 = ssub.s32 1, %s20
  %s23 = scalar_select 0, %s22, %s20
  $region1: #{encoder_forward.13} parent=0
    #allocation2 [shape = 'u8[131072]{0}', space=vmem, size = 0x20000, scoped, tag = 'input window, operand 15, single buffered']
    #allocation3 [shape = 's32[2]{0}', space=sflag, size = 0x8, scoped, tag = 'scoped memory for encoder_forward.13']
    %24 = vsyncpa [#allocation3], 0
    loop: start=0, step=1, limit=4
    $region2: #{encoder_forward.13} parent=1 // loop_pre_header
      _
    $region3: #{encoder_forward.13} parent=1 // loop_header
      %s26 = sphi 0, %s30
      %p27 = scmp.ge.s32.totalorder %s26, 4
      %s33 = sphi 0, %s45
      %s34 = sphi 0, %s41
      %s35 = sphi 0, %s33
      %s36 = sphi 0, %s34
      %s37 = sphi 0, %s35
      %s38 = sphi 0, %s36
      %s50 = sphi 0, %s52
      %s53 = sphi 0, %s50
      %s54 = sphi 0, %s53
      %s70 = sphi 0, %s54
      %s76 = sphi 0, %s78
      %s79 = sphi 0, %s76
      %s80 = sphi 0, %s79
      %s96 = sphi 0, %s80
      %s102 = sphi 0, %s104
      %s105 = sphi 0, %s102
      %s106 = sphi 0, %s105
      %s122 = sphi 0, %s106
      %s126 = sphi 0, %s126
      %s128 = sphi 0, %s126
      %s129 = sphi 0, %s128
      %s143 = sphi 0, %s129
      %s147 = sphi 0, %s147
      %s149 = sphi 0, %s147
      %s150 = sphi 0, %s149
      %s164 = sphi 0, %s150
      %s168 = sphi 0, %s168
      %s170 = sphi 0, %s168
      %s171 = sphi 0, %s170
      %s185 = sphi 0, %s171
      %s189 = sphi 0, %s189
      %s191 = sphi 0, %s189
      %s192 = sphi 0, %s191
      %s206 = sphi 0, %s192
      %s210 = sphi 0, %s210
      %s212 = sphi 0, %s210
      %s213 = sphi 0, %s212
      %s227 = sphi 0, %s213
      %s231 = sphi 0, %s231
      %s233 = sphi 0, %s231
      %s234 = sphi 0, %s233
      %s248 = sphi 0, %s234
      %s252 = sphi 0, %s252
      %s254 = sphi 0, %s252
      %s255 = sphi 0, %s254
      %s269 = sphi 0, %s255
      %s273 = sphi 0, %s273
      %s275 = sphi 0, %s273
      %s276 = sphi 0, %s275
      %s290 = sphi 0, %s276
      %s294 = sphi 0, %s294
      %s296 = sphi 0, %s294
      %s297 = sphi 0, %s296
      %s311 = sphi 0, %s297
      %s315 = sphi 0, %s315
      %s317 = sphi 0, %s315
      %s318 = sphi 0, %s317
      %s332 = sphi 0, %s318
      %s336 = sphi 0, %s336
      %s338 = sphi 0, %s336
      %s339 = sphi 0, %s338
      %s353 = sphi 0, %s339
      %s357 = sphi 0, %s357
      %s359 = sphi 0, %s357
      %s360 = sphi 0, %s359
      %s374 = sphi 0, %s360
      %s378 = sphi 0, %s378
      %s380 = sphi 0, %s378
      %s381 = sphi 0, %s380
      %s395 = sphi 0, %s381
      %s399 = sphi 0, %s399
      %s401 = sphi 0, %s399
      %s402 = sphi 0, %s401
      %s416 = sphi 0, %s402
      %s420 = sphi 0, %s420
      %s422 = sphi 0, %s420
      %s423 = sphi 0, %s422
      %s437 = sphi 0, %s423
      %s441 = sphi 0, %s441
      %s443 = sphi 0, %s441
      %s444 = sphi 0, %s443
      %s458 = sphi 0, %s444
      %s466 = sphi 0, %s468
      %s469 = sphi 0, %s466
      %s470 = sphi 0, %s469
      %s486 = sphi 0, %s470
    $region4: #{encoder_forward.13} parent=1 // loop_header_branch
      %29 = sbr.rel (%p27) target = $region8
    $region5: #{encoder_forward.13} parent=1 // loop_body
      %s31 = ssub.s32 %s26, 1
      %s32 = ssub.s32 %s26, 2
      %s39 = sadd.s32 1, %s34
      %p40 = scmp.ge.s32.totalorder %s39, 1
      %s41 = scalar_select %p40, 0, %s39
      %s42 = sadd.s32 1, %s33
      %s43 = scalar_select %p40, %s42, %s33
      %p44 = scmp.ge.s32.totalorder %s43, 2
      %s45 = scalar_select %p44, 0, %s43
      %s46 = ssub.s32 %s33, %s45
      %s47 = ssub.s32 %s34, %s41
      %s48 = sor.u32 %s46, %s47
      %p49 = scmp.eq.s32.totalorder %s48, 0
      %s51 = sadd.s32 %s50, 1
      %s52 = scalar_select %p49, %s50, %s51
      %p55 = pneg %p49
      %p56 = scmp.eq.s32.totalorder %s26, 1
      %p57 = por %p55, %p56
      %p58 = scmp.ne.s32.totalorder %s50, %s53
      %p59 = scmp.eq.s32.totalorder %s26, 0
      %p60 = por %p58, %p59
      %p61 = scmp.ne.s32.totalorder %s50, %s53
      %p62 = scmp.eq.s32.totalorder %s31, 1
      %p63 = por %p61, %p62
      %p64 = scmp.ne.s32.totalorder %s53, %s54
      %p65 = scmp.eq.s32.totalorder %s31, 0
      %p66 = por %p64, %p65
      %p67 = scmp.ne.s32.totalorder %s53, %s54
      %p68 = scmp.eq.s32.totalorder %s32, 1
      %p69 = por %p67, %p68
      %p71 = scmp.ne.s32.totalorder %s54, %s70
      %p72 = scmp.eq.s32.totalorder %s32, 0
      %p73 = por %p71, %p72
      %s74 = ssub.s32 %s33, %s45
      %p75 = scmp.eq.s32.totalorder %s74, 0
      %s77 = sadd.s32 %s76, 1
      %s78 = scalar_select %p75, %s76, %s77
      %p81 = pneg %p75
      %p82 = scmp.eq.s32.totalorder %s26, 1
      %p83 = por %p81, %p82
      %p84 = scmp.ne.s32.totalorder %s76, %s79
      %p85 = scmp.eq.s32.totalorder %s26, 0
      %p86 = por %p84, %p85
      %p87 = scmp.ne.s32.totalorder %s76, %s79
      %p88 = scmp.eq.s32.totalorder %s31, 1
      %p89 = por %p87, %p88
      %p90 = scmp.ne.s32.totalorder %s79, %s80
      %p91 = scmp.eq.s32.totalorder %s31, 0
      %p92 = por %p90, %p91
      %p93 = scmp.ne.s32.totalorder %s79, %s80
      %p94 = scmp.eq.s32.totalorder %s32, 1
      %p95 = por %p93, %p94
      %p97 = scmp.ne.s32.totalorder %s80, %s96
      %p98 = scmp.eq.s32.totalorder %s32, 0
      %p99 = por %p97, %p98
      %s100 = ssub.s32 %s33, %s45
      %p101 = scmp.eq.s32.totalorder %s100, 0
      %s103 = sadd.s32 %s102, 1
      %s104 = scalar_select %p101, %s102, %s103
      %p107 = pneg %p101
      %p108 = scmp.eq.s32.totalorder %s26, 1
      %p109 = por %p107, %p108
      %p110 = scmp.ne.s32.totalorder %s102, %s105
      %p111 = scmp.eq.s32.totalorder %s26, 0
      %p112 = por %p110, %p111
      %p113 = scmp.ne.s32.totalorder %s102, %s105
      %p114 = scmp.eq.s32.totalorder %s31, 1
      %p115 = por %p113, %p114
      %p116 = scmp.ne.s32.totalorder %s105, %s106
      %p117 = scmp.eq.s32.totalorder %s31, 0
      %p118 = por %p116, %p117
      %p119 = scmp.ne.s32.totalorder %s105, %s106
      %p120 = scmp.eq.s32.totalorder %s32, 1
      %p121 = por %p119, %p120
      %p123 = scmp.ne.s32.totalorder %s106, %s122
      %p124 = scmp.eq.s32.totalorder %s32, 0
      %p125 = por %p123, %p124
      %s127 = sadd.s32 %s126, 1
      %p130 = scmp.eq.s32.totalorder %s26, 1
      %p131 = scmp.ne.s32.totalorder %s126, %s128
      %p132 = scmp.eq.s32.totalorder %s26, 0
      %p133 = por %p131, %p132
      %p134 = scmp.ne.s32.totalorder %s126, %s128
      %p135 = scmp.eq.s32.totalorder %s31, 1
      %p136 = por %p134, %p135
      %p137 = scmp.ne.s32.totalorder %s128, %s129
      %p138 = scmp.eq.s32.totalorder %s31, 0
      %p139 = por %p137, %p138
      %p140 = scmp.ne.s32.totalorder %s128, %s129
      %p141 = scmp.eq.s32.totalorder %s32, 1
      %p142 = por %p140, %p141
      %p144 = scmp.ne.s32.totalorder %s129, %s143
      %p145 = scmp.eq.s32.totalorder %s32, 0
      %p146 = por %p144, %p145
      %s148 = sadd.s32 %s147, 1
      %p151 = scmp.eq.s32.totalorder %s26, 1
      %p152 = scmp.ne.s32.totalorder %s147, %s149
      %p153 = scmp.eq.s32.totalorder %s26, 0
      %p154 = por %p152, %p153
      %p155 = scmp.ne.s32.totalorder %s147, %s149
      %p156 = scmp.eq.s32.totalorder %s31, 1
      %p157 = por %p155, %p156
      %p158 = scmp.ne.s32.totalorder %s149, %s150
      %p159 = scmp.eq.s32.totalorder %s31, 0
      %p160 = por %p158, %p159
      %p161 = scmp.ne.s32.totalorder %s149, %s150
      %p162 = scmp.eq.s32.totalorder %s32, 1
      %p163 = por %p161, %p162
      %p165 = scmp.ne.s32.totalorder %s150, %s164
      %p166 = scmp.eq.s32.totalorder %s32, 0
      %p167 = por %p165, %p166
      %s169 = sadd.s32 %s168, 1
      %p172 = scmp.eq.s32.totalorder %s26, 1
      %p173 = scmp.ne.s32.totalorder %s168, %s170
      %p174 = scmp.eq.s32.totalorder %s26, 0
      %p175 = por %p173, %p174
      %p176 = scmp.ne.s32.totalorder %s168, %s170
      %p177 = scmp.eq.s32.totalorder %s31, 1
      %p178 = por %p176, %p177
      %p179 = scmp.ne.s32.totalorder %s170, %s171
      %p180 = scmp.eq.s32.totalorder %s31, 0
      %p181 = por %p179, %p180
      %p182 = scmp.ne.s32.totalorder %s170, %s171
      %p183 = scmp.eq.s32.totalorder %s32, 1
      %p184 = por %p182, %p183
      %p186 = scmp.ne.s32.totalorder %s171, %s185
      %p187 = scmp.eq.s32.totalorder %s32, 0
      %p188 = por %p186, %p187
      %s190 = sadd.s32 %s189, 1
      %p193 = scmp.eq.s32.totalorder %s26, 1
      %p194 = scmp.ne.s32.totalorder %s189, %s191
      %p195 = scmp.eq.s32.totalorder %s26, 0
      %p196 = por %p194, %p195
      %p197 = scmp.ne.s32.totalorder %s189, %s191
      %p198 = scmp.eq.s32.totalorder %s31, 1
      %p199 = por %p197, %p198
      %p200 = scmp.ne.s32.totalorder %s191, %s192
      %p201 = scmp.eq.s32.totalorder %s31, 0
      %p202 = por %p200, %p201
      %p203 = scmp.ne.s32.totalorder %s191, %s192
      %p204 = scmp.eq.s32.totalorder %s32, 1
      %p205 = por %p203, %p204
      %p207 = scmp.ne.s32.totalorder %s192, %s206
      %p208 = scmp.eq.s32.totalorder %s32, 0
      %p209 = por %p207, %p208
      %s211 = sadd.s32 %s210, 1
      %p214 = scmp.eq.s32.totalorder %s26, 1
      %p215 = scmp.ne.s32.totalorder %s210, %s212
      %p216 = scmp.eq.s32.totalorder %s26, 0
      %p217 = por %p215, %p216
      %p218 = scmp.ne.s32.totalorder %s210, %s212
      %p219 = scmp.eq.s32.totalorder %s31, 1
      %p220 = por %p218, %p219
      %p221 = scmp.ne.s32.totalorder %s212, %s213
      %p222 = scmp.eq.s32.totalorder %s31, 0
      %p223 = por %p221, %p222
      %p224 = scmp.ne.s32.totalorder %s212, %s213
      %p225 = scmp.eq.s32.totalorder %s32, 1
      %p226 = por %p224, %p225
      %p228 = scmp.ne.s32.totalorder %s213, %s227
      %p229 = scmp.eq.s32.totalorder %s32, 0
      %p230 = por %p228, %p229
      %s232 = sadd.s32 %s231, 1
      %p235 = scmp.eq.s32.totalorder %s26, 1
      %p236 = scmp.ne.s32.totalorder %s231, %s233
      %p237 = scmp.eq.s32.totalorder %s26, 0
      %p238 = por %p236, %p237
      %p239 = scmp.ne.s32.totalorder %s231, %s233
      %p240 = scmp.eq.s32.totalorder %s31, 1
      %p241 = por %p239, %p240
      %p242 = scmp.ne.s32.totalorder %s233, %s234
      %p243 = scmp.eq.s32.totalorder %s31, 0
      %p244 = por %p242, %p243
      %p245 = scmp.ne.s32.totalorder %s233, %s234
      %p246 = scmp.eq.s32.totalorder %s32, 1
      %p247 = por %p245, %p246
      %p249 = scmp.ne.s32.totalorder %s234, %s248
      %p250 = scmp.eq.s32.totalorder %s32, 0
      %p251 = por %p249, %p250
      %s253 = sadd.s32 %s252, 1
      %p256 = scmp.eq.s32.totalorder %s26, 1
      %p257 = scmp.ne.s32.totalorder %s252, %s254
      %p258 = scmp.eq.s32.totalorder %s26, 0
      %p259 = por %p257, %p258
      %p260 = scmp.ne.s32.totalorder %s252, %s254
      %p261 = scmp.eq.s32.totalorder %s31, 1
      %p262 = por %p260, %p261
      %p263 = scmp.ne.s32.totalorder %s254, %s255
      %p264 = scmp.eq.s32.totalorder %s31, 0
      %p265 = por %p263, %p264
      %p266 = scmp.ne.s32.totalorder %s254, %s255
      %p267 = scmp.eq.s32.totalorder %s32, 1
      %p268 = por %p266, %p267
      %p270 = scmp.ne.s32.totalorder %s255, %s269
      %p271 = scmp.eq.s32.totalorder %s32, 0
      %p272 = por %p270, %p271
      %s274 = sadd.s32 %s273, 1
      %p277 = scmp.eq.s32.totalorder %s26, 1
      %p278 = scmp.ne.s32.totalorder %s273, %s275
      %p279 = scmp.eq.s32.totalorder %s26, 0
      %p280 = por %p278, %p279
      %p281 = scmp.ne.s32.totalorder %s273, %s275
      %p282 = scmp.eq.s32.totalorder %s31, 1
      %p283 = por %p281, %p282
      %p284 = scmp.ne.s32.totalorder %s275, %s276
      %p285 = scmp.eq.s32.totalorder %s31, 0
      %p286 = por %p284, %p285
      %p287 = scmp.ne.s32.totalorder %s275, %s276
      %p288 = scmp.eq.s32.totalorder %s32, 1
      %p289 = por %p287, %p288
      %p291 = scmp.ne.s32.totalorder %s276, %s290
      %p292 = scmp.eq.s32.totalorder %s32, 0
      %p293 = por %p291, %p292
      %s295 = sadd.s32 %s294, 1
      %p298 = scmp.eq.s32.totalorder %s26, 1
      %p299 = scmp.ne.s32.totalorder %s294, %s296
      %p300 = scmp.eq.s32.totalorder %s26, 0
      %p301 = por %p299, %p300
      %p302 = scmp.ne.s32.totalorder %s294, %s296
      %p303 = scmp.eq.s32.totalorder %s31, 1
      %p304 = por %p302, %p303
      %p305 = scmp.ne.s32.totalorder %s296, %s297
      %p306 = scmp.eq.s32.totalorder %s31, 0
      %p307 = por %p305, %p306
      %p308 = scmp.ne.s32.totalorder %s296, %s297
      %p309 = scmp.eq.s32.totalorder %s32, 1
      %p310 = por %p308, %p309
      %p312 = scmp.ne.s32.totalorder %s297, %s311
      %p313 = scmp.eq.s32.totalorder %s32, 0
      %p314 = por %p312, %p313
      %s316 = sadd.s32 %s315, 1
      %p319 = scmp.eq.s32.totalorder %s26, 1
      %p320 = scmp.ne.s32.totalorder %s315, %s317
      %p321 = scmp.eq.s32.totalorder %s26, 0
      %p322 = por %p320, %p321
      %p323 = scmp.ne.s32.totalorder %s315, %s317
      %p324 = scmp.eq.s32.totalorder %s31, 1
      %p325 = por %p323, %p324
      %p326 = scmp.ne.s32.totalorder %s317, %s318
      %p327 = scmp.eq.s32.totalorder %s31, 0
      %p328 = por %p326, %p327
      %p329 = scmp.ne.s32.totalorder %s317, %s318
      %p330 = scmp.eq.s32.totalorder %s32, 1
      %p331 = por %p329, %p330
      %p333 = scmp.ne.s32.totalorder %s318, %s332
      %p334 = scmp.eq.s32.totalorder %s32, 0
      %p335 = por %p333, %p334
      %s337 = sadd.s32 %s336, 1
      %p340 = scmp.eq.s32.totalorder %s26, 1
      %p341 = scmp.ne.s32.totalorder %s336, %s338
      %p342 = scmp.eq.s32.totalorder %s26, 0
      %p343 = por %p341, %p342
      %p344 = scmp.ne.s32.totalorder %s336, %s338
      %p345 = scmp.eq.s32.totalorder %s31, 1
      %p346 = por %p344, %p345
      %p347 = scmp.ne.s32.totalorder %s338, %s339
      %p348 = scmp.eq.s32.totalorder %s31, 0
      %p349 = por %p347, %p348
      %p350 = scmp.ne.s32.totalorder %s338, %s339
      %p351 = scmp.eq.s32.totalorder %s32, 1
      %p352 = por %p350, %p351
      %p354 = scmp.ne.s32.totalorder %s339, %s353
      %p355 = scmp.eq.s32.totalorder %s32, 0
      %p356 = por %p354, %p355
      %s358 = sadd.s32 %s357, 1
      %p361 = scmp.eq.s32.totalorder %s26, 1
      %p362 = scmp.ne.s32.totalorder %s357, %s359
      %p363 = scmp.eq.s32.totalorder %s26, 0
      %p364 = por %p362, %p363
      %p365 = scmp.ne.s32.totalorder %s357, %s359
      %p366 = scmp.eq.s32.totalorder %s31, 1
      %p367 = por %p365, %p366
      %p368 = scmp.ne.s32.totalorder %s359, %s360
      %p369 = scmp.eq.s32.totalorder %s31, 0
      %p370 = por %p368, %p369
      %p371 = scmp.ne.s32.totalorder %s359, %s360
      %p372 = scmp.eq.s32.totalorder %s32, 1
      %p373 = por %p371, %p372
      %p375 = scmp.ne.s32.totalorder %s360, %s374
      %p376 = scmp.eq.s32.totalorder %s32, 0
      %p377 = por %p375, %p376
      %s379 = sadd.s32 %s378, 1
      %p382 = scmp.eq.s32.totalorder %s26, 1
      %p383 = scmp.ne.s32.totalorder %s378, %s380
      %p384 = scmp.eq.s32.totalorder %s26, 0
      %p385 = por %p383, %p384
      %p386 = scmp.ne.s32.totalorder %s378, %s380
      %p387 = scmp.eq.s32.totalorder %s31, 1
      %p388 = por %p386, %p387
      %p389 = scmp.ne.s32.totalorder %s380, %s381
      %p390 = scmp.eq.s32.totalorder %s31, 0
      %p391 = por %p389, %p390
      %p392 = scmp.ne.s32.totalorder %s380, %s381
      %p393 = scmp.eq.s32.totalorder %s32, 1
      %p394 = por %p392, %p393
      %p396 = scmp.ne.s32.totalorder %s381, %s395
      %p397 = scmp.eq.s32.totalorder %s32, 0
      %p398 = por %p396, %p397
      %s400 = sadd.s32 %s399, 1
      %p403 = scmp.eq.s32.totalorder %s26, 1
      %p404 = scmp.ne.s32.totalorder %s399, %s401
      %p405 = scmp.eq.s32.totalorder %s26, 0
      %p406 = por %p404, %p405
      %p407 = scmp.ne.s32.totalorder %s399, %s401
      %p408 = scmp.eq.s32.totalorder %s31, 1
      %p409 = por %p407, %p408
      %p410 = scmp.ne.s32.totalorder %s401, %s402
      %p411 = scmp.eq.s32.totalorder %s31, 0
      %p412 = por %p410, %p411
      %p413 = scmp.ne.s32.totalorder %s401, %s402
      %p414 = scmp.eq.s32.totalorder %s32, 1
      %p415 = por %p413, %p414
      %p417 = scmp.ne.s32.totalorder %s402, %s416
      %p418 = scmp.eq.s32.totalorder %s32, 0
      %p419 = por %p417, %p418
      %s421 = sadd.s32 %s420, 1
      %p424 = scmp.eq.s32.totalorder %s26, 1
      %p425 = scmp.ne.s32.totalorder %s420, %s422
      %p426 = scmp.eq.s32.totalorder %s26, 0
      %p427 = por %p425, %p426
      %p428 = scmp.ne.s32.totalorder %s420, %s422
      %p429 = scmp.eq.s32.totalorder %s31, 1
      %p430 = por %p428, %p429
      %p431 = scmp.ne.s32.totalorder %s422, %s423
      %p432 = scmp.eq.s32.totalorder %s31, 0
      %p433 = por %p431, %p432
      %p434 = scmp.ne.s32.totalorder %s422, %s423
      %p435 = scmp.eq.s32.totalorder %s32, 1
      %p436 = por %p434, %p435
      %p438 = scmp.ne.s32.totalorder %s423, %s437
      %p439 = scmp.eq.s32.totalorder %s32, 0
      %p440 = por %p438, %p439
      %s442 = sadd.s32 %s441, 1
      %p445 = scmp.eq.s32.totalorder %s26, 1
      %p446 = scmp.ne.s32.totalorder %s441, %s443
      %p447 = scmp.eq.s32.totalorder %s26, 0
      %p448 = por %p446, %p447
      %p449 = scmp.ne.s32.totalorder %s441, %s443
      %p450 = scmp.eq.s32.totalorder %s31, 1
      %p451 = por %p449, %p450
      %p452 = scmp.ne.s32.totalorder %s443, %s444
      %p453 = scmp.eq.s32.totalorder %s31, 0
      %p454 = por %p452, %p453
      %p455 = scmp.ne.s32.totalorder %s443, %s444
      %p456 = scmp.eq.s32.totalorder %s32, 1
      %p457 = por %p455, %p456
      %p459 = scmp.ne.s32.totalorder %s444, %s458
      %p460 = scmp.eq.s32.totalorder %s32, 0
      %p461 = por %p459, %p460
      %s462 = ssub.s32 %s33, %s45
      %s463 = ssub.s32 %s34, %s41
      %s464 = sor.u32 %s462, %s463
      %p465 = scmp.eq.s32.totalorder %s464, 0
      %s467 = sadd.s32 %s466, 1
      %s468 = scalar_select %p465, %s466, %s467
      %p471 = pneg %p465
      %p472 = scmp.eq.s32.totalorder %s26, 1
      %p473 = por %p471, %p472
      %p474 = scmp.ne.s32.totalorder %s466, %s469
      %p475 = scmp.eq.s32.totalorder %s26, 0
      %p476 = por %p474, %p475
      %p477 = scmp.ne.s32.totalorder %s466, %s469
      %p478 = scmp.eq.s32.totalorder %s31, 1
      %p479 = por %p477, %p478
      %p480 = scmp.ne.s32.totalorder %s469, %s470
      %p481 = scmp.eq.s32.totalorder %s31, 0
      %p482 = por %p480, %p481
      %p483 = scmp.ne.s32.totalorder %s469, %s470
      %p484 = scmp.eq.s32.totalorder %s32, 1
      %p485 = por %p483, %p484
      %p487 = scmp.ne.s32.totalorder %s470, %s486
      %p488 = scmp.eq.s32.totalorder %s32, 0
      %p489 = por %p487, %p488
      %p490 = scmp.le.s32.totalorder 1, %s26
      %p491 = scmp.lt.s32.totalorder %s26, 3
      %p492 = pnand %p490, %p491
      %p493 = pneg %p492
      // Predicated region
      $region9: #{encoder_forward.13} parent=5 // pred_check
        _
      $region10: #{encoder_forward.13} parent=5 // pred_check_branch
        %495 = sbr.rel (%p492) target = $region12
      $region11: #{encoder_forward.13} parent=5 // pred_region
        %s496 = ssub.s32 %s26, 1
        // Predicated region
        $region13: #{encoder_forward.13} parent=11 // pred_check
          %p497 = pneg %p139
        $region14: #{encoder_forward.13} parent=11 // pred_check_branch
          %499 = sbr.rel (%p497) target = $region16
        $region15: #{encoder_forward.13} parent=11 // pred_region
          _
        $region16: #{encoder_forward.13} parent=11 // pred_fallthru
          _
        // Predicated region
        $region17: #{encoder_forward.13} parent=11 // pred_check
          %p500 = pneg %p160
        $region18: #{encoder_forward.13} parent=11 // pred_check_branch
          %502 = sbr.rel (%p500) target = $region20
        $region19: #{encoder_forward.13} parent=11 // pred_region
          _
        $region20: #{encoder_forward.13} parent=11 // pred_fallthru
          _
        // Predicated region
        $region21: #{encoder_forward.13} parent=11 // pred_check
          %p503 = pneg %p181
        $region22: #{encoder_forward.13} parent=11 // pred_check_branch
          %505 = sbr.rel (%p503) target = $region24
        $region23: #{encoder_forward.13} parent=11 // pred_region
          _
        $region24: #{encoder_forward.13} parent=11 // pred_fallthru
          _
        // Predicated region
        $region25: #{encoder_forward.13} parent=11 // pred_check
          %p506 = pneg %p202
        $region26: #{encoder_forward.13} parent=11 // pred_check_branch
          %508 = sbr.rel (%p506) target = $region28
        $region27: #{encoder_forward.13} parent=11 // pred_region
          _
        $region28: #{encoder_forward.13} parent=11 // pred_fallthru
          _
        // Predicated region
        $region29: #{encoder_forward.13} parent=11 // pred_check
          %p509 = pneg %p223
        $region30: #{encoder_forward.13} parent=11 // pred_check_branch
          %511 = sbr.rel (%p509) target = $region32
        $region31: #{encoder_forward.13} parent=11 // pred_region
          _
        $region32: #{encoder_forward.13} parent=11 // pred_fallthru
          _
        // Predicated region
        $region33: #{encoder_forward.13} parent=11 // pred_check
          %p512 = pneg %p244
        $region34: #{encoder_forward.13} parent=11 // pred_check_branch
          %514 = sbr.rel (%p512) target = $region36
        $region35: #{encoder_forward.13} parent=11 // pred_region
          _
        $region36: #{encoder_forward.13} parent=11 // pred_fallthru
          _
        // Predicated region
        $region37: #{encoder_forward.13} parent=11 // pred_check
          %p515 = pneg %p265
        $region38: #{encoder_forward.13} parent=11 // pred_check_branch
          %517 = sbr.rel (%p515) target = $region40
        $region39: #{encoder_forward.13} parent=11 // pred_region
          _
        $region40: #{encoder_forward.13} parent=11 // pred_fallthru
          _
        // Predicated region
        $region41: #{encoder_forward.13} parent=11 // pred_check
          %p518 = pneg %p286
        $region42: #{encoder_forward.13} parent=11 // pred_check_branch
          %520 = sbr.rel (%p518) target = $region44
        $region43: #{encoder_forward.13} parent=11 // pred_region
          _
        $region44: #{encoder_forward.13} parent=11 // pred_fallthru
          _
        // Predicated region
        $region45: #{encoder_forward.13} parent=11 // pred_check
          %p521 = pneg %p307
        $region46: #{encoder_forward.13} parent=11 // pred_check_branch
          %523 = sbr.rel (%p521) target = $region48
        $region47: #{encoder_forward.13} parent=11 // pred_region
          _
        $region48: #{encoder_forward.13} parent=11 // pred_fallthru
          _
        // Predicated region
        $region49: #{encoder_forward.13} parent=11 // pred_check
          %p524 = pneg %p328
        $region50: #{encoder_forward.13} parent=11 // pred_check_branch
          %526 = sbr.rel (%p524) target = $region52
        $region51: #{encoder_forward.13} parent=11 // pred_region
          _
        $region52: #{encoder_forward.13} parent=11 // pred_fallthru
          _
        // Predicated region
        $region53: #{encoder_forward.13} parent=11 // pred_check
          %p527 = pneg %p349
        $region54: #{encoder_forward.13} parent=11 // pred_check_branch
          %529 = sbr.rel (%p527) target = $region56
        $region55: #{encoder_forward.13} parent=11 // pred_region
          _
        $region56: #{encoder_forward.13} parent=11 // pred_fallthru
          _
        // Predicated region
        $region57: #{encoder_forward.13} parent=11 // pred_check
          %p530 = pneg %p370
        $region58: #{encoder_forward.13} parent=11 // pred_check_branch
          %532 = sbr.rel (%p530) target = $region60
        $region59: #{encoder_forward.13} parent=11 // pred_region
          _
        $region60: #{encoder_forward.13} parent=11 // pred_fallthru
          _
        // Predicated region
        $region61: #{encoder_forward.13} parent=11 // pred_check
          %p533 = pneg %p391
        $region62: #{encoder_forward.13} parent=11 // pred_check_branch
          %535 = sbr.rel (%p533) target = $region64
        $region63: #{encoder_forward.13} parent=11 // pred_region
          %s537 = ssub.s32 4096, 4096
          %538 = vsyncadd [#allocation3], %s537
          %s539 = sshll.u32 [#allocation2], 4
          %s540 = int_to_ptr.vmem [resolvable:$true] %s539
          %545 = dma.hbm_to_vmem [thread:$0]  %s15, 4096, %s540, [#allocation3], 128, 128, 8
        $region64: #{encoder_forward.13} parent=11 // pred_fallthru
          _
        // Predicated region
        $region65: #{encoder_forward.13} parent=11 // pred_check
          %p546 = pneg %p412
        $region66: #{encoder_forward.13} parent=11 // pred_check_branch
          %548 = sbr.rel (%p546) target = $region68
        $region67: #{encoder_forward.13} parent=11 // pred_region
          _
        $region68: #{encoder_forward.13} parent=11 // pred_fallthru
          _
        // Predicated region
        $region69: #{encoder_forward.13} parent=11 // pred_check
          %p549 = pneg %p433
        $region70: #{encoder_forward.13} parent=11 // pred_check_branch
          %551 = sbr.rel (%p549) target = $region72
        $region71: #{encoder_forward.13} parent=11 // pred_region
          _
        $region72: #{encoder_forward.13} parent=11 // pred_fallthru
          _
        // Predicated region
        $region73: #{encoder_forward.13} parent=11 // pred_check
          %p552 = pneg %p454
        $region74: #{encoder_forward.13} parent=11 // pred_check_branch
          %554 = sbr.rel (%p552) target = $region76
        $region75: #{encoder_forward.13} parent=11 // pred_region
          _
        $region76: #{encoder_forward.13} parent=11 // pred_fallthru
          _
      $region12: #{encoder_forward.13} parent=5 // pred_fallthru
        _
      %p555 = scmp.lt.s32.totalorder %s26, 2
      // Predicated region
      $region77: #{encoder_forward.13} parent=5 // pred_check
        %p556 = pneg %p555
      $region78: #{encoder_forward.13} parent=5 // pred_check_branch
        %558 = sbr.rel (%p556) target = $region80
      $region79: #{encoder_forward.13} parent=5 // pred_region
        // Predicated region
        $region81: #{encoder_forward.13} parent=79 // pred_check
          %p559 = pneg %p60
        $region82: #{encoder_forward.13} parent=79 // pred_check_branch
          %561 = sbr.rel (%p559) target = $region84
        $region83: #{encoder_forward.13} parent=79 // pred_region
          %p562 = scmp.lt.s32.totalorder %s33, 1
          %s563 = scalar_select %p562, %s33, 1
          %p564 = scmp.lt.s32.totalorder %s34, 0
          %s565 = scalar_select %p564, %s34, 0
          %s566 = smul.addr %s565, 2
          %s567 = smul.addr %s563, 2
          %s568 = sadd.s32 %s566, %s567
          %s569 = smul.addr %s568, 4
          %s570 = scalar_lea.vmem %s0, %s569
        $region84: #{encoder_forward.13} parent=79 // pred_fallthru
          _
        // Predicated region
        $region85: #{encoder_forward.13} parent=79 // pred_check
          %p571 = pneg %p86
        $region86: #{encoder_forward.13} parent=79 // pred_check_branch
          %573 = sbr.rel (%p571) target = $region88
        $region87: #{encoder_forward.13} parent=79 // pred_region
          %p574 = scmp.lt.s32.totalorder %s33, 1
          %s575 = scalar_select %p574, %s33, 1
          %s576 = smul.addr %s575, 2
          %s577 = smul.addr %s576, 4
          %s578 = scalar_lea.vmem %s1, %s577
        $region88: #{encoder_forward.13} parent=79 // pred_fallthru
          _
        // Predicated region
        $region89: #{encoder_forward.13} parent=79 // pred_check
          %p579 = pneg %p112
        $region90: #{encoder_forward.13} parent=79 // pred_check_branch
          %581 = sbr.rel (%p579) target = $region92
        $region91: #{encoder_forward.13} parent=79 // pred_region
          %p582 = scmp.lt.s32.totalorder %s33, 1
          %s583 = scalar_select %p582, %s33, 1
          %s584 = scalar_lea.vmem %s2, %s583
        $region92: #{encoder_forward.13} parent=79 // pred_fallthru
          _
      $region80: #{encoder_forward.13} parent=5 // pred_fallthru
        _
      %p585 = scmp.le.s32.totalorder 1, %s26
      %p586 = scmp.lt.s32.totalorder %s26, 3
      %p587 = pnand %p585, %p586
      %p588 = pneg %p587
      // Predicated region
      $region93: #{encoder_forward.13} parent=5 // pred_check
        _
      $region94: #{encoder_forward.13} parent=5 // pred_check_branch
        %590 = sbr.rel (%p587) target = $region96
      $region95: #{encoder_forward.13} parent=5 // pred_region
        %s591 = ssub.s32 %s26, 1
        // Predicated region
        $region97: #{encoder_forward.13} parent=95 // pred_check
          %p592 = pneg %p391
        $region98: #{encoder_forward.13} parent=95 // pred_check_branch
          %594 = sbr.rel (%p592) target = $region100
        $region99: #{encoder_forward.13} parent=95 // pred_region
          %595 = dma.done [#allocation3], 4096
        $region100: #{encoder_forward.13} parent=95 // pred_fallthru
          _
        %p596 = scmp.lt.s32.totalorder %s35, 1
        %s597 = scalar_select %p596, %s35, 1
        %p598 = scmp.lt.s32.totalorder %s36, 0
        %s599 = scalar_select %p598, %s36, 0
        %s600 = smul.addr %s599, 2
        %s601 = smul.addr %s597, 2
        %s602 = sadd.s32 %s600, %s601
        %s603 = smul.addr %s602, 4
        %s604 = scalar_lea.vmem %s0, %s603
        %p605 = pneg %p66
        %p606 = pneg %p63
        %p607 = scmp.lt.s32.totalorder %s35, 1
        %s608 = scalar_select %p607, %s35, 1
        %s609 = smul.addr %s608, 2
        %s610 = smul.addr %s609, 4
        %s611 = scalar_lea.vmem %s1, %s610
        %p612 = pneg %p92
        %p613 = pneg %p89
        %p614 = scmp.lt.s32.totalorder %s35, 1
        %s615 = scalar_select %p614, %s35, 1
        %s616 = scalar_lea.vmem %s2, %s615
        %p617 = pneg %p118
        %p618 = pneg %p115
        %p619 = pneg %p139
        %p620 = pneg %p136
        %p621 = pneg %p160
        %p622 = pneg %p157
        %p623 = pneg %p181
        %p624 = pneg %p178
        %p625 = pneg %p202
        %p626 = pneg %p199
        %p627 = pneg %p223
        %p628 = pneg %p220
        %p629 = pneg %p244
        %p630 = pneg %p241
        %p631 = pneg %p265
        %p632 = pneg %p262
        %p633 = pneg %p286
        %p634 = pneg %p283
        %p635 = pneg %p307
        %p636 = pneg %p304
        %p637 = pneg %p328
        %p638 = pneg %p325
        %p639 = pneg %p349
        %p640 = pneg %p346
        %p641 = pneg %p370
        %p642 = pneg %p367
        %p643 = pneg %p391
        %p644 = pneg %p388
        %p645 = pneg %p412
        %p646 = pneg %p409
        %p647 = pneg %p433
        %p648 = pneg %p430
        %p649 = pneg %p454
        %p650 = pneg %p451
        %p651 = pneg %p482
        %p652 = pneg %p479
        %p653 = scmp.lt.s32.totalorder %s35, 1
        %s654 = scalar_select %p653, %s35, 1
        %p655 = scmp.lt.s32.totalorder %s36, 0
        %s656 = scalar_select %p655, %s36, 0
        %s657 = smul.addr %s656, 2
        %s658 = smul.addr %s654, 2
        %s659 = sadd.s32 %s657, %s658
        %s660 = smul.addr %s659, 4
        %s661 = scalar_lea.vmem %s19, %s660
        %p662 = scmp.lt.s32.totalorder %s35, 1
        %s663 = scalar_select %p662, %s35, 1
        %p664 = scmp.lt.s32.totalorder %s36, 0
        %s665 = scalar_select %p664, %s36, 0
        %s666 = smul.addr %s665, 2
        %s667 = smul.addr %s663, 2
        %s668 = sadd.s32 %s666, %s667
        %s669 = smul.addr %s668, 4
        %s670 = scalar_lea.vmem %s0, %s669
        %p671 = scmp.lt.s32.totalorder %s35, 1
        %s672 = scalar_select %p671, %s35, 1
        %s673 = smul.addr %s672, 2
        %s674 = smul.addr %s673, 4
        %s675 = scalar_lea.vmem %s1, %s674
        %p676 = scmp.lt.s32.totalorder %s35, 1
        %s677 = scalar_select %p676, %s35, 1
        %s678 = scalar_lea.vmem %s2, %s677
        %p679 = scmp.lt.s32.totalorder %s35, 1
        %s680 = scalar_select %p679, %s35, 1
        %p681 = scmp.lt.s32.totalorder %s36, 0
        %s682 = scalar_select %p681, %s36, 0
        %s683 = smul.addr %s682, 2
        %s684 = smul.addr %s680, 2
        %s685 = sadd.s32 %s683, %s684
        %s686 = smul.addr %s685, 4
        %s687 = scalar_lea.vmem %s19, %s686
        %v689 = vld [vmem:[%s670] sm:$0xff]
        %v690 = vld [vmem:[%s675] sm:$0xff]
        %v691 = vld [vmem:[%s678] sm:$0x1]
        %v692 = vunpack.c.l.bf16 %v689
        %v693 = vunpack.c.h.bf16 %v689
        %v694 = vld [vmem:[%s3] sm:$0xff]
        %v695 = vld [vmem:[%s3 + $0x8] sm:$0xff]
        %v696 = vld [vmem:[%s3 + $0x10] sm:$0xff]
        %v697 = vld [vmem:[%s3 + $0x18] sm:$0xff]
        %v698 = vld [vmem:[%s3 + $0x20] sm:$0xff]
        %v699 = vld [vmem:[%s3 + $0x28] sm:$0xff]
        %v700 = vld [vmem:[%s3 + $0x30] sm:$0xff]
        %v701 = vld [vmem:[%s3 + $0x38] sm:$0xff]
        %v702 = vld [vmem:[%s3 + $0x40] sm:$0xff]
        %v703 = vld [vmem:[%s3 + $0x48] sm:$0xff]
        %v704 = vld [vmem:[%s3 + $0x50] sm:$0xff]
        %v705 = vld [vmem:[%s3 + $0x58] sm:$0xff]
        %v706 = vld [vmem:[%s3 + $0x60] sm:$0xff]
        %v707 = vld [vmem:[%s3 + $0x68] sm:$0xff]
        %v708 = vld [vmem:[%s3 + $0x70] sm:$0xff]
        %v709 = vld [vmem:[%s3 + $0x78] sm:$0xff]
        %v710 = vld [vmem:[%s3 + $0x80] sm:$0xff]
        %v711 = vld [vmem:[%s3 + $0x88] sm:$0xff]
        %v712 = vld [vmem:[%s3 + $0x90] sm:$0xff]
        %v713 = vld [vmem:[%s3 + $0x98] sm:$0xff]
        %v714 = vld [vmem:[%s3 + $0xa0] sm:$0xff]
        %v715 = vld [vmem:[%s3 + $0xa8] sm:$0xff]
        %v716 = vld [vmem:[%s3 + $0xb0] sm:$0xff]
        %v717 = vld [vmem:[%s3 + $0xb8] sm:$0xff]
        %v718 = vld [vmem:[%s3 + $0xc0] sm:$0xff]
        %v719 = vld [vmem:[%s3 + $0xc8] sm:$0xff]
        %v720 = vld [vmem:[%s3 + $0xd0] sm:$0xff]
        %v721 = vld [vmem:[%s3 + $0xd8] sm:$0xff]
        %v722 = vld [vmem:[%s3 + $0xe0] sm:$0xff]
        %v723 = vld [vmem:[%s3 + $0xe8] sm:$0xff]
        %v724 = vld [vmem:[%s3 + $0xf0] sm:$0xff]
        %v725 = vld [vmem:[%s3 + $0xf8] sm:$0xff]
        %v726 = vld [vmem:[%s4] sm:$0x3]
        %v728 = vlaneseq
        %v729 = vshrl.u32 %v728, 7
        %v730 = vsub.s32 0, %v729
        %v731 = vrot.slane %v726, %v730
        %v732 = vlaneseq
        %v733 = vshrl.u32 %v732, 7
        %v734 = vsub.s32 1, %v733
        %v735 = vrot.slane %v726, %v734
        %v739 = vunpack.c.l.b16 %v689
        %v740 = vunpack.c.h.b16 %v689
        %v741 = vpack.c.b16 %v739, %v739
        %v742 = vpack.c.b16 %v740, %v740
        %v777 = vunpack.c.l.b16 %v694
        %v778 = vunpack.c.h.b16 %v694
        %v779 = vunpack.c.l.b16 %v695
        %v780 = vunpack.c.h.b16 %v695
        %v781 = vunpack.c.l.b16 %v696
        %v782 = vunpack.c.h.b16 %v696
        %v783 = vunpack.c.l.b16 %v697
        %v784 = vunpack.c.h.b16 %v697
        %v785 = vunpack.c.l.b16 %v698
        %v786 = vunpack.c.h.b16 %v698
        %v787 = vunpack.c.l.b16 %v699
        %v788 = vunpack.c.h.b16 %v699
        %v789 = vunpack.c.l.b16 %v700
        %v790 = vunpack.c.h.b16 %v700
        %v791 = vunpack.c.l.b16 %v701
        %v792 = vunpack.c.h.b16 %v701
        %v793 = vunpack.c.l.b16 %v702
        %v794 = vunpack.c.h.b16 %v702
        %v795 = vunpack.c.l.b16 %v703
        %v796 = vunpack.c.h.b16 %v703
        %v797 = vunpack.c.l.b16 %v704
        %v798 = vunpack.c.h.b16 %v704
        %v799 = vunpack.c.l.b16 %v705
        %v800 = vunpack.c.h.b16 %v705
        %v801 = vunpack.c.l.b16 %v706
        %v802 = vunpack.c.h.b16 %v706
        %v803 = vunpack.c.l.b16 %v707
        %v804 = vunpack.c.h.b16 %v707
        %v805 = vunpack.c.l.b16 %v708
        %v806 = vunpack.c.h.b16 %v708
        %v807 = vunpack.c.l.b16 %v709
        %v808 = vunpack.c.h.b16 %v709
        %v809 = vunpack.c.l.b16 %v710
        %v810 = vunpack.c.h.b16 %v710
        %v811 = vunpack.c.l.b16 %v711
        %v812 = vunpack.c.h.b16 %v711
        %v813 = vunpack.c.l.b16 %v712
        %v814 = vunpack.c.h.b16 %v712
        %v815 = vunpack.c.l.b16 %v713
        %v816 = vunpack.c.h.b16 %v713
        %v817 = vunpack.c.l.b16 %v714
        %v818 = vunpack.c.h.b16 %v714
        %v819 = vunpack.c.l.b16 %v715
        %v820 = vunpack.c.h.b16 %v715
        %v821 = vunpack.c.l.b16 %v716
        %v822 = vunpack.c.h.b16 %v716
        %v823 = vunpack.c.l.b16 %v717
        %v824 = vunpack.c.h.b16 %v717
        %v825 = vunpack.c.l.b16 %v718
        %v826 = vunpack.c.h.b16 %v718
        %v827 = vunpack.c.l.b16 %v719
        %v828 = vunpack.c.h.b16 %v719
        %v829 = vunpack.c.l.b16 %v720
        %v830 = vunpack.c.h.b16 %v720
        %v831 = vunpack.c.l.b16 %v721
        %v832 = vunpack.c.h.b16 %v721
        %v833 = vunpack.c.l.b16 %v722
        %v834 = vunpack.c.h.b16 %v722
        %v835 = vunpack.c.l.b16 %v723
        %v836 = vunpack.c.h.b16 %v723
        %v837 = vunpack.c.l.b16 %v724
        %v838 = vunpack.c.h.b16 %v724
        %v839 = vunpack.c.l.b16 %v725
        %v840 = vunpack.c.h.b16 %v725
        %v841 = vpack.c.b16 %v779, %v777
        %v842 = vpack.c.b16 %v780, %v778
        %v843 = vpack.c.b16 %v783, %v781
        %v844 = vpack.c.b16 %v784, %v782
        %v845 = vpack.c.b16 %v787, %v785
        %v846 = vpack.c.b16 %v788, %v786
        %v847 = vpack.c.b16 %v791, %v789
        %v848 = vpack.c.b16 %v792, %v790
        %v849 = vpack.c.b16 %v795, %v793
        %v850 = vpack.c.b16 %v796, %v794
        %v851 = vpack.c.b16 %v799, %v797
        %v852 = vpack.c.b16 %v800, %v798
        %v853 = vpack.c.b16 %v803, %v801
        %v854 = vpack.c.b16 %v804, %v802
        %v855 = vpack.c.b16 %v807, %v805
        %v856 = vpack.c.b16 %v808, %v806
        %v857 = vpack.c.b16 %v811, %v809
        %v858 = vpack.c.b16 %v812, %v810
        %v859 = vpack.c.b16 %v815, %v813
        %v860 = vpack.c.b16 %v816, %v814
        %v861 = vpack.c.b16 %v819, %v817
        %v862 = vpack.c.b16 %v820, %v818
        %v863 = vpack.c.b16 %v823, %v821
        %v864 = vpack.c.b16 %v824, %v822
        %v865 = vpack.c.b16 %v827, %v825
        %v866 = vpack.c.b16 %v828, %v826
        %v867 = vpack.c.b16 %v831, %v829
        %v868 = vpack.c.b16 %v832, %v830
        %v869 = vpack.c.b16 %v835, %v833
        %v870 = vpack.c.b16 %v836, %v834
        %v871 = vpack.c.b16 %v839, %v837
        %v872 = vpack.c.b16 %v840, %v838
        %905 = vmatprep.subr.bf16.mxu0 %v842
        %906 = vmatpush1.bf16.msra.mxu0 %v841
        %907 = vmatprep.subr.bf16.mxu0 %v844
        %908 = vmatpush1.bf16.msra.mxu0 %v843
        %909 = vmatprep.subr.bf16.mxu0 %v846
        %910 = vmatpush1.bf16.msra.mxu0 %v845
        %911 = vmatprep.subr.bf16.mxu0 %v848
        %912 = vmatpush1.bf16.msra.mxu0 %v847
        %913 = vmatprep.subr.bf16.mxu0 %v850
        %914 = vmatpush1.bf16.msra.mxu0 %v849
        %915 = vmatprep.subr.bf16.mxu0 %v852
        %916 = vmatpush1.bf16.msra.mxu0 %v851
        %917 = vmatprep.subr.bf16.mxu0 %v854
        %918 = vmatpush1.bf16.msra.mxu0 %v853
        %919 = vmatprep.subr.bf16.mxu0 %v856
        %920 = vmatpush1.bf16.msra.mxu0 %v855
        %921 = vmatprep.subr.bf16.mxu0 %v858
        %922 = vmatpush1.bf16.msra.mxu0 %v857
        %923 = vmatprep.subr.bf16.mxu0 %v860
        %924 = vmatpush1.bf16.msra.mxu0 %v859
        %925 = vmatprep.subr.bf16.mxu0 %v862
        %926 = vmatpush1.bf16.msra.mxu0 %v861
        %927 = vmatprep.subr.bf16.mxu0 %v864
        %928 = vmatpush1.bf16.msra.mxu0 %v863
        %929 = vmatprep.subr.bf16.mxu0 %v866
        %930 = vmatpush1.bf16.msra.mxu0 %v865
        %931 = vmatprep.subr.bf16.mxu0 %v868
        %932 = vmatpush1.bf16.msra.mxu0 %v867
        %933 = vmatprep.subr.bf16.mxu0 %v870
        %934 = vmatpush1.bf16.msra.mxu0 %v869
        %935 = vmatprep.subr.bf16.mxu0 %v872
        %936 = vmatpush1.bf16.msra.mxu0 %v871
        %937 = vmatprep.mubr.bf16.mxu0 %v742
        %938 = vmatmul.mubr.bf16.gmra.mrb[0].mxu0 %v741
        %v939 = vpop.f32.mrb[0].mxu0
        %v940 = vadd.f32 %v731, %v939
        %v941 = vpop.f32.mrb[0].mxu0
        %v942 = vadd.f32 %v735, %v941
        %v943 = vpop.f32.mrb[0].mxu0
        %v944 = vpop.f32.mrb[0].mxu0
        %945 = vdwg.mxu0
        %v946 = vmul.f32 %v940, 0.088388346
        %v947 = vmul.f32 %v942, 0.088388346
        %v948 = vld [vmem:[%s5] sm:$0xff]
        %v949 = vld [vmem:[%s5 + $0x8] sm:$0xff]
        %v950 = vld [vmem:[%s5 + $0x10] sm:$0xff]
        %v951 = vld [vmem:[%s5 + $0x18] sm:$0xff]
        %v952 = vld [vmem:[%s5 + $0x20] sm:$0xff]
        %v953 = vld [vmem:[%s5 + $0x28] sm:$0xff]
        %v954 = vld [vmem:[%s5 + $0x30] sm:$0xff]
        %v955 = vld [vmem:[%s5 + $0x38] sm:$0xff]
        %v956 = vld [vmem:[%s5 + $0x40] sm:$0xff]
        %v957 = vld [vmem:[%s5 + $0x48] sm:$0xff]
        %v958 = vld [vmem:[%s5 + $0x50] sm:$0xff]
        %v959 = vld [vmem:[%s5 + $0x58] sm:$0xff]
        %v960 = vld [vmem:[%s5 + $0x60] sm:$0xff]
        %v961 = vld [vmem:[%s5 + $0x68] sm:$0xff]
        %v962 = vld [vmem:[%s5 + $0x70] sm:$0xff]
        %v963 = vld [vmem:[%s5 + $0x78] sm:$0xff]
        %v964 = vld [vmem:[%s5 + $0x80] sm:$0xff]
        %v965 = vld [vmem:[%s5 + $0x88] sm:$0xff]
        %v966 = vld [vmem:[%s5 + $0x90] sm:$0xff]
        %v967 = vld [vmem:[%s5 + $0x98] sm:$0xff]
        %v968 = vld [vmem:[%s5 + $0xa0] sm:$0xff]
        %v969 = vld [vmem:[%s5 + $0xa8] sm:$0xff]
        %v970 = vld [vmem:[%s5 + $0xb0] sm:$0xff]
        %v971 = vld [vmem:[%s5 + $0xb8] sm:$0xff]
        %v972 = vld [vmem:[%s5 + $0xc0] sm:$0xff]
        %v973 = vld [vmem:[%s5 + $0xc8] sm:$0xff]
        %v974 = vld [vmem:[%s5 + $0xd0] sm:$0xff]
        %v975 = vld [vmem:[%s5 + $0xd8] sm:$0xff]
        %v976 = vld [vmem:[%s5 + $0xe0] sm:$0xff]
        %v977 = vld [vmem:[%s5 + $0xe8] sm:$0xff]
        %v978 = vld [vmem:[%s5 + $0xf0] sm:$0xff]
        %v979 = vld [vmem:[%s5 + $0xf8] sm:$0xff]
        %v980 = vld [vmem:[%s6] sm:$0x3]
        %v982 = vlaneseq
        %v983 = vshrl.u32 %v982, 7
        %v984 = vsub.s32 0, %v983
        %v985 = vrot.slane %v980, %v984
        %v986 = vlaneseq
        %v987 = vshrl.u32 %v986, 7
        %v988 = vsub.s32 1, %v987
        %v989 = vrot.slane %v980, %v988
        %v993 = vunpack.c.l.b16 %v690
        %v994 = vunpack.c.h.b16 %v690
        %v995 = vpack.c.b16 %v993, %v993
        %v996 = vpack.c.b16 %v994, %v994
        %v1031 = vunpack.c.l.b16 %v948
        %v1032 = vunpack.c.h.b16 %v948
        %v1033 = vunpack.c.l.b16 %v949
        %v1034 = vunpack.c.h.b16 %v949
        %v1035 = vunpack.c.l.b16 %v950
        %v1036 = vunpack.c.h.b16 %v950
        %v1037 = vunpack.c.l.b16 %v951
        %v1038 = vunpack.c.h.b16 %v951
        %v1039 = vunpack.c.l.b16 %v952
        %v1040 = vunpack.c.h.b16 %v952
        %v1041 = vunpack.c.l.b16 %v953
        %v1042 = vunpack.c.h.b16 %v953
        %v1043 = vunpack.c.l.b16 %v954
        %v1044 = vunpack.c.h.b16 %v954
        %v1045 = vunpack.c.l.b16 %v955
        %v1046 = vunpack.c.h.b16 %v955
        %v1047 = vunpack.c.l.b16 %v956
        %v1048 = vunpack.c.h.b16 %v956
        %v1049 = vunpack.c.l.b16 %v957
        %v1050 = vunpack.c.h.b16 %v957
        %v1051 = vunpack.c.l.b16 %v958
        %v1052 = vunpack.c.h.b16 %v958
        %v1053 = vunpack.c.l.b16 %v959
        %v1054 = vunpack.c.h.b16 %v959
        %v1055 = vunpack.c.l.b16 %v960
        %v1056 = vunpack.c.h.b16 %v960
        %v1057 = vunpack.c.l.b16 %v961
        %v1058 = vunpack.c.h.b16 %v961
        %v1059 = vunpack.c.l.b16 %v962
        %v1060 = vunpack.c.h.b16 %v962
        %v1061 = vunpack.c.l.b16 %v963
        %v1062 = vunpack.c.h.b16 %v963
        %v1063 = vunpack.c.l.b16 %v964
        %v1064 = vunpack.c.h.b16 %v964
        %v1065 = vunpack.c.l.b16 %v965
        %v1066 = vunpack.c.h.b16 %v965
        %v1067 = vunpack.c.l.b16 %v966
        %v1068 = vunpack.c.h.b16 %v966
        %v1069 = vunpack.c.l.b16 %v967
        %v1070 = vunpack.c.h.b16 %v967
        %v1071 = vunpack.c.l.b16 %v968
        %v1072 = vunpack.c.h.b16 %v968
        %v1073 = vunpack.c.l.b16 %v969
        %v1074 = vunpack.c.h.b16 %v969
        %v1075 = vunpack.c.l.b16 %v970
        %v1076 = vunpack.c.h.b16 %v970
        %v1077 = vunpack.c.l.b16 %v971
        %v1078 = vunpack.c.h.b16 %v971
        %v1079 = vunpack.c.l.b16 %v972
        %v1080 = vunpack.c.h.b16 %v972
        %v1081 = vunpack.c.l.b16 %v973
        %v1082 = vunpack.c.h.b16 %v973
        %v1083 = vunpack.c.l.b16 %v974
        %v1084 = vunpack.c.h.b16 %v974
        %v1085 = vunpack.c.l.b16 %v975
        %v1086 = vunpack.c.h.b16 %v975
        %v1087 = vunpack.c.l.b16 %v976
        %v1088 = vunpack.c.h.b16 %v976
        %v1089 = vunpack.c.l.b16 %v977
        %v1090 = vunpack.c.h.b16 %v977
        %v1091 = vunpack.c.l.b16 %v978
        %v1092 = vunpack.c.h.b16 %v978
        %v1093 = vunpack.c.l.b16 %v979
        %v1094 = vunpack.c.h.b16 %v979
        %v1095 = vpack.c.b16 %v1033, %v1031
        %v1096 = vpack.c.b16 %v1034, %v1032
        %v1097 = vpack.c.b16 %v1037, %v1035
        %v1098 = vpack.c.b16 %v1038, %v1036
        %v1099 = vpack.c.b16 %v1041, %v1039
        %v1100 = vpack.c.b16 %v1042, %v1040
        %v1101 = vpack.c.b16 %v1045, %v1043
        %v1102 = vpack.c.b16 %v1046, %v1044
        %v1103 = vpack.c.b16 %v1049, %v1047
        %v1104 = vpack.c.b16 %v1050, %v1048
        %v1105 = vpack.c.b16 %v1053, %v1051
        %v1106 = vpack.c.b16 %v1054, %v1052
        %v1107 = vpack.c.b16 %v1057, %v1055
        %v1108 = vpack.c.b16 %v1058, %v1056
        %v1109 = vpack.c.b16 %v1061, %v1059
        %v1110 = vpack.c.b16 %v1062, %v1060
        %v1111 = vpack.c.b16 %v1065, %v1063
        %v1112 = vpack.c.b16 %v1066, %v1064
        %v1113 = vpack.c.b16 %v1069, %v1067
        %v1114 = vpack.c.b16 %v1070, %v1068
        %v1115 = vpack.c.b16 %v1073, %v1071
        %v1116 = vpack.c.b16 %v1074, %v1072
        %v1117 = vpack.c.b16 %v1077, %v1075
        %v1118 = vpack.c.b16 %v1078, %v1076
        %v1119 = vpack.c.b16 %v1081, %v1079
        %v1120 = vpack.c.b16 %v1082, %v1080
        %v1121 = vpack.c.b16 %v1085, %v1083
        %v1122 = vpack.c.b16 %v1086, %v1084
        %v1123 = vpack.c.b16 %v1089, %v1087
        %v1124 = vpack.c.b16 %v1090, %v1088
        %v1125 = vpack.c.b16 %v1093, %v1091
        %v1126 = vpack.c.b16 %v1094, %v1092
        %1159 = vmatprep.subr.bf16.mxu0 %v1096
        %1160 = vmatpush1.bf16.msra.mxu0 %v1095
        %1161 = vmatprep.subr.bf16.mxu0 %v1098
        %1162 = vmatpush1.bf16.msra.mxu0 %v1097
        %1163 = vmatprep.subr.bf16.mxu0 %v1100
        %1164 = vmatpush1.bf16.msra.mxu0 %v1099
        %1165 = vmatprep.subr.bf16.mxu0 %v1102
        %1166 = vmatpush1.bf16.msra.mxu0 %v1101
        %1167 = vmatprep.subr.bf16.mxu0 %v1104
        %1168 = vmatpush1.bf16.msra.mxu0 %v1103
        %1169 = vmatprep.subr.bf16.mxu0 %v1106
        %1170 = vmatpush1.bf16.msra.mxu0 %v1105
        %1171 = vmatprep.subr.bf16.mxu0 %v1108
        %1172 = vmatpush1.bf16.msra.mxu0 %v1107
        %1173 = vmatprep.subr.bf16.mxu0 %v1110
        %1174 = vmatpush1.bf16.msra.mxu0 %v1109
        %1175 = vmatprep.subr.bf16.mxu0 %v1112
        %1176 = vmatpush1.bf16.msra.mxu0 %v1111
        %1177 = vmatprep.subr.bf16.mxu0 %v1114
        %1178 = vmatpush1.bf16.msra.mxu0 %v1113
        %1179 = vmatprep.subr.bf16.mxu0 %v1116
        %1180 = vmatpush1.bf16.msra.mxu0 %v1115
        %1181 = vmatprep.subr.bf16.mxu0 %v1118
        %1182 = vmatpush1.bf16.msra.mxu0 %v1117
        %1183 = vmatprep.subr.bf16.mxu0 %v1120
        %1184 = vmatpush1.bf16.msra.mxu0 %v1119
        %1185 = vmatprep.subr.bf16.mxu0 %v1122
        %1186 = vmatpush1.bf16.msra.mxu0 %v1121
        %1187 = vmatprep.subr.bf16.mxu0 %v1124
        %1188 = vmatpush1.bf16.msra.mxu0 %v1123
        %1189 = vmatprep.subr.bf16.mxu0 %v1126
        %1190 = vmatpush1.bf16.msra.mxu0 %v1125
        %1191 = vmatprep.mubr.bf16.mxu0 %v996
        %1192 = vmatmul.mubr.bf16.gmra.mrb[0].mxu0 %v995
        %v1193 = vpop.f32.mrb[0].mxu0
        %v1194 = vadd.f32 %v985, %v1193
        %v1195 = vpop.f32.mrb[0].mxu0
        %v1196 = vadd.f32 %v989, %v1195
        %v1197 = vpop.f32.mrb[0].mxu0
        %v1198 = vpop.f32.mrb[0].mxu0
        %1199 = vdwg.mxu0
        %v1200 = vld [vmem:[%s7] sm:$0xff]
        %v1201 = vld [vmem:[%s7 + $0x8] sm:$0xff]
        %v1202 = vld [vmem:[%s7 + $0x10] sm:$0xff]
        %v1203 = vld [vmem:[%s7 + $0x18] sm:$0xff]
        %v1204 = vld [vmem:[%s7 + $0x20] sm:$0xff]
        %v1205 = vld [vmem:[%s7 + $0x28] sm:$0xff]
        %v1206 = vld [vmem:[%s7 + $0x30] sm:$0xff]
        %v1207 = vld [vmem:[%s7 + $0x38] sm:$0xff]
        %v1208 = vld [vmem:[%s7 + $0x40] sm:$0xff]
        %v1209 = vld [vmem:[%s7 + $0x48] sm:$0xff]
        %v1210 = vld [vmem:[%s7 + $0x50] sm:$0xff]
        %v1211 = vld [vmem:[%s7 + $0x58] sm:$0xff]
        %v1212 = vld [vmem:[%s7 + $0x60] sm:$0xff]
        %v1213 = vld [vmem:[%s7 + $0x68] sm:$0xff]
        %v1214 = vld [vmem:[%s7 + $0x70] sm:$0xff]
        %v1215 = vld [vmem:[%s7 + $0x78] sm:$0xff]
        %v1216 = vld [vmem:[%s7 + $0x80] sm:$0xff]
        %v1217 = vld [vmem:[%s7 + $0x88] sm:$0xff]
        %v1218 = vld [vmem:[%s7 + $0x90] sm:$0xff]
        %v1219 = vld [vmem:[%s7 + $0x98] sm:$0xff]
        %v1220 = vld [vmem:[%s7 + $0xa0] sm:$0xff]
        %v1221 = vld [vmem:[%s7 + $0xa8] sm:$0xff]
        %v1222 = vld [vmem:[%s7 + $0xb0] sm:$0xff]
        %v1223 = vld [vmem:[%s7 + $0xb8] sm:$0xff]
        %v1224 = vld [vmem:[%s7 + $0xc0] sm:$0xff]
        %v1225 = vld [vmem:[%s7 + $0xc8] sm:$0xff]
        %v1226 = vld [vmem:[%s7 + $0xd0] sm:$0xff]
        %v1227 = vld [vmem:[%s7 + $0xd8] sm:$0xff]
        %v1228 = vld [vmem:[%s7 + $0xe0] sm:$0xff]
        %v1229 = vld [vmem:[%s7 + $0xe8] sm:$0xff]
        %v1230 = vld [vmem:[%s7 + $0xf0] sm:$0xff]
        %v1231 = vld [vmem:[%s7 + $0xf8] sm:$0xff]
        %v1232 = vld [vmem:[%s8] sm:$0x3]
        %v1234 = vlaneseq
        %v1235 = vshrl.u32 %v1234, 7
        %v1236 = vsub.s32 0, %v1235
        %v1237 = vrot.slane %v1232, %v1236
        %v1238 = vlaneseq
        %v1239 = vshrl.u32 %v1238, 7
        %v1240 = vsub.s32 1, %v1239
        %v1241 = vrot.slane %v1232, %v1240
        %v1276 = vunpack.c.l.b16 %v1200
        %v1277 = vunpack.c.h.b16 %v1200
        %v1278 = vunpack.c.l.b16 %v1201
        %v1279 = vunpack.c.h.b16 %v1201
        %v1280 = vunpack.c.l.b16 %v1202
        %v1281 = vunpack.c.h.b16 %v1202
        %v1282 = vunpack.c.l.b16 %v1203
        %v1283 = vunpack.c.h.b16 %v1203
        %v1284 = vunpack.c.l.b16 %v1204
        %v1285 = vunpack.c.h.b16 %v1204
        %v1286 = vunpack.c.l.b16 %v1205
        %v1287 = vunpack.c.h.b16 %v1205
        %v1288 = vunpack.c.l.b16 %v1206
        %v1289 = vunpack.c.h.b16 %v1206
        %v1290 = vunpack.c.l.b16 %v1207
        %v1291 = vunpack.c.h.b16 %v1207
        %v1292 = vunpack.c.l.b16 %v1208
        %v1293 = vunpack.c.h.b16 %v1208
        %v1294 = vunpack.c.l.b16 %v1209
        %v1295 = vunpack.c.h.b16 %v1209
        %v1296 = vunpack.c.l.b16 %v1210
        %v1297 = vunpack.c.h.b16 %v1210
        %v1298 = vunpack.c.l.b16 %v1211
        %v1299 = vunpack.c.h.b16 %v1211
        %v1300 = vunpack.c.l.b16 %v1212
        %v1301 = vunpack.c.h.b16 %v1212
        %v1302 = vunpack.c.l.b16 %v1213
        %v1303 = vunpack.c.h.b16 %v1213
        %v1304 = vunpack.c.l.b16 %v1214
        %v1305 = vunpack.c.h.b16 %v1214
        %v1306 = vunpack.c.l.b16 %v1215
        %v1307 = vunpack.c.h.b16 %v1215
        %v1308 = vunpack.c.l.b16 %v1216
        %v1309 = vunpack.c.h.b16 %v1216
        %v1310 = vunpack.c.l.b16 %v1217
        %v1311 = vunpack.c.h.b16 %v1217
        %v1312 = vunpack.c.l.b16 %v1218
        %v1313 = vunpack.c.h.b16 %v1218
        %v1314 = vunpack.c.l.b16 %v1219
        %v1315 = vunpack.c.h.b16 %v1219
        %v1316 = vunpack.c.l.b16 %v1220
        %v1317 = vunpack.c.h.b16 %v1220
        %v1318 = vunpack.c.l.b16 %v1221
        %v1319 = vunpack.c.h.b16 %v1221
        %v1320 = vunpack.c.l.b16 %v1222
        %v1321 = vunpack.c.h.b16 %v1222
        %v1322 = vunpack.c.l.b16 %v1223
        %v1323 = vunpack.c.h.b16 %v1223
        %v1324 = vunpack.c.l.b16 %v1224
        %v1325 = vunpack.c.h.b16 %v1224
        %v1326 = vunpack.c.l.b16 %v1225
        %v1327 = vunpack.c.h.b16 %v1225
        %v1328 = vunpack.c.l.b16 %v1226
        %v1329 = vunpack.c.h.b16 %v1226
        %v1330 = vunpack.c.l.b16 %v1227
        %v1331 = vunpack.c.h.b16 %v1227
        %v1332 = vunpack.c.l.b16 %v1228
        %v1333 = vunpack.c.h.b16 %v1228
        %v1334 = vunpack.c.l.b16 %v1229
        %v1335 = vunpack.c.h.b16 %v1229
        %v1336 = vunpack.c.l.b16 %v1230
        %v1337 = vunpack.c.h.b16 %v1230
        %v1338 = vunpack.c.l.b16 %v1231
        %v1339 = vunpack.c.h.b16 %v1231
        %v1340 = vpack.c.b16 %v1278, %v1276
        %v1341 = vpack.c.b16 %v1279, %v1277
        %v1342 = vpack.c.b16 %v1282, %v1280
        %v1343 = vpack.c.b16 %v1283, %v1281
        %v1344 = vpack.c.b16 %v1286, %v1284
        %v1345 = vpack.c.b16 %v1287, %v1285
        %v1346 = vpack.c.b16 %v1290, %v1288
        %v1347 = vpack.c.b16 %v1291, %v1289
        %v1348 = vpack.c.b16 %v1294, %v1292
        %v1349 = vpack.c.b16 %v1295, %v1293
        %v1350 = vpack.c.b16 %v1298, %v1296
        %v1351 = vpack.c.b16 %v1299, %v1297
        %v1352 = vpack.c.b16 %v1302, %v1300
        %v1353 = vpack.c.b16 %v1303, %v1301
        %v1354 = vpack.c.b16 %v1306, %v1304
        %v1355 = vpack.c.b16 %v1307, %v1305
        %v1356 = vpack.c.b16 %v1310, %v1308
        %v1357 = vpack.c.b16 %v1311, %v1309
        %v1358 = vpack.c.b16 %v1314, %v1312
        %v1359 = vpack.c.b16 %v1315, %v1313
        %v1360 = vpack.c.b16 %v1318, %v1316
        %v1361 = vpack.c.b16 %v1319, %v1317
        %v1362 = vpack.c.b16 %v1322, %v1320
        %v1363 = vpack.c.b16 %v1323, %v1321
        %v1364 = vpack.c.b16 %v1326, %v1324
        %v1365 = vpack.c.b16 %v1327, %v1325
        %v1366 = vpack.c.b16 %v1330, %v1328
        %v1367 = vpack.c.b16 %v1331, %v1329
        %v1368 = vpack.c.b16 %v1334, %v1332
        %v1369 = vpack.c.b16 %v1335, %v1333
        %v1370 = vpack.c.b16 %v1338, %v1336
        %v1371 = vpack.c.b16 %v1339, %v1337
        %1404 = vmatprep.subr.bf16.mxu0 %v1341
        %1405 = vmatpush1.bf16.msra.mxu0 %v1340
        %1406 = vmatprep.subr.bf16.mxu0 %v1343
        %1407 = vmatpush1.bf16.msra.mxu0 %v1342
        %1408 = vmatprep.subr.bf16.mxu0 %v1345
        %1409 = vmatpush1.bf16.msra.mxu0 %v1344
        %1410 = vmatprep.subr.bf16.mxu0 %v1347
        %1411 = vmatpush1.bf16.msra.mxu0 %v1346
        %1412 = vmatprep.subr.bf16.mxu0 %v1349
        %1413 = vmatpush1.bf16.msra.mxu0 %v1348
        %1414 = vmatprep.subr.bf16.mxu0 %v1351
        %1415 = vmatpush1.bf16.msra.mxu0 %v1350
        %1416 = vmatprep.subr.bf16.mxu0 %v1353
        %1417 = vmatpush1.bf16.msra.mxu0 %v1352
        %1418 = vmatprep.subr.bf16.mxu0 %v1355
        %1419 = vmatpush1.bf16.msra.mxu0 %v1354
        %1420 = vmatprep.subr.bf16.mxu0 %v1357
        %1421 = vmatpush1.bf16.msra.mxu0 %v1356
        %1422 = vmatprep.subr.bf16.mxu0 %v1359
        %1423 = vmatpush1.bf16.msra.mxu0 %v1358
        %1424 = vmatprep.subr.bf16.mxu0 %v1361
        %1425 = vmatpush1.bf16.msra.mxu0 %v1360
        %1426 = vmatprep.subr.bf16.mxu0 %v1363
        %1427 = vmatpush1.bf16.msra.mxu0 %v1362
        %1428 = vmatprep.subr.bf16.mxu0 %v1365
        %1429 = vmatpush1.bf16.msra.mxu0 %v1364
        %1430 = vmatprep.subr.bf16.mxu0 %v1367
        %1431 = vmatpush1.bf16.msra.mxu0 %v1366
        %1432 = vmatprep.subr.bf16.mxu0 %v1369
        %1433 = vmatpush1.bf16.msra.mxu0 %v1368
        %1434 = vmatprep.subr.bf16.mxu0 %v1371
        %1435 = vmatpush1.bf16.msra.mxu0 %v1370
        %1436 = vmatprep.mubr.bf16.mxu0 %v996
        %1437 = vmatmul.mubr.bf16.gmra.mrb[0].mxu0 %v995
        %v1438 = vpop.f32.mrb[0].mxu0
        %v1439 = vadd.f32 %v1237, %v1438
        %v1440 = vpop.f32.mrb[0].mxu0
        %v1441 = vadd.f32 %v1241, %v1440
        %v1442 = vpop.f32.mrb[0].mxu0
        %v1443 = vpop.f32.mrb[0].mxu0
        %1444 = vdwg.mxu0
        %v1445 = vpack.c.bf16 %v946, %v946
        %v1446 = vpack.c.bf16 %v947, %v947
        %v1447 = vpack.c.bf16 %v1194, %v1194
        %v1448 = vpack.c.bf16 %v1196, %v1196
        %v1449 = vpack.c.bf16 %v1439, %v1439
        %v1450 = vpack.c.bf16 %v1441, %v1441
        %v1452 = vlaneseq
        %v1453 = vshrl.u32 %v1452, 7
        %v1454 = vsub.s32 0, %v1453
        %v1455 = vrot.slane %v691, %v1454
        %1457 = vmatprep.subr.bf16.mxu0 0
        %1458 = vmatpush1.bf16.xpose.msra.mxu0 %v1447
        %1459 = vmatprep.subr.bf16.mxu0 0
        %1460 = vmatpush1.bf16.xpose.msra.mxu0 0
        %1461 = vmatprep.subr.bf16.mxu0 0
        %1462 = vmatpush1.bf16.xpose.msra.mxu0 0
        %1463 = vmatprep.subr.bf16.mxu0 0
        %1464 = vmatpush1.bf16.xpose.msra.mxu0 0
        %1465 = vmatprep.subr.bf16.mxu0 0
        %1466 = vmatpush1.bf16.xpose.msra.mxu0 0
        %1467 = vmatprep.subr.bf16.mxu0 0
        %1468 = vmatpush1.bf16.xpose.msra.mxu0 0
        %1469 = vmatprep.subr.bf16.mxu0 0
        %1470 = vmatpush1.bf16.xpose.msra.mxu0 0
        %1471 = vmatprep.subr.bf16.mxu0 0
        %1472 = vmatpush1.bf16.xpose.msra.mxu0 0
        %1473 = vmatprep.subr.bf16.mxu0 0
        %1474 = vmatpush1.bf16.xpose.msra.mxu0 0
        %1475 = vmatprep.subr.bf16.mxu0 0
        %1476 = vmatpush1.bf16.xpose.msra.mxu0 0
        %1477 = vmatprep.subr.bf16.mxu0 0
        %1478 = vmatpush1.bf16.xpose.msra.mxu0 0
        %1479 = vmatprep.subr.bf16.mxu0 0
        %1480 = vmatpush1.bf16.xpose.msra.mxu0 0
        %1481 = vmatprep.subr.bf16.mxu0 0
        %1482 = vmatpush1.bf16.xpose.msra.mxu0 0
        %1483 = vmatprep.subr.bf16.mxu0 0
        %1484 = vmatpush1.bf16.xpose.msra.mxu0 0
        %1485 = vmatprep.subr.bf16.mxu0 0
        %1486 = vmatpush1.bf16.xpose.msra.mxu0 0
        %1487 = vmatprep.subr.bf16.mxu0 0
        %1488 = vmatpush1.bf16.xpose.msra.mxu0 0
        %1489 = vmatprep.mubr.bf16.mxu0 0
        %1490 = vmatmul.mubr.bf16.gmra.mrb[0].mxu0 %v1445
        %v1491 = vpop.f32.mrb[0].mxu0
        %v1492 = vadd.f32 %v1455, %v1491
        %v1493 = vpop.f32.mrb[0].mxu0
        %v1494 = vpop.f32.mrb[0].mxu0
        %v1495 = vpop.f32.mrb[0].mxu0
        %1496 = vdwg.mxu0
        %vm1497 = vcmask 64512
        %v1498 = vsel %vm1497, %v1492, -inf
        %1499 = vmax.xlane.f32.xlu0 %v1498
        %v1500 = vpop.xlane.xlu0 %1499
        %v1501 = vsub.f32 %v1492, %v1500
        %v1502 = vmul.f32 %v1501, 1.442695
        %v1503 = vpow.pop %v1502
        %v1504 = vsel %vm1497, %v1503, 0.0
        %1505 = vadd.xlane.f32.xlu0 %v1504
        %v1506 = vpop.xlane.xlu0 %1505
        %v1507 = vrcp.pop %v1506
        %v1508 = vmul.f32 %v1503, %v1507
        %v1509 = vpack.c.bf16 %v1508, %v1508
        %v1511 = vsel %vm1497, %v1509, 0
        %vm1513 = vcmask 1043456
        %v1515 = vsel %vm1513, %v1449, 0
        %1517 = vmatprep.subr.bf16.mxu0 0
        %1518 = vmatpush1.bf16.msra.mxu0 %v1515
        %1519 = vmatprep.subr.bf16.mxu0 0
        %1520 = vmatpush1.bf16.msra.mxu0 0
        %1521 = vmatprep.subr.bf16.mxu0 0
        %1522 = vmatpush1.bf16.msra.mxu0 0
        %1523 = vmatprep.subr.bf16.mxu0 0
        %1524 = vmatpush1.bf16.msra.mxu0 0
        %1525 = vmatprep.subr.bf16.mxu0 0
        %1526 = vmatpush1.bf16.msra.mxu0 0
        %1527 = vmatprep.subr.bf16.mxu0 0
        %1528 = vmatpush1.bf16.msra.mxu0 0
        %1529 = vmatprep.subr.bf16.mxu0 0
        %1530 = vmatpush1.bf16.msra.mxu0 0
        %1531 = vmatprep.subr.bf16.mxu0 0
        %1532 = vmatpush1.bf16.msra.mxu0 0
        %1533 = vmatprep.subr.bf16.mxu0 0
        %1534 = vmatpush1.bf16.msra.mxu0 0
        %1535 = vmatprep.subr.bf16.mxu0 0
        %1536 = vmatpush1.bf16.msra.mxu0 0
        %1537 = vmatprep.subr.bf16.mxu0 0
        %1538 = vmatpush1.bf16.msra.mxu0 0
        %1539 = vmatprep.subr.bf16.mxu0 0
        %1540 = vmatpush1.bf16.msra.mxu0 0
        %1541 = vmatprep.subr.bf16.mxu0 0
        %1542 = vmatpush1.bf16.msra.mxu0 0
        %1543 = vmatprep.subr.bf16.mxu0 0
        %1544 = vmatpush1.bf16.msra.mxu0 0
        %1545 = vmatprep.subr.bf16.mxu0 0
        %1546 = vmatpush1.bf16.msra.mxu0 0
        %1547 = vmatprep.subr.bf16.mxu0 0
        %1548 = vmatpush1.bf16.msra.mxu0 0
        %1549 = vmatprep.mubr.bf16.mxu0 0
        %1550 = vmatmul.mubr.bf16.gmra.mrb[0].mxu0 %v1511
        %v1551 = vpop.f32.mrb[0].mxu0
        %v1552 = vadd.f32 0.0, %v1551
        %v1553 = vpop.f32.mrb[0].mxu0
        %v1554 = vpop.f32.mrb[0].mxu0
        %v1555 = vpop.f32.mrb[0].mxu0
        %1556 = vdwg.mxu0
        %v1557 = vpack.c.bf16 %v1552, %v1552
        %v1558 = vld [vmem:[%s9] sm:$0xff]
        %v1559 = vld [vmem:[%s9 + $0x8] sm:$0xff]
        %v1560 = vld [vmem:[%s9 + $0x10] sm:$0xff]
        %v1561 = vld [vmem:[%s9 + $0x18] sm:$0xff]
        %v1562 = vld [vmem:[%s9 + $0x20] sm:$0xff]
        %v1563 = vld [vmem:[%s9 + $0x28] sm:$0xff]
        %v1564 = vld [vmem:[%s9 + $0x30] sm:$0xff]
        %v1565 = vld [vmem:[%s9 + $0x38] sm:$0xff]
        %v1566 = vld [vmem:[%s9 + $0x40] sm:$0xff]
        %v1567 = vld [vmem:[%s9 + $0x48] sm:$0xff]
        %v1568 = vld [vmem:[%s9 + $0x50] sm:$0xff]
        %v1569 = vld [vmem:[%s9 + $0x58] sm:$0xff]
        %v1570 = vld [vmem:[%s9 + $0x60] sm:$0xff]
        %v1571 = vld [vmem:[%s9 + $0x68] sm:$0xff]
        %v1572 = vld [vmem:[%s9 + $0x70] sm:$0xff]
        %v1573 = vld [vmem:[%s9 + $0x78] sm:$0xff]
        %1574 = vmatprep.subr.bf16.mxu0 0
        %1575 = vmatpush1.bf16.xpose.msra.mxu0 %v1448
        %1576 = vmatprep.subr.bf16.mxu0 0
        %1577 = vmatpush1.bf16.xpose.msra.mxu0 0
        %1578 = vmatprep.subr.bf16.mxu0 0
        %1579 = vmatpush1.bf16.xpose.msra.mxu0 0
        %1580 = vmatprep.subr.bf16.mxu0 0
        %1581 = vmatpush1.bf16.xpose.msra.mxu0 0
        %1582 = vmatprep.subr.bf16.mxu0 0
        %1583 = vmatpush1.bf16.xpose.msra.mxu0 0
        %1584 = vmatprep.subr.bf16.mxu0 0
        %1585 = vmatpush1.bf16.xpose.msra.mxu0 0
        %1586 = vmatprep.subr.bf16.mxu0 0
        %1587 = vmatpush1.bf16.xpose.msra.mxu0 0
        %1588 = vmatprep.subr.bf16.mxu0 0
        %1589 = vmatpush1.bf16.xpose.msra.mxu0 0
        %1590 = vmatprep.subr.bf16.mxu0 0
        %1591 = vmatpush1.bf16.xpose.msra.mxu0 0
        %1592 = vmatprep.subr.bf16.mxu0 0
        %1593 = vmatpush1.bf16.xpose.msra.mxu0 0
        %1594 = vmatprep.subr.bf16.mxu0 0
        %1595 = vmatpush1.bf16.xpose.msra.mxu0 0
        %1596 = vmatprep.subr.bf16.mxu0 0
        %1597 = vmatpush1.bf16.xpose.msra.mxu0 0
        %1598 = vmatprep.subr.bf16.mxu0 0
        %1599 = vmatpush1.bf16.xpose.msra.mxu0 0
        %1600 = vmatprep.subr.bf16.mxu0 0
        %1601 = vmatpush1.bf16.xpose.msra.mxu0 0
        %1602 = vmatprep.subr.bf16.mxu0 0
        %1603 = vmatpush1.bf16.xpose.msra.mxu0 0
        %1604 = vmatprep.subr.bf16.mxu0 0
        %1605 = vmatpush1.bf16.xpose.msra.mxu0 0
        %1606 = vmatprep.mubr.bf16.mxu0 0
        %1607 = vmatmul.mubr.bf16.gmra.mrb[0].mxu0 %v1446
        %v1608 = vpop.f32.mrb[0].mxu0
        %v1609 = vadd.f32 %v1455, %v1608
        %v1610 = vpop.f32.mrb[0].mxu0
        %v1611 = vpop.f32.mrb[0].mxu0
        %v1612 = vpop.f32.mrb[0].mxu0
        %1613 = vdwg.mxu0
        %v1614 = vsel %vm1497, %v1609, -inf
        %1615 = vmax.xlane.f32.xlu0 %v1614
        %v1616 = vpop.xlane.xlu0 %1615
        %v1617 = vsub.f32 %v1609, %v1616
        %v1618 = vmul.f32 %v1617, 1.442695
        %v1619 = vpow.pop %v1618
        %v1620 = vsel %vm1497, %v1619, 0.0
        %1621 = vadd.xlane.f32.xlu0 %v1620
        %v1622 = vpop.xlane.xlu0 %1621
        %v1623 = vrcp.pop %v1622
        %v1624 = vmul.f32 %v1619, %v1623
        %v1625 = vpack.c.bf16 %v1624, %v1624
        %v1627 = vsel %vm1497, %v1625, 0
        %v1630 = vsel %vm1513, %v1450, 0
        %1632 = vmatprep.subr.bf16.mxu0 0
        %1633 = vmatpush1.bf16.msra.mxu0 %v1630
        %1634 = vmatprep.subr.bf16.mxu0 0
        %1635 = vmatpush1.bf16.msra.mxu0 0
        %1636 = vmatprep.subr.bf16.mxu0 0
        %1637 = vmatpush1.bf16.msra.mxu0 0
        %1638 = vmatprep.subr.bf16.mxu0 0
        %1639 = vmatpush1.bf16.msra.mxu0 0
        %1640 = vmatprep.subr.bf16.mxu0 0
        %1641 = vmatpush1.bf16.msra.mxu0 0
        %1642 = vmatprep.subr.bf16.mxu0 0
        %1643 = vmatpush1.bf16.msra.mxu0 0
        %1644 = vmatprep.subr.bf16.mxu0 0
        %1645 = vmatpush1.bf16.msra.mxu0 0
        %1646 = vmatprep.subr.bf16.mxu0 0
        %1647 = vmatpush1.bf16.msra.mxu0 0
        %1648 = vmatprep.subr.bf16.mxu0 0
        %1649 = vmatpush1.bf16.msra.mxu0 0
        %1650 = vmatprep.subr.bf16.mxu0 0
        %1651 = vmatpush1.bf16.msra.mxu0 0
        %1652 = vmatprep.subr.bf16.mxu0 0
        %1653 = vmatpush1.bf16.msra.mxu0 0
        %1654 = vmatprep.subr.bf16.mxu0 0
        %1655 = vmatpush1.bf16.msra.mxu0 0
        %1656 = vmatprep.subr.bf16.mxu0 0
        %1657 = vmatpush1.bf16.msra.mxu0 0
        %1658 = vmatprep.subr.bf16.mxu0 0
        %1659 = vmatpush1.bf16.msra.mxu0 0
        %1660 = vmatprep.subr.bf16.mxu0 0
        %1661 = vmatpush1.bf16.msra.mxu0 0
        %1662 = vmatprep.subr.bf16.mxu0 0
        %1663 = vmatpush1.bf16.msra.mxu0 0
        %1664 = vmatprep.mubr.bf16.mxu0 0
        %1665 = vmatmul.mubr.bf16.gmra.mrb[0].mxu0 %v1627
        %v1666 = vpop.f32.mrb[0].mxu0
        %v1667 = vadd.f32 0.0, %v1666
        %v1668 = vpop.f32.mrb[0].mxu0
        %v1669 = vpop.f32.mrb[0].mxu0
        %v1670 = vpop.f32.mrb[0].mxu0
        %1671 = vdwg.mxu0
        %v1672 = vpack.c.bf16 %v1667, %v1667
        %s1673 = scalar_lea.vmem %s9, 128
        %v1674 = vld [vmem:[%s1673] sm:$0xff]
        %v1675 = vld [vmem:[%s1673 + $0x8] sm:$0xff]
        %v1676 = vld [vmem:[%s1673 + $0x10] sm:$0xff]
        %v1677 = vld [vmem:[%s1673 + $0x18] sm:$0xff]
        %v1678 = vld [vmem:[%s1673 + $0x20] sm:$0xff]
        %v1679 = vld [vmem:[%s1673 + $0x28] sm:$0xff]
        %v1680 = vld [vmem:[%s1673 + $0x30] sm:$0xff]
        %v1681 = vld [vmem:[%s1673 + $0x38] sm:$0xff]
        %v1682 = vld [vmem:[%s1673 + $0x40] sm:$0xff]
        %v1683 = vld [vmem:[%s1673 + $0x48] sm:$0xff]
        %v1684 = vld [vmem:[%s1673 + $0x50] sm:$0xff]
        %v1685 = vld [vmem:[%s1673 + $0x58] sm:$0xff]
        %v1686 = vld [vmem:[%s1673 + $0x60] sm:$0xff]
        %v1687 = vld [vmem:[%s1673 + $0x68] sm:$0xff]
        %v1688 = vld [vmem:[%s1673 + $0x70] sm:$0xff]
        %v1689 = vld [vmem:[%s1673 + $0x78] sm:$0xff]
        %v1706 = vunpack.c.l.b16 %v1674
        %v1707 = vunpack.c.h.b16 %v1674
        %v1708 = vunpack.c.l.b16 %v1675
        %v1709 = vunpack.c.h.b16 %v1675
        %v1710 = vunpack.c.l.b16 %v1676
        %v1711 = vunpack.c.h.b16 %v1676
        %v1712 = vunpack.c.l.b16 %v1677
        %v1713 = vunpack.c.h.b16 %v1677
        %v1714 = vunpack.c.l.b16 %v1678
        %v1715 = vunpack.c.h.b16 %v1678
        %v1716 = vunpack.c.l.b16 %v1679
        %v1717 = vunpack.c.h.b16 %v1679
        %v1718 = vunpack.c.l.b16 %v1680
        %v1719 = vunpack.c.h.b16 %v1680
        %v1720 = vunpack.c.l.b16 %v1681
        %v1721 = vunpack.c.h.b16 %v1681
        %v1722 = vunpack.c.l.b16 %v1682
        %v1723 = vunpack.c.h.b16 %v1682
        %v1724 = vunpack.c.l.b16 %v1683
        %v1725 = vunpack.c.h.b16 %v1683
        %v1726 = vunpack.c.l.b16 %v1684
        %v1727 = vunpack.c.h.b16 %v1684
        %v1728 = vunpack.c.l.b16 %v1685
        %v1729 = vunpack.c.h.b16 %v1685
        %v1730 = vunpack.c.l.b16 %v1686
        %v1731 = vunpack.c.h.b16 %v1686
        %v1732 = vunpack.c.l.b16 %v1687
        %v1733 = vunpack.c.h.b16 %v1687
        %v1734 = vunpack.c.l.b16 %v1688
        %v1735 = vunpack.c.h.b16 %v1688
        %v1736 = vunpack.c.l.b16 %v1689
        %v1737 = vunpack.c.h.b16 %v1689
        %v1738 = vpack.c.b16 %v1708, %v1706
        %v1739 = vpack.c.b16 %v1709, %v1707
        %v1740 = vpack.c.b16 %v1712, %v1710
        %v1741 = vpack.c.b16 %v1713, %v1711
        %v1742 = vpack.c.b16 %v1716, %v1714
        %v1743 = vpack.c.b16 %v1717, %v1715
        %v1744 = vpack.c.b16 %v1720, %v1718
        %v1745 = vpack.c.b16 %v1721, %v1719
        %v1746 = vpack.c.b16 %v1724, %v1722
        %v1747 = vpack.c.b16 %v1725, %v1723
        %v1748 = vpack.c.b16 %v1728, %v1726
        %v1749 = vpack.c.b16 %v1729, %v1727
        %v1750 = vpack.c.b16 %v1732, %v1730
        %v1751 = vpack.c.b16 %v1733, %v1731
        %v1752 = vpack.c.b16 %v1736, %v1734
        %v1753 = vpack.c.b16 %v1737, %v1735
        %1770 = vmatprep.subr.bf16.mxu0 %v1739
        %1771 = vmatpush1.bf16.msra.mxu0 %v1738
        %1772 = vmatprep.subr.bf16.mxu0 %v1741
        %1773 = vmatpush1.bf16.msra.mxu0 %v1740
        %1774 = vmatprep.subr.bf16.mxu0 %v1743
        %1775 = vmatpush1.bf16.msra.mxu0 %v1742
        %1776 = vmatprep.subr.bf16.mxu0 %v1745
        %1777 = vmatpush1.bf16.msra.mxu0 %v1744
        %1778 = vmatprep.subr.bf16.mxu0 %v1747
        %1779 = vmatpush1.bf16.msra.mxu0 %v1746
        %1780 = vmatprep.subr.bf16.mxu0 %v1749
        %1781 = vmatpush1.bf16.msra.mxu0 %v1748
        %1782 = vmatprep.subr.bf16.mxu0 %v1751
        %1783 = vmatpush1.bf16.msra.mxu0 %v1750
        %1784 = vmatprep.subr.bf16.mxu0 %v1753
        %1785 = vmatpush1.bf16.msra.mxu0 %v1752
        %1786 = vmatprep.subr.bf16.mxu0 0
        %1787 = vmatpush1.bf16.msra.mxu0 0
        %1788 = vmatprep.subr.bf16.mxu0 0
        %1789 = vmatpush1.bf16.msra.mxu0 0
        %1790 = vmatprep.subr.bf16.mxu0 0
        %1791 = vmatpush1.bf16.msra.mxu0 0
        %1792 = vmatprep.subr.bf16.mxu0 0
        %1793 = vmatpush1.bf16.msra.mxu0 0
        %1794 = vmatprep.subr.bf16.mxu0 0
        %1795 = vmatpush1.bf16.msra.mxu0 0
        %1796 = vmatprep.subr.bf16.mxu0 0
        %1797 = vmatpush1.bf16.msra.mxu0 0
        %1798 = vmatprep.subr.bf16.mxu0 0
        %1799 = vmatpush1.bf16.msra.mxu0 0
        %1800 = vmatprep.subr.bf16.mxu0 0
        %1801 = vmatpush1.bf16.msra.mxu0 0
        %1802 = vmatprep.mubr.bf16.mxu0 0
        %1803 = vmatmul.mubr.bf16.gmra.mrb[0].mxu0 %v1672
        %v1804 = vpop.f32.mrb[0].mxu0
        %v1805 = vadd.f32 0.0, %v1804
        %v1806 = vpop.f32.mrb[0].mxu0
        %v1807 = vadd.f32 0.0, %v1806
        %v1808 = vpop.f32.mrb[0].mxu0
        %v1809 = vpop.f32.mrb[0].mxu0
        %1810 = vdwg.mxu0
        %v1827 = vunpack.c.l.b16 %v1558
        %v1828 = vunpack.c.h.b16 %v1558
        %v1829 = vunpack.c.l.b16 %v1559
        %v1830 = vunpack.c.h.b16 %v1559
        %v1831 = vunpack.c.l.b16 %v1560
        %v1832 = vunpack.c.h.b16 %v1560
        %v1833 = vunpack.c.l.b16 %v1561
        %v1834 = vunpack.c.h.b16 %v1561
        %v1835 = vunpack.c.l.b16 %v1562
        %v1836 = vunpack.c.h.b16 %v1562
        %v1837 = vunpack.c.l.b16 %v1563
        %v1838 = vunpack.c.h.b16 %v1563
        %v1839 = vunpack.c.l.b16 %v1564
        %v1840 = vunpack.c.h.b16 %v1564
        %v1841 = vunpack.c.l.b16 %v1565
        %v1842 = vunpack.c.h.b16 %v1565
        %v1843 = vunpack.c.l.b16 %v1566
        %v1844 = vunpack.c.h.b16 %v1566
        %v1845 = vunpack.c.l.b16 %v1567
        %v1846 = vunpack.c.h.b16 %v1567
        %v1847 = vunpack.c.l.b16 %v1568
        %v1848 = vunpack.c.h.b16 %v1568
        %v1849 = vunpack.c.l.b16 %v1569
        %v1850 = vunpack.c.h.b16 %v1569
        %v1851 = vunpack.c.l.b16 %v1570
        %v1852 = vunpack.c.h.b16 %v1570
        %v1853 = vunpack.c.l.b16 %v1571
        %v1854 = vunpack.c.h.b16 %v1571
        %v1855 = vunpack.c.l.b16 %v1572
        %v1856 = vunpack.c.h.b16 %v1572
        %v1857 = vunpack.c.l.b16 %v1573
        %v1858 = vunpack.c.h.b16 %v1573
        %v1859 = vpack.c.b16 %v1829, %v1827
        %v1860 = vpack.c.b16 %v1830, %v1828
        %v1861 = vpack.c.b16 %v1833, %v1831
        %v1862 = vpack.c.b16 %v1834, %v1832
        %v1863 = vpack.c.b16 %v1837, %v1835
        %v1864 = vpack.c.b16 %v1838, %v1836
        %v1865 = vpack.c.b16 %v1841, %v1839
        %v1866 = vpack.c.b16 %v1842, %v1840
        %v1867 = vpack.c.b16 %v1845, %v1843
        %v1868 = vpack.c.b16 %v1846, %v1844
        %v1869 = vpack.c.b16 %v1849, %v1847
        %v1870 = vpack.c.b16 %v1850, %v1848
        %v1871 = vpack.c.b16 %v1853, %v1851
        %v1872 = vpack.c.b16 %v1854, %v1852
        %v1873 = vpack.c.b16 %v1857, %v1855
        %v1874 = vpack.c.b16 %v1858, %v1856
        %1891 = vmatprep.subr.bf16.mxu0 %v1860
        %1892 = vmatpush1.bf16.msra.mxu0 %v1859
        %1893 = vmatprep.subr.bf16.mxu0 %v1862
        %1894 = vmatpush1.bf16.msra.mxu0 %v1861
        %1895 = vmatprep.subr.bf16.mxu0 %v1864
        %1896 = vmatpush1.bf16.msra.mxu0 %v1863
        %1897 = vmatprep.subr.bf16.mxu0 %v1866
        %1898 = vmatpush1.bf16.msra.mxu0 %v1865
        %1899 = vmatprep.subr.bf16.mxu0 %v1868
        %1900 = vmatpush1.bf16.msra.mxu0 %v1867
        %1901 = vmatprep.subr.bf16.mxu0 %v1870
        %1902 = vmatpush1.bf16.msra.mxu0 %v1869
        %1903 = vmatprep.subr.bf16.mxu0 %v1872
        %1904 = vmatpush1.bf16.msra.mxu0 %v1871
        %1905 = vmatprep.subr.bf16.mxu0 %v1874
        %1906 = vmatpush1.bf16.msra.mxu0 %v1873
        %1907 = vmatprep.subr.bf16.mxu0 0
        %1908 = vmatpush1.bf16.msra.mxu0 0
        %1909 = vmatprep.subr.bf16.mxu0 0
        %1910 = vmatpush1.bf16.msra.mxu0 0
        %1911 = vmatprep.subr.bf16.mxu0 0
        %1912 = vmatpush1.bf16.msra.mxu0 0
        %1913 = vmatprep.subr.bf16.mxu0 0
        %1914 = vmatpush1.bf16.msra.mxu0 0
        %1915 = vmatprep.subr.bf16.mxu0 0
        %1916 = vmatpush1.bf16.msra.mxu0 0
        %1917 = vmatprep.subr.bf16.mxu0 0
        %1918 = vmatpush1.bf16.msra.mxu0 0
        %1919 = vmatprep.subr.bf16.mxu0 0
        %1920 = vmatpush1.bf16.msra.mxu0 0
        %1921 = vmatprep.subr.bf16.mxu0 0
        %1922 = vmatpush1.bf16.msra.mxu0 0
        %1923 = vmatprep.mubr.bf16.mxu0 0
        %1924 = vmatmul.mubr.bf16.gmra.mrb[0].mxu0 %v1557
        %v1925 = vpop.f32.mrb[0].mxu0
        %v1926 = vadd.f32 %v1805, %v1925
        %v1927 = vpop.f32.mrb[0].mxu0
        %v1928 = vadd.f32 %v1807, %v1927
        %v1929 = vpop.f32.mrb[0].mxu0
        %v1930 = vpop.f32.mrb[0].mxu0
        %1931 = vdwg.mxu0
        %v1932 = vld [vmem:[%s10] sm:$0x3]
        %v1934 = vlaneseq
        %v1935 = vshrl.u32 %v1934, 7
        %v1936 = vsub.s32 0, %v1935
        %v1937 = vrot.slane %v1932, %v1936
        %v1938 = vlaneseq
        %v1939 = vshrl.u32 %v1938, 7
        %v1940 = vsub.s32 1, %v1939
        %v1941 = vrot.slane %v1932, %v1940
        %v1944 = vadd.f32 %v1926, %v1937
        %v1945 = vadd.f32 %v1928, %v1941
        %v1946 = vadd.f32 %v692, %v1944
        %v1947 = vadd.f32 %v693, %v1945
        %v1948 = vadd.f32 %v1946, %v1947
        %1949 = vadd.xlane.f32.xlu0 %v1948
        %v1950 = vpop.xlane.xlu0 %1949
        %v1951 = vrcp.pop 256.0
        %v1952 = vmul.f32 %v1950, %v1951
        %v1953 = vsub.f32 %v1946, %v1952
        %v1954 = vsub.f32 %v1947, %v1952
        %v1955 = vmul.f32 %v1953, %v1953
        %v1956 = vmul.f32 %v1954, %v1954
        %v1957 = vadd.f32 %v1955, %v1956
        %1958 = vadd.xlane.f32.xlu0 %v1957
        %v1959 = vpop.xlane.xlu0 %1958
        %v1960 = vmul.f32 %v1959, %v1951
        %v1961 = vadd.f32 %v1960, 1e-12
        %v1962 = vrsqrt.pop %v1961
        %v1963 = vmul.f32 %v1953, %v1962
        %v1964 = vmul.f32 %v1954, %v1962
        %v1965 = vld [vmem:[%s11] sm:$0x3]
        %v1967 = vlaneseq
        %v1968 = vshrl.u32 %v1967, 7
        %v1969 = vsub.s32 0, %v1968
        %v1970 = vrot.slane %v1965, %v1969
        %v1971 = vlaneseq
        %v1972 = vshrl.u32 %v1971, 7
        %v1973 = vsub.s32 1, %v1972
        %v1974 = vrot.slane %v1965, %v1973
        %v1977 = vmul.f32 %v1970, %v1963
        %v1978 = vmul.f32 %v1974, %v1964
        %v1979 = vld [vmem:[%s12] sm:$0x3]
        %v1981 = vlaneseq
        %v1982 = vshrl.u32 %v1981, 7
        %v1983 = vsub.s32 0, %v1982
        %v1984 = vrot.slane %v1979, %v1983
        %v1985 = vlaneseq
        %v1986 = vshrl.u32 %v1985, 7
        %v1987 = vsub.s32 1, %v1986
        %v1988 = vrot.slane %v1979, %v1987
        %v1991 = vadd.f32 %v1977, %v1984
        %v1992 = vadd.f32 %v1978, %v1988
        %v1993 = vpack.c.bf16 %v1991, %v1991
        %v1994 = vpack.c.bf16 %v1992, %v1992
        %v1995 = vld [vmem:[%s13] sm:$0xff]
        %v1996 = vld [vmem:[%s13 + $0x8] sm:$0xff]
        %v1997 = vld [vmem:[%s13 + $0x10] sm:$0xff]
        %v1998 = vld [vmem:[%s13 + $0x18] sm:$0xff]
        %v1999 = vld [vmem:[%s13 + $0x20] sm:$0xff]
        %v2000 = vld [vmem:[%s13 + $0x28] sm:$0xff]
        %v2001 = vld [vmem:[%s13 + $0x30] sm:$0xff]
        %v2002 = vld [vmem:[%s13 + $0x38] sm:$0xff]
        %v2003 = vld [vmem:[%s13 + $0x40] sm:$0xff]
        %v2004 = vld [vmem:[%s13 + $0x48] sm:$0xff]
        %v2005 = vld [vmem:[%s13 + $0x50] sm:$0xff]
        %v2006 = vld [vmem:[%s13 + $0x58] sm:$0xff]
        %v2007 = vld [vmem:[%s13 + $0x60] sm:$0xff]
        %v2008 = vld [vmem:[%s13 + $0x68] sm:$0xff]
        %v2009 = vld [vmem:[%s13 + $0x70] sm:$0xff]
        %v2010 = vld [vmem:[%s13 + $0x78] sm:$0xff]
        %v2011 = vld [vmem:[%s13 + $0x80] sm:$0xff]
        %v2012 = vld [vmem:[%s13 + $0x88] sm:$0xff]
        %v2013 = vld [vmem:[%s13 + $0x90] sm:$0xff]
        %v2014 = vld [vmem:[%s13 + $0x98] sm:$0xff]
        %v2015 = vld [vmem:[%s13 + $0xa0] sm:$0xff]
        %v2016 = vld [vmem:[%s13 + $0xa8] sm:$0xff]
        %v2017 = vld [vmem:[%s13 + $0xb0] sm:$0xff]
        %v2018 = vld [vmem:[%s13 + $0xb8] sm:$0xff]
        %v2019 = vld [vmem:[%s13 + $0xc0] sm:$0xff]
        %v2020 = vld [vmem:[%s13 + $0xc8] sm:$0xff]
        %v2021 = vld [vmem:[%s13 + $0xd0] sm:$0xff]
        %v2022 = vld [vmem:[%s13 + $0xd8] sm:$0xff]
        %v2023 = vld [vmem:[%s13 + $0xe0] sm:$0xff]
        %v2024 = vld [vmem:[%s13 + $0xe8] sm:$0xff]
        %v2025 = vld [vmem:[%s13 + $0xf0] sm:$0xff]
        %v2026 = vld [vmem:[%s13 + $0xf8] sm:$0xff]
        %v2027 = vld [vmem:[%s14] sm:$0x3]
        %v2029 = vlaneseq
        %v2030 = vshrl.u32 %v2029, 7
        %v2031 = vsub.s32 0, %v2030
        %v2032 = vrot.slane %v2027, %v2031
        %v2033 = vlaneseq
        %v2034 = vshrl.u32 %v2033, 7
        %v2035 = vsub.s32 1, %v2034
        %v2036 = vrot.slane %v2027, %v2035
        %v2071 = vunpack.c.l.b16 %v1995
        %v2072 = vunpack.c.h.b16 %v1995
        %v2073 = vunpack.c.l.b16 %v1996
        %v2074 = vunpack.c.h.b16 %v1996
        %v2075 = vunpack.c.l.b16 %v1997
        %v2076 = vunpack.c.h.b16 %v1997
        %v2077 = vunpack.c.l.b16 %v1998
        %v2078 = vunpack.c.h.b16 %v1998
        %v2079 = vunpack.c.l.b16 %v1999
        %v2080 = vunpack.c.h.b16 %v1999
        %v2081 = vunpack.c.l.b16 %v2000
        %v2082 = vunpack.c.h.b16 %v2000
        %v2083 = vunpack.c.l.b16 %v2001
        %v2084 = vunpack.c.h.b16 %v2001
        %v2085 = vunpack.c.l.b16 %v2002
        %v2086 = vunpack.c.h.b16 %v2002
        %v2087 = vunpack.c.l.b16 %v2003
        %v2088 = vunpack.c.h.b16 %v2003
        %v2089 = vunpack.c.l.b16 %v2004
        %v2090 = vunpack.c.h.b16 %v2004
        %v2091 = vunpack.c.l.b16 %v2005
        %v2092 = vunpack.c.h.b16 %v2005
        %v2093 = vunpack.c.l.b16 %v2006
        %v2094 = vunpack.c.h.b16 %v2006
        %v2095 = vunpack.c.l.b16 %v2007
        %v2096 = vunpack.c.h.b16 %v2007
        %v2097 = vunpack.c.l.b16 %v2008
        %v2098 = vunpack.c.h.b16 %v2008
        %v2099 = vunpack.c.l.b16 %v2009
        %v2100 = vunpack.c.h.b16 %v2009
        %v2101 = vunpack.c.l.b16 %v2010
        %v2102 = vunpack.c.h.b16 %v2010
        %v2103 = vunpack.c.l.b16 %v2011
        %v2104 = vunpack.c.h.b16 %v2011
        %v2105 = vunpack.c.l.b16 %v2012
        %v2106 = vunpack.c.h.b16 %v2012
        %v2107 = vunpack.c.l.b16 %v2013
        %v2108 = vunpack.c.h.b16 %v2013
        %v2109 = vunpack.c.l.b16 %v2014
        %v2110 = vunpack.c.h.b16 %v2014
        %v2111 = vunpack.c.l.b16 %v2015
        %v2112 = vunpack.c.h.b16 %v2015
        %v2113 = vunpack.c.l.b16 %v2016
        %v2114 = vunpack.c.h.b16 %v2016
        %v2115 = vunpack.c.l.b16 %v2017
        %v2116 = vunpack.c.h.b16 %v2017
        %v2117 = vunpack.c.l.b16 %v2018
        %v2118 = vunpack.c.h.b16 %v2018
        %v2119 = vunpack.c.l.b16 %v2019
        %v2120 = vunpack.c.h.b16 %v2019
        %v2121 = vunpack.c.l.b16 %v2020
        %v2122 = vunpack.c.h.b16 %v2020
        %v2123 = vunpack.c.l.b16 %v2021
        %v2124 = vunpack.c.h.b16 %v2021
        %v2125 = vunpack.c.l.b16 %v2022
        %v2126 = vunpack.c.h.b16 %v2022
        %v2127 = vunpack.c.l.b16 %v2023
        %v2128 = vunpack.c.h.b16 %v2023
        %v2129 = vunpack.c.l.b16 %v2024
        %v2130 = vunpack.c.h.b16 %v2024
        %v2131 = vunpack.c.l.b16 %v2025
        %v2132 = vunpack.c.h.b16 %v2025
        %v2133 = vunpack.c.l.b16 %v2026
        %v2134 = vunpack.c.h.b16 %v2026
        %v2135 = vpack.c.b16 %v2073, %v2071
        %v2136 = vpack.c.b16 %v2074, %v2072
        %v2137 = vpack.c.b16 %v2077, %v2075
        %v2138 = vpack.c.b16 %v2078, %v2076
        %v2139 = vpack.c.b16 %v2081, %v2079
        %v2140 = vpack.c.b16 %v2082, %v2080
        %v2141 = vpack.c.b16 %v2085, %v2083
        %v2142 = vpack.c.b16 %v2086, %v2084
        %v2143 = vpack.c.b16 %v2089, %v2087
        %v2144 = vpack.c.b16 %v2090, %v2088
        %v2145 = vpack.c.b16 %v2093, %v2091
        %v2146 = vpack.c.b16 %v2094, %v2092
        %v2147 = vpack.c.b16 %v2097, %v2095
        %v2148 = vpack.c.b16 %v2098, %v2096
        %v2149 = vpack.c.b16 %v2101, %v2099
        %v2150 = vpack.c.b16 %v2102, %v2100
        %v2151 = vpack.c.b16 %v2105, %v2103
        %v2152 = vpack.c.b16 %v2106, %v2104
        %v2153 = vpack.c.b16 %v2109, %v2107
        %v2154 = vpack.c.b16 %v2110, %v2108
        %v2155 = vpack.c.b16 %v2113, %v2111
        %v2156 = vpack.c.b16 %v2114, %v2112
        %v2157 = vpack.c.b16 %v2117, %v2115
        %v2158 = vpack.c.b16 %v2118, %v2116
        %v2159 = vpack.c.b16 %v2121, %v2119
        %v2160 = vpack.c.b16 %v2122, %v2120
        %v2161 = vpack.c.b16 %v2125, %v2123
        %v2162 = vpack.c.b16 %v2126, %v2124
        %v2163 = vpack.c.b16 %v2129, %v2127
        %v2164 = vpack.c.b16 %v2130, %v2128
        %v2165 = vpack.c.b16 %v2133, %v2131
        %v2166 = vpack.c.b16 %v2134, %v2132
        %2199 = vmatprep.subr.bf16.mxu0 %v2136
        %2200 = vmatpush1.bf16.msra.mxu0 %v2135
        %2201 = vmatprep.subr.bf16.mxu0 %v2138
        %2202 = vmatpush1.bf16.msra.mxu0 %v2137
        %2203 = vmatprep.subr.bf16.mxu0 %v2140
        %2204 = vmatpush1.bf16.msra.mxu0 %v2139
        %2205 = vmatprep.subr.bf16.mxu0 %v2142
        %2206 = vmatpush1.bf16.msra.mxu0 %v2141
        %2207 = vmatprep.subr.bf16.mxu0 %v2144
        %2208 = vmatpush1.bf16.msra.mxu0 %v2143
        %2209 = vmatprep.subr.bf16.mxu0 %v2146
        %2210 = vmatpush1.bf16.msra.mxu0 %v2145
        %2211 = vmatprep.subr.bf16.mxu0 %v2148
        %2212 = vmatpush1.bf16.msra.mxu0 %v2147
        %2213 = vmatprep.subr.bf16.mxu0 %v2150
        %2214 = vmatpush1.bf16.msra.mxu0 %v2149
        %2215 = vmatprep.subr.bf16.mxu0 %v2152
        %2216 = vmatpush1.bf16.msra.mxu0 %v2151
        %2217 = vmatprep.subr.bf16.mxu0 %v2154
        %2218 = vmatpush1.bf16.msra.mxu0 %v2153
        %2219 = vmatprep.subr.bf16.mxu0 %v2156
        %2220 = vmatpush1.bf16.msra.mxu0 %v2155
        %2221 = vmatprep.subr.bf16.mxu0 %v2158
        %2222 = vmatpush1.bf16.msra.mxu0 %v2157
        %2223 = vmatprep.subr.bf16.mxu0 %v2160
        %2224 = vmatpush1.bf16.msra.mxu0 %v2159
        %2225 = vmatprep.subr.bf16.mxu0 %v2162
        %2226 = vmatpush1.bf16.msra.mxu0 %v2161
        %2227 = vmatprep.subr.bf16.mxu0 %v2164
        %2228 = vmatpush1.bf16.msra.mxu0 %v2163
        %2229 = vmatprep.subr.bf16.mxu0 %v2166
        %2230 = vmatpush1.bf16.msra.mxu0 %v2165
        %2231 = vmatprep.mubr.bf16.mxu0 %v1994
        %2232 = vmatmul.mubr.bf16.gmra.mrb[0].mxu0 %v1993
        %v2233 = vpop.f32.mrb[0].mxu0
        %v2234 = vadd.f32 %v2032, %v2233
        %v2235 = vpop.f32.mrb[0].mxu0
        %v2236 = vadd.f32 %v2036, %v2235
        %v2237 = vpop.f32.mrb[0].mxu0
        %v2238 = vpop.f32.mrb[0].mxu0
        %2239 = vdwg.mxu0
        %v2240 = vmax.f32 %v2234, 0.0
        %v2241 = vmax.f32 %v2236, 0.0
        %v2242 = vpack.c.bf16 %v2240, %v2240
        %v2243 = vpack.c.bf16 %v2241, %v2241
        %v2244 = vld [vmem:[#allocation2] sm:$0xff]
        %v2245 = vld [vmem:[#allocation2 + $0x8] sm:$0xff]
        %v2246 = vld [vmem:[#allocation2 + $0x10] sm:$0xff]
        %v2247 = vld [vmem:[#allocation2 + $0x18] sm:$0xff]
        %v2248 = vld [vmem:[#allocation2 + $0x20] sm:$0xff]
        %v2249 = vld [vmem:[#allocation2 + $0x28] sm:$0xff]
        %v2250 = vld [vmem:[#allocation2 + $0x30] sm:$0xff]
        %v2251 = vld [vmem:[#allocation2 + $0x38] sm:$0xff]
        %v2252 = vld [vmem:[#allocation2 + $0x40] sm:$0xff]
        %v2253 = vld [vmem:[#allocation2 + $0x48] sm:$0xff]
        %v2254 = vld [vmem:[#allocation2 + $0x50] sm:$0xff]
        %v2255 = vld [vmem:[#allocation2 + $0x58] sm:$0xff]
        %v2256 = vld [vmem:[#allocation2 + $0x60] sm:$0xff]
        %v2257 = vld [vmem:[#allocation2 + $0x68] sm:$0xff]
        %v2258 = vld [vmem:[#allocation2 + $0x70] sm:$0xff]
        %v2259 = vld [vmem:[#allocation2 + $0x78] sm:$0xff]
        %v2260 = vld [vmem:[#allocation2 + $0x80] sm:$0xff]
        %v2261 = vld [vmem:[#allocation2 + $0x88] sm:$0xff]
        %v2262 = vld [vmem:[#allocation2 + $0x90] sm:$0xff]
        %v2263 = vld [vmem:[#allocation2 + $0x98] sm:$0xff]
        %v2264 = vld [vmem:[#allocation2 + $0xa0] sm:$0xff]
        %v2265 = vld [vmem:[#allocation2 + $0xa8] sm:$0xff]
        %v2266 = vld [vmem:[#allocation2 + $0xb0] sm:$0xff]
        %v2267 = vld [vmem:[#allocation2 + $0xb8] sm:$0xff]
        %v2268 = vld [vmem:[#allocation2 + $0xc0] sm:$0xff]
        %v2269 = vld [vmem:[#allocation2 + $0xc8] sm:$0xff]
        %v2270 = vld [vmem:[#allocation2 + $0xd0] sm:$0xff]
        %v2271 = vld [vmem:[#allocation2 + $0xd8] sm:$0xff]
        %v2272 = vld [vmem:[#allocation2 + $0xe0] sm:$0xff]
        %v2273 = vld [vmem:[#allocation2 + $0xe8] sm:$0xff]
        %v2274 = vld [vmem:[#allocation2 + $0xf0] sm:$0xff]
        %v2275 = vld [vmem:[#allocation2 + $0xf8] sm:$0xff]
        %v2276 = vld [vmem:[%s16] sm:$0x3]
        %v2278 = vlaneseq
        %v2279 = vshrl.u32 %v2278, 7
        %v2280 = vsub.s32 0, %v2279
        %v2281 = vrot.slane %v2276, %v2280
        %v2282 = vlaneseq
        %v2283 = vshrl.u32 %v2282, 7
        %v2284 = vsub.s32 1, %v2283
        %v2285 = vrot.slane %v2276, %v2284
        %v2320 = vunpack.c.l.b16 %v2244
        %v2321 = vunpack.c.h.b16 %v2244
        %v2322 = vunpack.c.l.b16 %v2245
        %v2323 = vunpack.c.h.b16 %v2245
        %v2324 = vunpack.c.l.b16 %v2246
        %v2325 = vunpack.c.h.b16 %v2246
        %v2326 = vunpack.c.l.b16 %v2247
        %v2327 = vunpack.c.h.b16 %v2247
        %v2328 = vunpack.c.l.b16 %v2248
        %v2329 = vunpack.c.h.b16 %v2248
        %v2330 = vunpack.c.l.b16 %v2249
        %v2331 = vunpack.c.h.b16 %v2249
        %v2332 = vunpack.c.l.b16 %v2250
        %v2333 = vunpack.c.h.b16 %v2250
        %v2334 = vunpack.c.l.b16 %v2251
        %v2335 = vunpack.c.h.b16 %v2251
        %v2336 = vunpack.c.l.b16 %v2252
        %v2337 = vunpack.c.h.b16 %v2252
        %v2338 = vunpack.c.l.b16 %v2253
        %v2339 = vunpack.c.h.b16 %v2253
        %v2340 = vunpack.c.l.b16 %v2254
        %v2341 = vunpack.c.h.b16 %v2254
        %v2342 = vunpack.c.l.b16 %v2255
        %v2343 = vunpack.c.h.b16 %v2255
        %v2344 = vunpack.c.l.b16 %v2256
        %v2345 = vunpack.c.h.b16 %v2256
        %v2346 = vunpack.c.l.b16 %v2257
        %v2347 = vunpack.c.h.b16 %v2257
        %v2348 = vunpack.c.l.b16 %v2258
        %v2349 = vunpack.c.h.b16 %v2258
        %v2350 = vunpack.c.l.b16 %v2259
        %v2351 = vunpack.c.h.b16 %v2259
        %v2352 = vunpack.c.l.b16 %v2260
        %v2353 = vunpack.c.h.b16 %v2260
        %v2354 = vunpack.c.l.b16 %v2261
        %v2355 = vunpack.c.h.b16 %v2261
        %v2356 = vunpack.c.l.b16 %v2262
        %v2357 = vunpack.c.h.b16 %v2262
        %v2358 = vunpack.c.l.b16 %v2263
        %v2359 = vunpack.c.h.b16 %v2263
        %v2360 = vunpack.c.l.b16 %v2264
        %v2361 = vunpack.c.h.b16 %v2264
        %v2362 = vunpack.c.l.b16 %v2265
        %v2363 = vunpack.c.h.b16 %v2265
        %v2364 = vunpack.c.l.b16 %v2266
        %v2365 = vunpack.c.h.b16 %v2266
        %v2366 = vunpack.c.l.b16 %v2267
        %v2367 = vunpack.c.h.b16 %v2267
        %v2368 = vunpack.c.l.b16 %v2268
        %v2369 = vunpack.c.h.b16 %v2268
        %v2370 = vunpack.c.l.b16 %v2269
        %v2371 = vunpack.c.h.b16 %v2269
        %v2372 = vunpack.c.l.b16 %v2270
        %v2373 = vunpack.c.h.b16 %v2270
        %v2374 = vunpack.c.l.b16 %v2271
        %v2375 = vunpack.c.h.b16 %v2271
        %v2376 = vunpack.c.l.b16 %v2272
        %v2377 = vunpack.c.h.b16 %v2272
        %v2378 = vunpack.c.l.b16 %v2273
        %v2379 = vunpack.c.h.b16 %v2273
        %v2380 = vunpack.c.l.b16 %v2274
        %v2381 = vunpack.c.h.b16 %v2274
        %v2382 = vunpack.c.l.b16 %v2275
        %v2383 = vunpack.c.h.b16 %v2275
        %v2384 = vpack.c.b16 %v2322, %v2320
        %v2385 = vpack.c.b16 %v2323, %v2321
        %v2386 = vpack.c.b16 %v2326, %v2324
        %v2387 = vpack.c.b16 %v2327, %v2325
        %v2388 = vpack.c.b16 %v2330, %v2328
        %v2389 = vpack.c.b16 %v2331, %v2329
        %v2390 = vpack.c.b16 %v2334, %v2332
        %v2391 = vpack.c.b16 %v2335, %v2333
        %v2392 = vpack.c.b16 %v2338, %v2336
        %v2393 = vpack.c.b16 %v2339, %v2337
        %v2394 = vpack.c.b16 %v2342, %v2340
        %v2395 = vpack.c.b16 %v2343, %v2341
        %v2396 = vpack.c.b16 %v2346, %v2344
        %v2397 = vpack.c.b16 %v2347, %v2345
        %v2398 = vpack.c.b16 %v2350, %v2348
        %v2399 = vpack.c.b16 %v2351, %v2349
        %v2400 = vpack.c.b16 %v2354, %v2352
        %v2401 = vpack.c.b16 %v2355, %v2353
        %v2402 = vpack.c.b16 %v2358, %v2356
        %v2403 = vpack.c.b16 %v2359, %v2357
        %v2404 = vpack.c.b16 %v2362, %v2360
        %v2405 = vpack.c.b16 %v2363, %v2361
        %v2406 = vpack.c.b16 %v2366, %v2364
        %v2407 = vpack.c.b16 %v2367, %v2365
        %v2408 = vpack.c.b16 %v2370, %v2368
        %v2409 = vpack.c.b16 %v2371, %v2369
        %v2410 = vpack.c.b16 %v2374, %v2372
        %v2411 = vpack.c.b16 %v2375, %v2373
        %v2412 = vpack.c.b16 %v2378, %v2376
        %v2413 = vpack.c.b16 %v2379, %v2377
        %v2414 = vpack.c.b16 %v2382, %v2380
        %v2415 = vpack.c.b16 %v2383, %v2381
        %2448 = vmatprep.subr.bf16.mxu0 %v2385
        %2449 = vmatpush1.bf16.msra.mxu0 %v2384
        %2450 = vmatprep.subr.bf16.mxu0 %v2387
        %2451 = vmatpush1.bf16.msra.mxu0 %v2386
        %2452 = vmatprep.subr.bf16.mxu0 %v2389
        %2453 = vmatpush1.bf16.msra.mxu0 %v2388
        %2454 = vmatprep.subr.bf16.mxu0 %v2391
        %2455 = vmatpush1.bf16.msra.mxu0 %v2390
        %2456 = vmatprep.subr.bf16.mxu0 %v2393
        %2457 = vmatpush1.bf16.msra.mxu0 %v2392
        %2458 = vmatprep.subr.bf16.mxu0 %v2395
        %2459 = vmatpush1.bf16.msra.mxu0 %v2394
        %2460 = vmatprep.subr.bf16.mxu0 %v2397
        %2461 = vmatpush1.bf16.msra.mxu0 %v2396
        %2462 = vmatprep.subr.bf16.mxu0 %v2399
        %2463 = vmatpush1.bf16.msra.mxu0 %v2398
        %2464 = vmatprep.subr.bf16.mxu0 %v2401
        %2465 = vmatpush1.bf16.msra.mxu0 %v2400
        %2466 = vmatprep.subr.bf16.mxu0 %v2403
        %2467 = vmatpush1.bf16.msra.mxu0 %v2402
        %2468 = vmatprep.subr.bf16.mxu0 %v2405
        %2469 = vmatpush1.bf16.msra.mxu0 %v2404
        %2470 = vmatprep.subr.bf16.mxu0 %v2407
        %2471 = vmatpush1.bf16.msra.mxu0 %v2406
        %2472 = vmatprep.subr.bf16.mxu0 %v2409
        %2473 = vmatpush1.bf16.msra.mxu0 %v2408
        %2474 = vmatprep.subr.bf16.mxu0 %v2411
        %2475 = vmatpush1.bf16.msra.mxu0 %v2410
        %2476 = vmatprep.subr.bf16.mxu0 %v2413
        %2477 = vmatpush1.bf16.msra.mxu0 %v2412
        %2478 = vmatprep.subr.bf16.mxu0 %v2415
        %2479 = vmatpush1.bf16.msra.mxu0 %v2414
        %2480 = vmatprep.mubr.bf16.mxu0 %v2243
        %2481 = vmatmul.mubr.bf16.gmra.mrb[0].mxu0 %v2242
        %v2482 = vpop.f32.mrb[0].mxu0
        %v2483 = vadd.f32 %v2281, %v2482
        %v2484 = vpop.f32.mrb[0].mxu0
        %v2485 = vadd.f32 %v2285, %v2484
        %v2486 = vpop.f32.mrb[0].mxu0
        %v2487 = vpop.f32.mrb[0].mxu0
        %2488 = vdwg.mxu0
        %v2489 = vadd.f32 %v1991, %v2483
        %v2490 = vadd.f32 %v1992, %v2485
        %v2491 = vadd.f32 %v2489, %v2490
        %2492 = vadd.xlane.f32.xlu0 %v2491
        %v2493 = vpop.xlane.xlu0 %2492
        %v2494 = vmul.f32 %v2493, %v1951
        %v2495 = vsub.f32 %v2489, %v2494
        %v2496 = vsub.f32 %v2490, %v2494
        %v2497 = vmul.f32 %v2495, %v2495
        %v2498 = vmul.f32 %v2496, %v2496
        %v2499 = vadd.f32 %v2497, %v2498
        %2500 = vadd.xlane.f32.xlu0 %v2499
        %v2501 = vpop.xlane.xlu0 %2500
        %v2502 = vmul.f32 %v2501, %v1951
        %v2503 = vadd.f32 %v2502, 1e-12
        %v2504 = vrsqrt.pop %v2503
        %v2505 = vmul.f32 %v2495, %v2504
        %v2506 = vmul.f32 %v2496, %v2504
        %v2507 = vld [vmem:[%s17] sm:$0x3]
        %v2509 = vlaneseq
        %v2510 = vshrl.u32 %v2509, 7
        %v2511 = vsub.s32 0, %v2510
        %v2512 = vrot.slane %v2507, %v2511
        %v2513 = vlaneseq
        %v2514 = vshrl.u32 %v2513, 7
        %v2515 = vsub.s32 1, %v2514
        %v2516 = vrot.slane %v2507, %v2515
        %v2519 = vmul.f32 %v2512, %v2505
        %v2520 = vmul.f32 %v2516, %v2506
        %v2521 = vld [vmem:[%s18] sm:$0x3]
        %v2523 = vlaneseq
        %v2524 = vshrl.u32 %v2523, 7
        %v2525 = vsub.s32 0, %v2524
        %v2526 = vrot.slane %v2521, %v2525
        %v2527 = vlaneseq
        %v2528 = vshrl.u32 %v2527, 7
        %v2529 = vsub.s32 1, %v2528
        %v2530 = vrot.slane %v2521, %v2529
        %v2533 = vadd.f32 %v2519, %v2526
        %v2534 = vadd.f32 %v2520, %v2530
        %v2535 = vpack.c.bf16 %v2533, %v2533
        %v2536 = vpack.c.bf16 %v2534, %v2534
        %v2539 = vunpack.c.l.b16 %v2535
        %v2540 = vunpack.c.l.b16 %v2536
        %v2541 = vpack.c.b16 %v2540, %v2539
        %2543 = vst [vmem:[%s687] sm:$0xff] %v2541
        %p2544 = scmp.lt.s32.totalorder %s35, 1
        %s2545 = scalar_select %p2544, %s35, 1
        %p2546 = scmp.lt.s32.totalorder %s36, 0
        %s2547 = scalar_select %p2546, %s36, 0
        %s2548 = smul.addr %s2547, 2
        %s2549 = smul.addr %s2545, 2
        %s2550 = sadd.s32 %s2548, %s2549
        %s2551 = smul.addr %s2550, 4
        %s2552 = scalar_lea.vmem %s19, %s2551
        // Predicated region
        $region101: #{encoder_forward.13} parent=95 // pred_check
          %p2553 = pneg %p479
        $region102: #{encoder_forward.13} parent=95 // pred_check_branch
          %2555 = sbr.rel (%p2553) target = $region104
        $region103: #{encoder_forward.13} parent=95 // pred_region
          _
        $region104: #{encoder_forward.13} parent=95 // pred_fallthru
          _
      $region96: #{encoder_forward.13} parent=5 // pred_fallthru
        _
      %p2556 = scmp.le.s32.totalorder 2, %s26
      // Predicated region
      $region105: #{encoder_forward.13} parent=5 // pred_check
        %p2557 = pneg %p2556
      $region106: #{encoder_forward.13} parent=5 // pred_check_branch
        %2559 = sbr.rel (%p2557) target = $region108
      $region107: #{encoder_forward.13} parent=5 // pred_region
        %s2560 = ssub.s32 %s26, 2
        // Predicated region
        $region109: #{encoder_forward.13} parent=107 // pred_check
          %p2561 = pneg %p485
        $region110: #{encoder_forward.13} parent=107 // pred_check_branch
          %2563 = sbr.rel (%p2561) target = $region112
        $region111: #{encoder_forward.13} parent=107 // pred_region
          %p2564 = scmp.lt.s32.totalorder %s37, 1
          %s2565 = scalar_select %p2564, %s37, 1
          %p2566 = scmp.lt.s32.totalorder %s38, 0
          %s2567 = scalar_select %p2566, %s38, 0
          %s2568 = smul.addr %s2567, 2
          %s2569 = smul.addr %s2565, 2
          %s2570 = sadd.s32 %s2568, %s2569
          %s2571 = smul.addr %s2570, 4
          %s2572 = scalar_lea.vmem %s19, %s2571
        $region112: #{encoder_forward.13} parent=107 // pred_fallthru
          _
      $region108: #{encoder_forward.13} parent=5 // pred_fallthru
        _
    $region6: #{encoder_forward.13} parent=1 // loop_footer
      %s30 = sadd.s32 1, %s26
    $region7: #{encoder_forward.13} parent=1 // loop_footer_branch
      %25 = sbr.rel target = $region3
    $region8: #{encoder_forward.13} parent=1 // loop_exit
      _
    %2573 = vsyncpa [#allocation3], 1
    %s2574 = scalar_lea.sflag [#allocation3], 1
    %2575 = vsyncpa %s2574, 1

</llo_original>
